<compile_context>
chip_gen: v7x
topology: tpu7x:2x2x1
jax: 0.10.0
libtpu: 0.0.40
codegen_flags: <defaults>
</compile_context>

<pallas_src>
import jax
import jax.numpy as jnp
from jax.experimental import pallas as pl
from jax.experimental.pallas import tpu as pltpu

EPS = 1e-5
F32 = jnp.float32


# ---------------------------------------------------------------------------
# In-kernel building block (shared by both fused kernels)
# ---------------------------------------------------------------------------
def _conv_relu_bn(src_ref, w_ref, p_ref):
    """conv (full input width) + bias -> ReLU -> folded eval-BatchNorm.

    src_ref : (N, H, C)            activations (channels last), VMEM ref
    w_ref   : (KH, N, C, Cout)     per-offset weight slices (batched on N)
    p_ref   : (N, 3, Cout)         packed (conv bias, BN scale, BN shift)
    returns : (N, H-KH+1, Cout)    value
    """
    kh = w_ref.shape[0]
    ho = src_ref.shape[1] - kh + 1
    acc = jnp.einsum('nhc,nco->nho', src_ref[:, 0:ho, :], w_ref[0],
                     preferred_element_type=jnp.float32)
    for i in range(1, kh):
        acc = acc + jnp.einsum('nhc,nco->nho', src_ref[:, i:i + ho, :],
                               w_ref[i], preferred_element_type=jnp.float32)
    y = jnp.maximum(acc + p_ref[:, 0:1, :], 0.0)        # conv bias, then ReLU
    return y * p_ref[:, 1:2, :] + p_ref[:, 2:3, :]      # BN folded to scale/shift


# ---------------------------------------------------------------------------
# Pallas kernels
# ---------------------------------------------------------------------------
def _sensor_stage_kernel(x_ref, w1_ref, p1_ref, w2_ref, p2_ref, w3_ref, p3_ref,
                         o_ref, h1_s, h2_s):
    # x: (S*B, T, 3) -- all sensor branches batched on the rows axis.
    h1_s[...] = _conv_relu_bn(x_ref, w1_ref, p1_ref)     # (S*B, T-1, F)
    h2_s[...] = _conv_relu_bn(h1_s, w2_ref, p2_ref)      # (S*B, T-3, F)
    o_ref[...] = _conv_relu_bn(h2_s, w3_ref, p3_ref)     # (S*B, T-4, F)


def _merge_mlp_kernel(m_ref, w1_ref, p1_ref, w2_ref, p2_ref, w3_ref, p3_ref,
                      wl1_ref, bl1_ref, wl2_ref, bl2_ref, o_ref,
                      g1_s, g2_s, g3_s):
    # m: (B, F*(T-4), S) -- merged sensor features, "channels" (S) last.
    g1_s[...] = _conv_relu_bn(m_ref, w1_ref, p1_ref)     # (B, Mh-1, F)
    g2_s[...] = _conv_relu_bn(g1_s, w2_ref, p2_ref)      # (B, Mh-3, F)
    g3_s[...] = _conv_relu_bn(g2_s, w3_ref, p3_ref)      # (B, M3,  F)

    b, m3, _ = g3_s.shape
    hidden = wl1_ref.shape[-1]
    # lin1: contraction over the (M3, F) block, unrolled over M3 so that no
    # in-kernel flatten/transpose is needed (wl1 is pre-permuted host-side).
    acc = jnp.zeros((b, 1, hidden), jnp.float32)
    for m in range(m3):
        acc = acc + jnp.einsum('nkc,nco->nko', g3_s[:, m:m + 1, :], wl1_ref[m],
                               preferred_element_type=jnp.float32)
    h1 = jnp.maximum(acc + bl1_ref[...], 0.0)
    o_ref[...] = (jnp.einsum('nkh,nho->nko', h1, wl2_ref[...],
                             preferred_element_type=jnp.float32)
                  + bl2_ref[...])


def _vmem():
    return pl.BlockSpec(memory_space=pltpu.MemorySpace.VMEM)


# ---------------------------------------------------------------------------
# Host-side weight preparation (layout plumbing only, runs under jit)
# ---------------------------------------------------------------------------
def _fold_bn(layer):
    """Pack (conv bias, BN scale, BN shift) into one (3, Cout) array."""
    scale = layer["gamma"] * jax.lax.rsqrt(layer["var"] + EPS)
    shift = layer["beta"] - layer["mean"] * scale
    return jnp.stack([layer["b"], scale, shift], axis=0).astype(F32)


def _w_spatial(w):
    # (Cout, 1, KH, KW) -> (KH, KW, Cout)   [(2,3) and (2,S) convs, Cin == 1]
    return jnp.transpose(w[:, 0], (1, 2, 0)).astype(F32)


def _w_channel(w):
    # (Cout, Cin, KH, 1) -> (KH, Cin, Cout) [(KH,1) convs]
    return jnp.transpose(w[:, :, :, 0], (2, 1, 0)).astype(F32)


def deepsense_forward(params, input_seqs, sensor_num):
    B, T, _ = input_seqs.shape
    S = sensor_num
    F_ = params["conv0_1"]["w"].shape[0]          # num_filter
    N = S * B
    H3 = T - 4

    # ---- stage 1: per-sensor conv towers, all sensors batched on rows ------
    xs = (input_seqs.astype(F32).reshape(B, T, S, 3)
          .transpose(2, 0, 1, 3).reshape(N, T, 3))

    def sensor_stack(j, wfn):
        w = jnp.stack([wfn(params[f"conv{i}_{j}"]["w"]) for i in range(S)], 0)
        p = jnp.stack([_fold_bn(params[f"conv{i}_{j}"]) for i in range(S)], 0)
        # rows are ordered n = s*B + b, so repeat each sensor's weights B times
        w = jnp.transpose(jnp.repeat(w, B, axis=0), (1, 0, 2, 3))  # (kh,N,C,F)
        p = jnp.repeat(p, B, axis=0)                               # (N,3,F)
        return w, p

    w1, p1 = sensor_stack(1, _w_spatial)
    w2, p2 = sensor_stack(2, _w_channel)
    w3, p3 = sensor_stack(3, _w_channel)

    h3 = pl.pallas_call(
        _sensor_stage_kernel,
        out_shape=jax.ShapeDtypeStruct((N, H3, F_), F32),
        in_specs=[_vmem()] * 7,
        out_specs=_vmem(),
        scratch_shapes=[pltpu.VMEM((N, T - 1, F_), F32),
                        pltpu.VMEM((N, T - 3, F_), F32)],
    )(xs, w1, p1, w2, p2, w3, p3)

    # ---- the module's flatten/cat relayout (tiny, done once in XLA) --------
    Mh = F_ * H3
    merge = h3.reshape(S, B, H3, F_).transpose(1, 3, 2, 0).reshape(B, Mh, S)

    # ---- stage 2: merge convs + MLP head, fused -----------------------------
    def merge_stack(name, wfn):
        w = wfn(params[name]["w"])                            # (kh, C, F)
        w = jnp.broadcast_to(w[:, None], (w.shape[0], B) + w.shape[1:])
        p = jnp.broadcast_to(_fold_bn(params[name])[None], (B, 3, F_))
        return w, p

    mw1, mp1 = merge_stack("merge_conv1", _w_spatial)
    mw2, mp2 = merge_stack("merge_conv2", _w_channel)
    mw3, mp3 = merge_stack("merge_conv3", _w_channel)

    M3 = Mh - 4
    lw1 = params["lin1"]["w"].astype(F32)                 # (hidden, F_*M3)
    hidden = lw1.shape[0]
    # permute lin1 columns from PyTorch flatten order (c*M3 + m) to the
    # in-kernel (m, c) order, then broadcast per batch for batched einsum
    wl1 = lw1.reshape(hidden, F_, M3).transpose(2, 1, 0)   # (M3, F_, hidden)
    wl1 = jnp.broadcast_to(wl1[:, None], (M3, B, F_, hidden))
    bl1 = params["lin1"]["b"].astype(F32).reshape(1, 1, hidden)
    lw2 = params["lin2"]["w"].astype(F32)                  # (out, hidden)
    out_dim = lw2.shape[0]
    wl2 = jnp.broadcast_to(lw2.T[None], (B, hidden, out_dim))
    bl2 = params["lin2"]["b"].astype(F32).reshape(1, 1, out_dim)

    out = pl.pallas_call(
        _merge_mlp_kernel,
        out_shape=jax.ShapeDtypeStruct((B, 1, out_dim), F32),
        in_specs=[_vmem()] * 11,
        out_specs=_vmem(),
        scratch_shapes=[pltpu.VMEM((B, Mh - 1, F_), F32),
                        pltpu.VMEM((B, Mh - 3, F_), F32),
                        pltpu.VMEM((B, M3, F_), F32)],
    )(merge, mw1, mp1, mw2, mp2, mw3, mp3, wl1, bl1, wl2, bl2)
    return out[:, 0, :]


# ---------------------------------------------------------------------------
# Pure-XLA reference (mirrors the PyTorch module) for a numerical self-check
# ---------------------------------------------------------------------------
def _ref_conv_block(x, layer):
    y = jax.lax.conv_general_dilated(
        x, layer["w"], (1, 1), "VALID",
        dimension_numbers=("NCHW", "OIHW", "NCHW"),
        precision=jax.lax.Precision.HIGHEST)
    y = jnp.maximum(y + layer["b"][None, :, None, None], 0.0)
    scale = layer["gamma"] * jax.lax.rsqrt(layer["var"] + EPS)
    shift = layer["beta"] - layer["mean"] * scale
    return y * scale[None, :, None, None] + shift[None, :, None, None]


def deepsense_reference(params, input_seqs, sensor_num):
    B, T, _ = input_seqs.shape
    h = input_seqs.reshape(B, T, sensor_num, 3)
    hs = []
    for i in range(sensor_num):
        t = h[:, :, i, :][:, None, :, :]
        for j in range(3):
            t = _ref_conv_block(t, params[f"conv{i}_{j + 1}"])
        hs.append(t.reshape(B, -1)[:, :, None])
    h = jnp.concatenate(hs, axis=2)[:, None, :, :]
    h = _ref_conv_block(h, params["merge_conv1"])
    h = _ref_conv_block(h, params["merge_conv2"])
    h = _ref_conv_block(h, params["merge_conv3"])
    flat = h.reshape(B, -1)
    h1 = jnp.maximum(
        jnp.dot(flat, params["lin1"]["w"].T,
                precision=jax.lax.Precision.HIGHEST) + params["lin1"]["b"], 0.0)
    return (jnp.dot(h1, params["lin2"]["w"].T,
                    precision=jax.lax.Precision.HIGHEST) + params["lin2"]["b"])


# ---------------------------------------------------------------------------
# Deterministic parameter construction (synthetic weights, no checkpoint)
# ---------------------------------------------------------------------------
def _conv_params(key, cout, cin, kh, kw):
    k = jax.random.split(key, 6)
    return dict(
        w=0.2 * jax.random.normal(k[0], (cout, cin, kh, kw), jnp.float32),
        b=0.1 * jax.random.normal(k[1], (cout,), jnp.float32),
        gamma=1.0 + 0.1 * jax.random.normal(k[2], (cout,), jnp.float32),
        beta=0.1 * jax.random.normal(k[3], (cout,), jnp.float32),
        mean=0.1 * jax.random.normal(k[4], (cout,), jnp.float32),
        var=1.0 + 0.1 * jax.random.uniform(k[5], (cout,), jnp.float32),
    )


def _linear_params(key, out_dim, in_dim):
    k1, k2 = jax.random.split(key)
    return dict(
        w=0.1 * jax.random.normal(k1, (out_dim, in_dim), jnp.float32),
        b=0.1 * jax.random.normal(k2, (out_dim,), jnp.float32),
    )


def init_params(key, sensor_num, num_filter, flat_num, output):
    keys = jax.random.split(key, sensor_num * 3 + 3 + 2)
    params = {}
    idx = 0
    for i in range(sensor_num):
        params[f"conv{i}_1"] = _conv_params(keys[idx], num_filter, 1, 2, 3); idx += 1
        params[f"conv{i}_2"] = _conv_params(keys[idx], num_filter, num_filter, 3, 1); idx += 1
        params[f"conv{i}_3"] = _conv_params(keys[idx], num_filter, num_filter, 2, 1); idx += 1
    params["merge_conv1"] = _conv_params(keys[idx], num_filter, 1, 2, sensor_num); idx += 1
    params["merge_conv2"] = _conv_params(keys[idx], num_filter, num_filter, 3, 1); idx += 1
    params["merge_conv3"] = _conv_params(keys[idx], num_filter, num_filter, 2, 1); idx += 1
    params["lin1"] = _linear_params(keys[idx], 12, flat_num); idx += 1
    params["lin2"] = _linear_params(keys[idx], output, 12); idx += 1
    return params


# ---------------------------------------------------------------------------
if __name__ == "__main__":
    # Module-consistent small shapes:
    #   input dim = 12 -> sensor_num = 4; seq len T = 8; num_filter = 8; output = 6
    #   flat_num = num_filter * (num_filter * (T - 4) - 4) = 8 * 28 = 224
    B, T, INPUT_DIM, NUM_FILTER, OUTPUT = 2, 8, 12, 8, 6
    SENSOR_NUM = INPUT_DIM // 3
    FLAT_NUM = NUM_FILTER * (NUM_FILTER * (T - 4) - 4)

    key = jax.random.PRNGKey(0)
    k_params, k_x = jax.random.split(key)
    params = init_params(k_params, SENSOR_NUM, NUM_FILTER, FLAT_NUM, OUTPUT)
    x = jax.random.normal(k_x, (B, T, INPUT_DIM), jnp.float32)

    fwd = jax.jit(lambda p, xx: deepsense_forward(p, xx, SENSOR_NUM))
    out = fwd(params, x)
    jax.block_until_ready(out)
    assert out.shape == (B, OUTPUT), out.shape

    ref = deepsense_reference(params, x, SENSOR_NUM)
    assert bool(jnp.allclose(out, ref, atol=5e-2, rtol=5e-2)), (
        float(jnp.max(jnp.abs(out - ref))))
    print("KERNEL_OK")
</pallas_src>

<mosaic_0001>
module attributes {stable_mosaic.version = 11 : i64} {
  func.func @_sensor_stage_kernel(%arg0: memref<8x8x3xf32, #tpu.memory_space<vmem>>, %arg1: memref<2x8x3x8xf32, #tpu.memory_space<vmem>>, %arg2: memref<8x3x8xf32, #tpu.memory_space<vmem>>, %arg3: memref<3x8x8x8xf32, #tpu.memory_space<vmem>>, %arg4: memref<8x3x8xf32, #tpu.memory_space<vmem>>, %arg5: memref<2x8x8x8xf32, #tpu.memory_space<vmem>>, %arg6: memref<8x3x8xf32, #tpu.memory_space<vmem>>, %arg7: memref<8x4x8xf32, #tpu.memory_space<vmem>>, %arg8: memref<8x7x8xf32, #tpu.memory_space<vmem>>, %arg9: memref<8x5x8xf32, #tpu.memory_space<vmem>>) attributes {dimension_semantics = [], scalar_prefetch = 0 : i64, scratch_operands = 2 : i64, tpu.core_type = #tpu.core_type<tc>} {
    %c0 = arith.constant 0 : index
    %c0_0 = arith.constant 0 : index
    %c0_1 = arith.constant 0 : index
    %0 = vector.load %arg0[%c0, %c0_0, %c0_1] : memref<8x8x3xf32, #tpu.memory_space<vmem>>, vector<8x7x3xf32>
    %c0_2 = arith.constant 0 : index
    %c0_3 = arith.constant 0 : index
    %c0_4 = arith.constant 0 : index
    %c0_5 = arith.constant 0 : index
    %1 = vector.load %arg1[%c0_2, %c0_3, %c0_4, %c0_5] : memref<2x8x3x8xf32, #tpu.memory_space<vmem>>, vector<1x8x3x8xf32>
    %2 = vector.shape_cast %1 : vector<1x8x3x8xf32> to vector<8x3x8xf32>
    "tpu.trace_start"() <{level = 10 : i32, message = "nhc,nco->nho"}> : () -> ()
    %cst = arith.constant dense<0.000000e+00> : vector<8x7x8xf32>
    %3 = tpu.matmul %0, %2, %cst {dimension_numbers = #tpu.dot_dimension_numbers<[2], [1], [1], [2], [0, 0, 0, 1, 1, 2], [0], [0]>} : vector<8x7x3xf32>, vector<8x3x8xf32>, vector<8x7x8xf32> -> vector<8x7x8xf32>
    "tpu.trace_stop"() : () -> ()
    %c0_6 = arith.constant 0 : index
    %c1 = arith.constant 1 : index
    %c0_7 = arith.constant 0 : index
    %4 = vector.load %arg0[%c0_6, %c1, %c0_7] : memref<8x8x3xf32, #tpu.memory_space<vmem>>, vector<8x7x3xf32>
    %c1_8 = arith.constant 1 : index
    %c0_9 = arith.constant 0 : index
    %c0_10 = arith.constant 0 : index
    %c0_11 = arith.constant 0 : index
    %5 = vector.load %arg1[%c1_8, %c0_9, %c0_10, %c0_11] : memref<2x8x3x8xf32, #tpu.memory_space<vmem>>, vector<1x8x3x8xf32>
    %6 = vector.shape_cast %5 : vector<1x8x3x8xf32> to vector<8x3x8xf32>
    "tpu.trace_start"() <{level = 10 : i32, message = "nhc,nco->nho"}> : () -> ()
    %cst_12 = arith.constant dense<0.000000e+00> : vector<8x7x8xf32>
    %7 = tpu.matmul %4, %6, %cst_12 {dimension_numbers = #tpu.dot_dimension_numbers<[2], [1], [1], [2], [0, 0, 0, 1, 1, 2], [0], [0]>} : vector<8x7x3xf32>, vector<8x3x8xf32>, vector<8x7x8xf32> -> vector<8x7x8xf32>
    "tpu.trace_stop"() : () -> ()
    %8 = arith.addf %3, %7 : vector<8x7x8xf32>
    %c0_13 = arith.constant 0 : index
    %c0_14 = arith.constant 0 : index
    %c0_15 = arith.constant 0 : index
    %9 = vector.load %arg2[%c0_13, %c0_14, %c0_15] : memref<8x3x8xf32, #tpu.memory_space<vmem>>, vector<8x1x8xf32>
    %10 = vector.broadcast %9 : vector<8x1x8xf32> to vector<8x7x8xf32>
    %11 = arith.addf %8, %10 : vector<8x7x8xf32>
    %cst_16 = arith.constant 0.000000e+00 : f32
    %12 = vector.broadcast %cst_16 : f32 to vector<8x7x8xf32>
    %13 = arith.maximumf %11, %12 : vector<8x7x8xf32>
    %c0_17 = arith.constant 0 : index
    %c1_18 = arith.constant 1 : index
    %c0_19 = arith.constant 0 : index
    %14 = vector.load %arg2[%c0_17, %c1_18, %c0_19] : memref<8x3x8xf32, #tpu.memory_space<vmem>>, vector<8x1x8xf32>
    %15 = vector.broadcast %14 : vector<8x1x8xf32> to vector<8x7x8xf32>
    %16 = arith.mulf %13, %15 : vector<8x7x8xf32>
    %c0_20 = arith.constant 0 : index
    %c2 = arith.constant 2 : index
    %c0_21 = arith.constant 0 : index
    %17 = vector.load %arg2[%c0_20, %c2, %c0_21] : memref<8x3x8xf32, #tpu.memory_space<vmem>>, vector<8x1x8xf32>
    %18 = vector.broadcast %17 : vector<8x1x8xf32> to vector<8x7x8xf32>
    %19 = arith.addf %16, %18 : vector<8x7x8xf32>
    %c0_22 = arith.constant 0 : index
    %c0_23 = arith.constant 0 : index
    %c0_24 = arith.constant 0 : index
    %20 = vector.load %arg8[%c0_22, %c0_23, %c0_24] : memref<8x7x8xf32, #tpu.memory_space<vmem>>, vector<8x7x8xf32>
    tpu.vector_store %arg8[%c0_22, %c0_23, %c0_24], %19 {strides = array<i32>} : memref<8x7x8xf32, #tpu.memory_space<vmem>>, vector<8x7x8xf32>,
    %c0_25 = arith.constant 0 : index
    %c0_26 = arith.constant 0 : index
    %c0_27 = arith.constant 0 : index
    %21 = vector.load %arg8[%c0_25, %c0_26, %c0_27] : memref<8x7x8xf32, #tpu.memory_space<vmem>>, vector<8x5x8xf32>
    %c0_28 = arith.constant 0 : index
    %c0_29 = arith.constant 0 : index
    %c0_30 = arith.constant 0 : index
    %c0_31 = arith.constant 0 : index
    %22 = vector.load %arg3[%c0_28, %c0_29, %c0_30, %c0_31] : memref<3x8x8x8xf32, #tpu.memory_space<vmem>>, vector<1x8x8x8xf32>
    %23 = vector.shape_cast %22 : vector<1x8x8x8xf32> to vector<8x8x8xf32>
    "tpu.trace_start"() <{level = 10 : i32, message = "nhc,nco->nho"}> : () -> ()
    %cst_32 = arith.constant dense<0.000000e+00> : vector<8x5x8xf32>
    %24 = tpu.matmul %21, %23, %cst_32 {dimension_numbers = #tpu.dot_dimension_numbers<[2], [1], [1], [2], [0, 0, 0, 1, 1, 2], [0], [0]>} : vector<8x5x8xf32>, vector<8x8x8xf32>, vector<8x5x8xf32> -> vector<8x5x8xf32>
    "tpu.trace_stop"() : () -> ()
    %c0_33 = arith.constant 0 : index
    %c1_34 = arith.constant 1 : index
    %c0_35 = arith.constant 0 : index
    %25 = vector.load %arg8[%c0_33, %c1_34, %c0_35] : memref<8x7x8xf32, #tpu.memory_space<vmem>>, vector<8x5x8xf32>
    %c1_36 = arith.constant 1 : index
    %c0_37 = arith.constant 0 : index
    %c0_38 = arith.constant 0 : index
    %c0_39 = arith.constant 0 : index
    %26 = vector.load %arg3[%c1_36, %c0_37, %c0_38, %c0_39] : memref<3x8x8x8xf32, #tpu.memory_space<vmem>>, vector<1x8x8x8xf32>
    %27 = vector.shape_cast %26 : vector<1x8x8x8xf32> to vector<8x8x8xf32>
    "tpu.trace_start"() <{level = 10 : i32, message = "nhc,nco->nho"}> : () -> ()
    %cst_40 = arith.constant dense<0.000000e+00> : vector<8x5x8xf32>
    %28 = tpu.matmul %25, %27, %cst_40 {dimension_numbers = #tpu.dot_dimension_numbers<[2], [1], [1], [2], [0, 0, 0, 1, 1, 2], [0], [0]>} : vector<8x5x8xf32>, vector<8x8x8xf32>, vector<8x5x8xf32> -> vector<8x5x8xf32>
    "tpu.trace_stop"() : () -> ()
    %29 = arith.addf %24, %28 : vector<8x5x8xf32>
    %c0_41 = arith.constant 0 : index
    %c2_42 = arith.constant 2 : index
    %c0_43 = arith.constant 0 : index
    %30 = vector.load %arg8[%c0_41, %c2_42, %c0_43] : memref<8x7x8xf32, #tpu.memory_space<vmem>>, vector<8x5x8xf32>
    %c2_44 = arith.constant 2 : index
    %c0_45 = arith.constant 0 : index
    %c0_46 = arith.constant 0 : index
    %c0_47 = arith.constant 0 : index
    %31 = vector.load %arg3[%c2_44, %c0_45, %c0_46, %c0_47] : memref<3x8x8x8xf32, #tpu.memory_space<vmem>>, vector<1x8x8x8xf32>
    %32 = vector.shape_cast %31 : vector<1x8x8x8xf32> to vector<8x8x8xf32>
    "tpu.trace_start"() <{level = 10 : i32, message = "nhc,nco->nho"}> : () -> ()
    %cst_48 = arith.constant dense<0.000000e+00> : vector<8x5x8xf32>
    %33 = tpu.matmul %30, %32, %cst_48 {dimension_numbers = #tpu.dot_dimension_numbers<[2], [1], [1], [2], [0, 0, 0, 1, 1, 2], [0], [0]>} : vector<8x5x8xf32>, vector<8x8x8xf32>, vector<8x5x8xf32> -> vector<8x5x8xf32>
    "tpu.trace_stop"() : () -> ()
    %34 = arith.addf %29, %33 : vector<8x5x8xf32>
    %c0_49 = arith.constant 0 : index
    %c0_50 = arith.constant 0 : index
    %c0_51 = arith.constant 0 : index
    %35 = vector.load %arg4[%c0_49, %c0_50, %c0_51] : memref<8x3x8xf32, #tpu.memory_space<vmem>>, vector<8x1x8xf32>
    %36 = vector.broadcast %35 : vector<8x1x8xf32> to vector<8x5x8xf32>
    %37 = arith.addf %34, %36 : vector<8x5x8xf32>
    %cst_52 = arith.constant 0.000000e+00 : f32
    %38 = vector.broadcast %cst_52 : f32 to vector<8x5x8xf32>
    %39 = arith.maximumf %37, %38 : vector<8x5x8xf32>
    %c0_53 = arith.constant 0 : index
    %c1_54 = arith.constant 1 : index
    %c0_55 = arith.constant 0 : index
    %40 = vector.load %arg4[%c0_53, %c1_54, %c0_55] : memref<8x3x8xf32, #tpu.memory_space<vmem>>, vector<8x1x8xf32>
    %41 = vector.broadcast %40 : vector<8x1x8xf32> to vector<8x5x8xf32>
    %42 = arith.mulf %39, %41 : vector<8x5x8xf32>
    %c0_56 = arith.constant 0 : index
    %c2_57 = arith.constant 2 : index
    %c0_58 = arith.constant 0 : index
    %43 = vector.load %arg4[%c0_56, %c2_57, %c0_58] : memref<8x3x8xf32, #tpu.memory_space<vmem>>, vector<8x1x8xf32>
    %44 = vector.broadcast %43 : vector<8x1x8xf32> to vector<8x5x8xf32>
    %45 = arith.addf %42, %44 : vector<8x5x8xf32>
    %c0_59 = arith.constant 0 : index
    %c0_60 = arith.constant 0 : index
    %c0_61 = arith.constant 0 : index
    %46 = vector.load %arg9[%c0_59, %c0_60, %c0_61] : memref<8x5x8xf32, #tpu.memory_space<vmem>>, vector<8x5x8xf32>
    tpu.vector_store %arg9[%c0_59, %c0_60, %c0_61], %45 {strides = array<i32>} : memref<8x5x8xf32, #tpu.memory_space<vmem>>, vector<8x5x8xf32>,
    %c0_62 = arith.constant 0 : index
    %c0_63 = arith.constant 0 : index
    %c0_64 = arith.constant 0 : index
    %47 = vector.load %arg9[%c0_62, %c0_63, %c0_64] : memref<8x5x8xf32, #tpu.memory_space<vmem>>, vector<8x4x8xf32>
    %c0_65 = arith.constant 0 : index
    %c0_66 = arith.constant 0 : index
    %c0_67 = arith.constant 0 : index
    %c0_68 = arith.constant 0 : index
    %48 = vector.load %arg5[%c0_65, %c0_66, %c0_67, %c0_68] : memref<2x8x8x8xf32, #tpu.memory_space<vmem>>, vector<1x8x8x8xf32>
    %49 = vector.shape_cast %48 : vector<1x8x8x8xf32> to vector<8x8x8xf32>
    "tpu.trace_start"() <{level = 10 : i32, message = "nhc,nco->nho"}> : () -> ()
    %cst_69 = arith.constant dense<0.000000e+00> : vector<8x4x8xf32>
    %50 = tpu.matmul %47, %49, %cst_69 {dimension_numbers = #tpu.dot_dimension_numbers<[2], [1], [1], [2], [0, 0, 0, 1, 1, 2], [0], [0]>} : vector<8x4x8xf32>, vector<8x8x8xf32>, vector<8x4x8xf32> -> vector<8x4x8xf32>
    "tpu.trace_stop"() : () -> ()
    %c0_70 = arith.constant 0 : index
    %c1_71 = arith.constant 1 : index
    %c0_72 = arith.constant 0 : index
    %51 = vector.load %arg9[%c0_70, %c1_71, %c0_72] : memref<8x5x8xf32, #tpu.memory_space<vmem>>, vector<8x4x8xf32>
    %c1_73 = arith.constant 1 : index
    %c0_74 = arith.constant 0 : index
    %c0_75 = arith.constant 0 : index
    %c0_76 = arith.constant 0 : index
    %52 = vector.load %arg5[%c1_73, %c0_74, %c0_75, %c0_76] : memref<2x8x8x8xf32, #tpu.memory_space<vmem>>, vector<1x8x8x8xf32>
    %53 = vector.shape_cast %52 : vector<1x8x8x8xf32> to vector<8x8x8xf32>
    "tpu.trace_start"() <{level = 10 : i32, message = "nhc,nco->nho"}> : () -> ()
    %cst_77 = arith.constant dense<0.000000e+00> : vector<8x4x8xf32>
    %54 = tpu.matmul %51, %53, %cst_77 {dimension_numbers = #tpu.dot_dimension_numbers<[2], [1], [1], [2], [0, 0, 0, 1, 1, 2], [0], [0]>} : vector<8x4x8xf32>, vector<8x8x8xf32>, vector<8x4x8xf32> -> vector<8x4x8xf32>
    "tpu.trace_stop"() : () -> ()
    %55 = arith.addf %50, %54 : vector<8x4x8xf32>
    %c0_78 = arith.constant 0 : index
    %c0_79 = arith.constant 0 : index
    %c0_80 = arith.constant 0 : index
    %56 = vector.load %arg6[%c0_78, %c0_79, %c0_80] : memref<8x3x8xf32, #tpu.memory_space<vmem>>, vector<8x1x8xf32>
    %57 = vector.broadcast %56 : vector<8x1x8xf32> to vector<8x4x8xf32>
    %58 = arith.addf %55, %57 : vector<8x4x8xf32>
    %cst_81 = arith.constant 0.000000e+00 : f32
    %59 = vector.broadcast %cst_81 : f32 to vector<8x4x8xf32>
    %60 = arith.maximumf %58, %59 : vector<8x4x8xf32>
    %c0_82 = arith.constant 0 : index
    %c1_83 = arith.constant 1 : index
    %c0_84 = arith.constant 0 : index
    %61 = vector.load %arg6[%c0_82, %c1_83, %c0_84] : memref<8x3x8xf32, #tpu.memory_space<vmem>>, vector<8x1x8xf32>
    %62 = vector.broadcast %61 : vector<8x1x8xf32> to vector<8x4x8xf32>
    %63 = arith.mulf %60, %62 : vector<8x4x8xf32>
    %c0_85 = arith.constant 0 : index
    %c2_86 = arith.constant 2 : index
    %c0_87 = arith.constant 0 : index
    %64 = vector.load %arg6[%c0_85, %c2_86, %c0_87] : memref<8x3x8xf32, #tpu.memory_space<vmem>>, vector<8x1x8xf32>
    %65 = vector.broadcast %64 : vector<8x1x8xf32> to vector<8x4x8xf32>
    %66 = arith.addf %63, %65 : vector<8x4x8xf32>
    %c0_88 = arith.constant 0 : index
    %c0_89 = arith.constant 0 : index
    %c0_90 = arith.constant 0 : index
    %67 = vector.load %arg7[%c0_88, %c0_89, %c0_90] : memref<8x4x8xf32, #tpu.memory_space<vmem>>, vector<8x4x8xf32>
    tpu.vector_store %arg7[%c0_88, %c0_89, %c0_90], %66 {strides = array<i32>} : memref<8x4x8xf32, #tpu.memory_space<vmem>>, vector<8x4x8xf32>,
    return
  }
}

module attributes {stable_mosaic.version = 11 : i64} {
  func.func @_merge_mlp_kernel(%arg0: memref<2x32x4xf32, #tpu.memory_space<vmem>>, %arg1: memref<2x2x4x8xf32, #tpu.memory_space<vmem>>, %arg2: memref<2x3x8xf32, #tpu.memory_space<vmem>>, %arg3: memref<3x2x8x8xf32, #tpu.memory_space<vmem>>, %arg4: memref<2x3x8xf32, #tpu.memory_space<vmem>>, %arg5: memref<2x2x8x8xf32, #tpu.memory_space<vmem>>, %arg6: memref<2x3x8xf32, #tpu.memory_space<vmem>>, %arg7: memref<28x2x8x12xf32, #tpu.memory_space<vmem>>, %arg8: memref<1x1x12xf32, #tpu.memory_space<vmem>>, %arg9: memref<2x12x6xf32, #tpu.memory_space<vmem>>, %arg10: memref<1x1x6xf32, #tpu.memory_space<vmem>>, %arg11: memref<2x1x6xf32, #tpu.memory_space<vmem>>, %arg12: memref<2x31x8xf32, #tpu.memory_space<vmem>>, %arg13: memref<2x29x8xf32, #tpu.memory_space<vmem>>, %arg14: memref<2x28x8xf32, #tpu.memory_space<vmem>>) attributes {dimension_semantics = [], scalar_prefetch = 0 : i64, scratch_operands = 3 : i64, tpu.core_type = #tpu.core_type<tc>} {
    %c0 = arith.constant 0 : index
    %c0_0 = arith.constant 0 : index
    %c0_1 = arith.constant 0 : index
    %0 = vector.load %arg0[%c0, %c0_0, %c0_1] : memref<2x32x4xf32, #tpu.memory_space<vmem>>, vector<2x31x4xf32>
    %c0_2 = arith.constant 0 : index
    %c0_3 = arith.constant 0 : index
    %c0_4 = arith.constant 0 : index
    %c0_5 = arith.constant 0 : index
    %1 = vector.load %arg1[%c0_2, %c0_3, %c0_4, %c0_5] : memref<2x2x4x8xf32, #tpu.memory_space<vmem>>, vector<1x2x4x8xf32>
    %2 = vector.shape_cast %1 : vector<1x2x4x8xf32> to vector<2x4x8xf32>
    "tpu.trace_start"() <{level = 10 : i32, message = "nhc,nco->nho"}> : () -> ()
    %cst = arith.constant dense<0.000000e+00> : vector<2x31x8xf32>
    %3 = tpu.matmul %0, %2, %cst {dimension_numbers = #tpu.dot_dimension_numbers<[2], [1], [1], [2], [0, 0, 0, 1, 1, 2], [0], [0]>} : vector<2x31x4xf32>, vector<2x4x8xf32>, vector<2x31x8xf32> -> vector<2x31x8xf32>
    "tpu.trace_stop"() : () -> ()
    %c0_6 = arith.constant 0 : index
    %c1 = arith.constant 1 : index
    %c0_7 = arith.constant 0 : index
    %4 = vector.load %arg0[%c0_6, %c1, %c0_7] : memref<2x32x4xf32, #tpu.memory_space<vmem>>, vector<2x31x4xf32>
    %c1_8 = arith.constant 1 : index
    %c0_9 = arith.constant 0 : index
    %c0_10 = arith.constant 0 : index
    %c0_11 = arith.constant 0 : index
    %5 = vector.load %arg1[%c1_8, %c0_9, %c0_10, %c0_11] : memref<2x2x4x8xf32, #tpu.memory_space<vmem>>, vector<1x2x4x8xf32>
    %6 = vector.shape_cast %5 : vector<1x2x4x8xf32> to vector<2x4x8xf32>
    "tpu.trace_start"() <{level = 10 : i32, message = "nhc,nco->nho"}> : () -> ()
    %cst_12 = arith.constant dense<0.000000e+00> : vector<2x31x8xf32>
    %7 = tpu.matmul %4, %6, %cst_12 {dimension_numbers = #tpu.dot_dimension_numbers<[2], [1], [1], [2], [0, 0, 0, 1, 1, 2], [0], [0]>} : vector<2x31x4xf32>, vector<2x4x8xf32>, vector<2x31x8xf32> -> vector<2x31x8xf32>
    "tpu.trace_stop"() : () -> ()
    %8 = arith.addf %3, %7 : vector<2x31x8xf32>
    %c0_13 = arith.constant 0 : index
    %c0_14 = arith.constant 0 : index
    %c0_15 = arith.constant 0 : index
    %9 = vector.load %arg2[%c0_13, %c0_14, %c0_15] : memref<2x3x8xf32, #tpu.memory_space<vmem>>, vector<2x1x8xf32>
    %10 = vector.broadcast %9 : vector<2x1x8xf32> to vector<2x31x8xf32>
    %11 = arith.addf %8, %10 : vector<2x31x8xf32>
    %cst_16 = arith.constant 0.000000e+00 : f32
    %12 = vector.broadcast %cst_16 : f32 to vector<2x31x8xf32>
    %13 = arith.maximumf %11, %12 : vector<2x31x8xf32>
    %c0_17 = arith.constant 0 : index
    %c1_18 = arith.constant 1 : index
    %c0_19 = arith.constant 0 : index
    %14 = vector.load %arg2[%c0_17, %c1_18, %c0_19] : memref<2x3x8xf32, #tpu.memory_space<vmem>>, vector<2x1x8xf32>
    %15 = vector.broadcast %14 : vector<2x1x8xf32> to vector<2x31x8xf32>
    %16 = arith.mulf %13, %15 : vector<2x31x8xf32>
    %c0_20 = arith.constant 0 : index
    %c2 = arith.constant 2 : index
    %c0_21 = arith.constant 0 : index
    %17 = vector.load %arg2[%c0_20, %c2, %c0_21] : memref<2x3x8xf32, #tpu.memory_space<vmem>>, vector<2x1x8xf32>
    %18 = vector.broadcast %17 : vector<2x1x8xf32> to vector<2x31x8xf32>
    %19 = arith.addf %16, %18 : vector<2x31x8xf32>
    %c0_22 = arith.constant 0 : index
    %c0_23 = arith.constant 0 : index
    %c0_24 = arith.constant 0 : index
    %20 = vector.load %arg12[%c0_22, %c0_23, %c0_24] : memref<2x31x8xf32, #tpu.memory_space<vmem>>, vector<2x31x8xf32>
    tpu.vector_store %arg12[%c0_22, %c0_23, %c0_24], %19 {strides = array<i32>} : memref<2x31x8xf32, #tpu.memory_space<vmem>>, vector<2x31x8xf32>,
    %c0_25 = arith.constant 0 : index
    %c0_26 = arith.constant 0 : index
    %c0_27 = arith.constant 0 : index
    %21 = vector.load %arg12[%c0_25, %c0_26, %c0_27] : memref<2x31x8xf32, #tpu.memory_space<vmem>>, vector<2x29x8xf32>
    %c0_28 = arith.constant 0 : index
    %c0_29 = arith.constant 0 : index
    %c0_30 = arith.constant 0 : index
    %c0_31 = arith.constant 0 : index
    %22 = vector.load %arg3[%c0_28, %c0_29, %c0_30, %c0_31] : memref<3x2x8x8xf32, #tpu.memory_space<vmem>>, vector<1x2x8x8xf32>
    %23 = vector.shape_cast %22 : vector<1x2x8x8xf32> to vector<2x8x8xf32>
    "tpu.trace_start"() <{level = 10 : i32, message = "nhc,nco->nho"}> : () -> ()
    %cst_32 = arith.constant dense<0.000000e+00> : vector<2x29x8xf32>
    %24 = tpu.matmul %21, %23, %cst_32 {dimension_numbers = #tpu.dot_dimension_numbers<[2], [1], [1], [2], [0, 0, 0, 1, 1, 2], [0], [0]>} : vector<2x29x8xf32>, vector<2x8x8xf32>, vector<2x29x8xf32> -> vector<2x29x8xf32>
    "tpu.trace_stop"() : () -> ()
    %c0_33 = arith.constant 0 : index
    %c1_34 = arith.constant 1 : index
    %c0_35 = arith.constant 0 : index
    %25 = vector.load %arg12[%c0_33, %c1_34, %c0_35] : memref<2x31x8xf32, #tpu.memory_space<vmem>>, vector<2x29x8xf32>
    %c1_36 = arith.constant 1 : index
    %c0_37 = arith.constant 0 : index
    %c0_38 = arith.constant 0 : index
    %c0_39 = arith.constant 0 : index
    %26 = vector.load %arg3[%c1_36, %c0_37, %c0_38, %c0_39] : memref<3x2x8x8xf32, #tpu.memory_space<vmem>>, vector<1x2x8x8xf32>
    %27 = vector.shape_cast %26 : vector<1x2x8x8xf32> to vector<2x8x8xf32>
    "tpu.trace_start"() <{level = 10 : i32, message = "nhc,nco->nho"}> : () -> ()
    %cst_40 = arith.constant dense<0.000000e+00> : vector<2x29x8xf32>
    %28 = tpu.matmul %25, %27, %cst_40 {dimension_numbers = #tpu.dot_dimension_numbers<[2], [1], [1], [2], [0, 0, 0, 1, 1, 2], [0], [0]>} : vector<2x29x8xf32>, vector<2x8x8xf32>, vector<2x29x8xf32> -> vector<2x29x8xf32>
    "tpu.trace_stop"() : () -> ()
    %29 = arith.addf %24, %28 : vector<2x29x8xf32>
    %c0_41 = arith.constant 0 : index
    %c2_42 = arith.constant 2 : index
    %c0_43 = arith.constant 0 : index
    %30 = vector.load %arg12[%c0_41, %c2_42, %c0_43] : memref<2x31x8xf32, #tpu.memory_space<vmem>>, vector<2x29x8xf32>
    %c2_44 = arith.constant 2 : index
    %c0_45 = arith.constant 0 : index
    %c0_46 = arith.constant 0 : index
    %c0_47 = arith.constant 0 : index
    %31 = vector.load %arg3[%c2_44, %c0_45, %c0_46, %c0_47] : memref<3x2x8x8xf32, #tpu.memory_space<vmem>>, vector<1x2x8x8xf32>
    %32 = vector.shape_cast %31 : vector<1x2x8x8xf32> to vector<2x8x8xf32>
    "tpu.trace_start"() <{level = 10 : i32, message = "nhc,nco->nho"}> : () -> ()
    %cst_48 = arith.constant dense<0.000000e+00> : vector<2x29x8xf32>
    %33 = tpu.matmul %30, %32, %cst_48 {dimension_numbers = #tpu.dot_dimension_numbers<[2], [1], [1], [2], [0, 0, 0, 1, 1, 2], [0], [0]>} : vector<2x29x8xf32>, vector<2x8x8xf32>, vector<2x29x8xf32> -> vector<2x29x8xf32>
    "tpu.trace_stop"() : () -> ()
    %34 = arith.addf %29, %33 : vector<2x29x8xf32>
    %c0_49 = arith.constant 0 : index
    %c0_50 = arith.constant 0 : index
    %c0_51 = arith.constant 0 : index
    %35 = vector.load %arg4[%c0_49, %c0_50, %c0_51] : memref<2x3x8xf32, #tpu.memory_space<vmem>>, vector<2x1x8xf32>
    %36 = vector.broadcast %35 : vector<2x1x8xf32> to vector<2x29x8xf32>
    %37 = arith.addf %34, %36 : vector<2x29x8xf32>
    %cst_52 = arith.constant 0.000000e+00 : f32
    %38 = vector.broadcast %cst_52 : f32 to vector<2x29x8xf32>
    %39 = arith.maximumf %37, %38 : vector<2x29x8xf32>
    %c0_53 = arith.constant 0 : index
    %c1_54 = arith.constant 1 : index
    %c0_55 = arith.constant 0 : index
    %40 = vector.load %arg4[%c0_53, %c1_54, %c0_55] : memref<2x3x8xf32, #tpu.memory_space<vmem>>, vector<2x1x8xf32>
    %41 = vector.broadcast %40 : vector<2x1x8xf32> to vector<2x29x8xf32>
    %42 = arith.mulf %39, %41 : vector<2x29x8xf32>
    %c0_56 = arith.constant 0 : index
    %c2_57 = arith.constant 2 : index
    %c0_58 = arith.constant 0 : index
    %43 = vector.load %arg4[%c0_56, %c2_57, %c0_58] : memref<2x3x8xf32, #tpu.memory_space<vmem>>, vector<2x1x8xf32>
    %44 = vector.broadcast %43 : vector<2x1x8xf32> to vector<2x29x8xf32>
    %45 = arith.addf %42, %44 : vector<2x29x8xf32>
    %c0_59 = arith.constant 0 : index
    %c0_60 = arith.constant 0 : index
    %c0_61 = arith.constant 0 : index
    %46 = vector.load %arg13[%c0_59, %c0_60, %c0_61] : memref<2x29x8xf32, #tpu.memory_space<vmem>>, vector<2x29x8xf32>
    tpu.vector_store %arg13[%c0_59, %c0_60, %c0_61], %45 {strides = array<i32>} : memref<2x29x8xf32, #tpu.memory_space<vmem>>, vector<2x29x8xf32>,
    %c0_62 = arith.constant 0 : index
    %c0_63 = arith.constant 0 : index
    %c0_64 = arith.constant 0 : index
    %47 = vector.load %arg13[%c0_62, %c0_63, %c0_64] : memref<2x29x8xf32, #tpu.memory_space<vmem>>, vector<2x28x8xf32>
    %c0_65 = arith.constant 0 : index
    %c0_66 = arith.constant 0 : index
    %c0_67 = arith.constant 0 : index
    %c0_68 = arith.constant 0 : index
    %48 = vector.load %arg5[%c0_65, %c0_66, %c0_67, %c0_68] : memref<2x2x8x8xf32, #tpu.memory_space<vmem>>, vector<1x2x8x8xf32>
    %49 = vector.shape_cast %48 : vector<1x2x8x8xf32> to vector<2x8x8xf32>
    "tpu.trace_start"() <{level = 10 : i32, message = "nhc,nco->nho"}> : () -> ()
    %cst_69 = arith.constant dense<0.000000e+00> : vector<2x28x8xf32>
    %50 = tpu.matmul %47, %49, %cst_69 {dimension_numbers = #tpu.dot_dimension_numbers<[2], [1], [1], [2], [0, 0, 0, 1, 1, 2], [0], [0]>} : vector<2x28x8xf32>, vector<2x8x8xf32>, vector<2x28x8xf32> -> vector<2x28x8xf32>
    "tpu.trace_stop"() : () -> ()
    %c0_70 = arith.constant 0 : index
    %c1_71 = arith.constant 1 : index
    %c0_72 = arith.constant 0 : index
    %51 = vector.load %arg13[%c0_70, %c1_71, %c0_72] : memref<2x29x8xf32, #tpu.memory_space<vmem>>, vector<2x28x8xf32>
    %c1_73 = arith.constant 1 : index
    %c0_74 = arith.constant 0 : index
    %c0_75 = arith.constant 0 : index
    %c0_76 = arith.constant 0 : index
    %52 = vector.load %arg5[%c1_73, %c0_74, %c0_75, %c0_76] : memref<2x2x8x8xf32, #tpu.memory_space<vmem>>, vector<1x2x8x8xf32>
    %53 = vector.shape_cast %52 : vector<1x2x8x8xf32> to vector<2x8x8xf32>
    "tpu.trace_start"() <{level = 10 : i32, message = "nhc,nco->nho"}> : () -> ()
    %cst_77 = arith.constant dense<0.000000e+00> : vector<2x28x8xf32>
    %54 = tpu.matmul %51, %53, %cst_77 {dimension_numbers = #tpu.dot_dimension_numbers<[2], [1], [1], [2], [0, 0, 0, 1, 1, 2], [0], [0]>} : vector<2x28x8xf32>, vector<2x8x8xf32>, vector<2x28x8xf32> -> vector<2x28x8xf32>
    "tpu.trace_stop"() : () -> ()
    %55 = arith.addf %50, %54 : vector<2x28x8xf32>
    %c0_78 = arith.constant 0 : index
    %c0_79 = arith.constant 0 : index
    %c0_80 = arith.constant 0 : index
    %56 = vector.load %arg6[%c0_78, %c0_79, %c0_80] : memref<2x3x8xf32, #tpu.memory_space<vmem>>, vector<2x1x8xf32>
    %57 = vector.broadcast %56 : vector<2x1x8xf32> to vector<2x28x8xf32>
    %58 = arith.addf %55, %57 : vector<2x28x8xf32>
    %cst_81 = arith.constant 0.000000e+00 : f32
    %59 = vector.broadcast %cst_81 : f32 to vector<2x28x8xf32>
    %60 = arith.maximumf %58, %59 : vector<2x28x8xf32>
    %c0_82 = arith.constant 0 : index
    %c1_83 = arith.constant 1 : index
    %c0_84 = arith.constant 0 : index
    %61 = vector.load %arg6[%c0_82, %c1_83, %c0_84] : memref<2x3x8xf32, #tpu.memory_space<vmem>>, vector<2x1x8xf32>
    %62 = vector.broadcast %61 : vector<2x1x8xf32> to vector<2x28x8xf32>
    %63 = arith.mulf %60, %62 : vector<2x28x8xf32>
    %c0_85 = arith.constant 0 : index
    %c2_86 = arith.constant 2 : index
    %c0_87 = arith.constant 0 : index
    %64 = vector.load %arg6[%c0_85, %c2_86, %c0_87] : memref<2x3x8xf32, #tpu.memory_space<vmem>>, vector<2x1x8xf32>
    %65 = vector.broadcast %64 : vector<2x1x8xf32> to vector<2x28x8xf32>
    %66 = arith.addf %63, %65 : vector<2x28x8xf32>
    %c0_88 = arith.constant 0 : index
    %c0_89 = arith.constant 0 : index
    %c0_90 = arith.constant 0 : index
    %67 = vector.load %arg14[%c0_88, %c0_89, %c0_90] : memref<2x28x8xf32, #tpu.memory_space<vmem>>, vector<2x28x8xf32>
    tpu.vector_store %arg14[%c0_88, %c0_89, %c0_90], %66 {strides = array<i32>} : memref<2x28x8xf32, #tpu.memory_space<vmem>>, vector<2x28x8xf32>,
    %cst_91 = arith.constant 0.000000e+00 : f32
    %68 = vector.broadcast %cst_91 : f32 to vector<2x1x12xf32>
    %c0_92 = arith.constant 0 : index
    %c0_93 = arith.constant 0 : index
    %c0_94 = arith.constant 0 : index
    %69 = vector.load %arg14[%c0_92, %c0_93, %c0_94] : memref<2x28x8xf32, #tpu.memory_space<vmem>>, vector<2x1x8xf32>
    %c0_95 = arith.constant 0 : index
    %c0_96 = arith.constant 0 : index
    %c0_97 = arith.constant 0 : index
    %c0_98 = arith.constant 0 : index
    %70 = vector.load %arg7[%c0_95, %c0_96, %c0_97, %c0_98] : memref<28x2x8x12xf32, #tpu.memory_space<vmem>>, vector<1x2x8x12xf32>
    %71 = vector.shape_cast %70 : vector<1x2x8x12xf32> to vector<2x8x12xf32>
    "tpu.trace_start"() <{level = 10 : i32, message = "nkc,nco->nko"}> : () -> ()
    %cst_99 = arith.constant dense<0.000000e+00> : vector<2x1x12xf32>
    %72 = tpu.matmul %69, %71, %cst_99 {dimension_numbers = #tpu.dot_dimension_numbers<[2], [1], [1], [2], [0, 0, 0, 1, 1, 2], [0], [0]>} : vector<2x1x8xf32>, vector<2x8x12xf32>, vector<2x1x12xf32> -> vector<2x1x12xf32>
    "tpu.trace_stop"() : () -> ()
    %73 = arith.addf %68, %72 : vector<2x1x12xf32>
    %c0_100 = arith.constant 0 : index
    %c1_101 = arith.constant 1 : index
    %c0_102 = arith.constant 0 : index
    %74 = vector.load %arg14[%c0_100, %c1_101, %c0_102] : memref<2x28x8xf32, #tpu.memory_space<vmem>>, vector<2x1x8xf32>
    %c1_103 = arith.constant 1 : index
    %c0_104 = arith.constant 0 : index
    %c0_105 = arith.constant 0 : index
    %c0_106 = arith.constant 0 : index
    %75 = vector.load %arg7[%c1_103, %c0_104, %c0_105, %c0_106] : memref<28x2x8x12xf32, #tpu.memory_space<vmem>>, vector<1x2x8x12xf32>
    %76 = vector.shape_cast %75 : vector<1x2x8x12xf32> to vector<2x8x12xf32>
    "tpu.trace_start"() <{level = 10 : i32, message = "nkc,nco->nko"}> : () -> ()
    %cst_107 = arith.constant dense<0.000000e+00> : vector<2x1x12xf32>
    %77 = tpu.matmul %74, %76, %cst_107 {dimension_numbers = #tpu.dot_dimension_numbers<[2], [1], [1], [2], [0, 0, 0, 1, 1, 2], [0], [0]>} : vector<2x1x8xf32>, vector<2x8x12xf32>, vector<2x1x12xf32> -> vector<2x1x12xf32>
    "tpu.trace_stop"() : () -> ()
    %78 = arith.addf %73, %77 : vector<2x1x12xf32>
    %c0_108 = arith.constant 0 : index
    %c2_109 = arith.constant 2 : index
    %c0_110 = arith.constant 0 : index
    %79 = vector.load %arg14[%c0_108, %c2_109, %c0_110] : memref<2x28x8xf32, #tpu.memory_space<vmem>>, vector<2x1x8xf32>
    %c2_111 = arith.constant 2 : index
    %c0_112 = arith.constant 0 : index
    %c0_113 = arith.constant 0 : index
    %c0_114 = arith.constant 0 : index
    %80 = vector.load %arg7[%c2_111, %c0_112, %c0_113, %c0_114] : memref<28x2x8x12xf32, #tpu.memory_space<vmem>>, vector<1x2x8x12xf32>
    %81 = vector.shape_cast %80 : vector<1x2x8x12xf32> to vector<2x8x12xf32>
    "tpu.trace_start"() <{level = 10 : i32, message = "nkc,nco->nko"}> : () -> ()
    %cst_115 = arith.constant dense<0.000000e+00> : vector<2x1x12xf32>
    %82 = tpu.matmul %79, %81, %cst_115 {dimension_numbers = #tpu.dot_dimension_numbers<[2], [1], [1], [2], [0, 0, 0, 1, 1, 2], [0], [0]>} : vector<2x1x8xf32>, vector<2x8x12xf32>, vector<2x1x12xf32> -> vector<2x1x12xf32>
    "tpu.trace_stop"() : () -> ()
    %83 = arith.addf %78, %82 : vector<2x1x12xf32>
    %c0_116 = arith.constant 0 : index
    %c3 = arith.constant 3 : index
    %c0_117 = arith.constant 0 : index
    %84 = vector.load %arg14[%c0_116, %c3, %c0_117] : memref<2x28x8xf32, #tpu.memory_space<vmem>>, vector<2x1x8xf32>
    %c3_118 = arith.constant 3 : index
    %c0_119 = arith.constant 0 : index
    %c0_120 = arith.constant 0 : index
    %c0_121 = arith.constant 0 : index
    %85 = vector.load %arg7[%c3_118, %c0_119, %c0_120, %c0_121] : memref<28x2x8x12xf32, #tpu.memory_space<vmem>>, vector<1x2x8x12xf32>
    %86 = vector.shape_cast %85 : vector<1x2x8x12xf32> to vector<2x8x12xf32>
    "tpu.trace_start"() <{level = 10 : i32, message = "nkc,nco->nko"}> : () -> ()
    %cst_122 = arith.constant dense<0.000000e+00> : vector<2x1x12xf32>
    %87 = tpu.matmul %84, %86, %cst_122 {dimension_numbers = #tpu.dot_dimension_numbers<[2], [1], [1], [2], [0, 0, 0, 1, 1, 2], [0], [0]>} : vector<2x1x8xf32>, vector<2x8x12xf32>, vector<2x1x12xf32> -> vector<2x1x12xf32>
    "tpu.trace_stop"() : () -> ()
    %88 = arith.addf %83, %87 : vector<2x1x12xf32>
    %c0_123 = arith.constant 0 : index
    %c4 = arith.constant 4 : index
    %c0_124 = arith.constant 0 : index
    %89 = vector.load %arg14[%c0_123, %c4, %c0_124] : memref<2x28x8xf32, #tpu.memory_space<vmem>>, vector<2x1x8xf32>
    %c4_125 = arith.constant 4 : index
    %c0_126 = arith.constant 0 : index
    %c0_127 = arith.constant 0 : index
    %c0_128 = arith.constant 0 : index
    %90 = vector.load %arg7[%c4_125, %c0_126, %c0_127, %c0_128] : memref<28x2x8x12xf32, #tpu.memory_space<vmem>>, vector<1x2x8x12xf32>
    %91 = vector.shape_cast %90 : vector<1x2x8x12xf32> to vector<2x8x12xf32>
    "tpu.trace_start"() <{level = 10 : i32, message = "nkc,nco->nko"}> : () -> ()
    %cst_129 = arith.constant dense<0.000000e+00> : vector<2x1x12xf32>
    %92 = tpu.matmul %89, %91, %cst_129 {dimension_numbers = #tpu.dot_dimension_numbers<[2], [1], [1], [2], [0, 0, 0, 1, 1, 2], [0], [0]>} : vector<2x1x8xf32>, vector<2x8x12xf32>, vector<2x1x12xf32> -> vector<2x1x12xf32>
    "tpu.trace_stop"() : () -> ()
    %93 = arith.addf %88, %92 : vector<2x1x12xf32>
    %c0_130 = arith.constant 0 : index
    %c5 = arith.constant 5 : index
    %c0_131 = arith.constant 0 : index
    %94 = vector.load %arg14[%c0_130, %c5, %c0_131] : memref<2x28x8xf32, #tpu.memory_space<vmem>>, vector<2x1x8xf32>
    %c5_132 = arith.constant 5 : index
    %c0_133 = arith.constant 0 : index
    %c0_134 = arith.constant 0 : index
    %c0_135 = arith.constant 0 : index
    %95 = vector.load %arg7[%c5_132, %c0_133, %c0_134, %c0_135] : memref<28x2x8x12xf32, #tpu.memory_space<vmem>>, vector<1x2x8x12xf32>
    %96 = vector.shape_cast %95 : vector<1x2x8x12xf32> to vector<2x8x12xf32>
    "tpu.trace_start"() <{level = 10 : i32, message = "nkc,nco->nko"}> : () -> ()
    %cst_136 = arith.constant dense<0.000000e+00> : vector<2x1x12xf32>
    %97 = tpu.matmul %94, %96, %cst_136 {dimension_numbers = #tpu.dot_dimension_numbers<[2], [1], [1], [2], [0, 0, 0, 1, 1, 2], [0], [0]>} : vector<2x1x8xf32>, vector<2x8x12xf32>, vector<2x1x12xf32> -> vector<2x1x12xf32>
    "tpu.trace_stop"() : () -> ()
    %98 = arith.addf %93, %97 : vector<2x1x12xf32>
    %c0_137 = arith.constant 0 : index
    %c6 = arith.constant 6 : index
    %c0_138 = arith.constant 0 : index
    %99 = vector.load %arg14[%c0_137, %c6, %c0_138] : memref<2x28x8xf32, #tpu.memory_space<vmem>>, vector<2x1x8xf32>
    %c6_139 = arith.constant 6 : index
    %c0_140 = arith.constant 0 : index
    %c0_141 = arith.constant 0 : index
    %c0_142 = arith.constant 0 : index
    %100 = vector.load %arg7[%c6_139, %c0_140, %c0_141, %c0_142] : memref<28x2x8x12xf32, #tpu.memory_space<vmem>>, vector<1x2x8x12xf32>
    %101 = vector.shape_cast %100 : vector<1x2x8x12xf32> to vector<2x8x12xf32>
    "tpu.trace_start"() <{level = 10 : i32, message = "nkc,nco->nko"}> : () -> ()
    %cst_143 = arith.constant dense<0.000000e+00> : vector<2x1x12xf32>
    %102 = tpu.matmul %99, %101, %cst_143 {dimension_numbers = #tpu.dot_dimension_numbers<[2], [1], [1], [2], [0, 0, 0, 1, 1, 2], [0], [0]>} : vector<2x1x8xf32>, vector<2x8x12xf32>, vector<2x1x12xf32> -> vector<2x1x12xf32>
    "tpu.trace_stop"() : () -> ()
    %103 = arith.addf %98, %102 : vector<2x1x12xf32>
    %c0_144 = arith.constant 0 : index
    %c7 = arith.constant 7 : index
    %c0_145 = arith.constant 0 : index
    %104 = vector.load %arg14[%c0_144, %c7, %c0_145] : memref<2x28x8xf32, #tpu.memory_space<vmem>>, vector<2x1x8xf32>
    %c7_146 = arith.constant 7 : index
    %c0_147 = arith.constant 0 : index
    %c0_148 = arith.constant 0 : index
    %c0_149 = arith.constant 0 : index
    %105 = vector.load %arg7[%c7_146, %c0_147, %c0_148, %c0_149] : memref<28x2x8x12xf32, #tpu.memory_space<vmem>>, vector<1x2x8x12xf32>
    %106 = vector.shape_cast %105 : vector<1x2x8x12xf32> to vector<2x8x12xf32>
    "tpu.trace_start"() <{level = 10 : i32, message = "nkc,nco->nko"}> : () -> ()
    %cst_150 = arith.constant dense<0.000000e+00> : vector<2x1x12xf32>
    %107 = tpu.matmul %104, %106, %cst_150 {dimension_numbers = #tpu.dot_dimension_numbers<[2], [1], [1], [2], [0, 0, 0, 1, 1, 2], [0], [0]>} : vector<2x1x8xf32>, vector<2x8x12xf32>, vector<2x1x12xf32> -> vector<2x1x12xf32>
    "tpu.trace_stop"() : () -> ()
    %108 = arith.addf %103, %107 : vector<2x1x12xf32>
    %c0_151 = arith.constant 0 : index
    %c8 = arith.constant 8 : index
    %c0_152 = arith.constant 0 : index
    %109 = vector.load %arg14[%c0_151, %c8, %c0_152] : memref<2x28x8xf32, #tpu.memory_space<vmem>>, vector<2x1x8xf32>
    %c8_153 = arith.constant 8 : index
    %c0_154 = arith.constant 0 : index
    %c0_155 = arith.constant 0 : index
    %c0_156 = arith.constant 0 : index
    %110 = vector.load %arg7[%c8_153, %c0_154, %c0_155, %c0_156] : memref<28x2x8x12xf32, #tpu.memory_space<vmem>>, vector<1x2x8x12xf32>
    %111 = vector.shape_cast %110 : vector<1x2x8x12xf32> to vector<2x8x12xf32>
    "tpu.trace_start"() <{level = 10 : i32, message = "nkc,nco->nko"}> : () -> ()
    %cst_157 = arith.constant dense<0.000000e+00> : vector<2x1x12xf32>
    %112 = tpu.matmul %109, %111, %cst_157 {dimension_numbers = #tpu.dot_dimension_numbers<[2], [1], [1], [2], [0, 0, 0, 1, 1, 2], [0], [0]>} : vector<2x1x8xf32>, vector<2x8x12xf32>, vector<2x1x12xf32> -> vector<2x1x12xf32>
    "tpu.trace_stop"() : () -> ()
    %113 = arith.addf %108, %112 : vector<2x1x12xf32>
    %c0_158 = arith.constant 0 : index
    %c9 = arith.constant 9 : index
    %c0_159 = arith.constant 0 : index
    %114 = vector.load %arg14[%c0_158, %c9, %c0_159] : memref<2x28x8xf32, #tpu.memory_space<vmem>>, vector<2x1x8xf32>
    %c9_160 = arith.constant 9 : index
    %c0_161 = arith.constant 0 : index
    %c0_162 = arith.constant 0 : index
    %c0_163 = arith.constant 0 : index
    %115 = vector.load %arg7[%c9_160, %c0_161, %c0_162, %c0_163] : memref<28x2x8x12xf32, #tpu.memory_space<vmem>>, vector<1x2x8x12xf32>
    %116 = vector.shape_cast %115 : vector<1x2x8x12xf32> to vector<2x8x12xf32>
    "tpu.trace_start"() <{level = 10 : i32, message = "nkc,nco->nko"}> : () -> ()
    %cst_164 = arith.constant dense<0.000000e+00> : vector<2x1x12xf32>
    %117 = tpu.matmul %114, %116, %cst_164 {dimension_numbers = #tpu.dot_dimension_numbers<[2], [1], [1], [2], [0, 0, 0, 1, 1, 2], [0], [0]>} : vector<2x1x8xf32>, vector<2x8x12xf32>, vector<2x1x12xf32> -> vector<2x1x12xf32>
    "tpu.trace_stop"() : () -> ()
    %118 = arith.addf %113, %117 : vector<2x1x12xf32>
    %c0_165 = arith.constant 0 : index
    %c10 = arith.constant 10 : index
    %c0_166 = arith.constant 0 : index
    %119 = vector.load %arg14[%c0_165, %c10, %c0_166] : memref<2x28x8xf32, #tpu.memory_space<vmem>>, vector<2x1x8xf32>
    %c10_167 = arith.constant 10 : index
    %c0_168 = arith.constant 0 : index
    %c0_169 = arith.constant 0 : index
    %c0_170 = arith.constant 0 : index
    %120 = vector.load %arg7[%c10_167, %c0_168, %c0_169, %c0_170] : memref<28x2x8x12xf32, #tpu.memory_space<vmem>>, vector<1x2x8x12xf32>
    %121 = vector.shape_cast %120 : vector<1x2x8x12xf32> to vector<2x8x12xf32>
    "tpu.trace_start"() <{level = 10 : i32, message = "nkc,nco->nko"}> : () -> ()
    %cst_171 = arith.constant dense<0.000000e+00> : vector<2x1x12xf32>
    %122 = tpu.matmul %119, %121, %cst_171 {dimension_numbers = #tpu.dot_dimension_numbers<[2], [1], [1], [2], [0, 0, 0, 1, 1, 2], [0], [0]>} : vector<2x1x8xf32>, vector<2x8x12xf32>, vector<2x1x12xf32> -> vector<2x1x12xf32>
    "tpu.trace_stop"() : () -> ()
    %123 = arith.addf %118, %122 : vector<2x1x12xf32>
    %c0_172 = arith.constant 0 : index
    %c11 = arith.constant 11 : index
    %c0_173 = arith.constant 0 : index
    %124 = vector.load %arg14[%c0_172, %c11, %c0_173] : memref<2x28x8xf32, #tpu.memory_space<vmem>>, vector<2x1x8xf32>
    %c11_174 = arith.constant 11 : index
    %c0_175 = arith.constant 0 : index
    %c0_176 = arith.constant 0 : index
    %c0_177 = arith.constant 0 : index
    %125 = vector.load %arg7[%c11_174, %c0_175, %c0_176, %c0_177] : memref<28x2x8x12xf32, #tpu.memory_space<vmem>>, vector<1x2x8x12xf32>
    %126 = vector.shape_cast %125 : vector<1x2x8x12xf32> to vector<2x8x12xf32>
    "tpu.trace_start"() <{level = 10 : i32, message = "nkc,nco->nko"}> : () -> ()
    %cst_178 = arith.constant dense<0.000000e+00> : vector<2x1x12xf32>
    %127 = tpu.matmul %124, %126, %cst_178 {dimension_numbers = #tpu.dot_dimension_numbers<[2], [1], [1], [2], [0, 0, 0, 1, 1, 2], [0], [0]>} : vector<2x1x8xf32>, vector<2x8x12xf32>, vector<2x1x12xf32> -> vector<2x1x12xf32>
    "tpu.trace_stop"() : () -> ()
    %128 = arith.addf %123, %127 : vector<2x1x12xf32>
    %c0_179 = arith.constant 0 : index
    %c12 = arith.constant 12 : index
    %c0_180 = arith.constant 0 : index
    %129 = vector.load %arg14[%c0_179, %c12, %c0_180] : memref<2x28x8xf32, #tpu.memory_space<vmem>>, vector<2x1x8xf32>
    %c12_181 = arith.constant 12 : index
    %c0_182 = arith.constant 0 : index
    %c0_183 = arith.constant 0 : index
    %c0_184 = arith.constant 0 : index
    %130 = vector.load %arg7[%c12_181, %c0_182, %c0_183, %c0_184] : memref<28x2x8x12xf32, #tpu.memory_space<vmem>>, vector<1x2x8x12xf32>
    %131 = vector.shape_cast %130 : vector<1x2x8x12xf32> to vector<2x8x12xf32>
    "tpu.trace_start"() <{level = 10 : i32, message = "nkc,nco->nko"}> : () -> ()
    %cst_185 = arith.constant dense<0.000000e+00> : vector<2x1x12xf32>
    %132 = tpu.matmul %129, %131, %cst_185 {dimension_numbers = #tpu.dot_dimension_numbers<[2], [1], [1], [2], [0, 0, 0, 1, 1, 2], [0], [0]>} : vector<2x1x8xf32>, vector<2x8x12xf32>, vector<2x1x12xf32> -> vector<2x1x12xf32>
    "tpu.trace_stop"() : () -> ()
    %133 = arith.addf %128, %132 : vector<2x1x12xf32>
    %c0_186 = arith.constant 0 : index
    %c13 = arith.constant 13 : index
    %c0_187 = arith.constant 0 : index
    %134 = vector.load %arg14[%c0_186, %c13, %c0_187] : memref<2x28x8xf32, #tpu.memory_space<vmem>>, vector<2x1x8xf32>
    %c13_188 = arith.constant 13 : index
    %c0_189 = arith.constant 0 : index
    %c0_190 = arith.constant 0 : index
    %c0_191 = arith.constant 0 : index
    %135 = vector.load %arg7[%c13_188, %c0_189, %c0_190, %c0_191] : memref<28x2x8x12xf32, #tpu.memory_space<vmem>>, vector<1x2x8x12xf32>
    %136 = vector.shape_cast %135 : vector<1x2x8x12xf32> to vector<2x8x12xf32>
    "tpu.trace_start"() <{level = 10 : i32, message = "nkc,nco->nko"}> : () -> ()
    %cst_192 = arith.constant dense<0.000000e+00> : vector<2x1x12xf32>
    %137 = tpu.matmul %134, %136, %cst_192 {dimension_numbers = #tpu.dot_dimension_numbers<[2], [1], [1], [2], [0, 0, 0, 1, 1, 2], [0], [0]>} : vector<2x1x8xf32>, vector<2x8x12xf32>, vector<2x1x12xf32> -> vector<2x1x12xf32>
    "tpu.trace_stop"() : () -> ()
    %138 = arith.addf %133, %137 : vector<2x1x12xf32>
    %c0_193 = arith.constant 0 : index
    %c14 = arith.constant 14 : index
    %c0_194 = arith.constant 0 : index
    %139 = vector.load %arg14[%c0_193, %c14, %c0_194] : memref<2x28x8xf32, #tpu.memory_space<vmem>>, vector<2x1x8xf32>
    %c14_195 = arith.constant 14 : index
    %c0_196 = arith.constant 0 : index
    %c0_197 = arith.constant 0 : index
    %c0_198 = arith.constant 0 : index
    %140 = vector.load %arg7[%c14_195, %c0_196, %c0_197, %c0_198] : memref<28x2x8x12xf32, #tpu.memory_space<vmem>>, vector<1x2x8x12xf32>
    %141 = vector.shape_cast %140 : vector<1x2x8x12xf32> to vector<2x8x12xf32>
    "tpu.trace_start"() <{level = 10 : i32, message = "nkc,nco->nko"}> : () -> ()
    %cst_199 = arith.constant dense<0.000000e+00> : vector<2x1x12xf32>
    %142 = tpu.matmul %139, %141, %cst_199 {dimension_numbers = #tpu.dot_dimension_numbers<[2], [1], [1], [2], [0, 0, 0, 1, 1, 2], [0], [0]>} : vector<2x1x8xf32>, vector<2x8x12xf32>, vector<2x1x12xf32> -> vector<2x1x12xf32>
    "tpu.trace_stop"() : () -> ()
    %143 = arith.addf %138, %142 : vector<2x1x12xf32>
    %c0_200 = arith.constant 0 : index
    %c15 = arith.constant 15 : index
    %c0_201 = arith.constant 0 : index
    %144 = vector.load %arg14[%c0_200, %c15, %c0_201] : memref<2x28x8xf32, #tpu.memory_space<vmem>>, vector<2x1x8xf32>
    %c15_202 = arith.constant 15 : index
    %c0_203 = arith.constant 0 : index
    %c0_204 = arith.constant 0 : index
    %c0_205 = arith.constant 0 : index
    %145 = vector.load %arg7[%c15_202, %c0_203, %c0_204, %c0_205] : memref<28x2x8x12xf32, #tpu.memory_space<vmem>>, vector<1x2x8x12xf32>
    %146 = vector.shape_cast %145 : vector<1x2x8x12xf32> to vector<2x8x12xf32>
    "tpu.trace_start"() <{level = 10 : i32, message = "nkc,nco->nko"}> : () -> ()
    %cst_206 = arith.constant dense<0.000000e+00> : vector<2x1x12xf32>
    %147 = tpu.matmul %144, %146, %cst_206 {dimension_numbers = #tpu.dot_dimension_numbers<[2], [1], [1], [2], [0, 0, 0, 1, 1, 2], [0], [0]>} : vector<2x1x8xf32>, vector<2x8x12xf32>, vector<2x1x12xf32> -> vector<2x1x12xf32>
    "tpu.trace_stop"() : () -> ()
    %148 = arith.addf %143, %147 : vector<2x1x12xf32>
    %c0_207 = arith.constant 0 : index
    %c16 = arith.constant 16 : index
    %c0_208 = arith.constant 0 : index
    %149 = vector.load %arg14[%c0_207, %c16, %c0_208] : memref<2x28x8xf32, #tpu.memory_space<vmem>>, vector<2x1x8xf32>
    %c16_209 = arith.constant 16 : index
    %c0_210 = arith.constant 0 : index
    %c0_211 = arith.constant 0 : index
    %c0_212 = arith.constant 0 : index
    %150 = vector.load %arg7[%c16_209, %c0_210, %c0_211, %c0_212] : memref<28x2x8x12xf32, #tpu.memory_space<vmem>>, vector<1x2x8x12xf32>
    %151 = vector.shape_cast %150 : vector<1x2x8x12xf32> to vector<2x8x12xf32>
    "tpu.trace_start"() <{level = 10 : i32, message = "nkc,nco->nko"}> : () -> ()
    %cst_213 = arith.constant dense<0.000000e+00> : vector<2x1x12xf32>
    %152 = tpu.matmul %149, %151, %cst_213 {dimension_numbers = #tpu.dot_dimension_numbers<[2], [1], [1], [2], [0, 0, 0, 1, 1, 2], [0], [0]>} : vector<2x1x8xf32>, vector<2x8x12xf32>, vector<2x1x12xf32> -> vector<2x1x12xf32>
    "tpu.trace_stop"() : () -> ()
    %153 = arith.addf %148, %152 : vector<2x1x12xf32>
    %c0_214 = arith.constant 0 : index
    %c17 = arith.constant 17 : index
    %c0_215 = arith.constant 0 : index
    %154 = vector.load %arg14[%c0_214, %c17, %c0_215] : memref<2x28x8xf32, #tpu.memory_space<vmem>>, vector<2x1x8xf32>
    %c17_216 = arith.constant 17 : index
    %c0_217 = arith.constant 0 : index
    %c0_218 = arith.constant 0 : index
    %c0_219 = arith.constant 0 : index
    %155 = vector.load %arg7[%c17_216, %c0_217, %c0_218, %c0_219] : memref<28x2x8x12xf32, #tpu.memory_space<vmem>>, vector<1x2x8x12xf32>
    %156 = vector.shape_cast %155 : vector<1x2x8x12xf32> to vector<2x8x12xf32>
    "tpu.trace_start"() <{level = 10 : i32, message = "nkc,nco->nko"}> : () -> ()
    %cst_220 = arith.constant dense<0.000000e+00> : vector<2x1x12xf32>
    %157 = tpu.matmul %154, %156, %cst_220 {dimension_numbers = #tpu.dot_dimension_numbers<[2], [1], [1], [2], [0, 0, 0, 1, 1, 2], [0], [0]>} : vector<2x1x8xf32>, vector<2x8x12xf32>, vector<2x1x12xf32> -> vector<2x1x12xf32>
    "tpu.trace_stop"() : () -> ()
    %158 = arith.addf %153, %157 : vector<2x1x12xf32>
    %c0_221 = arith.constant 0 : index
    %c18 = arith.constant 18 : index
    %c0_222 = arith.constant 0 : index
    %159 = vector.load %arg14[%c0_221, %c18, %c0_222] : memref<2x28x8xf32, #tpu.memory_space<vmem>>, vector<2x1x8xf32>
    %c18_223 = arith.constant 18 : index
    %c0_224 = arith.constant 0 : index
    %c0_225 = arith.constant 0 : index
    %c0_226 = arith.constant 0 : index
    %160 = vector.load %arg7[%c18_223, %c0_224, %c0_225, %c0_226] : memref<28x2x8x12xf32, #tpu.memory_space<vmem>>, vector<1x2x8x12xf32>
    %161 = vector.shape_cast %160 : vector<1x2x8x12xf32> to vector<2x8x12xf32>
    "tpu.trace_start"() <{level = 10 : i32, message = "nkc,nco->nko"}> : () -> ()
    %cst_227 = arith.constant dense<0.000000e+00> : vector<2x1x12xf32>
    %162 = tpu.matmul %159, %161, %cst_227 {dimension_numbers = #tpu.dot_dimension_numbers<[2], [1], [1], [2], [0, 0, 0, 1, 1, 2], [0], [0]>} : vector<2x1x8xf32>, vector<2x8x12xf32>, vector<2x1x12xf32> -> vector<2x1x12xf32>
    "tpu.trace_stop"() : () -> ()
    %163 = arith.addf %158, %162 : vector<2x1x12xf32>
    %c0_228 = arith.constant 0 : index
    %c19 = arith.constant 19 : index
    %c0_229 = arith.constant 0 : index
    %164 = vector.load %arg14[%c0_228, %c19, %c0_229] : memref<2x28x8xf32, #tpu.memory_space<vmem>>, vector<2x1x8xf32>
    %c19_230 = arith.constant 19 : index
    %c0_231 = arith.constant 0 : index
    %c0_232 = arith.constant 0 : index
    %c0_233 = arith.constant 0 : index
    %165 = vector.load %arg7[%c19_230, %c0_231, %c0_232, %c0_233] : memref<28x2x8x12xf32, #tpu.memory_space<vmem>>, vector<1x2x8x12xf32>
    %166 = vector.shape_cast %165 : vector<1x2x8x12xf32> to vector<2x8x12xf32>
    "tpu.trace_start"() <{level = 10 : i32, message = "nkc,nco->nko"}> : () -> ()
    %cst_234 = arith.constant dense<0.000000e+00> : vector<2x1x12xf32>
    %167 = tpu.matmul %164, %166, %cst_234 {dimension_numbers = #tpu.dot_dimension_numbers<[2], [1], [1], [2], [0, 0, 0, 1, 1, 2], [0], [0]>} : vector<2x1x8xf32>, vector<2x8x12xf32>, vector<2x1x12xf32> -> vector<2x1x12xf32>
    "tpu.trace_stop"() : () -> ()
    %168 = arith.addf %163, %167 : vector<2x1x12xf32>
    %c0_235 = arith.constant 0 : index
    %c20 = arith.constant 20 : index
    %c0_236 = arith.constant 0 : index
    %169 = vector.load %arg14[%c0_235, %c20, %c0_236] : memref<2x28x8xf32, #tpu.memory_space<vmem>>, vector<2x1x8xf32>
    %c20_237 = arith.constant 20 : index
    %c0_238 = arith.constant 0 : index
    %c0_239 = arith.constant 0 : index
    %c0_240 = arith.constant 0 : index
    %170 = vector.load %arg7[%c20_237, %c0_238, %c0_239, %c0_240] : memref<28x2x8x12xf32, #tpu.memory_space<vmem>>, vector<1x2x8x12xf32>
    %171 = vector.shape_cast %170 : vector<1x2x8x12xf32> to vector<2x8x12xf32>
    "tpu.trace_start"() <{level = 10 : i32, message = "nkc,nco->nko"}> : () -> ()
    %cst_241 = arith.constant dense<0.000000e+00> : vector<2x1x12xf32>
    %172 = tpu.matmul %169, %171, %cst_241 {dimension_numbers = #tpu.dot_dimension_numbers<[2], [1], [1], [2], [0, 0, 0, 1, 1, 2], [0], [0]>} : vector<2x1x8xf32>, vector<2x8x12xf32>, vector<2x1x12xf32> -> vector<2x1x12xf32>
    "tpu.trace_stop"() : () -> ()
    %173 = arith.addf %168, %172 : vector<2x1x12xf32>
    %c0_242 = arith.constant 0 : index
    %c21 = arith.constant 21 : index
    %c0_243 = arith.constant 0 : index
    %174 = vector.load %arg14[%c0_242, %c21, %c0_243] : memref<2x28x8xf32, #tpu.memory_space<vmem>>, vector<2x1x8xf32>
    %c21_244 = arith.constant 21 : index
    %c0_245 = arith.constant 0 : index
    %c0_246 = arith.constant 0 : index
    %c0_247 = arith.constant 0 : index
    %175 = vector.load %arg7[%c21_244, %c0_245, %c0_246, %c0_247] : memref<28x2x8x12xf32, #tpu.memory_space<vmem>>, vector<1x2x8x12xf32>
    %176 = vector.shape_cast %175 : vector<1x2x8x12xf32> to vector<2x8x12xf32>
    "tpu.trace_start"() <{level = 10 : i32, message = "nkc,nco->nko"}> : () -> ()
    %cst_248 = arith.constant dense<0.000000e+00> : vector<2x1x12xf32>
    %177 = tpu.matmul %174, %176, %cst_248 {dimension_numbers = #tpu.dot_dimension_numbers<[2], [1], [1], [2], [0, 0, 0, 1, 1, 2], [0], [0]>} : vector<2x1x8xf32>, vector<2x8x12xf32>, vector<2x1x12xf32> -> vector<2x1x12xf32>
    "tpu.trace_stop"() : () -> ()
    %178 = arith.addf %173, %177 : vector<2x1x12xf32>
    %c0_249 = arith.constant 0 : index
    %c22 = arith.constant 22 : index
    %c0_250 = arith.constant 0 : index
    %179 = vector.load %arg14[%c0_249, %c22, %c0_250] : memref<2x28x8xf32, #tpu.memory_space<vmem>>, vector<2x1x8xf32>
    %c22_251 = arith.constant 22 : index
    %c0_252 = arith.constant 0 : index
    %c0_253 = arith.constant 0 : index
    %c0_254 = arith.constant 0 : index
    %180 = vector.load %arg7[%c22_251, %c0_252, %c0_253, %c0_254] : memref<28x2x8x12xf32, #tpu.memory_space<vmem>>, vector<1x2x8x12xf32>
    %181 = vector.shape_cast %180 : vector<1x2x8x12xf32> to vector<2x8x12xf32>
    "tpu.trace_start"() <{level = 10 : i32, message = "nkc,nco->nko"}> : () -> ()
    %cst_255 = arith.constant dense<0.000000e+00> : vector<2x1x12xf32>
    %182 = tpu.matmul %179, %181, %cst_255 {dimension_numbers = #tpu.dot_dimension_numbers<[2], [1], [1], [2], [0, 0, 0, 1, 1, 2], [0], [0]>} : vector<2x1x8xf32>, vector<2x8x12xf32>, vector<2x1x12xf32> -> vector<2x1x12xf32>
    "tpu.trace_stop"() : () -> ()
    %183 = arith.addf %178, %182 : vector<2x1x12xf32>
    %c0_256 = arith.constant 0 : index
    %c23 = arith.constant 23 : index
    %c0_257 = arith.constant 0 : index
    %184 = vector.load %arg14[%c0_256, %c23, %c0_257] : memref<2x28x8xf32, #tpu.memory_space<vmem>>, vector<2x1x8xf32>
    %c23_258 = arith.constant 23 : index
    %c0_259 = arith.constant 0 : index
    %c0_260 = arith.constant 0 : index
    %c0_261 = arith.constant 0 : index
    %185 = vector.load %arg7[%c23_258, %c0_259, %c0_260, %c0_261] : memref<28x2x8x12xf32, #tpu.memory_space<vmem>>, vector<1x2x8x12xf32>
    %186 = vector.shape_cast %185 : vector<1x2x8x12xf32> to vector<2x8x12xf32>
    "tpu.trace_start"() <{level = 10 : i32, message = "nkc,nco->nko"}> : () -> ()
    %cst_262 = arith.constant dense<0.000000e+00> : vector<2x1x12xf32>
    %187 = tpu.matmul %184, %186, %cst_262 {dimension_numbers = #tpu.dot_dimension_numbers<[2], [1], [1], [2], [0, 0, 0, 1, 1, 2], [0], [0]>} : vector<2x1x8xf32>, vector<2x8x12xf32>, vector<2x1x12xf32> -> vector<2x1x12xf32>
    "tpu.trace_stop"() : () -> ()
    %188 = arith.addf %183, %187 : vector<2x1x12xf32>
    %c0_263 = arith.constant 0 : index
    %c24 = arith.constant 24 : index
    %c0_264 = arith.constant 0 : index
    %189 = vector.load %arg14[%c0_263, %c24, %c0_264] : memref<2x28x8xf32, #tpu.memory_space<vmem>>, vector<2x1x8xf32>
    %c24_265 = arith.constant 24 : index
    %c0_266 = arith.constant 0 : index
    %c0_267 = arith.constant 0 : index
    %c0_268 = arith.constant 0 : index
    %190 = vector.load %arg7[%c24_265, %c0_266, %c0_267, %c0_268] : memref<28x2x8x12xf32, #tpu.memory_space<vmem>>, vector<1x2x8x12xf32>
    %191 = vector.shape_cast %190 : vector<1x2x8x12xf32> to vector<2x8x12xf32>
    "tpu.trace_start"() <{level = 10 : i32, message = "nkc,nco->nko"}> : () -> ()
    %cst_269 = arith.constant dense<0.000000e+00> : vector<2x1x12xf32>
    %192 = tpu.matmul %189, %191, %cst_269 {dimension_numbers = #tpu.dot_dimension_numbers<[2], [1], [1], [2], [0, 0, 0, 1, 1, 2], [0], [0]>} : vector<2x1x8xf32>, vector<2x8x12xf32>, vector<2x1x12xf32> -> vector<2x1x12xf32>
    "tpu.trace_stop"() : () -> ()
    %193 = arith.addf %188, %192 : vector<2x1x12xf32>
    %c0_270 = arith.constant 0 : index
    %c25 = arith.constant 25 : index
    %c0_271 = arith.constant 0 : index
    %194 = vector.load %arg14[%c0_270, %c25, %c0_271] : memref<2x28x8xf32, #tpu.memory_space<vmem>>, vector<2x1x8xf32>
    %c25_272 = arith.constant 25 : index
    %c0_273 = arith.constant 0 : index
    %c0_274 = arith.constant 0 : index
    %c0_275 = arith.constant 0 : index
    %195 = vector.load %arg7[%c25_272, %c0_273, %c0_274, %c0_275] : memref<28x2x8x12xf32, #tpu.memory_space<vmem>>, vector<1x2x8x12xf32>
    %196 = vector.shape_cast %195 : vector<1x2x8x12xf32> to vector<2x8x12xf32>
    "tpu.trace_start"() <{level = 10 : i32, message = "nkc,nco->nko"}> : () -> ()
    %cst_276 = arith.constant dense<0.000000e+00> : vector<2x1x12xf32>
    %197 = tpu.matmul %194, %196, %cst_276 {dimension_numbers = #tpu.dot_dimension_numbers<[2], [1], [1], [2], [0, 0, 0, 1, 1, 2], [0], [0]>} : vector<2x1x8xf32>, vector<2x8x12xf32>, vector<2x1x12xf32> -> vector<2x1x12xf32>
    "tpu.trace_stop"() : () -> ()
    %198 = arith.addf %193, %197 : vector<2x1x12xf32>
    %c0_277 = arith.constant 0 : index
    %c26 = arith.constant 26 : index
    %c0_278 = arith.constant 0 : index
    %199 = vector.load %arg14[%c0_277, %c26, %c0_278] : memref<2x28x8xf32, #tpu.memory_space<vmem>>, vector<2x1x8xf32>
    %c26_279 = arith.constant 26 : index
    %c0_280 = arith.constant 0 : index
    %c0_281 = arith.constant 0 : index
    %c0_282 = arith.constant 0 : index
    %200 = vector.load %arg7[%c26_279, %c0_280, %c0_281, %c0_282] : memref<28x2x8x12xf32, #tpu.memory_space<vmem>>, vector<1x2x8x12xf32>
    %201 = vector.shape_cast %200 : vector<1x2x8x12xf32> to vector<2x8x12xf32>
    "tpu.trace_start"() <{level = 10 : i32, message = "nkc,nco->nko"}> : () -> ()
    %cst_283 = arith.constant dense<0.000000e+00> : vector<2x1x12xf32>
    %202 = tpu.matmul %199, %201, %cst_283 {dimension_numbers = #tpu.dot_dimension_numbers<[2], [1], [1], [2], [0, 0, 0, 1, 1, 2], [0], [0]>} : vector<2x1x8xf32>, vector<2x8x12xf32>, vector<2x1x12xf32> -> vector<2x1x12xf32>
    "tpu.trace_stop"() : () -> ()
    %203 = arith.addf %198, %202 : vector<2x1x12xf32>
    %c0_284 = arith.constant 0 : index
    %c27 = arith.constant 27 : index
    %c0_285 = arith.constant 0 : index
    %204 = vector.load %arg14[%c0_284, %c27, %c0_285] : memref<2x28x8xf32, #tpu.memory_space<vmem>>, vector<2x1x8xf32>
    %c27_286 = arith.constant 27 : index
    %c0_287 = arith.constant 0 : index
    %c0_288 = arith.constant 0 : index
    %c0_289 = arith.constant 0 : index
    %205 = vector.load %arg7[%c27_286, %c0_287, %c0_288, %c0_289] : memref<28x2x8x12xf32, #tpu.memory_space<vmem>>, vector<1x2x8x12xf32>
    %206 = vector.shape_cast %205 : vector<1x2x8x12xf32> to vector<2x8x12xf32>
    "tpu.trace_start"() <{level = 10 : i32, message = "nkc,nco->nko"}> : () -> ()
    %cst_290 = arith.constant dense<0.000000e+00> : vector<2x1x12xf32>
    %207 = tpu.matmul %204, %206, %cst_290 {dimension_numbers = #tpu.dot_dimension_numbers<[2], [1], [1], [2], [0, 0, 0, 1, 1, 2], [0], [0]>} : vector<2x1x8xf32>, vector<2x8x12xf32>, vector<2x1x12xf32> -> vector<2x1x12xf32>
    "tpu.trace_stop"() : () -> ()
    %208 = arith.addf %203, %207 : vector<2x1x12xf32>
    %c0_291 = arith.constant 0 : index
    %c0_292 = arith.constant 0 : index
    %c0_293 = arith.constant 0 : index
    %209 = vector.load %arg8[%c0_291, %c0_292, %c0_293] : memref<1x1x12xf32, #tpu.memory_space<vmem>>, vector<1x1x12xf32>
    %210 = vector.broadcast %209 : vector<1x1x12xf32> to vector<2x1x12xf32>
    %211 = arith.addf %208, %210 : vector<2x1x12xf32>
    %cst_294 = arith.constant 0.000000e+00 : f32
    %212 = vector.broadcast %cst_294 : f32 to vector<2x1x12xf32>
    %213 = arith.maximumf %211, %212 : vector<2x1x12xf32>
    %c0_295 = arith.constant 0 : index
    %c0_296 = arith.constant 0 : index
    %c0_297 = arith.constant 0 : index
    %214 = vector.load %arg9[%c0_295, %c0_296, %c0_297] : memref<2x12x6xf32, #tpu.memory_space<vmem>>, vector<2x12x6xf32>
    "tpu.trace_start"() <{level = 10 : i32, message = "nkh,nho->nko"}> : () -> ()
    %cst_298 = arith.constant dense<0.000000e+00> : vector<2x1x6xf32>
    %215 = tpu.matmul %213, %214, %cst_298 {dimension_numbers = #tpu.dot_dimension_numbers<[2], [1], [1], [2], [0, 0, 0, 1, 1, 2], [0], [0]>} : vector<2x1x12xf32>, vector<2x12x6xf32>, vector<2x1x6xf32> -> vector<2x1x6xf32>
    "tpu.trace_stop"() : () -> ()
    %c0_299 = arith.constant 0 : index
    %c0_300 = arith.constant 0 : index
    %c0_301 = arith.constant 0 : index
    %216 = vector.load %arg10[%c0_299, %c0_300, %c0_301] : memref<1x1x6xf32, #tpu.memory_space<vmem>>, vector<1x1x6xf32>
    %217 = vector.broadcast %216 : vector<1x1x6xf32> to vector<2x1x6xf32>
    %218 = arith.addf %215, %217 : vector<2x1x6xf32>
    %c0_302 = arith.constant 0 : index
    %c0_303 = arith.constant 0 : index
    %c0_304 = arith.constant 0 : index
    %219 = vector.load %arg11[%c0_302, %c0_303, %c0_304] : memref<2x1x6xf32, #tpu.memory_space<vmem>>, vector<2x1x6xf32>
    tpu.vector_store %arg11[%c0_302, %c0_303, %c0_304], %218 {strides = array<i32>} : memref<2x1x6xf32, #tpu.memory_space<vmem>>, vector<2x1x6xf32>,
    return
  }
}

</mosaic_0001>

<llo_original>
// kernel: _lambda_.2
$region0: #{_lambda_.2}
  #allocation0 [shape = 'u32[]', space=smem, size = 0x4, offset = 0x4, fixed_abs, tag = 'smem constant byte address 0x4 - core index']
  #allocation1 [shape = 'u32[144,128]{1,0:T(1,128)}', space=vmem, size = 0x12000, scoped, tag = 'internal scratch']
  #allocation2 [shape = 'f32[8,7,8]{2,1,0:T(8,128)}', space=vmem, size = 0x8000, scoped, tag = 'scratch operand']
  #allocation3 [shape = 'f32[8,5,8]{2,1,0:T(8,128)}', space=vmem, size = 0x8000, scoped, tag = 'scratch operand']
  %s0 = inlined_call_operand.vmem [shape: f32[8,8,3], index: 0, kind: input, shape index: {}]
  %s1 = inlined_call_operand.vmem [shape: f32[2,8,3,8], index: 1, kind: input, shape index: {}]
  %s2 = inlined_call_operand.vmem [shape: f32[8,3,8], index: 2, kind: input, shape index: {}]
  %s3 = inlined_call_operand.vmem [shape: f32[3,8,8,8], index: 3, kind: input, shape index: {}]
  %s4 = inlined_call_operand.vmem [shape: f32[8,3,8], index: 4, kind: input, shape index: {}]
  %s5 = inlined_call_operand.vmem [shape: f32[2,8,8,8], index: 5, kind: input, shape index: {}]
  %s6 = inlined_call_operand.vmem [shape: f32[8,3,8], index: 6, kind: input, shape index: {}]
  %s7 = inlined_call_operand.vmem [shape: f32[8,4,8], index: 7, kind: output, shape index: {}]
  %s8 = sld [smem:[#allocation0]]
  $region38: #{_lambda_.2} parent=0
    _
  %s10 = ssub.s32 1, %s8
  %s11 = scalar_select 0, %s10, %s8
  // Predicated region
  $region2: #{_lambda_.2} parent=0 // pred_check
    _
  $region3: #{_lambda_.2} parent=0 // pred_check_branch
    %13 = sbr.rel (0) target = $region5
  $region4: #{_lambda_.2} parent=0 // pred_region
    _
  $region5: #{_lambda_.2} parent=0 // pred_fallthru
    _
  // Predicated region
  $region6: #{_lambda_.2} parent=0 // pred_check
    _
  $region7: #{_lambda_.2} parent=0 // pred_check_branch
    %15 = sbr.rel (0) target = $region9
  $region8: #{_lambda_.2} parent=0 // pred_region
    _
  $region9: #{_lambda_.2} parent=0 // pred_fallthru
    _
  // Predicated region
  $region10: #{_lambda_.2} parent=0 // pred_check
    _
  $region11: #{_lambda_.2} parent=0 // pred_check_branch
    %17 = sbr.rel (0) target = $region13
  $region12: #{_lambda_.2} parent=0 // pred_region
    _
  $region13: #{_lambda_.2} parent=0 // pred_fallthru
    _
  // Predicated region
  $region14: #{_lambda_.2} parent=0 // pred_check
    _
  $region15: #{_lambda_.2} parent=0 // pred_check_branch
    %19 = sbr.rel (0) target = $region17
  $region16: #{_lambda_.2} parent=0 // pred_region
    _
  $region17: #{_lambda_.2} parent=0 // pred_fallthru
    _
  // Predicated region
  $region18: #{_lambda_.2} parent=0 // pred_check
    _
  $region19: #{_lambda_.2} parent=0 // pred_check_branch
    %21 = sbr.rel (0) target = $region21
  $region20: #{_lambda_.2} parent=0 // pred_region
    _
  $region21: #{_lambda_.2} parent=0 // pred_fallthru
    _
  // Predicated region
  $region22: #{_lambda_.2} parent=0 // pred_check
    _
  $region23: #{_lambda_.2} parent=0 // pred_check_branch
    %23 = sbr.rel (0) target = $region25
  $region24: #{_lambda_.2} parent=0 // pred_region
    _
  $region25: #{_lambda_.2} parent=0 // pred_fallthru
    _
  // Predicated region
  $region26: #{_lambda_.2} parent=0 // pred_check
    _
  $region27: #{_lambda_.2} parent=0 // pred_check_branch
    %25 = sbr.rel (0) target = $region29
  $region28: #{_lambda_.2} parent=0 // pred_region
    _
  $region29: #{_lambda_.2} parent=0 // pred_fallthru
    _
  %v26 = vld [vmem:[%s0] sm:$0x7f]
  %v27 = vld [vmem:[%s0 + $0x8] sm:$0x7f]
  %v28 = vld [vmem:[%s0 + $0x10] sm:$0x7f]
  %v29 = vld [vmem:[%s0 + $0x18] sm:$0x7f]
  %v30 = vld [vmem:[%s0 + $0x20] sm:$0x7f]
  %v31 = vld [vmem:[%s0 + $0x28] sm:$0x7f]
  %v32 = vld [vmem:[%s0 + $0x30] sm:$0x7f]
  %v33 = vld [vmem:[%s0 + $0x38] sm:$0x7f]
  %v34 = vld [vmem:[%s1] sm:$0x7]
  %v35 = vld [vmem:[%s1 + $0x4] sm:$0x7]
  %v36 = vld [vmem:[%s1 + $0x8] sm:$0x7]
  %v37 = vld [vmem:[%s1 + $0xc] sm:$0x7]
  %v38 = vld [vmem:[%s1 + $0x10] sm:$0x7]
  %v39 = vld [vmem:[%s1 + $0x14] sm:$0x7]
  %v40 = vld [vmem:[%s1 + $0x18] sm:$0x7]
  %v41 = vld [vmem:[%s1 + $0x1c] sm:$0x7]
  %v42 = vld [vmem:[%s0 + $0x1] sm:$0x7f]
  %v43 = vld [vmem:[%s0 + $0x9] sm:$0x7f]
  %v44 = vld [vmem:[%s0 + $0x11] sm:$0x7f]
  %v45 = vld [vmem:[%s0 + $0x19] sm:$0x7f]
  %v46 = vld [vmem:[%s0 + $0x21] sm:$0x7f]
  %v47 = vld [vmem:[%s0 + $0x29] sm:$0x7f]
  %v48 = vld [vmem:[%s0 + $0x31] sm:$0x7f]
  %v49 = vld [vmem:[%s0 + $0x39] sm:$0x7f]
  %s50 = scalar_lea.vmem %s1, 32
  %v51 = vld [vmem:[%s50] sm:$0x7]
  %v52 = vld [vmem:[%s50 + $0x4] sm:$0x7]
  %v53 = vld [vmem:[%s50 + $0x8] sm:$0x7]
  %v54 = vld [vmem:[%s50 + $0xc] sm:$0x7]
  %v55 = vld [vmem:[%s50 + $0x10] sm:$0x7]
  %v56 = vld [vmem:[%s50 + $0x14] sm:$0x7]
  %v57 = vld [vmem:[%s50 + $0x18] sm:$0x7]
  %v58 = vld [vmem:[%s50 + $0x1c] sm:$0x7]
  %vm59 = vcmask 23552
  %v61 = vsel %vm59, %v42, 0
  %vm63 = vcmask 1042432
  %v65 = vsel %vm63, %v51, 0
  %67 = vmatprep.subr.mxu0 0.0
  %68 = vmatpush1.msra.mxu0 %v65
  %69 = vmatprep.subr.mxu0 0.0
  %70 = vmatpush1.msra.mxu0 0.0
  %71 = vmatprep.subr.mxu0 0.0
  %72 = vmatpush1.msra.mxu0 0.0
  %73 = vmatprep.subr.mxu0 0.0
  %74 = vmatpush1.msra.mxu0 0.0
  %75 = vmatprep.subr.mxu0 0.0
  %76 = vmatpush1.msra.mxu0 0.0
  %77 = vmatprep.subr.mxu0 0.0
  %78 = vmatpush1.msra.mxu0 0.0
  %79 = vmatprep.subr.mxu0 0.0
  %80 = vmatpush1.msra.mxu0 0.0
  %81 = vmatprep.subr.mxu0 0.0
  %82 = vmatpush1.msra.mxu0 0.0
  %83 = vmatprep.subr.mxu0 0.0
  %84 = vmatpush1.msra.mxu0 0.0
  %85 = vmatprep.subr.mxu0 0.0
  %86 = vmatpush1.msra.mxu0 0.0
  %87 = vmatprep.subr.mxu0 0.0
  %88 = vmatpush1.msra.mxu0 0.0
  %89 = vmatprep.subr.mxu0 0.0
  %90 = vmatpush1.msra.mxu0 0.0
  %91 = vmatprep.subr.mxu0 0.0
  %92 = vmatpush1.msra.mxu0 0.0
  %93 = vmatprep.subr.mxu0 0.0
  %94 = vmatpush1.msra.mxu0 0.0
  %95 = vmatprep.subr.mxu0 0.0
  %96 = vmatpush1.msra.mxu0 0.0
  %97 = vmatprep.subr.mxu0 0.0
  %98 = vmatpush1.msra.mxu0 0.0
  %99 = vmatprep.subr.mxu0 0.0
  %100 = vmatpush1.msra.mxu0 0.0
  %101 = vmatprep.subr.mxu0 0.0
  %102 = vmatpush1.msra.mxu0 0.0
  %103 = vmatprep.subr.mxu0 0.0
  %104 = vmatpush1.msra.mxu0 0.0
  %105 = vmatprep.subr.mxu0 0.0
  %106 = vmatpush1.msra.mxu0 0.0
  %107 = vmatprep.subr.mxu0 0.0
  %108 = vmatpush1.msra.mxu0 0.0
  %109 = vmatprep.subr.mxu0 0.0
  %110 = vmatpush1.msra.mxu0 0.0
  %111 = vmatprep.subr.mxu0 0.0
  %112 = vmatpush1.msra.mxu0 0.0
  %113 = vmatprep.subr.mxu0 0.0
  %114 = vmatpush1.msra.mxu0 0.0
  %115 = vmatprep.subr.mxu0 0.0
  %116 = vmatpush1.msra.mxu0 0.0
  %117 = vmatprep.subr.mxu0 0.0
  %118 = vmatpush1.msra.mxu0 0.0
  %119 = vmatprep.subr.mxu0 0.0
  %120 = vmatpush1.msra.mxu0 0.0
  %121 = vmatprep.subr.mxu0 0.0
  %122 = vmatpush1.msra.mxu0 0.0
  %123 = vmatprep.subr.mxu0 0.0
  %124 = vmatpush1.msra.mxu0 0.0
  %125 = vmatprep.subr.mxu0 0.0
  %126 = vmatpush1.msra.mxu0 0.0
  %127 = vmatprep.subr.mxu0 0.0
  %128 = vmatpush1.msra.mxu0 0.0
  %129 = vmatprep.subr.mxu0 0.0
  %130 = vmatpush1.msra.mxu0 0.0
  %131 = vmatprep.mubr.f32.mxu0 0.0
  %132 = vmatmul.mubr.f32.gmra.mrb[0].mxu0 %v61
  %v133 = vpop.f32.mrb[0].mxu0
  %v134 = vadd.f32 0.0, %v133
  %v135 = vpop.f32.mrb[0].mxu0
  %136 = vdwg.mxu0
  %v138 = vsel %vm59, %v43, 0
  %v141 = vsel %vm63, %v52, 0
  %143 = vmatprep.subr.mxu0 0.0
  %144 = vmatpush1.msra.mxu0 %v141
  %145 = vmatprep.subr.mxu0 0.0
  %146 = vmatpush1.msra.mxu0 0.0
  %147 = vmatprep.subr.mxu0 0.0
  %148 = vmatpush1.msra.mxu0 0.0
  %149 = vmatprep.subr.mxu0 0.0
  %150 = vmatpush1.msra.mxu0 0.0
  %151 = vmatprep.subr.mxu0 0.0
  %152 = vmatpush1.msra.mxu0 0.0
  %153 = vmatprep.subr.mxu0 0.0
  %154 = vmatpush1.msra.mxu0 0.0
  %155 = vmatprep.subr.mxu0 0.0
  %156 = vmatpush1.msra.mxu0 0.0
  %157 = vmatprep.subr.mxu0 0.0
  %158 = vmatpush1.msra.mxu0 0.0
  %159 = vmatprep.subr.mxu0 0.0
  %160 = vmatpush1.msra.mxu0 0.0
  %161 = vmatprep.subr.mxu0 0.0
  %162 = vmatpush1.msra.mxu0 0.0
  %163 = vmatprep.subr.mxu0 0.0
  %164 = vmatpush1.msra.mxu0 0.0
  %165 = vmatprep.subr.mxu0 0.0
  %166 = vmatpush1.msra.mxu0 0.0
  %167 = vmatprep.subr.mxu0 0.0
  %168 = vmatpush1.msra.mxu0 0.0
  %169 = vmatprep.subr.mxu0 0.0
  %170 = vmatpush1.msra.mxu0 0.0
  %171 = vmatprep.subr.mxu0 0.0
  %172 = vmatpush1.msra.mxu0 0.0
  %173 = vmatprep.subr.mxu0 0.0
  %174 = vmatpush1.msra.mxu0 0.0
  %175 = vmatprep.subr.mxu0 0.0
  %176 = vmatpush1.msra.mxu0 0.0
  %177 = vmatprep.subr.mxu0 0.0
  %178 = vmatpush1.msra.mxu0 0.0
  %179 = vmatprep.subr.mxu0 0.0
  %180 = vmatpush1.msra.mxu0 0.0
  %181 = vmatprep.subr.mxu0 0.0
  %182 = vmatpush1.msra.mxu0 0.0
  %183 = vmatprep.subr.mxu0 0.0
  %184 = vmatpush1.msra.mxu0 0.0
  %185 = vmatprep.subr.mxu0 0.0
  %186 = vmatpush1.msra.mxu0 0.0
  %187 = vmatprep.subr.mxu0 0.0
  %188 = vmatpush1.msra.mxu0 0.0
  %189 = vmatprep.subr.mxu0 0.0
  %190 = vmatpush1.msra.mxu0 0.0
  %191 = vmatprep.subr.mxu0 0.0
  %192 = vmatpush1.msra.mxu0 0.0
  %193 = vmatprep.subr.mxu0 0.0
  %194 = vmatpush1.msra.mxu0 0.0
  %195 = vmatprep.subr.mxu0 0.0
  %196 = vmatpush1.msra.mxu0 0.0
  %197 = vmatprep.subr.mxu0 0.0
  %198 = vmatpush1.msra.mxu0 0.0
  %199 = vmatprep.subr.mxu0 0.0
  %200 = vmatpush1.msra.mxu0 0.0
  %201 = vmatprep.subr.mxu0 0.0
  %202 = vmatpush1.msra.mxu0 0.0
  %203 = vmatprep.subr.mxu0 0.0
  %204 = vmatpush1.msra.mxu0 0.0
  %205 = vmatprep.subr.mxu0 0.0
  %206 = vmatpush1.msra.mxu0 0.0
  %207 = vmatprep.mubr.f32.mxu0 0.0
  %208 = vmatmul.mubr.f32.gmra.mrb[0].mxu0 %v138
  %v209 = vpop.f32.mrb[0].mxu0
  %v210 = vadd.f32 0.0, %v209
  %v211 = vpop.f32.mrb[0].mxu0
  %212 = vdwg.mxu0
  %v214 = vsel %vm59, %v44, 0
  %v217 = vsel %vm63, %v53, 0
  %219 = vmatprep.subr.mxu0 0.0
  %220 = vmatpush1.msra.mxu0 %v217
  %221 = vmatprep.subr.mxu0 0.0
  %222 = vmatpush1.msra.mxu0 0.0
  %223 = vmatprep.subr.mxu0 0.0
  %224 = vmatpush1.msra.mxu0 0.0
  %225 = vmatprep.subr.mxu0 0.0
  %226 = vmatpush1.msra.mxu0 0.0
  %227 = vmatprep.subr.mxu0 0.0
  %228 = vmatpush1.msra.mxu0 0.0
  %229 = vmatprep.subr.mxu0 0.0
  %230 = vmatpush1.msra.mxu0 0.0
  %231 = vmatprep.subr.mxu0 0.0
  %232 = vmatpush1.msra.mxu0 0.0
  %233 = vmatprep.subr.mxu0 0.0
  %234 = vmatpush1.msra.mxu0 0.0
  %235 = vmatprep.subr.mxu0 0.0
  %236 = vmatpush1.msra.mxu0 0.0
  %237 = vmatprep.subr.mxu0 0.0
  %238 = vmatpush1.msra.mxu0 0.0
  %239 = vmatprep.subr.mxu0 0.0
  %240 = vmatpush1.msra.mxu0 0.0
  %241 = vmatprep.subr.mxu0 0.0
  %242 = vmatpush1.msra.mxu0 0.0
  %243 = vmatprep.subr.mxu0 0.0
  %244 = vmatpush1.msra.mxu0 0.0
  %245 = vmatprep.subr.mxu0 0.0
  %246 = vmatpush1.msra.mxu0 0.0
  %247 = vmatprep.subr.mxu0 0.0
  %248 = vmatpush1.msra.mxu0 0.0
  %249 = vmatprep.subr.mxu0 0.0
  %250 = vmatpush1.msra.mxu0 0.0
  %251 = vmatprep.subr.mxu0 0.0
  %252 = vmatpush1.msra.mxu0 0.0
  %253 = vmatprep.subr.mxu0 0.0
  %254 = vmatpush1.msra.mxu0 0.0
  %255 = vmatprep.subr.mxu0 0.0
  %256 = vmatpush1.msra.mxu0 0.0
  %257 = vmatprep.subr.mxu0 0.0
  %258 = vmatpush1.msra.mxu0 0.0
  %259 = vmatprep.subr.mxu0 0.0
  %260 = vmatpush1.msra.mxu0 0.0
  %261 = vmatprep.subr.mxu0 0.0
  %262 = vmatpush1.msra.mxu0 0.0
  %263 = vmatprep.subr.mxu0 0.0
  %264 = vmatpush1.msra.mxu0 0.0
  %265 = vmatprep.subr.mxu0 0.0
  %266 = vmatpush1.msra.mxu0 0.0
  %267 = vmatprep.subr.mxu0 0.0
  %268 = vmatpush1.msra.mxu0 0.0
  %269 = vmatprep.subr.mxu0 0.0
  %270 = vmatpush1.msra.mxu0 0.0
  %271 = vmatprep.subr.mxu0 0.0
  %272 = vmatpush1.msra.mxu0 0.0
  %273 = vmatprep.subr.mxu0 0.0
  %274 = vmatpush1.msra.mxu0 0.0
  %275 = vmatprep.subr.mxu0 0.0
  %276 = vmatpush1.msra.mxu0 0.0
  %277 = vmatprep.subr.mxu0 0.0
  %278 = vmatpush1.msra.mxu0 0.0
  %279 = vmatprep.subr.mxu0 0.0
  %280 = vmatpush1.msra.mxu0 0.0
  %281 = vmatprep.subr.mxu0 0.0
  %282 = vmatpush1.msra.mxu0 0.0
  %283 = vmatprep.mubr.f32.mxu0 0.0
  %284 = vmatmul.mubr.f32.gmra.mrb[0].mxu0 %v214
  %v285 = vpop.f32.mrb[0].mxu0
  %v286 = vadd.f32 0.0, %v285
  %v287 = vpop.f32.mrb[0].mxu0
  %288 = vdwg.mxu0
  %v290 = vsel %vm59, %v45, 0
  %v293 = vsel %vm63, %v54, 0
  %295 = vmatprep.subr.mxu0 0.0
  %296 = vmatpush1.msra.mxu0 %v293
  %297 = vmatprep.subr.mxu0 0.0
  %298 = vmatpush1.msra.mxu0 0.0
  %299 = vmatprep.subr.mxu0 0.0
  %300 = vmatpush1.msra.mxu0 0.0
  %301 = vmatprep.subr.mxu0 0.0
  %302 = vmatpush1.msra.mxu0 0.0
  %303 = vmatprep.subr.mxu0 0.0
  %304 = vmatpush1.msra.mxu0 0.0
  %305 = vmatprep.subr.mxu0 0.0
  %306 = vmatpush1.msra.mxu0 0.0
  %307 = vmatprep.subr.mxu0 0.0
  %308 = vmatpush1.msra.mxu0 0.0
  %309 = vmatprep.subr.mxu0 0.0
  %310 = vmatpush1.msra.mxu0 0.0
  %311 = vmatprep.subr.mxu0 0.0
  %312 = vmatpush1.msra.mxu0 0.0
  %313 = vmatprep.subr.mxu0 0.0
  %314 = vmatpush1.msra.mxu0 0.0
  %315 = vmatprep.subr.mxu0 0.0
  %316 = vmatpush1.msra.mxu0 0.0
  %317 = vmatprep.subr.mxu0 0.0
  %318 = vmatpush1.msra.mxu0 0.0
  %319 = vmatprep.subr.mxu0 0.0
  %320 = vmatpush1.msra.mxu0 0.0
  %321 = vmatprep.subr.mxu0 0.0
  %322 = vmatpush1.msra.mxu0 0.0
  %323 = vmatprep.subr.mxu0 0.0
  %324 = vmatpush1.msra.mxu0 0.0
  %325 = vmatprep.subr.mxu0 0.0
  %326 = vmatpush1.msra.mxu0 0.0
  %327 = vmatprep.subr.mxu0 0.0
  %328 = vmatpush1.msra.mxu0 0.0
  %329 = vmatprep.subr.mxu0 0.0
  %330 = vmatpush1.msra.mxu0 0.0
  %331 = vmatprep.subr.mxu0 0.0
  %332 = vmatpush1.msra.mxu0 0.0
  %333 = vmatprep.subr.mxu0 0.0
  %334 = vmatpush1.msra.mxu0 0.0
  %335 = vmatprep.subr.mxu0 0.0
  %336 = vmatpush1.msra.mxu0 0.0
  %337 = vmatprep.subr.mxu0 0.0
  %338 = vmatpush1.msra.mxu0 0.0
  %339 = vmatprep.subr.mxu0 0.0
  %340 = vmatpush1.msra.mxu0 0.0
  %341 = vmatprep.subr.mxu0 0.0
  %342 = vmatpush1.msra.mxu0 0.0
  %343 = vmatprep.subr.mxu0 0.0
  %344 = vmatpush1.msra.mxu0 0.0
  %345 = vmatprep.subr.mxu0 0.0
  %346 = vmatpush1.msra.mxu0 0.0
  %347 = vmatprep.subr.mxu0 0.0
  %348 = vmatpush1.msra.mxu0 0.0
  %349 = vmatprep.subr.mxu0 0.0
  %350 = vmatpush1.msra.mxu0 0.0
  %351 = vmatprep.subr.mxu0 0.0
  %352 = vmatpush1.msra.mxu0 0.0
  %353 = vmatprep.subr.mxu0 0.0
  %354 = vmatpush1.msra.mxu0 0.0
  %355 = vmatprep.subr.mxu0 0.0
  %356 = vmatpush1.msra.mxu0 0.0
  %357 = vmatprep.subr.mxu0 0.0
  %358 = vmatpush1.msra.mxu0 0.0
  %359 = vmatprep.mubr.f32.mxu0 0.0
  %360 = vmatmul.mubr.f32.gmra.mrb[0].mxu0 %v290
  %v361 = vpop.f32.mrb[0].mxu0
  %v362 = vadd.f32 0.0, %v361
  %v363 = vpop.f32.mrb[0].mxu0
  %364 = vdwg.mxu0
  %v366 = vsel %vm59, %v46, 0
  %v369 = vsel %vm63, %v55, 0
  %371 = vmatprep.subr.mxu0 0.0
  %372 = vmatpush1.msra.mxu0 %v369
  %373 = vmatprep.subr.mxu0 0.0
  %374 = vmatpush1.msra.mxu0 0.0
  %375 = vmatprep.subr.mxu0 0.0
  %376 = vmatpush1.msra.mxu0 0.0
  %377 = vmatprep.subr.mxu0 0.0
  %378 = vmatpush1.msra.mxu0 0.0
  %379 = vmatprep.subr.mxu0 0.0
  %380 = vmatpush1.msra.mxu0 0.0
  %381 = vmatprep.subr.mxu0 0.0
  %382 = vmatpush1.msra.mxu0 0.0
  %383 = vmatprep.subr.mxu0 0.0
  %384 = vmatpush1.msra.mxu0 0.0
  %385 = vmatprep.subr.mxu0 0.0
  %386 = vmatpush1.msra.mxu0 0.0
  %387 = vmatprep.subr.mxu0 0.0
  %388 = vmatpush1.msra.mxu0 0.0
  %389 = vmatprep.subr.mxu0 0.0
  %390 = vmatpush1.msra.mxu0 0.0
  %391 = vmatprep.subr.mxu0 0.0
  %392 = vmatpush1.msra.mxu0 0.0
  %393 = vmatprep.subr.mxu0 0.0
  %394 = vmatpush1.msra.mxu0 0.0
  %395 = vmatprep.subr.mxu0 0.0
  %396 = vmatpush1.msra.mxu0 0.0
  %397 = vmatprep.subr.mxu0 0.0
  %398 = vmatpush1.msra.mxu0 0.0
  %399 = vmatprep.subr.mxu0 0.0
  %400 = vmatpush1.msra.mxu0 0.0
  %401 = vmatprep.subr.mxu0 0.0
  %402 = vmatpush1.msra.mxu0 0.0
  %403 = vmatprep.subr.mxu0 0.0
  %404 = vmatpush1.msra.mxu0 0.0
  %405 = vmatprep.subr.mxu0 0.0
  %406 = vmatpush1.msra.mxu0 0.0
  %407 = vmatprep.subr.mxu0 0.0
  %408 = vmatpush1.msra.mxu0 0.0
  %409 = vmatprep.subr.mxu0 0.0
  %410 = vmatpush1.msra.mxu0 0.0
  %411 = vmatprep.subr.mxu0 0.0
  %412 = vmatpush1.msra.mxu0 0.0
  %413 = vmatprep.subr.mxu0 0.0
  %414 = vmatpush1.msra.mxu0 0.0
  %415 = vmatprep.subr.mxu0 0.0
  %416 = vmatpush1.msra.mxu0 0.0
  %417 = vmatprep.subr.mxu0 0.0
  %418 = vmatpush1.msra.mxu0 0.0
  %419 = vmatprep.subr.mxu0 0.0
  %420 = vmatpush1.msra.mxu0 0.0
  %421 = vmatprep.subr.mxu0 0.0
  %422 = vmatpush1.msra.mxu0 0.0
  %423 = vmatprep.subr.mxu0 0.0
  %424 = vmatpush1.msra.mxu0 0.0
  %425 = vmatprep.subr.mxu0 0.0
  %426 = vmatpush1.msra.mxu0 0.0
  %427 = vmatprep.subr.mxu0 0.0
  %428 = vmatpush1.msra.mxu0 0.0
  %429 = vmatprep.subr.mxu0 0.0
  %430 = vmatpush1.msra.mxu0 0.0
  %431 = vmatprep.subr.mxu0 0.0
  %432 = vmatpush1.msra.mxu0 0.0
  %433 = vmatprep.subr.mxu0 0.0
  %434 = vmatpush1.msra.mxu0 0.0
  %435 = vmatprep.mubr.f32.mxu0 0.0
  %436 = vmatmul.mubr.f32.gmra.mrb[0].mxu0 %v366
  %v437 = vpop.f32.mrb[0].mxu0
  %v438 = vadd.f32 0.0, %v437
  %v439 = vpop.f32.mrb[0].mxu0
  %440 = vdwg.mxu0
  %v442 = vsel %vm59, %v47, 0
  %v445 = vsel %vm63, %v56, 0
  %447 = vmatprep.subr.mxu0 0.0
  %448 = vmatpush1.msra.mxu0 %v445
  %449 = vmatprep.subr.mxu0 0.0
  %450 = vmatpush1.msra.mxu0 0.0
  %451 = vmatprep.subr.mxu0 0.0
  %452 = vmatpush1.msra.mxu0 0.0
  %453 = vmatprep.subr.mxu0 0.0
  %454 = vmatpush1.msra.mxu0 0.0
  %455 = vmatprep.subr.mxu0 0.0
  %456 = vmatpush1.msra.mxu0 0.0
  %457 = vmatprep.subr.mxu0 0.0
  %458 = vmatpush1.msra.mxu0 0.0
  %459 = vmatprep.subr.mxu0 0.0
  %460 = vmatpush1.msra.mxu0 0.0
  %461 = vmatprep.subr.mxu0 0.0
  %462 = vmatpush1.msra.mxu0 0.0
  %463 = vmatprep.subr.mxu0 0.0
  %464 = vmatpush1.msra.mxu0 0.0
  %465 = vmatprep.subr.mxu0 0.0
  %466 = vmatpush1.msra.mxu0 0.0
  %467 = vmatprep.subr.mxu0 0.0
  %468 = vmatpush1.msra.mxu0 0.0
  %469 = vmatprep.subr.mxu0 0.0
  %470 = vmatpush1.msra.mxu0 0.0
  %471 = vmatprep.subr.mxu0 0.0
  %472 = vmatpush1.msra.mxu0 0.0
  %473 = vmatprep.subr.mxu0 0.0
  %474 = vmatpush1.msra.mxu0 0.0
  %475 = vmatprep.subr.mxu0 0.0
  %476 = vmatpush1.msra.mxu0 0.0
  %477 = vmatprep.subr.mxu0 0.0
  %478 = vmatpush1.msra.mxu0 0.0
  %479 = vmatprep.subr.mxu0 0.0
  %480 = vmatpush1.msra.mxu0 0.0
  %481 = vmatprep.subr.mxu0 0.0
  %482 = vmatpush1.msra.mxu0 0.0
  %483 = vmatprep.subr.mxu0 0.0
  %484 = vmatpush1.msra.mxu0 0.0
  %485 = vmatprep.subr.mxu0 0.0
  %486 = vmatpush1.msra.mxu0 0.0
  %487 = vmatprep.subr.mxu0 0.0
  %488 = vmatpush1.msra.mxu0 0.0
  %489 = vmatprep.subr.mxu0 0.0
  %490 = vmatpush1.msra.mxu0 0.0
  %491 = vmatprep.subr.mxu0 0.0
  %492 = vmatpush1.msra.mxu0 0.0
  %493 = vmatprep.subr.mxu0 0.0
  %494 = vmatpush1.msra.mxu0 0.0
  %495 = vmatprep.subr.mxu0 0.0
  %496 = vmatpush1.msra.mxu0 0.0
  %497 = vmatprep.subr.mxu0 0.0
  %498 = vmatpush1.msra.mxu0 0.0
  %499 = vmatprep.subr.mxu0 0.0
  %500 = vmatpush1.msra.mxu0 0.0
  %501 = vmatprep.subr.mxu0 0.0
  %502 = vmatpush1.msra.mxu0 0.0
  %503 = vmatprep.subr.mxu0 0.0
  %504 = vmatpush1.msra.mxu0 0.0
  %505 = vmatprep.subr.mxu0 0.0
  %506 = vmatpush1.msra.mxu0 0.0
  %507 = vmatprep.subr.mxu0 0.0
  %508 = vmatpush1.msra.mxu0 0.0
  %509 = vmatprep.subr.mxu0 0.0
  %510 = vmatpush1.msra.mxu0 0.0
  %511 = vmatprep.mubr.f32.mxu0 0.0
  %512 = vmatmul.mubr.f32.gmra.mrb[0].mxu0 %v442
  %v513 = vpop.f32.mrb[0].mxu0
  %v514 = vadd.f32 0.0, %v513
  %v515 = vpop.f32.mrb[0].mxu0
  %516 = vdwg.mxu0
  %v518 = vsel %vm59, %v48, 0
  %v521 = vsel %vm63, %v57, 0
  %523 = vmatprep.subr.mxu0 0.0
  %524 = vmatpush1.msra.mxu0 %v521
  %525 = vmatprep.subr.mxu0 0.0
  %526 = vmatpush1.msra.mxu0 0.0
  %527 = vmatprep.subr.mxu0 0.0
  %528 = vmatpush1.msra.mxu0 0.0
  %529 = vmatprep.subr.mxu0 0.0
  %530 = vmatpush1.msra.mxu0 0.0
  %531 = vmatprep.subr.mxu0 0.0
  %532 = vmatpush1.msra.mxu0 0.0
  %533 = vmatprep.subr.mxu0 0.0
  %534 = vmatpush1.msra.mxu0 0.0
  %535 = vmatprep.subr.mxu0 0.0
  %536 = vmatpush1.msra.mxu0 0.0
  %537 = vmatprep.subr.mxu0 0.0
  %538 = vmatpush1.msra.mxu0 0.0
  %539 = vmatprep.subr.mxu0 0.0
  %540 = vmatpush1.msra.mxu0 0.0
  %541 = vmatprep.subr.mxu0 0.0
  %542 = vmatpush1.msra.mxu0 0.0
  %543 = vmatprep.subr.mxu0 0.0
  %544 = vmatpush1.msra.mxu0 0.0
  %545 = vmatprep.subr.mxu0 0.0
  %546 = vmatpush1.msra.mxu0 0.0
  %547 = vmatprep.subr.mxu0 0.0
  %548 = vmatpush1.msra.mxu0 0.0
  %549 = vmatprep.subr.mxu0 0.0
  %550 = vmatpush1.msra.mxu0 0.0
  %551 = vmatprep.subr.mxu0 0.0
  %552 = vmatpush1.msra.mxu0 0.0
  %553 = vmatprep.subr.mxu0 0.0
  %554 = vmatpush1.msra.mxu0 0.0
  %555 = vmatprep.subr.mxu0 0.0
  %556 = vmatpush1.msra.mxu0 0.0
  %557 = vmatprep.subr.mxu0 0.0
  %558 = vmatpush1.msra.mxu0 0.0
  %559 = vmatprep.subr.mxu0 0.0
  %560 = vmatpush1.msra.mxu0 0.0
  %561 = vmatprep.subr.mxu0 0.0
  %562 = vmatpush1.msra.mxu0 0.0
  %563 = vmatprep.subr.mxu0 0.0
  %564 = vmatpush1.msra.mxu0 0.0
  %565 = vmatprep.subr.mxu0 0.0
  %566 = vmatpush1.msra.mxu0 0.0
  %567 = vmatprep.subr.mxu0 0.0
  %568 = vmatpush1.msra.mxu0 0.0
  %569 = vmatprep.subr.mxu0 0.0
  %570 = vmatpush1.msra.mxu0 0.0
  %571 = vmatprep.subr.mxu0 0.0
  %572 = vmatpush1.msra.mxu0 0.0
  %573 = vmatprep.subr.mxu0 0.0
  %574 = vmatpush1.msra.mxu0 0.0
  %575 = vmatprep.subr.mxu0 0.0
  %576 = vmatpush1.msra.mxu0 0.0
  %577 = vmatprep.subr.mxu0 0.0
  %578 = vmatpush1.msra.mxu0 0.0
  %579 = vmatprep.subr.mxu0 0.0
  %580 = vmatpush1.msra.mxu0 0.0
  %581 = vmatprep.subr.mxu0 0.0
  %582 = vmatpush1.msra.mxu0 0.0
  %583 = vmatprep.subr.mxu0 0.0
  %584 = vmatpush1.msra.mxu0 0.0
  %585 = vmatprep.subr.mxu0 0.0
  %586 = vmatpush1.msra.mxu0 0.0
  %587 = vmatprep.mubr.f32.mxu0 0.0
  %588 = vmatmul.mubr.f32.gmra.mrb[0].mxu0 %v518
  %v589 = vpop.f32.mrb[0].mxu0
  %v590 = vadd.f32 0.0, %v589
  %v591 = vpop.f32.mrb[0].mxu0
  %592 = vdwg.mxu0
  %v594 = vsel %vm59, %v49, 0
  %v597 = vsel %vm63, %v58, 0
  %599 = vmatprep.subr.mxu0 0.0
  %600 = vmatpush1.msra.mxu0 %v597
  %601 = vmatprep.subr.mxu0 0.0
  %602 = vmatpush1.msra.mxu0 0.0
  %603 = vmatprep.subr.mxu0 0.0
  %604 = vmatpush1.msra.mxu0 0.0
  %605 = vmatprep.subr.mxu0 0.0
  %606 = vmatpush1.msra.mxu0 0.0
  %607 = vmatprep.subr.mxu0 0.0
  %608 = vmatpush1.msra.mxu0 0.0
  %609 = vmatprep.subr.mxu0 0.0
  %610 = vmatpush1.msra.mxu0 0.0
  %611 = vmatprep.subr.mxu0 0.0
  %612 = vmatpush1.msra.mxu0 0.0
  %613 = vmatprep.subr.mxu0 0.0
  %614 = vmatpush1.msra.mxu0 0.0
  %615 = vmatprep.subr.mxu0 0.0
  %616 = vmatpush1.msra.mxu0 0.0
  %617 = vmatprep.subr.mxu0 0.0
  %618 = vmatpush1.msra.mxu0 0.0
  %619 = vmatprep.subr.mxu0 0.0
  %620 = vmatpush1.msra.mxu0 0.0
  %621 = vmatprep.subr.mxu0 0.0
  %622 = vmatpush1.msra.mxu0 0.0
  %623 = vmatprep.subr.mxu0 0.0
  %624 = vmatpush1.msra.mxu0 0.0
  %625 = vmatprep.subr.mxu0 0.0
  %626 = vmatpush1.msra.mxu0 0.0
  %627 = vmatprep.subr.mxu0 0.0
  %628 = vmatpush1.msra.mxu0 0.0
  %629 = vmatprep.subr.mxu0 0.0
  %630 = vmatpush1.msra.mxu0 0.0
  %631 = vmatprep.subr.mxu0 0.0
  %632 = vmatpush1.msra.mxu0 0.0
  %633 = vmatprep.subr.mxu0 0.0
  %634 = vmatpush1.msra.mxu0 0.0
  %635 = vmatprep.subr.mxu0 0.0
  %636 = vmatpush1.msra.mxu0 0.0
  %637 = vmatprep.subr.mxu0 0.0
  %638 = vmatpush1.msra.mxu0 0.0
  %639 = vmatprep.subr.mxu0 0.0
  %640 = vmatpush1.msra.mxu0 0.0
  %641 = vmatprep.subr.mxu0 0.0
  %642 = vmatpush1.msra.mxu0 0.0
  %643 = vmatprep.subr.mxu0 0.0
  %644 = vmatpush1.msra.mxu0 0.0
  %645 = vmatprep.subr.mxu0 0.0
  %646 = vmatpush1.msra.mxu0 0.0
  %647 = vmatprep.subr.mxu0 0.0
  %648 = vmatpush1.msra.mxu0 0.0
  %649 = vmatprep.subr.mxu0 0.0
  %650 = vmatpush1.msra.mxu0 0.0
  %651 = vmatprep.subr.mxu0 0.0
  %652 = vmatpush1.msra.mxu0 0.0
  %653 = vmatprep.subr.mxu0 0.0
  %654 = vmatpush1.msra.mxu0 0.0
  %655 = vmatprep.subr.mxu0 0.0
  %656 = vmatpush1.msra.mxu0 0.0
  %657 = vmatprep.subr.mxu0 0.0
  %658 = vmatpush1.msra.mxu0 0.0
  %659 = vmatprep.subr.mxu0 0.0
  %660 = vmatpush1.msra.mxu0 0.0
  %661 = vmatprep.subr.mxu0 0.0
  %662 = vmatpush1.msra.mxu0 0.0
  %663 = vmatprep.mubr.f32.mxu0 0.0
  %664 = vmatmul.mubr.f32.gmra.mrb[0].mxu0 %v594
  %v665 = vpop.f32.mrb[0].mxu0
  %v666 = vadd.f32 0.0, %v665
  %v667 = vpop.f32.mrb[0].mxu0
  %668 = vdwg.mxu0
  %v670 = vsel %vm59, %v26, 0
  %v673 = vsel %vm63, %v34, 0
  %675 = vmatprep.subr.mxu0 0.0
  %676 = vmatpush1.msra.mxu0 %v673
  %677 = vmatprep.subr.mxu0 0.0
  %678 = vmatpush1.msra.mxu0 0.0
  %679 = vmatprep.subr.mxu0 0.0
  %680 = vmatpush1.msra.mxu0 0.0
  %681 = vmatprep.subr.mxu0 0.0
  %682 = vmatpush1.msra.mxu0 0.0
  %683 = vmatprep.subr.mxu0 0.0
  %684 = vmatpush1.msra.mxu0 0.0
  %685 = vmatprep.subr.mxu0 0.0
  %686 = vmatpush1.msra.mxu0 0.0
  %687 = vmatprep.subr.mxu0 0.0
  %688 = vmatpush1.msra.mxu0 0.0
  %689 = vmatprep.subr.mxu0 0.0
  %690 = vmatpush1.msra.mxu0 0.0
  %691 = vmatprep.subr.mxu0 0.0
  %692 = vmatpush1.msra.mxu0 0.0
  %693 = vmatprep.subr.mxu0 0.0
  %694 = vmatpush1.msra.mxu0 0.0
  %695 = vmatprep.subr.mxu0 0.0
  %696 = vmatpush1.msra.mxu0 0.0
  %697 = vmatprep.subr.mxu0 0.0
  %698 = vmatpush1.msra.mxu0 0.0
  %699 = vmatprep.subr.mxu0 0.0
  %700 = vmatpush1.msra.mxu0 0.0
  %701 = vmatprep.subr.mxu0 0.0
  %702 = vmatpush1.msra.mxu0 0.0
  %703 = vmatprep.subr.mxu0 0.0
  %704 = vmatpush1.msra.mxu0 0.0
  %705 = vmatprep.subr.mxu0 0.0
  %706 = vmatpush1.msra.mxu0 0.0
  %707 = vmatprep.subr.mxu0 0.0
  %708 = vmatpush1.msra.mxu0 0.0
  %709 = vmatprep.subr.mxu0 0.0
  %710 = vmatpush1.msra.mxu0 0.0
  %711 = vmatprep.subr.mxu0 0.0
  %712 = vmatpush1.msra.mxu0 0.0
  %713 = vmatprep.subr.mxu0 0.0
  %714 = vmatpush1.msra.mxu0 0.0
  %715 = vmatprep.subr.mxu0 0.0
  %716 = vmatpush1.msra.mxu0 0.0
  %717 = vmatprep.subr.mxu0 0.0
  %718 = vmatpush1.msra.mxu0 0.0
  %719 = vmatprep.subr.mxu0 0.0
  %720 = vmatpush1.msra.mxu0 0.0
  %721 = vmatprep.subr.mxu0 0.0
  %722 = vmatpush1.msra.mxu0 0.0
  %723 = vmatprep.subr.mxu0 0.0
  %724 = vmatpush1.msra.mxu0 0.0
  %725 = vmatprep.subr.mxu0 0.0
  %726 = vmatpush1.msra.mxu0 0.0
  %727 = vmatprep.subr.mxu0 0.0
  %728 = vmatpush1.msra.mxu0 0.0
  %729 = vmatprep.subr.mxu0 0.0
  %730 = vmatpush1.msra.mxu0 0.0
  %731 = vmatprep.subr.mxu0 0.0
  %732 = vmatpush1.msra.mxu0 0.0
  %733 = vmatprep.subr.mxu0 0.0
  %734 = vmatpush1.msra.mxu0 0.0
  %735 = vmatprep.subr.mxu0 0.0
  %736 = vmatpush1.msra.mxu0 0.0
  %737 = vmatprep.subr.mxu0 0.0
  %738 = vmatpush1.msra.mxu0 0.0
  %739 = vmatprep.mubr.f32.mxu0 0.0
  %740 = vmatmul.mubr.f32.gmra.mrb[0].mxu0 %v670
  %v741 = vpop.f32.mrb[0].mxu0
  %v742 = vadd.f32 %v134, %v741
  %v743 = vpop.f32.mrb[0].mxu0
  %744 = vdwg.mxu0
  %v746 = vsel %vm59, %v27, 0
  %v749 = vsel %vm63, %v35, 0
  %751 = vmatprep.subr.mxu0 0.0
  %752 = vmatpush1.msra.mxu0 %v749
  %753 = vmatprep.subr.mxu0 0.0
  %754 = vmatpush1.msra.mxu0 0.0
  %755 = vmatprep.subr.mxu0 0.0
  %756 = vmatpush1.msra.mxu0 0.0
  %757 = vmatprep.subr.mxu0 0.0
  %758 = vmatpush1.msra.mxu0 0.0
  %759 = vmatprep.subr.mxu0 0.0
  %760 = vmatpush1.msra.mxu0 0.0
  %761 = vmatprep.subr.mxu0 0.0
  %762 = vmatpush1.msra.mxu0 0.0
  %763 = vmatprep.subr.mxu0 0.0
  %764 = vmatpush1.msra.mxu0 0.0
  %765 = vmatprep.subr.mxu0 0.0
  %766 = vmatpush1.msra.mxu0 0.0
  %767 = vmatprep.subr.mxu0 0.0
  %768 = vmatpush1.msra.mxu0 0.0
  %769 = vmatprep.subr.mxu0 0.0
  %770 = vmatpush1.msra.mxu0 0.0
  %771 = vmatprep.subr.mxu0 0.0
  %772 = vmatpush1.msra.mxu0 0.0
  %773 = vmatprep.subr.mxu0 0.0
  %774 = vmatpush1.msra.mxu0 0.0
  %775 = vmatprep.subr.mxu0 0.0
  %776 = vmatpush1.msra.mxu0 0.0
  %777 = vmatprep.subr.mxu0 0.0
  %778 = vmatpush1.msra.mxu0 0.0
  %779 = vmatprep.subr.mxu0 0.0
  %780 = vmatpush1.msra.mxu0 0.0
  %781 = vmatprep.subr.mxu0 0.0
  %782 = vmatpush1.msra.mxu0 0.0
  %783 = vmatprep.subr.mxu0 0.0
  %784 = vmatpush1.msra.mxu0 0.0
  %785 = vmatprep.subr.mxu0 0.0
  %786 = vmatpush1.msra.mxu0 0.0
  %787 = vmatprep.subr.mxu0 0.0
  %788 = vmatpush1.msra.mxu0 0.0
  %789 = vmatprep.subr.mxu0 0.0
  %790 = vmatpush1.msra.mxu0 0.0
  %791 = vmatprep.subr.mxu0 0.0
  %792 = vmatpush1.msra.mxu0 0.0
  %793 = vmatprep.subr.mxu0 0.0
  %794 = vmatpush1.msra.mxu0 0.0
  %795 = vmatprep.subr.mxu0 0.0
  %796 = vmatpush1.msra.mxu0 0.0
  %797 = vmatprep.subr.mxu0 0.0
  %798 = vmatpush1.msra.mxu0 0.0
  %799 = vmatprep.subr.mxu0 0.0
  %800 = vmatpush1.msra.mxu0 0.0
  %801 = vmatprep.subr.mxu0 0.0
  %802 = vmatpush1.msra.mxu0 0.0
  %803 = vmatprep.subr.mxu0 0.0
  %804 = vmatpush1.msra.mxu0 0.0
  %805 = vmatprep.subr.mxu0 0.0
  %806 = vmatpush1.msra.mxu0 0.0
  %807 = vmatprep.subr.mxu0 0.0
  %808 = vmatpush1.msra.mxu0 0.0
  %809 = vmatprep.subr.mxu0 0.0
  %810 = vmatpush1.msra.mxu0 0.0
  %811 = vmatprep.subr.mxu0 0.0
  %812 = vmatpush1.msra.mxu0 0.0
  %813 = vmatprep.subr.mxu0 0.0
  %814 = vmatpush1.msra.mxu0 0.0
  %815 = vmatprep.mubr.f32.mxu0 0.0
  %816 = vmatmul.mubr.f32.gmra.mrb[0].mxu0 %v746
  %v817 = vpop.f32.mrb[0].mxu0
  %v818 = vadd.f32 %v210, %v817
  %v819 = vpop.f32.mrb[0].mxu0
  %820 = vdwg.mxu0
  %v822 = vsel %vm59, %v28, 0
  %v825 = vsel %vm63, %v36, 0
  %827 = vmatprep.subr.mxu0 0.0
  %828 = vmatpush1.msra.mxu0 %v825
  %829 = vmatprep.subr.mxu0 0.0
  %830 = vmatpush1.msra.mxu0 0.0
  %831 = vmatprep.subr.mxu0 0.0
  %832 = vmatpush1.msra.mxu0 0.0
  %833 = vmatprep.subr.mxu0 0.0
  %834 = vmatpush1.msra.mxu0 0.0
  %835 = vmatprep.subr.mxu0 0.0
  %836 = vmatpush1.msra.mxu0 0.0
  %837 = vmatprep.subr.mxu0 0.0
  %838 = vmatpush1.msra.mxu0 0.0
  %839 = vmatprep.subr.mxu0 0.0
  %840 = vmatpush1.msra.mxu0 0.0
  %841 = vmatprep.subr.mxu0 0.0
  %842 = vmatpush1.msra.mxu0 0.0
  %843 = vmatprep.subr.mxu0 0.0
  %844 = vmatpush1.msra.mxu0 0.0
  %845 = vmatprep.subr.mxu0 0.0
  %846 = vmatpush1.msra.mxu0 0.0
  %847 = vmatprep.subr.mxu0 0.0
  %848 = vmatpush1.msra.mxu0 0.0
  %849 = vmatprep.subr.mxu0 0.0
  %850 = vmatpush1.msra.mxu0 0.0
  %851 = vmatprep.subr.mxu0 0.0
  %852 = vmatpush1.msra.mxu0 0.0
  %853 = vmatprep.subr.mxu0 0.0
  %854 = vmatpush1.msra.mxu0 0.0
  %855 = vmatprep.subr.mxu0 0.0
  %856 = vmatpush1.msra.mxu0 0.0
  %857 = vmatprep.subr.mxu0 0.0
  %858 = vmatpush1.msra.mxu0 0.0
  %859 = vmatprep.subr.mxu0 0.0
  %860 = vmatpush1.msra.mxu0 0.0
  %861 = vmatprep.subr.mxu0 0.0
  %862 = vmatpush1.msra.mxu0 0.0
  %863 = vmatprep.subr.mxu0 0.0
  %864 = vmatpush1.msra.mxu0 0.0
  %865 = vmatprep.subr.mxu0 0.0
  %866 = vmatpush1.msra.mxu0 0.0
  %867 = vmatprep.subr.mxu0 0.0
  %868 = vmatpush1.msra.mxu0 0.0
  %869 = vmatprep.subr.mxu0 0.0
  %870 = vmatpush1.msra.mxu0 0.0
  %871 = vmatprep.subr.mxu0 0.0
  %872 = vmatpush1.msra.mxu0 0.0
  %873 = vmatprep.subr.mxu0 0.0
  %874 = vmatpush1.msra.mxu0 0.0
  %875 = vmatprep.subr.mxu0 0.0
  %876 = vmatpush1.msra.mxu0 0.0
  %877 = vmatprep.subr.mxu0 0.0
  %878 = vmatpush1.msra.mxu0 0.0
  %879 = vmatprep.subr.mxu0 0.0
  %880 = vmatpush1.msra.mxu0 0.0
  %881 = vmatprep.subr.mxu0 0.0
  %882 = vmatpush1.msra.mxu0 0.0
  %883 = vmatprep.subr.mxu0 0.0
  %884 = vmatpush1.msra.mxu0 0.0
  %885 = vmatprep.subr.mxu0 0.0
  %886 = vmatpush1.msra.mxu0 0.0
  %887 = vmatprep.subr.mxu0 0.0
  %888 = vmatpush1.msra.mxu0 0.0
  %889 = vmatprep.subr.mxu0 0.0
  %890 = vmatpush1.msra.mxu0 0.0
  %891 = vmatprep.mubr.f32.mxu0 0.0
  %892 = vmatmul.mubr.f32.gmra.mrb[0].mxu0 %v822
  %v893 = vpop.f32.mrb[0].mxu0
  %v894 = vadd.f32 %v286, %v893
  %v895 = vpop.f32.mrb[0].mxu0
  %896 = vdwg.mxu0
  %v898 = vsel %vm59, %v29, 0
  %v901 = vsel %vm63, %v37, 0
  %903 = vmatprep.subr.mxu0 0.0
  %904 = vmatpush1.msra.mxu0 %v901
  %905 = vmatprep.subr.mxu0 0.0
  %906 = vmatpush1.msra.mxu0 0.0
  %907 = vmatprep.subr.mxu0 0.0
  %908 = vmatpush1.msra.mxu0 0.0
  %909 = vmatprep.subr.mxu0 0.0
  %910 = vmatpush1.msra.mxu0 0.0
  %911 = vmatprep.subr.mxu0 0.0
  %912 = vmatpush1.msra.mxu0 0.0
  %913 = vmatprep.subr.mxu0 0.0
  %914 = vmatpush1.msra.mxu0 0.0
  %915 = vmatprep.subr.mxu0 0.0
  %916 = vmatpush1.msra.mxu0 0.0
  %917 = vmatprep.subr.mxu0 0.0
  %918 = vmatpush1.msra.mxu0 0.0
  %919 = vmatprep.subr.mxu0 0.0
  %920 = vmatpush1.msra.mxu0 0.0
  %921 = vmatprep.subr.mxu0 0.0
  %922 = vmatpush1.msra.mxu0 0.0
  %923 = vmatprep.subr.mxu0 0.0
  %924 = vmatpush1.msra.mxu0 0.0
  %925 = vmatprep.subr.mxu0 0.0
  %926 = vmatpush1.msra.mxu0 0.0
  %927 = vmatprep.subr.mxu0 0.0
  %928 = vmatpush1.msra.mxu0 0.0
  %929 = vmatprep.subr.mxu0 0.0
  %930 = vmatpush1.msra.mxu0 0.0
  %931 = vmatprep.subr.mxu0 0.0
  %932 = vmatpush1.msra.mxu0 0.0
  %933 = vmatprep.subr.mxu0 0.0
  %934 = vmatpush1.msra.mxu0 0.0
  %935 = vmatprep.subr.mxu0 0.0
  %936 = vmatpush1.msra.mxu0 0.0
  %937 = vmatprep.subr.mxu0 0.0
  %938 = vmatpush1.msra.mxu0 0.0
  %939 = vmatprep.subr.mxu0 0.0
  %940 = vmatpush1.msra.mxu0 0.0
  %941 = vmatprep.subr.mxu0 0.0
  %942 = vmatpush1.msra.mxu0 0.0
  %943 = vmatprep.subr.mxu0 0.0
  %944 = vmatpush1.msra.mxu0 0.0
  %945 = vmatprep.subr.mxu0 0.0
  %946 = vmatpush1.msra.mxu0 0.0
  %947 = vmatprep.subr.mxu0 0.0
  %948 = vmatpush1.msra.mxu0 0.0
  %949 = vmatprep.subr.mxu0 0.0
  %950 = vmatpush1.msra.mxu0 0.0
  %951 = vmatprep.subr.mxu0 0.0
  %952 = vmatpush1.msra.mxu0 0.0
  %953 = vmatprep.subr.mxu0 0.0
  %954 = vmatpush1.msra.mxu0 0.0
  %955 = vmatprep.subr.mxu0 0.0
  %956 = vmatpush1.msra.mxu0 0.0
  %957 = vmatprep.subr.mxu0 0.0
  %958 = vmatpush1.msra.mxu0 0.0
  %959 = vmatprep.subr.mxu0 0.0
  %960 = vmatpush1.msra.mxu0 0.0
  %961 = vmatprep.subr.mxu0 0.0
  %962 = vmatpush1.msra.mxu0 0.0
  %963 = vmatprep.subr.mxu0 0.0
  %964 = vmatpush1.msra.mxu0 0.0
  %965 = vmatprep.subr.mxu0 0.0
  %966 = vmatpush1.msra.mxu0 0.0
  %967 = vmatprep.mubr.f32.mxu0 0.0
  %968 = vmatmul.mubr.f32.gmra.mrb[0].mxu0 %v898
  %v969 = vpop.f32.mrb[0].mxu0
  %v970 = vadd.f32 %v362, %v969
  %v971 = vpop.f32.mrb[0].mxu0
  %972 = vdwg.mxu0
  %v974 = vsel %vm59, %v30, 0
  %v977 = vsel %vm63, %v38, 0
  %979 = vmatprep.subr.mxu0 0.0
  %980 = vmatpush1.msra.mxu0 %v977
  %981 = vmatprep.subr.mxu0 0.0
  %982 = vmatpush1.msra.mxu0 0.0
  %983 = vmatprep.subr.mxu0 0.0
  %984 = vmatpush1.msra.mxu0 0.0
  %985 = vmatprep.subr.mxu0 0.0
  %986 = vmatpush1.msra.mxu0 0.0
  %987 = vmatprep.subr.mxu0 0.0
  %988 = vmatpush1.msra.mxu0 0.0
  %989 = vmatprep.subr.mxu0 0.0
  %990 = vmatpush1.msra.mxu0 0.0
  %991 = vmatprep.subr.mxu0 0.0
  %992 = vmatpush1.msra.mxu0 0.0
  %993 = vmatprep.subr.mxu0 0.0
  %994 = vmatpush1.msra.mxu0 0.0
  %995 = vmatprep.subr.mxu0 0.0
  %996 = vmatpush1.msra.mxu0 0.0
  %997 = vmatprep.subr.mxu0 0.0
  %998 = vmatpush1.msra.mxu0 0.0
  %999 = vmatprep.subr.mxu0 0.0
  %1000 = vmatpush1.msra.mxu0 0.0
  %1001 = vmatprep.subr.mxu0 0.0
  %1002 = vmatpush1.msra.mxu0 0.0
  %1003 = vmatprep.subr.mxu0 0.0
  %1004 = vmatpush1.msra.mxu0 0.0
  %1005 = vmatprep.subr.mxu0 0.0
  %1006 = vmatpush1.msra.mxu0 0.0
  %1007 = vmatprep.subr.mxu0 0.0
  %1008 = vmatpush1.msra.mxu0 0.0
  %1009 = vmatprep.subr.mxu0 0.0
  %1010 = vmatpush1.msra.mxu0 0.0
  %1011 = vmatprep.subr.mxu0 0.0
  %1012 = vmatpush1.msra.mxu0 0.0
  %1013 = vmatprep.subr.mxu0 0.0
  %1014 = vmatpush1.msra.mxu0 0.0
  %1015 = vmatprep.subr.mxu0 0.0
  %1016 = vmatpush1.msra.mxu0 0.0
  %1017 = vmatprep.subr.mxu0 0.0
  %1018 = vmatpush1.msra.mxu0 0.0
  %1019 = vmatprep.subr.mxu0 0.0
  %1020 = vmatpush1.msra.mxu0 0.0
  %1021 = vmatprep.subr.mxu0 0.0
  %1022 = vmatpush1.msra.mxu0 0.0
  %1023 = vmatprep.subr.mxu0 0.0
  %1024 = vmatpush1.msra.mxu0 0.0
  %1025 = vmatprep.subr.mxu0 0.0
  %1026 = vmatpush1.msra.mxu0 0.0
  %1027 = vmatprep.subr.mxu0 0.0
  %1028 = vmatpush1.msra.mxu0 0.0
  %1029 = vmatprep.subr.mxu0 0.0
  %1030 = vmatpush1.msra.mxu0 0.0
  %1031 = vmatprep.subr.mxu0 0.0
  %1032 = vmatpush1.msra.mxu0 0.0
  %1033 = vmatprep.subr.mxu0 0.0
  %1034 = vmatpush1.msra.mxu0 0.0
  %1035 = vmatprep.subr.mxu0 0.0
  %1036 = vmatpush1.msra.mxu0 0.0
  %1037 = vmatprep.subr.mxu0 0.0
  %1038 = vmatpush1.msra.mxu0 0.0
  %1039 = vmatprep.subr.mxu0 0.0
  %1040 = vmatpush1.msra.mxu0 0.0
  %1041 = vmatprep.subr.mxu0 0.0
  %1042 = vmatpush1.msra.mxu0 0.0
  %1043 = vmatprep.mubr.f32.mxu0 0.0
  %1044 = vmatmul.mubr.f32.gmra.mrb[0].mxu0 %v974
  %v1045 = vpop.f32.mrb[0].mxu0
  %v1046 = vadd.f32 %v438, %v1045
  %v1047 = vpop.f32.mrb[0].mxu0
  %1048 = vdwg.mxu0
  %v1050 = vsel %vm59, %v31, 0
  %v1053 = vsel %vm63, %v39, 0
  %1055 = vmatprep.subr.mxu0 0.0
  %1056 = vmatpush1.msra.mxu0 %v1053
  %1057 = vmatprep.subr.mxu0 0.0
  %1058 = vmatpush1.msra.mxu0 0.0
  %1059 = vmatprep.subr.mxu0 0.0
  %1060 = vmatpush1.msra.mxu0 0.0
  %1061 = vmatprep.subr.mxu0 0.0
  %1062 = vmatpush1.msra.mxu0 0.0
  %1063 = vmatprep.subr.mxu0 0.0
  %1064 = vmatpush1.msra.mxu0 0.0
  %1065 = vmatprep.subr.mxu0 0.0
  %1066 = vmatpush1.msra.mxu0 0.0
  %1067 = vmatprep.subr.mxu0 0.0
  %1068 = vmatpush1.msra.mxu0 0.0
  %1069 = vmatprep.subr.mxu0 0.0
  %1070 = vmatpush1.msra.mxu0 0.0
  %1071 = vmatprep.subr.mxu0 0.0
  %1072 = vmatpush1.msra.mxu0 0.0
  %1073 = vmatprep.subr.mxu0 0.0
  %1074 = vmatpush1.msra.mxu0 0.0
  %1075 = vmatprep.subr.mxu0 0.0
  %1076 = vmatpush1.msra.mxu0 0.0
  %1077 = vmatprep.subr.mxu0 0.0
  %1078 = vmatpush1.msra.mxu0 0.0
  %1079 = vmatprep.subr.mxu0 0.0
  %1080 = vmatpush1.msra.mxu0 0.0
  %1081 = vmatprep.subr.mxu0 0.0
  %1082 = vmatpush1.msra.mxu0 0.0
  %1083 = vmatprep.subr.mxu0 0.0
  %1084 = vmatpush1.msra.mxu0 0.0
  %1085 = vmatprep.subr.mxu0 0.0
  %1086 = vmatpush1.msra.mxu0 0.0
  %1087 = vmatprep.subr.mxu0 0.0
  %1088 = vmatpush1.msra.mxu0 0.0
  %1089 = vmatprep.subr.mxu0 0.0
  %1090 = vmatpush1.msra.mxu0 0.0
  %1091 = vmatprep.subr.mxu0 0.0
  %1092 = vmatpush1.msra.mxu0 0.0
  %1093 = vmatprep.subr.mxu0 0.0
  %1094 = vmatpush1.msra.mxu0 0.0
  %1095 = vmatprep.subr.mxu0 0.0
  %1096 = vmatpush1.msra.mxu0 0.0
  %1097 = vmatprep.subr.mxu0 0.0
  %1098 = vmatpush1.msra.mxu0 0.0
  %1099 = vmatprep.subr.mxu0 0.0
  %1100 = vmatpush1.msra.mxu0 0.0
  %1101 = vmatprep.subr.mxu0 0.0
  %1102 = vmatpush1.msra.mxu0 0.0
  %1103 = vmatprep.subr.mxu0 0.0
  %1104 = vmatpush1.msra.mxu0 0.0
  %1105 = vmatprep.subr.mxu0 0.0
  %1106 = vmatpush1.msra.mxu0 0.0
  %1107 = vmatprep.subr.mxu0 0.0
  %1108 = vmatpush1.msra.mxu0 0.0
  %1109 = vmatprep.subr.mxu0 0.0
  %1110 = vmatpush1.msra.mxu0 0.0
  %1111 = vmatprep.subr.mxu0 0.0
  %1112 = vmatpush1.msra.mxu0 0.0
  %1113 = vmatprep.subr.mxu0 0.0
  %1114 = vmatpush1.msra.mxu0 0.0
  %1115 = vmatprep.subr.mxu0 0.0
  %1116 = vmatpush1.msra.mxu0 0.0
  %1117 = vmatprep.subr.mxu0 0.0
  %1118 = vmatpush1.msra.mxu0 0.0
  %1119 = vmatprep.mubr.f32.mxu0 0.0
  %1120 = vmatmul.mubr.f32.gmra.mrb[0].mxu0 %v1050
  %v1121 = vpop.f32.mrb[0].mxu0
  %v1122 = vadd.f32 %v514, %v1121
  %v1123 = vpop.f32.mrb[0].mxu0
  %1124 = vdwg.mxu0
  %v1126 = vsel %vm59, %v32, 0
  %v1129 = vsel %vm63, %v40, 0
  %1131 = vmatprep.subr.mxu0 0.0
  %1132 = vmatpush1.msra.mxu0 %v1129
  %1133 = vmatprep.subr.mxu0 0.0
  %1134 = vmatpush1.msra.mxu0 0.0
  %1135 = vmatprep.subr.mxu0 0.0
  %1136 = vmatpush1.msra.mxu0 0.0
  %1137 = vmatprep.subr.mxu0 0.0
  %1138 = vmatpush1.msra.mxu0 0.0
  %1139 = vmatprep.subr.mxu0 0.0
  %1140 = vmatpush1.msra.mxu0 0.0
  %1141 = vmatprep.subr.mxu0 0.0
  %1142 = vmatpush1.msra.mxu0 0.0
  %1143 = vmatprep.subr.mxu0 0.0
  %1144 = vmatpush1.msra.mxu0 0.0
  %1145 = vmatprep.subr.mxu0 0.0
  %1146 = vmatpush1.msra.mxu0 0.0
  %1147 = vmatprep.subr.mxu0 0.0
  %1148 = vmatpush1.msra.mxu0 0.0
  %1149 = vmatprep.subr.mxu0 0.0
  %1150 = vmatpush1.msra.mxu0 0.0
  %1151 = vmatprep.subr.mxu0 0.0
  %1152 = vmatpush1.msra.mxu0 0.0
  %1153 = vmatprep.subr.mxu0 0.0
  %1154 = vmatpush1.msra.mxu0 0.0
  %1155 = vmatprep.subr.mxu0 0.0
  %1156 = vmatpush1.msra.mxu0 0.0
  %1157 = vmatprep.subr.mxu0 0.0
  %1158 = vmatpush1.msra.mxu0 0.0
  %1159 = vmatprep.subr.mxu0 0.0
  %1160 = vmatpush1.msra.mxu0 0.0
  %1161 = vmatprep.subr.mxu0 0.0
  %1162 = vmatpush1.msra.mxu0 0.0
  %1163 = vmatprep.subr.mxu0 0.0
  %1164 = vmatpush1.msra.mxu0 0.0
  %1165 = vmatprep.subr.mxu0 0.0
  %1166 = vmatpush1.msra.mxu0 0.0
  %1167 = vmatprep.subr.mxu0 0.0
  %1168 = vmatpush1.msra.mxu0 0.0
  %1169 = vmatprep.subr.mxu0 0.0
  %1170 = vmatpush1.msra.mxu0 0.0
  %1171 = vmatprep.subr.mxu0 0.0
  %1172 = vmatpush1.msra.mxu0 0.0
  %1173 = vmatprep.subr.mxu0 0.0
  %1174 = vmatpush1.msra.mxu0 0.0
  %1175 = vmatprep.subr.mxu0 0.0
  %1176 = vmatpush1.msra.mxu0 0.0
  %1177 = vmatprep.subr.mxu0 0.0
  %1178 = vmatpush1.msra.mxu0 0.0
  %1179 = vmatprep.subr.mxu0 0.0
  %1180 = vmatpush1.msra.mxu0 0.0
  %1181 = vmatprep.subr.mxu0 0.0
  %1182 = vmatpush1.msra.mxu0 0.0
  %1183 = vmatprep.subr.mxu0 0.0
  %1184 = vmatpush1.msra.mxu0 0.0
  %1185 = vmatprep.subr.mxu0 0.0
  %1186 = vmatpush1.msra.mxu0 0.0
  %1187 = vmatprep.subr.mxu0 0.0
  %1188 = vmatpush1.msra.mxu0 0.0
  %1189 = vmatprep.subr.mxu0 0.0
  %1190 = vmatpush1.msra.mxu0 0.0
  %1191 = vmatprep.subr.mxu0 0.0
  %1192 = vmatpush1.msra.mxu0 0.0
  %1193 = vmatprep.subr.mxu0 0.0
  %1194 = vmatpush1.msra.mxu0 0.0
  %1195 = vmatprep.mubr.f32.mxu0 0.0
  %1196 = vmatmul.mubr.f32.gmra.mrb[0].mxu0 %v1126
  %v1197 = vpop.f32.mrb[0].mxu0
  %v1198 = vadd.f32 %v590, %v1197
  %v1199 = vpop.f32.mrb[0].mxu0
  %1200 = vdwg.mxu0
  %v1202 = vsel %vm59, %v33, 0
  %v1205 = vsel %vm63, %v41, 0
  %1207 = vmatprep.subr.mxu0 0.0
  %1208 = vmatpush1.msra.mxu0 %v1205
  %1209 = vmatprep.subr.mxu0 0.0
  %1210 = vmatpush1.msra.mxu0 0.0
  %1211 = vmatprep.subr.mxu0 0.0
  %1212 = vmatpush1.msra.mxu0 0.0
  %1213 = vmatprep.subr.mxu0 0.0
  %1214 = vmatpush1.msra.mxu0 0.0
  %1215 = vmatprep.subr.mxu0 0.0
  %1216 = vmatpush1.msra.mxu0 0.0
  %1217 = vmatprep.subr.mxu0 0.0
  %1218 = vmatpush1.msra.mxu0 0.0
  %1219 = vmatprep.subr.mxu0 0.0
  %1220 = vmatpush1.msra.mxu0 0.0
  %1221 = vmatprep.subr.mxu0 0.0
  %1222 = vmatpush1.msra.mxu0 0.0
  %1223 = vmatprep.subr.mxu0 0.0
  %1224 = vmatpush1.msra.mxu0 0.0
  %1225 = vmatprep.subr.mxu0 0.0
  %1226 = vmatpush1.msra.mxu0 0.0
  %1227 = vmatprep.subr.mxu0 0.0
  %1228 = vmatpush1.msra.mxu0 0.0
  %1229 = vmatprep.subr.mxu0 0.0
  %1230 = vmatpush1.msra.mxu0 0.0
  %1231 = vmatprep.subr.mxu0 0.0
  %1232 = vmatpush1.msra.mxu0 0.0
  %1233 = vmatprep.subr.mxu0 0.0
  %1234 = vmatpush1.msra.mxu0 0.0
  %1235 = vmatprep.subr.mxu0 0.0
  %1236 = vmatpush1.msra.mxu0 0.0
  %1237 = vmatprep.subr.mxu0 0.0
  %1238 = vmatpush1.msra.mxu0 0.0
  %1239 = vmatprep.subr.mxu0 0.0
  %1240 = vmatpush1.msra.mxu0 0.0
  %1241 = vmatprep.subr.mxu0 0.0
  %1242 = vmatpush1.msra.mxu0 0.0
  %1243 = vmatprep.subr.mxu0 0.0
  %1244 = vmatpush1.msra.mxu0 0.0
  %1245 = vmatprep.subr.mxu0 0.0
  %1246 = vmatpush1.msra.mxu0 0.0
  %1247 = vmatprep.subr.mxu0 0.0
  %1248 = vmatpush1.msra.mxu0 0.0
  %1249 = vmatprep.subr.mxu0 0.0
  %1250 = vmatpush1.msra.mxu0 0.0
  %1251 = vmatprep.subr.mxu0 0.0
  %1252 = vmatpush1.msra.mxu0 0.0
  %1253 = vmatprep.subr.mxu0 0.0
  %1254 = vmatpush1.msra.mxu0 0.0
  %1255 = vmatprep.subr.mxu0 0.0
  %1256 = vmatpush1.msra.mxu0 0.0
  %1257 = vmatprep.subr.mxu0 0.0
  %1258 = vmatpush1.msra.mxu0 0.0
  %1259 = vmatprep.subr.mxu0 0.0
  %1260 = vmatpush1.msra.mxu0 0.0
  %1261 = vmatprep.subr.mxu0 0.0
  %1262 = vmatpush1.msra.mxu0 0.0
  %1263 = vmatprep.subr.mxu0 0.0
  %1264 = vmatpush1.msra.mxu0 0.0
  %1265 = vmatprep.subr.mxu0 0.0
  %1266 = vmatpush1.msra.mxu0 0.0
  %1267 = vmatprep.subr.mxu0 0.0
  %1268 = vmatpush1.msra.mxu0 0.0
  %1269 = vmatprep.subr.mxu0 0.0
  %1270 = vmatpush1.msra.mxu0 0.0
  %1271 = vmatprep.mubr.f32.mxu0 0.0
  %1272 = vmatmul.mubr.f32.gmra.mrb[0].mxu0 %v1202
  %v1273 = vpop.f32.mrb[0].mxu0
  %v1274 = vadd.f32 %v666, %v1273
  %v1275 = vpop.f32.mrb[0].mxu0
  %1276 = vdwg.mxu0
  %v1277 = vld [vmem:[%s2] sm:$0x1]
  %v1278 = vld [vmem:[%s2 + $0x4] sm:$0x1]
  %v1279 = vld [vmem:[%s2 + $0x8] sm:$0x1]
  %v1280 = vld [vmem:[%s2 + $0xc] sm:$0x1]
  %v1281 = vld [vmem:[%s2 + $0x10] sm:$0x1]
  %v1282 = vld [vmem:[%s2 + $0x14] sm:$0x1]
  %v1283 = vld [vmem:[%s2 + $0x18] sm:$0x1]
  %v1284 = vld [vmem:[%s2 + $0x1c] sm:$0x1]
  %v1285 = vlaneseq
  %v1286 = vshrl.u32 %v1285, 7
  %v1287 = vsub.s32 0, %v1286
  %v1288 = vrot.slane %v1277, %v1287
  %v1289 = vlaneseq
  %v1290 = vshrl.u32 %v1289, 7
  %v1291 = vsub.s32 0, %v1290
  %v1292 = vrot.slane %v1278, %v1291
  %v1293 = vlaneseq
  %v1294 = vshrl.u32 %v1293, 7
  %v1295 = vsub.s32 0, %v1294
  %v1296 = vrot.slane %v1279, %v1295
  %v1297 = vlaneseq
  %v1298 = vshrl.u32 %v1297, 7
  %v1299 = vsub.s32 0, %v1298
  %v1300 = vrot.slane %v1280, %v1299
  %v1301 = vlaneseq
  %v1302 = vshrl.u32 %v1301, 7
  %v1303 = vsub.s32 0, %v1302
  %v1304 = vrot.slane %v1281, %v1303
  %v1305 = vlaneseq
  %v1306 = vshrl.u32 %v1305, 7
  %v1307 = vsub.s32 0, %v1306
  %v1308 = vrot.slane %v1282, %v1307
  %v1309 = vlaneseq
  %v1310 = vshrl.u32 %v1309, 7
  %v1311 = vsub.s32 0, %v1310
  %v1312 = vrot.slane %v1283, %v1311
  %v1313 = vlaneseq
  %v1314 = vshrl.u32 %v1313, 7
  %v1315 = vsub.s32 0, %v1314
  %v1316 = vrot.slane %v1284, %v1315
  %v1317 = vadd.f32 %v742, %v1288
  %v1318 = vadd.f32 %v818, %v1292
  %v1319 = vadd.f32 %v894, %v1296
  %v1320 = vadd.f32 %v970, %v1300
  %v1321 = vadd.f32 %v1046, %v1304
  %v1322 = vadd.f32 %v1122, %v1308
  %v1323 = vadd.f32 %v1198, %v1312
  %v1324 = vadd.f32 %v1274, %v1316
  %v1325 = vmax.f32 %v1317, 0.0
  %v1326 = vmax.f32 %v1318, 0.0
  %v1327 = vmax.f32 %v1319, 0.0
  %v1328 = vmax.f32 %v1320, 0.0
  %v1329 = vmax.f32 %v1321, 0.0
  %v1330 = vmax.f32 %v1322, 0.0
  %v1331 = vmax.f32 %v1323, 0.0
  %v1332 = vmax.f32 %v1324, 0.0
  %v1333 = vld [vmem:[%s2 + $0x1] sm:$0x1]
  %v1334 = vld [vmem:[%s2 + $0x5] sm:$0x1]
  %v1335 = vld [vmem:[%s2 + $0x9] sm:$0x1]
  %v1336 = vld [vmem:[%s2 + $0xd] sm:$0x1]
  %v1337 = vld [vmem:[%s2 + $0x11] sm:$0x1]
  %v1338 = vld [vmem:[%s2 + $0x15] sm:$0x1]
  %v1339 = vld [vmem:[%s2 + $0x19] sm:$0x1]
  %v1340 = vld [vmem:[%s2 + $0x1d] sm:$0x1]
  %v1341 = vlaneseq
  %v1342 = vshrl.u32 %v1341, 7
  %v1343 = vsub.s32 0, %v1342
  %v1344 = vrot.slane %v1333, %v1343
  %v1345 = vlaneseq
  %v1346 = vshrl.u32 %v1345, 7
  %v1347 = vsub.s32 0, %v1346
  %v1348 = vrot.slane %v1334, %v1347
  %v1349 = vlaneseq
  %v1350 = vshrl.u32 %v1349, 7
  %v1351 = vsub.s32 0, %v1350
  %v1352 = vrot.slane %v1335, %v1351
  %v1353 = vlaneseq
  %v1354 = vshrl.u32 %v1353, 7
  %v1355 = vsub.s32 0, %v1354
  %v1356 = vrot.slane %v1336, %v1355
  %v1357 = vlaneseq
  %v1358 = vshrl.u32 %v1357, 7
  %v1359 = vsub.s32 0, %v1358
  %v1360 = vrot.slane %v1337, %v1359
  %v1361 = vlaneseq
  %v1362 = vshrl.u32 %v1361, 7
  %v1363 = vsub.s32 0, %v1362
  %v1364 = vrot.slane %v1338, %v1363
  %v1365 = vlaneseq
  %v1366 = vshrl.u32 %v1365, 7
  %v1367 = vsub.s32 0, %v1366
  %v1368 = vrot.slane %v1339, %v1367
  %v1369 = vlaneseq
  %v1370 = vshrl.u32 %v1369, 7
  %v1371 = vsub.s32 0, %v1370
  %v1372 = vrot.slane %v1340, %v1371
  %v1373 = vmul.f32 %v1325, %v1344
  %v1374 = vmul.f32 %v1326, %v1348
  %v1375 = vmul.f32 %v1327, %v1352
  %v1376 = vmul.f32 %v1328, %v1356
  %v1377 = vmul.f32 %v1329, %v1360
  %v1378 = vmul.f32 %v1330, %v1364
  %v1379 = vmul.f32 %v1331, %v1368
  %v1380 = vmul.f32 %v1332, %v1372
  %v1381 = vld [vmem:[%s2 + $0x2] sm:$0x1]
  %v1382 = vld [vmem:[%s2 + $0x6] sm:$0x1]
  %v1383 = vld [vmem:[%s2 + $0xa] sm:$0x1]
  %v1384 = vld [vmem:[%s2 + $0xe] sm:$0x1]
  %v1385 = vld [vmem:[%s2 + $0x12] sm:$0x1]
  %v1386 = vld [vmem:[%s2 + $0x16] sm:$0x1]
  %v1387 = vld [vmem:[%s2 + $0x1a] sm:$0x1]
  %v1388 = vld [vmem:[%s2 + $0x1e] sm:$0x1]
  %v1389 = vlaneseq
  %v1390 = vshrl.u32 %v1389, 7
  %v1391 = vsub.s32 0, %v1390
  %v1392 = vrot.slane %v1381, %v1391
  %v1393 = vlaneseq
  %v1394 = vshrl.u32 %v1393, 7
  %v1395 = vsub.s32 0, %v1394
  %v1396 = vrot.slane %v1382, %v1395
  %v1397 = vlaneseq
  %v1398 = vshrl.u32 %v1397, 7
  %v1399 = vsub.s32 0, %v1398
  %v1400 = vrot.slane %v1383, %v1399
  %v1401 = vlaneseq
  %v1402 = vshrl.u32 %v1401, 7
  %v1403 = vsub.s32 0, %v1402
  %v1404 = vrot.slane %v1384, %v1403
  %v1405 = vlaneseq
  %v1406 = vshrl.u32 %v1405, 7
  %v1407 = vsub.s32 0, %v1406
  %v1408 = vrot.slane %v1385, %v1407
  %v1409 = vlaneseq
  %v1410 = vshrl.u32 %v1409, 7
  %v1411 = vsub.s32 0, %v1410
  %v1412 = vrot.slane %v1386, %v1411
  %v1413 = vlaneseq
  %v1414 = vshrl.u32 %v1413, 7
  %v1415 = vsub.s32 0, %v1414
  %v1416 = vrot.slane %v1387, %v1415
  %v1417 = vlaneseq
  %v1418 = vshrl.u32 %v1417, 7
  %v1419 = vsub.s32 0, %v1418
  %v1420 = vrot.slane %v1388, %v1419
  %v1421 = vadd.f32 %v1373, %v1392
  %v1422 = vadd.f32 %v1374, %v1396
  %v1423 = vadd.f32 %v1375, %v1400
  %v1424 = vadd.f32 %v1376, %v1404
  %v1425 = vadd.f32 %v1377, %v1408
  %v1426 = vadd.f32 %v1378, %v1412
  %v1427 = vadd.f32 %v1379, %v1416
  %v1428 = vadd.f32 %v1380, %v1420
  %vm1429 = vcmask 63488
  %1430 = vst.msk [vmem:[#allocation2] sm:$0x7f] %vm1429, %v1421
  %1431 = vst.msk [vmem:[#allocation2 + $0x8] sm:$0x7f] %vm1429, %v1422
  %1432 = vst.msk [vmem:[#allocation2 + $0x10] sm:$0x7f] %vm1429, %v1423
  %1433 = vst.msk [vmem:[#allocation2 + $0x18] sm:$0x7f] %vm1429, %v1424
  %1434 = vst.msk [vmem:[#allocation2 + $0x20] sm:$0x7f] %vm1429, %v1425
  %1435 = vst.msk [vmem:[#allocation2 + $0x28] sm:$0x7f] %vm1429, %v1426
  %1436 = vst.msk [vmem:[#allocation2 + $0x30] sm:$0x7f] %vm1429, %v1427
  %1437 = vst.msk [vmem:[#allocation2 + $0x38] sm:$0x7f] %vm1429, %v1428
  %v1438 = vld [vmem:[#allocation2] sm:$0x1f]
  %v1439 = vld [vmem:[#allocation2 + $0x8] sm:$0x1f]
  %v1440 = vld [vmem:[#allocation2 + $0x10] sm:$0x1f]
  %v1441 = vld [vmem:[#allocation2 + $0x18] sm:$0x1f]
  %v1442 = vld [vmem:[#allocation2 + $0x20] sm:$0x1f]
  %v1443 = vld [vmem:[#allocation2 + $0x28] sm:$0x1f]
  %v1444 = vld [vmem:[#allocation2 + $0x30] sm:$0x1f]
  %v1445 = vld [vmem:[#allocation2 + $0x38] sm:$0x1f]
  %v1446 = vld [vmem:[%s3] sm:$0xff]
  %v1447 = vld [vmem:[%s3 + $0x8] sm:$0xff]
  %v1448 = vld [vmem:[%s3 + $0x10] sm:$0xff]
  %v1449 = vld [vmem:[%s3 + $0x18] sm:$0xff]
  %v1450 = vld [vmem:[%s3 + $0x20] sm:$0xff]
  %v1451 = vld [vmem:[%s3 + $0x28] sm:$0xff]
  %v1452 = vld [vmem:[%s3 + $0x30] sm:$0xff]
  %v1453 = vld [vmem:[%s3 + $0x38] sm:$0xff]
  %v1454 = vld [vmem:[#allocation2 + $0x1] sm:$0x1f]
  %v1455 = vld [vmem:[#allocation2 + $0x9] sm:$0x1f]
  %v1456 = vld [vmem:[#allocation2 + $0x11] sm:$0x1f]
  %v1457 = vld [vmem:[#allocation2 + $0x19] sm:$0x1f]
  %v1458 = vld [vmem:[#allocation2 + $0x21] sm:$0x1f]
  %v1459 = vld [vmem:[#allocation2 + $0x29] sm:$0x1f]
  %v1460 = vld [vmem:[#allocation2 + $0x31] sm:$0x1f]
  %v1461 = vld [vmem:[#allocation2 + $0x39] sm:$0x1f]
  %s1462 = scalar_lea.vmem %s3, 64
  %v1463 = vld [vmem:[%s1462] sm:$0xff]
  %v1464 = vld [vmem:[%s1462 + $0x8] sm:$0xff]
  %v1465 = vld [vmem:[%s1462 + $0x10] sm:$0xff]
  %v1466 = vld [vmem:[%s1462 + $0x18] sm:$0xff]
  %v1467 = vld [vmem:[%s1462 + $0x20] sm:$0xff]
  %v1468 = vld [vmem:[%s1462 + $0x28] sm:$0xff]
  %v1469 = vld [vmem:[%s1462 + $0x30] sm:$0xff]
  %v1470 = vld [vmem:[%s1462 + $0x38] sm:$0xff]
  %vm1471 = vcmask 64512
  %v1473 = vsel %vm1471, %v1454, 0
  %1475 = vmatprep.subr.mxu0 0.0
  %1476 = vmatpush1.msra.mxu0 %v1463
  %1477 = vmatprep.subr.mxu0 0.0
  %1478 = vmatpush1.msra.mxu0 0.0
  %1479 = vmatprep.subr.mxu0 0.0
  %1480 = vmatpush1.msra.mxu0 0.0
  %1481 = vmatprep.subr.mxu0 0.0
  %1482 = vmatpush1.msra.mxu0 0.0
  %1483 = vmatprep.subr.mxu0 0.0
  %1484 = vmatpush1.msra.mxu0 0.0
  %1485 = vmatprep.subr.mxu0 0.0
  %1486 = vmatpush1.msra.mxu0 0.0
  %1487 = vmatprep.subr.mxu0 0.0
  %1488 = vmatpush1.msra.mxu0 0.0
  %1489 = vmatprep.subr.mxu0 0.0
  %1490 = vmatpush1.msra.mxu0 0.0
  %1491 = vmatprep.subr.mxu0 0.0
  %1492 = vmatpush1.msra.mxu0 0.0
  %1493 = vmatprep.subr.mxu0 0.0
  %1494 = vmatpush1.msra.mxu0 0.0
  %1495 = vmatprep.subr.mxu0 0.0
  %1496 = vmatpush1.msra.mxu0 0.0
  %1497 = vmatprep.subr.mxu0 0.0
  %1498 = vmatpush1.msra.mxu0 0.0
  %1499 = vmatprep.subr.mxu0 0.0
  %1500 = vmatpush1.msra.mxu0 0.0
  %1501 = vmatprep.subr.mxu0 0.0
  %1502 = vmatpush1.msra.mxu0 0.0
  %1503 = vmatprep.subr.mxu0 0.0
  %1504 = vmatpush1.msra.mxu0 0.0
  %1505 = vmatprep.subr.mxu0 0.0
  %1506 = vmatpush1.msra.mxu0 0.0
  %1507 = vmatprep.subr.mxu0 0.0
  %1508 = vmatpush1.msra.mxu0 0.0
  %1509 = vmatprep.subr.mxu0 0.0
  %1510 = vmatpush1.msra.mxu0 0.0
  %1511 = vmatprep.subr.mxu0 0.0
  %1512 = vmatpush1.msra.mxu0 0.0
  %1513 = vmatprep.subr.mxu0 0.0
  %1514 = vmatpush1.msra.mxu0 0.0
  %1515 = vmatprep.subr.mxu0 0.0
  %1516 = vmatpush1.msra.mxu0 0.0
  %1517 = vmatprep.subr.mxu0 0.0
  %1518 = vmatpush1.msra.mxu0 0.0
  %1519 = vmatprep.subr.mxu0 0.0
  %1520 = vmatpush1.msra.mxu0 0.0
  %1521 = vmatprep.subr.mxu0 0.0
  %1522 = vmatpush1.msra.mxu0 0.0
  %1523 = vmatprep.subr.mxu0 0.0
  %1524 = vmatpush1.msra.mxu0 0.0
  %1525 = vmatprep.subr.mxu0 0.0
  %1526 = vmatpush1.msra.mxu0 0.0
  %1527 = vmatprep.subr.mxu0 0.0
  %1528 = vmatpush1.msra.mxu0 0.0
  %1529 = vmatprep.subr.mxu0 0.0
  %1530 = vmatpush1.msra.mxu0 0.0
  %1531 = vmatprep.subr.mxu0 0.0
  %1532 = vmatpush1.msra.mxu0 0.0
  %1533 = vmatprep.subr.mxu0 0.0
  %1534 = vmatpush1.msra.mxu0 0.0
  %1535 = vmatprep.subr.mxu0 0.0
  %1536 = vmatpush1.msra.mxu0 0.0
  %1537 = vmatprep.subr.mxu0 0.0
  %1538 = vmatpush1.msra.mxu0 0.0
  %1539 = vmatprep.mubr.f32.mxu0 0.0
  %1540 = vmatmul.mubr.f32.gmra.mrb[0].mxu0 %v1473
  %v1541 = vpop.f32.mrb[0].mxu0
  %v1542 = vadd.f32 0.0, %v1541
  %v1543 = vpop.f32.mrb[0].mxu0
  %1544 = vdwg.mxu0
  %v1546 = vsel %vm1471, %v1455, 0
  %1548 = vmatprep.subr.mxu0 0.0
  %1549 = vmatpush1.msra.mxu0 %v1464
  %1550 = vmatprep.subr.mxu0 0.0
  %1551 = vmatpush1.msra.mxu0 0.0
  %1552 = vmatprep.subr.mxu0 0.0
  %1553 = vmatpush1.msra.mxu0 0.0
  %1554 = vmatprep.subr.mxu0 0.0
  %1555 = vmatpush1.msra.mxu0 0.0
  %1556 = vmatprep.subr.mxu0 0.0
  %1557 = vmatpush1.msra.mxu0 0.0
  %1558 = vmatprep.subr.mxu0 0.0
  %1559 = vmatpush1.msra.mxu0 0.0
  %1560 = vmatprep.subr.mxu0 0.0
  %1561 = vmatpush1.msra.mxu0 0.0
  %1562 = vmatprep.subr.mxu0 0.0
  %1563 = vmatpush1.msra.mxu0 0.0
  %1564 = vmatprep.subr.mxu0 0.0
  %1565 = vmatpush1.msra.mxu0 0.0
  %1566 = vmatprep.subr.mxu0 0.0
  %1567 = vmatpush1.msra.mxu0 0.0
  %1568 = vmatprep.subr.mxu0 0.0
  %1569 = vmatpush1.msra.mxu0 0.0
  %1570 = vmatprep.subr.mxu0 0.0
  %1571 = vmatpush1.msra.mxu0 0.0
  %1572 = vmatprep.subr.mxu0 0.0
  %1573 = vmatpush1.msra.mxu0 0.0
  %1574 = vmatprep.subr.mxu0 0.0
  %1575 = vmatpush1.msra.mxu0 0.0
  %1576 = vmatprep.subr.mxu0 0.0
  %1577 = vmatpush1.msra.mxu0 0.0
  %1578 = vmatprep.subr.mxu0 0.0
  %1579 = vmatpush1.msra.mxu0 0.0
  %1580 = vmatprep.subr.mxu0 0.0
  %1581 = vmatpush1.msra.mxu0 0.0
  %1582 = vmatprep.subr.mxu0 0.0
  %1583 = vmatpush1.msra.mxu0 0.0
  %1584 = vmatprep.subr.mxu0 0.0
  %1585 = vmatpush1.msra.mxu0 0.0
  %1586 = vmatprep.subr.mxu0 0.0
  %1587 = vmatpush1.msra.mxu0 0.0
  %1588 = vmatprep.subr.mxu0 0.0
  %1589 = vmatpush1.msra.mxu0 0.0
  %1590 = vmatprep.subr.mxu0 0.0
  %1591 = vmatpush1.msra.mxu0 0.0
  %1592 = vmatprep.subr.mxu0 0.0
  %1593 = vmatpush1.msra.mxu0 0.0
  %1594 = vmatprep.subr.mxu0 0.0
  %1595 = vmatpush1.msra.mxu0 0.0
  %1596 = vmatprep.subr.mxu0 0.0
  %1597 = vmatpush1.msra.mxu0 0.0
  %1598 = vmatprep.subr.mxu0 0.0
  %1599 = vmatpush1.msra.mxu0 0.0
  %1600 = vmatprep.subr.mxu0 0.0
  %1601 = vmatpush1.msra.mxu0 0.0
  %1602 = vmatprep.subr.mxu0 0.0
  %1603 = vmatpush1.msra.mxu0 0.0
  %1604 = vmatprep.subr.mxu0 0.0
  %1605 = vmatpush1.msra.mxu0 0.0
  %1606 = vmatprep.subr.mxu0 0.0
  %1607 = vmatpush1.msra.mxu0 0.0
  %1608 = vmatprep.subr.mxu0 0.0
  %1609 = vmatpush1.msra.mxu0 0.0
  %1610 = vmatprep.subr.mxu0 0.0
  %1611 = vmatpush1.msra.mxu0 0.0
  %1612 = vmatprep.mubr.f32.mxu0 0.0
  %1613 = vmatmul.mubr.f32.gmra.mrb[0].mxu0 %v1546
  %v1614 = vpop.f32.mrb[0].mxu0
  %v1615 = vadd.f32 0.0, %v1614
  %v1616 = vpop.f32.mrb[0].mxu0
  %1617 = vdwg.mxu0
  %v1619 = vsel %vm1471, %v1456, 0
  %1621 = vmatprep.subr.mxu0 0.0
  %1622 = vmatpush1.msra.mxu0 %v1465
  %1623 = vmatprep.subr.mxu0 0.0
  %1624 = vmatpush1.msra.mxu0 0.0
  %1625 = vmatprep.subr.mxu0 0.0
  %1626 = vmatpush1.msra.mxu0 0.0
  %1627 = vmatprep.subr.mxu0 0.0
  %1628 = vmatpush1.msra.mxu0 0.0
  %1629 = vmatprep.subr.mxu0 0.0
  %1630 = vmatpush1.msra.mxu0 0.0
  %1631 = vmatprep.subr.mxu0 0.0
  %1632 = vmatpush1.msra.mxu0 0.0
  %1633 = vmatprep.subr.mxu0 0.0
  %1634 = vmatpush1.msra.mxu0 0.0
  %1635 = vmatprep.subr.mxu0 0.0
  %1636 = vmatpush1.msra.mxu0 0.0
  %1637 = vmatprep.subr.mxu0 0.0
  %1638 = vmatpush1.msra.mxu0 0.0
  %1639 = vmatprep.subr.mxu0 0.0
  %1640 = vmatpush1.msra.mxu0 0.0
  %1641 = vmatprep.subr.mxu0 0.0
  %1642 = vmatpush1.msra.mxu0 0.0
  %1643 = vmatprep.subr.mxu0 0.0
  %1644 = vmatpush1.msra.mxu0 0.0
  %1645 = vmatprep.subr.mxu0 0.0
  %1646 = vmatpush1.msra.mxu0 0.0
  %1647 = vmatprep.subr.mxu0 0.0
  %1648 = vmatpush1.msra.mxu0 0.0
  %1649 = vmatprep.subr.mxu0 0.0
  %1650 = vmatpush1.msra.mxu0 0.0
  %1651 = vmatprep.subr.mxu0 0.0
  %1652 = vmatpush1.msra.mxu0 0.0
  %1653 = vmatprep.subr.mxu0 0.0
  %1654 = vmatpush1.msra.mxu0 0.0
  %1655 = vmatprep.subr.mxu0 0.0
  %1656 = vmatpush1.msra.mxu0 0.0
  %1657 = vmatprep.subr.mxu0 0.0
  %1658 = vmatpush1.msra.mxu0 0.0
  %1659 = vmatprep.subr.mxu0 0.0
  %1660 = vmatpush1.msra.mxu0 0.0
  %1661 = vmatprep.subr.mxu0 0.0
  %1662 = vmatpush1.msra.mxu0 0.0
  %1663 = vmatprep.subr.mxu0 0.0
  %1664 = vmatpush1.msra.mxu0 0.0
  %1665 = vmatprep.subr.mxu0 0.0
  %1666 = vmatpush1.msra.mxu0 0.0
  %1667 = vmatprep.subr.mxu0 0.0
  %1668 = vmatpush1.msra.mxu0 0.0
  %1669 = vmatprep.subr.mxu0 0.0
  %1670 = vmatpush1.msra.mxu0 0.0
  %1671 = vmatprep.subr.mxu0 0.0
  %1672 = vmatpush1.msra.mxu0 0.0
  %1673 = vmatprep.subr.mxu0 0.0
  %1674 = vmatpush1.msra.mxu0 0.0
  %1675 = vmatprep.subr.mxu0 0.0
  %1676 = vmatpush1.msra.mxu0 0.0
  %1677 = vmatprep.subr.mxu0 0.0
  %1678 = vmatpush1.msra.mxu0 0.0
  %1679 = vmatprep.subr.mxu0 0.0
  %1680 = vmatpush1.msra.mxu0 0.0
  %1681 = vmatprep.subr.mxu0 0.0
  %1682 = vmatpush1.msra.mxu0 0.0
  %1683 = vmatprep.subr.mxu0 0.0
  %1684 = vmatpush1.msra.mxu0 0.0
  %1685 = vmatprep.mubr.f32.mxu0 0.0
  %1686 = vmatmul.mubr.f32.gmra.mrb[0].mxu0 %v1619
  %v1687 = vpop.f32.mrb[0].mxu0
  %v1688 = vadd.f32 0.0, %v1687
  %v1689 = vpop.f32.mrb[0].mxu0
  %1690 = vdwg.mxu0
  %v1692 = vsel %vm1471, %v1457, 0
  %1694 = vmatprep.subr.mxu0 0.0
  %1695 = vmatpush1.msra.mxu0 %v1466
  %1696 = vmatprep.subr.mxu0 0.0
  %1697 = vmatpush1.msra.mxu0 0.0
  %1698 = vmatprep.subr.mxu0 0.0
  %1699 = vmatpush1.msra.mxu0 0.0
  %1700 = vmatprep.subr.mxu0 0.0
  %1701 = vmatpush1.msra.mxu0 0.0
  %1702 = vmatprep.subr.mxu0 0.0
  %1703 = vmatpush1.msra.mxu0 0.0
  %1704 = vmatprep.subr.mxu0 0.0
  %1705 = vmatpush1.msra.mxu0 0.0
  %1706 = vmatprep.subr.mxu0 0.0
  %1707 = vmatpush1.msra.mxu0 0.0
  %1708 = vmatprep.subr.mxu0 0.0
  %1709 = vmatpush1.msra.mxu0 0.0
  %1710 = vmatprep.subr.mxu0 0.0
  %1711 = vmatpush1.msra.mxu0 0.0
  %1712 = vmatprep.subr.mxu0 0.0
  %1713 = vmatpush1.msra.mxu0 0.0
  %1714 = vmatprep.subr.mxu0 0.0
  %1715 = vmatpush1.msra.mxu0 0.0
  %1716 = vmatprep.subr.mxu0 0.0
  %1717 = vmatpush1.msra.mxu0 0.0
  %1718 = vmatprep.subr.mxu0 0.0
  %1719 = vmatpush1.msra.mxu0 0.0
  %1720 = vmatprep.subr.mxu0 0.0
  %1721 = vmatpush1.msra.mxu0 0.0
  %1722 = vmatprep.subr.mxu0 0.0
  %1723 = vmatpush1.msra.mxu0 0.0
  %1724 = vmatprep.subr.mxu0 0.0
  %1725 = vmatpush1.msra.mxu0 0.0
  %1726 = vmatprep.subr.mxu0 0.0
  %1727 = vmatpush1.msra.mxu0 0.0
  %1728 = vmatprep.subr.mxu0 0.0
  %1729 = vmatpush1.msra.mxu0 0.0
  %1730 = vmatprep.subr.mxu0 0.0
  %1731 = vmatpush1.msra.mxu0 0.0
  %1732 = vmatprep.subr.mxu0 0.0
  %1733 = vmatpush1.msra.mxu0 0.0
  %1734 = vmatprep.subr.mxu0 0.0
  %1735 = vmatpush1.msra.mxu0 0.0
  %1736 = vmatprep.subr.mxu0 0.0
  %1737 = vmatpush1.msra.mxu0 0.0
  %1738 = vmatprep.subr.mxu0 0.0
  %1739 = vmatpush1.msra.mxu0 0.0
  %1740 = vmatprep.subr.mxu0 0.0
  %1741 = vmatpush1.msra.mxu0 0.0
  %1742 = vmatprep.subr.mxu0 0.0
  %1743 = vmatpush1.msra.mxu0 0.0
  %1744 = vmatprep.subr.mxu0 0.0
  %1745 = vmatpush1.msra.mxu0 0.0
  %1746 = vmatprep.subr.mxu0 0.0
  %1747 = vmatpush1.msra.mxu0 0.0
  %1748 = vmatprep.subr.mxu0 0.0
  %1749 = vmatpush1.msra.mxu0 0.0
  %1750 = vmatprep.subr.mxu0 0.0
  %1751 = vmatpush1.msra.mxu0 0.0
  %1752 = vmatprep.subr.mxu0 0.0
  %1753 = vmatpush1.msra.mxu0 0.0
  %1754 = vmatprep.subr.mxu0 0.0
  %1755 = vmatpush1.msra.mxu0 0.0
  %1756 = vmatprep.subr.mxu0 0.0
  %1757 = vmatpush1.msra.mxu0 0.0
  %1758 = vmatprep.mubr.f32.mxu0 0.0
  %1759 = vmatmul.mubr.f32.gmra.mrb[0].mxu0 %v1692
  %v1760 = vpop.f32.mrb[0].mxu0
  %v1761 = vadd.f32 0.0, %v1760
  %v1762 = vpop.f32.mrb[0].mxu0
  %1763 = vdwg.mxu0
  %v1765 = vsel %vm1471, %v1458, 0
  %1767 = vmatprep.subr.mxu0 0.0
  %1768 = vmatpush1.msra.mxu0 %v1467
  %1769 = vmatprep.subr.mxu0 0.0
  %1770 = vmatpush1.msra.mxu0 0.0
  %1771 = vmatprep.subr.mxu0 0.0
  %1772 = vmatpush1.msra.mxu0 0.0
  %1773 = vmatprep.subr.mxu0 0.0
  %1774 = vmatpush1.msra.mxu0 0.0
  %1775 = vmatprep.subr.mxu0 0.0
  %1776 = vmatpush1.msra.mxu0 0.0
  %1777 = vmatprep.subr.mxu0 0.0
  %1778 = vmatpush1.msra.mxu0 0.0
  %1779 = vmatprep.subr.mxu0 0.0
  %1780 = vmatpush1.msra.mxu0 0.0
  %1781 = vmatprep.subr.mxu0 0.0
  %1782 = vmatpush1.msra.mxu0 0.0
  %1783 = vmatprep.subr.mxu0 0.0
  %1784 = vmatpush1.msra.mxu0 0.0
  %1785 = vmatprep.subr.mxu0 0.0
  %1786 = vmatpush1.msra.mxu0 0.0
  %1787 = vmatprep.subr.mxu0 0.0
  %1788 = vmatpush1.msra.mxu0 0.0
  %1789 = vmatprep.subr.mxu0 0.0
  %1790 = vmatpush1.msra.mxu0 0.0
  %1791 = vmatprep.subr.mxu0 0.0
  %1792 = vmatpush1.msra.mxu0 0.0
  %1793 = vmatprep.subr.mxu0 0.0
  %1794 = vmatpush1.msra.mxu0 0.0
  %1795 = vmatprep.subr.mxu0 0.0
  %1796 = vmatpush1.msra.mxu0 0.0
  %1797 = vmatprep.subr.mxu0 0.0
  %1798 = vmatpush1.msra.mxu0 0.0
  %1799 = vmatprep.subr.mxu0 0.0
  %1800 = vmatpush1.msra.mxu0 0.0
  %1801 = vmatprep.subr.mxu0 0.0
  %1802 = vmatpush1.msra.mxu0 0.0
  %1803 = vmatprep.subr.mxu0 0.0
  %1804 = vmatpush1.msra.mxu0 0.0
  %1805 = vmatprep.subr.mxu0 0.0
  %1806 = vmatpush1.msra.mxu0 0.0
  %1807 = vmatprep.subr.mxu0 0.0
  %1808 = vmatpush1.msra.mxu0 0.0
  %1809 = vmatprep.subr.mxu0 0.0
  %1810 = vmatpush1.msra.mxu0 0.0
  %1811 = vmatprep.subr.mxu0 0.0
  %1812 = vmatpush1.msra.mxu0 0.0
  %1813 = vmatprep.subr.mxu0 0.0
  %1814 = vmatpush1.msra.mxu0 0.0
  %1815 = vmatprep.subr.mxu0 0.0
  %1816 = vmatpush1.msra.mxu0 0.0
  %1817 = vmatprep.subr.mxu0 0.0
  %1818 = vmatpush1.msra.mxu0 0.0
  %1819 = vmatprep.subr.mxu0 0.0
  %1820 = vmatpush1.msra.mxu0 0.0
  %1821 = vmatprep.subr.mxu0 0.0
  %1822 = vmatpush1.msra.mxu0 0.0
  %1823 = vmatprep.subr.mxu0 0.0
  %1824 = vmatpush1.msra.mxu0 0.0
  %1825 = vmatprep.subr.mxu0 0.0
  %1826 = vmatpush1.msra.mxu0 0.0
  %1827 = vmatprep.subr.mxu0 0.0
  %1828 = vmatpush1.msra.mxu0 0.0
  %1829 = vmatprep.subr.mxu0 0.0
  %1830 = vmatpush1.msra.mxu0 0.0
  %1831 = vmatprep.mubr.f32.mxu0 0.0
  %1832 = vmatmul.mubr.f32.gmra.mrb[0].mxu0 %v1765
  %v1833 = vpop.f32.mrb[0].mxu0
  %v1834 = vadd.f32 0.0, %v1833
  %v1835 = vpop.f32.mrb[0].mxu0
  %1836 = vdwg.mxu0
  %v1838 = vsel %vm1471, %v1459, 0
  %1840 = vmatprep.subr.mxu0 0.0
  %1841 = vmatpush1.msra.mxu0 %v1468
  %1842 = vmatprep.subr.mxu0 0.0
  %1843 = vmatpush1.msra.mxu0 0.0
  %1844 = vmatprep.subr.mxu0 0.0
  %1845 = vmatpush1.msra.mxu0 0.0
  %1846 = vmatprep.subr.mxu0 0.0
  %1847 = vmatpush1.msra.mxu0 0.0
  %1848 = vmatprep.subr.mxu0 0.0
  %1849 = vmatpush1.msra.mxu0 0.0
  %1850 = vmatprep.subr.mxu0 0.0
  %1851 = vmatpush1.msra.mxu0 0.0
  %1852 = vmatprep.subr.mxu0 0.0
  %1853 = vmatpush1.msra.mxu0 0.0
  %1854 = vmatprep.subr.mxu0 0.0
  %1855 = vmatpush1.msra.mxu0 0.0
  %1856 = vmatprep.subr.mxu0 0.0
  %1857 = vmatpush1.msra.mxu0 0.0
  %1858 = vmatprep.subr.mxu0 0.0
  %1859 = vmatpush1.msra.mxu0 0.0
  %1860 = vmatprep.subr.mxu0 0.0
  %1861 = vmatpush1.msra.mxu0 0.0
  %1862 = vmatprep.subr.mxu0 0.0
  %1863 = vmatpush1.msra.mxu0 0.0
  %1864 = vmatprep.subr.mxu0 0.0
  %1865 = vmatpush1.msra.mxu0 0.0
  %1866 = vmatprep.subr.mxu0 0.0
  %1867 = vmatpush1.msra.mxu0 0.0
  %1868 = vmatprep.subr.mxu0 0.0
  %1869 = vmatpush1.msra.mxu0 0.0
  %1870 = vmatprep.subr.mxu0 0.0
  %1871 = vmatpush1.msra.mxu0 0.0
  %1872 = vmatprep.subr.mxu0 0.0
  %1873 = vmatpush1.msra.mxu0 0.0
  %1874 = vmatprep.subr.mxu0 0.0
  %1875 = vmatpush1.msra.mxu0 0.0
  %1876 = vmatprep.subr.mxu0 0.0
  %1877 = vmatpush1.msra.mxu0 0.0
  %1878 = vmatprep.subr.mxu0 0.0
  %1879 = vmatpush1.msra.mxu0 0.0
  %1880 = vmatprep.subr.mxu0 0.0
  %1881 = vmatpush1.msra.mxu0 0.0
  %1882 = vmatprep.subr.mxu0 0.0
  %1883 = vmatpush1.msra.mxu0 0.0
  %1884 = vmatprep.subr.mxu0 0.0
  %1885 = vmatpush1.msra.mxu0 0.0
  %1886 = vmatprep.subr.mxu0 0.0
  %1887 = vmatpush1.msra.mxu0 0.0
  %1888 = vmatprep.subr.mxu0 0.0
  %1889 = vmatpush1.msra.mxu0 0.0
  %1890 = vmatprep.subr.mxu0 0.0
  %1891 = vmatpush1.msra.mxu0 0.0
  %1892 = vmatprep.subr.mxu0 0.0
  %1893 = vmatpush1.msra.mxu0 0.0
  %1894 = vmatprep.subr.mxu0 0.0
  %1895 = vmatpush1.msra.mxu0 0.0
  %1896 = vmatprep.subr.mxu0 0.0
  %1897 = vmatpush1.msra.mxu0 0.0
  %1898 = vmatprep.subr.mxu0 0.0
  %1899 = vmatpush1.msra.mxu0 0.0
  %1900 = vmatprep.subr.mxu0 0.0
  %1901 = vmatpush1.msra.mxu0 0.0
  %1902 = vmatprep.subr.mxu0 0.0
  %1903 = vmatpush1.msra.mxu0 0.0
  %1904 = vmatprep.mubr.f32.mxu0 0.0
  %1905 = vmatmul.mubr.f32.gmra.mrb[0].mxu0 %v1838
  %v1906 = vpop.f32.mrb[0].mxu0
  %v1907 = vadd.f32 0.0, %v1906
  %v1908 = vpop.f32.mrb[0].mxu0
  %1909 = vdwg.mxu0
  %v1911 = vsel %vm1471, %v1460, 0
  %1913 = vmatprep.subr.mxu0 0.0
  %1914 = vmatpush1.msra.mxu0 %v1469
  %1915 = vmatprep.subr.mxu0 0.0
  %1916 = vmatpush1.msra.mxu0 0.0
  %1917 = vmatprep.subr.mxu0 0.0
  %1918 = vmatpush1.msra.mxu0 0.0
  %1919 = vmatprep.subr.mxu0 0.0
  %1920 = vmatpush1.msra.mxu0 0.0
  %1921 = vmatprep.subr.mxu0 0.0
  %1922 = vmatpush1.msra.mxu0 0.0
  %1923 = vmatprep.subr.mxu0 0.0
  %1924 = vmatpush1.msra.mxu0 0.0
  %1925 = vmatprep.subr.mxu0 0.0
  %1926 = vmatpush1.msra.mxu0 0.0
  %1927 = vmatprep.subr.mxu0 0.0
  %1928 = vmatpush1.msra.mxu0 0.0
  %1929 = vmatprep.subr.mxu0 0.0
  %1930 = vmatpush1.msra.mxu0 0.0
  %1931 = vmatprep.subr.mxu0 0.0
  %1932 = vmatpush1.msra.mxu0 0.0
  %1933 = vmatprep.subr.mxu0 0.0
  %1934 = vmatpush1.msra.mxu0 0.0
  %1935 = vmatprep.subr.mxu0 0.0
  %1936 = vmatpush1.msra.mxu0 0.0
  %1937 = vmatprep.subr.mxu0 0.0
  %1938 = vmatpush1.msra.mxu0 0.0
  %1939 = vmatprep.subr.mxu0 0.0
  %1940 = vmatpush1.msra.mxu0 0.0
  %1941 = vmatprep.subr.mxu0 0.0
  %1942 = vmatpush1.msra.mxu0 0.0
  %1943 = vmatprep.subr.mxu0 0.0
  %1944 = vmatpush1.msra.mxu0 0.0
  %1945 = vmatprep.subr.mxu0 0.0
  %1946 = vmatpush1.msra.mxu0 0.0
  %1947 = vmatprep.subr.mxu0 0.0
  %1948 = vmatpush1.msra.mxu0 0.0
  %1949 = vmatprep.subr.mxu0 0.0
  %1950 = vmatpush1.msra.mxu0 0.0
  %1951 = vmatprep.subr.mxu0 0.0
  %1952 = vmatpush1.msra.mxu0 0.0
  %1953 = vmatprep.subr.mxu0 0.0
  %1954 = vmatpush1.msra.mxu0 0.0
  %1955 = vmatprep.subr.mxu0 0.0
  %1956 = vmatpush1.msra.mxu0 0.0
  %1957 = vmatprep.subr.mxu0 0.0
  %1958 = vmatpush1.msra.mxu0 0.0
  %1959 = vmatprep.subr.mxu0 0.0
  %1960 = vmatpush1.msra.mxu0 0.0
  %1961 = vmatprep.subr.mxu0 0.0
  %1962 = vmatpush1.msra.mxu0 0.0
  %1963 = vmatprep.subr.mxu0 0.0
  %1964 = vmatpush1.msra.mxu0 0.0
  %1965 = vmatprep.subr.mxu0 0.0
  %1966 = vmatpush1.msra.mxu0 0.0
  %1967 = vmatprep.subr.mxu0 0.0
  %1968 = vmatpush1.msra.mxu0 0.0
  %1969 = vmatprep.subr.mxu0 0.0
  %1970 = vmatpush1.msra.mxu0 0.0
  %1971 = vmatprep.subr.mxu0 0.0
  %1972 = vmatpush1.msra.mxu0 0.0
  %1973 = vmatprep.subr.mxu0 0.0
  %1974 = vmatpush1.msra.mxu0 0.0
  %1975 = vmatprep.subr.mxu0 0.0
  %1976 = vmatpush1.msra.mxu0 0.0
  %1977 = vmatprep.mubr.f32.mxu0 0.0
  %1978 = vmatmul.mubr.f32.gmra.mrb[0].mxu0 %v1911
  %v1979 = vpop.f32.mrb[0].mxu0
  %v1980 = vadd.f32 0.0, %v1979
  %v1981 = vpop.f32.mrb[0].mxu0
  %1982 = vdwg.mxu0
  %v1984 = vsel %vm1471, %v1461, 0
  %1986 = vmatprep.subr.mxu0 0.0
  %1987 = vmatpush1.msra.mxu0 %v1470
  %1988 = vmatprep.subr.mxu0 0.0
  %1989 = vmatpush1.msra.mxu0 0.0
  %1990 = vmatprep.subr.mxu0 0.0
  %1991 = vmatpush1.msra.mxu0 0.0
  %1992 = vmatprep.subr.mxu0 0.0
  %1993 = vmatpush1.msra.mxu0 0.0
  %1994 = vmatprep.subr.mxu0 0.0
  %1995 = vmatpush1.msra.mxu0 0.0
  %1996 = vmatprep.subr.mxu0 0.0
  %1997 = vmatpush1.msra.mxu0 0.0
  %1998 = vmatprep.subr.mxu0 0.0
  %1999 = vmatpush1.msra.mxu0 0.0
  %2000 = vmatprep.subr.mxu0 0.0
  %2001 = vmatpush1.msra.mxu0 0.0
  %2002 = vmatprep.subr.mxu0 0.0
  %2003 = vmatpush1.msra.mxu0 0.0
  %2004 = vmatprep.subr.mxu0 0.0
  %2005 = vmatpush1.msra.mxu0 0.0
  %2006 = vmatprep.subr.mxu0 0.0
  %2007 = vmatpush1.msra.mxu0 0.0
  %2008 = vmatprep.subr.mxu0 0.0
  %2009 = vmatpush1.msra.mxu0 0.0
  %2010 = vmatprep.subr.mxu0 0.0
  %2011 = vmatpush1.msra.mxu0 0.0
  %2012 = vmatprep.subr.mxu0 0.0
  %2013 = vmatpush1.msra.mxu0 0.0
  %2014 = vmatprep.subr.mxu0 0.0
  %2015 = vmatpush1.msra.mxu0 0.0
  %2016 = vmatprep.subr.mxu0 0.0
  %2017 = vmatpush1.msra.mxu0 0.0
  %2018 = vmatprep.subr.mxu0 0.0
  %2019 = vmatpush1.msra.mxu0 0.0
  %2020 = vmatprep.subr.mxu0 0.0
  %2021 = vmatpush1.msra.mxu0 0.0
  %2022 = vmatprep.subr.mxu0 0.0
  %2023 = vmatpush1.msra.mxu0 0.0
  %2024 = vmatprep.subr.mxu0 0.0
  %2025 = vmatpush1.msra.mxu0 0.0
  %2026 = vmatprep.subr.mxu0 0.0
  %2027 = vmatpush1.msra.mxu0 0.0
  %2028 = vmatprep.subr.mxu0 0.0
  %2029 = vmatpush1.msra.mxu0 0.0
  %2030 = vmatprep.subr.mxu0 0.0
  %2031 = vmatpush1.msra.mxu0 0.0
  %2032 = vmatprep.subr.mxu0 0.0
  %2033 = vmatpush1.msra.mxu0 0.0
  %2034 = vmatprep.subr.mxu0 0.0
  %2035 = vmatpush1.msra.mxu0 0.0
  %2036 = vmatprep.subr.mxu0 0.0
  %2037 = vmatpush1.msra.mxu0 0.0
  %2038 = vmatprep.subr.mxu0 0.0
  %2039 = vmatpush1.msra.mxu0 0.0
  %2040 = vmatprep.subr.mxu0 0.0
  %2041 = vmatpush1.msra.mxu0 0.0
  %2042 = vmatprep.subr.mxu0 0.0
  %2043 = vmatpush1.msra.mxu0 0.0
  %2044 = vmatprep.subr.mxu0 0.0
  %2045 = vmatpush1.msra.mxu0 0.0
  %2046 = vmatprep.subr.mxu0 0.0
  %2047 = vmatpush1.msra.mxu0 0.0
  %2048 = vmatprep.subr.mxu0 0.0
  %2049 = vmatpush1.msra.mxu0 0.0
  %2050 = vmatprep.mubr.f32.mxu0 0.0
  %2051 = vmatmul.mubr.f32.gmra.mrb[0].mxu0 %v1984
  %v2052 = vpop.f32.mrb[0].mxu0
  %v2053 = vadd.f32 0.0, %v2052
  %v2054 = vpop.f32.mrb[0].mxu0
  %2055 = vdwg.mxu0
  %v2057 = vsel %vm1471, %v1438, 0
  %2059 = vmatprep.subr.mxu0 0.0
  %2060 = vmatpush1.msra.mxu0 %v1446
  %2061 = vmatprep.subr.mxu0 0.0
  %2062 = vmatpush1.msra.mxu0 0.0
  %2063 = vmatprep.subr.mxu0 0.0
  %2064 = vmatpush1.msra.mxu0 0.0
  %2065 = vmatprep.subr.mxu0 0.0
  %2066 = vmatpush1.msra.mxu0 0.0
  %2067 = vmatprep.subr.mxu0 0.0
  %2068 = vmatpush1.msra.mxu0 0.0
  %2069 = vmatprep.subr.mxu0 0.0
  %2070 = vmatpush1.msra.mxu0 0.0
  %2071 = vmatprep.subr.mxu0 0.0
  %2072 = vmatpush1.msra.mxu0 0.0
  %2073 = vmatprep.subr.mxu0 0.0
  %2074 = vmatpush1.msra.mxu0 0.0
  %2075 = vmatprep.subr.mxu0 0.0
  %2076 = vmatpush1.msra.mxu0 0.0
  %2077 = vmatprep.subr.mxu0 0.0
  %2078 = vmatpush1.msra.mxu0 0.0
  %2079 = vmatprep.subr.mxu0 0.0
  %2080 = vmatpush1.msra.mxu0 0.0
  %2081 = vmatprep.subr.mxu0 0.0
  %2082 = vmatpush1.msra.mxu0 0.0
  %2083 = vmatprep.subr.mxu0 0.0
  %2084 = vmatpush1.msra.mxu0 0.0
  %2085 = vmatprep.subr.mxu0 0.0
  %2086 = vmatpush1.msra.mxu0 0.0
  %2087 = vmatprep.subr.mxu0 0.0
  %2088 = vmatpush1.msra.mxu0 0.0
  %2089 = vmatprep.subr.mxu0 0.0
  %2090 = vmatpush1.msra.mxu0 0.0
  %2091 = vmatprep.subr.mxu0 0.0
  %2092 = vmatpush1.msra.mxu0 0.0
  %2093 = vmatprep.subr.mxu0 0.0
  %2094 = vmatpush1.msra.mxu0 0.0
  %2095 = vmatprep.subr.mxu0 0.0
  %2096 = vmatpush1.msra.mxu0 0.0
  %2097 = vmatprep.subr.mxu0 0.0
  %2098 = vmatpush1.msra.mxu0 0.0
  %2099 = vmatprep.subr.mxu0 0.0
  %2100 = vmatpush1.msra.mxu0 0.0
  %2101 = vmatprep.subr.mxu0 0.0
  %2102 = vmatpush1.msra.mxu0 0.0
  %2103 = vmatprep.subr.mxu0 0.0
  %2104 = vmatpush1.msra.mxu0 0.0
  %2105 = vmatprep.subr.mxu0 0.0
  %2106 = vmatpush1.msra.mxu0 0.0
  %2107 = vmatprep.subr.mxu0 0.0
  %2108 = vmatpush1.msra.mxu0 0.0
  %2109 = vmatprep.subr.mxu0 0.0
  %2110 = vmatpush1.msra.mxu0 0.0
  %2111 = vmatprep.subr.mxu0 0.0
  %2112 = vmatpush1.msra.mxu0 0.0
  %2113 = vmatprep.subr.mxu0 0.0
  %2114 = vmatpush1.msra.mxu0 0.0
  %2115 = vmatprep.subr.mxu0 0.0
  %2116 = vmatpush1.msra.mxu0 0.0
  %2117 = vmatprep.subr.mxu0 0.0
  %2118 = vmatpush1.msra.mxu0 0.0
  %2119 = vmatprep.subr.mxu0 0.0
  %2120 = vmatpush1.msra.mxu0 0.0
  %2121 = vmatprep.subr.mxu0 0.0
  %2122 = vmatpush1.msra.mxu0 0.0
  %2123 = vmatprep.mubr.f32.mxu0 0.0
  %2124 = vmatmul.mubr.f32.gmra.mrb[0].mxu0 %v2057
  %v2125 = vpop.f32.mrb[0].mxu0
  %v2126 = vadd.f32 %v1542, %v2125
  %v2127 = vpop.f32.mrb[0].mxu0
  %2128 = vdwg.mxu0
  %v2130 = vsel %vm1471, %v1439, 0
  %2132 = vmatprep.subr.mxu0 0.0
  %2133 = vmatpush1.msra.mxu0 %v1447
  %2134 = vmatprep.subr.mxu0 0.0
  %2135 = vmatpush1.msra.mxu0 0.0
  %2136 = vmatprep.subr.mxu0 0.0
  %2137 = vmatpush1.msra.mxu0 0.0
  %2138 = vmatprep.subr.mxu0 0.0
  %2139 = vmatpush1.msra.mxu0 0.0
  %2140 = vmatprep.subr.mxu0 0.0
  %2141 = vmatpush1.msra.mxu0 0.0
  %2142 = vmatprep.subr.mxu0 0.0
  %2143 = vmatpush1.msra.mxu0 0.0
  %2144 = vmatprep.subr.mxu0 0.0
  %2145 = vmatpush1.msra.mxu0 0.0
  %2146 = vmatprep.subr.mxu0 0.0
  %2147 = vmatpush1.msra.mxu0 0.0
  %2148 = vmatprep.subr.mxu0 0.0
  %2149 = vmatpush1.msra.mxu0 0.0
  %2150 = vmatprep.subr.mxu0 0.0
  %2151 = vmatpush1.msra.mxu0 0.0
  %2152 = vmatprep.subr.mxu0 0.0
  %2153 = vmatpush1.msra.mxu0 0.0
  %2154 = vmatprep.subr.mxu0 0.0
  %2155 = vmatpush1.msra.mxu0 0.0
  %2156 = vmatprep.subr.mxu0 0.0
  %2157 = vmatpush1.msra.mxu0 0.0
  %2158 = vmatprep.subr.mxu0 0.0
  %2159 = vmatpush1.msra.mxu0 0.0
  %2160 = vmatprep.subr.mxu0 0.0
  %2161 = vmatpush1.msra.mxu0 0.0
  %2162 = vmatprep.subr.mxu0 0.0
  %2163 = vmatpush1.msra.mxu0 0.0
  %2164 = vmatprep.subr.mxu0 0.0
  %2165 = vmatpush1.msra.mxu0 0.0
  %2166 = vmatprep.subr.mxu0 0.0
  %2167 = vmatpush1.msra.mxu0 0.0
  %2168 = vmatprep.subr.mxu0 0.0
  %2169 = vmatpush1.msra.mxu0 0.0
  %2170 = vmatprep.subr.mxu0 0.0
  %2171 = vmatpush1.msra.mxu0 0.0
  %2172 = vmatprep.subr.mxu0 0.0
  %2173 = vmatpush1.msra.mxu0 0.0
  %2174 = vmatprep.subr.mxu0 0.0
  %2175 = vmatpush1.msra.mxu0 0.0
  %2176 = vmatprep.subr.mxu0 0.0
  %2177 = vmatpush1.msra.mxu0 0.0
  %2178 = vmatprep.subr.mxu0 0.0
  %2179 = vmatpush1.msra.mxu0 0.0
  %2180 = vmatprep.subr.mxu0 0.0
  %2181 = vmatpush1.msra.mxu0 0.0
  %2182 = vmatprep.subr.mxu0 0.0
  %2183 = vmatpush1.msra.mxu0 0.0
  %2184 = vmatprep.subr.mxu0 0.0
  %2185 = vmatpush1.msra.mxu0 0.0
  %2186 = vmatprep.subr.mxu0 0.0
  %2187 = vmatpush1.msra.mxu0 0.0
  %2188 = vmatprep.subr.mxu0 0.0
  %2189 = vmatpush1.msra.mxu0 0.0
  %2190 = vmatprep.subr.mxu0 0.0
  %2191 = vmatpush1.msra.mxu0 0.0
  %2192 = vmatprep.subr.mxu0 0.0
  %2193 = vmatpush1.msra.mxu0 0.0
  %2194 = vmatprep.subr.mxu0 0.0
  %2195 = vmatpush1.msra.mxu0 0.0
  %2196 = vmatprep.mubr.f32.mxu0 0.0
  %2197 = vmatmul.mubr.f32.gmra.mrb[0].mxu0 %v2130
  %v2198 = vpop.f32.mrb[0].mxu0
  %v2199 = vadd.f32 %v1615, %v2198
  %v2200 = vpop.f32.mrb[0].mxu0
  %2201 = vdwg.mxu0
  %v2203 = vsel %vm1471, %v1440, 0
  %2205 = vmatprep.subr.mxu0 0.0
  %2206 = vmatpush1.msra.mxu0 %v1448
  %2207 = vmatprep.subr.mxu0 0.0
  %2208 = vmatpush1.msra.mxu0 0.0
  %2209 = vmatprep.subr.mxu0 0.0
  %2210 = vmatpush1.msra.mxu0 0.0
  %2211 = vmatprep.subr.mxu0 0.0
  %2212 = vmatpush1.msra.mxu0 0.0
  %2213 = vmatprep.subr.mxu0 0.0
  %2214 = vmatpush1.msra.mxu0 0.0
  %2215 = vmatprep.subr.mxu0 0.0
  %2216 = vmatpush1.msra.mxu0 0.0
  %2217 = vmatprep.subr.mxu0 0.0
  %2218 = vmatpush1.msra.mxu0 0.0
  %2219 = vmatprep.subr.mxu0 0.0
  %2220 = vmatpush1.msra.mxu0 0.0
  %2221 = vmatprep.subr.mxu0 0.0
  %2222 = vmatpush1.msra.mxu0 0.0
  %2223 = vmatprep.subr.mxu0 0.0
  %2224 = vmatpush1.msra.mxu0 0.0
  %2225 = vmatprep.subr.mxu0 0.0
  %2226 = vmatpush1.msra.mxu0 0.0
  %2227 = vmatprep.subr.mxu0 0.0
  %2228 = vmatpush1.msra.mxu0 0.0
  %2229 = vmatprep.subr.mxu0 0.0
  %2230 = vmatpush1.msra.mxu0 0.0
  %2231 = vmatprep.subr.mxu0 0.0
  %2232 = vmatpush1.msra.mxu0 0.0
  %2233 = vmatprep.subr.mxu0 0.0
  %2234 = vmatpush1.msra.mxu0 0.0
  %2235 = vmatprep.subr.mxu0 0.0
  %2236 = vmatpush1.msra.mxu0 0.0
  %2237 = vmatprep.subr.mxu0 0.0
  %2238 = vmatpush1.msra.mxu0 0.0
  %2239 = vmatprep.subr.mxu0 0.0
  %2240 = vmatpush1.msra.mxu0 0.0
  %2241 = vmatprep.subr.mxu0 0.0
  %2242 = vmatpush1.msra.mxu0 0.0
  %2243 = vmatprep.subr.mxu0 0.0
  %2244 = vmatpush1.msra.mxu0 0.0
  %2245 = vmatprep.subr.mxu0 0.0
  %2246 = vmatpush1.msra.mxu0 0.0
  %2247 = vmatprep.subr.mxu0 0.0
  %2248 = vmatpush1.msra.mxu0 0.0
  %2249 = vmatprep.subr.mxu0 0.0
  %2250 = vmatpush1.msra.mxu0 0.0
  %2251 = vmatprep.subr.mxu0 0.0
  %2252 = vmatpush1.msra.mxu0 0.0
  %2253 = vmatprep.subr.mxu0 0.0
  %2254 = vmatpush1.msra.mxu0 0.0
  %2255 = vmatprep.subr.mxu0 0.0
  %2256 = vmatpush1.msra.mxu0 0.0
  %2257 = vmatprep.subr.mxu0 0.0
  %2258 = vmatpush1.msra.mxu0 0.0
  %2259 = vmatprep.subr.mxu0 0.0
  %2260 = vmatpush1.msra.mxu0 0.0
  %2261 = vmatprep.subr.mxu0 0.0
  %2262 = vmatpush1.msra.mxu0 0.0
  %2263 = vmatprep.subr.mxu0 0.0
  %2264 = vmatpush1.msra.mxu0 0.0
  %2265 = vmatprep.subr.mxu0 0.0
  %2266 = vmatpush1.msra.mxu0 0.0
  %2267 = vmatprep.subr.mxu0 0.0
  %2268 = vmatpush1.msra.mxu0 0.0
  %2269 = vmatprep.mubr.f32.mxu0 0.0
  %2270 = vmatmul.mubr.f32.gmra.mrb[0].mxu0 %v2203
  %v2271 = vpop.f32.mrb[0].mxu0
  %v2272 = vadd.f32 %v1688, %v2271
  %v2273 = vpop.f32.mrb[0].mxu0
  %2274 = vdwg.mxu0
  %v2276 = vsel %vm1471, %v1441, 0
  %2278 = vmatprep.subr.mxu0 0.0
  %2279 = vmatpush1.msra.mxu0 %v1449
  %2280 = vmatprep.subr.mxu0 0.0
  %2281 = vmatpush1.msra.mxu0 0.0
  %2282 = vmatprep.subr.mxu0 0.0
  %2283 = vmatpush1.msra.mxu0 0.0
  %2284 = vmatprep.subr.mxu0 0.0
  %2285 = vmatpush1.msra.mxu0 0.0
  %2286 = vmatprep.subr.mxu0 0.0
  %2287 = vmatpush1.msra.mxu0 0.0
  %2288 = vmatprep.subr.mxu0 0.0
  %2289 = vmatpush1.msra.mxu0 0.0
  %2290 = vmatprep.subr.mxu0 0.0
  %2291 = vmatpush1.msra.mxu0 0.0
  %2292 = vmatprep.subr.mxu0 0.0
  %2293 = vmatpush1.msra.mxu0 0.0
  %2294 = vmatprep.subr.mxu0 0.0
  %2295 = vmatpush1.msra.mxu0 0.0
  %2296 = vmatprep.subr.mxu0 0.0
  %2297 = vmatpush1.msra.mxu0 0.0
  %2298 = vmatprep.subr.mxu0 0.0
  %2299 = vmatpush1.msra.mxu0 0.0
  %2300 = vmatprep.subr.mxu0 0.0
  %2301 = vmatpush1.msra.mxu0 0.0
  %2302 = vmatprep.subr.mxu0 0.0
  %2303 = vmatpush1.msra.mxu0 0.0
  %2304 = vmatprep.subr.mxu0 0.0
  %2305 = vmatpush1.msra.mxu0 0.0
  %2306 = vmatprep.subr.mxu0 0.0
  %2307 = vmatpush1.msra.mxu0 0.0
  %2308 = vmatprep.subr.mxu0 0.0
  %2309 = vmatpush1.msra.mxu0 0.0
  %2310 = vmatprep.subr.mxu0 0.0
  %2311 = vmatpush1.msra.mxu0 0.0
  %2312 = vmatprep.subr.mxu0 0.0
  %2313 = vmatpush1.msra.mxu0 0.0
  %2314 = vmatprep.subr.mxu0 0.0
  %2315 = vmatpush1.msra.mxu0 0.0
  %2316 = vmatprep.subr.mxu0 0.0
  %2317 = vmatpush1.msra.mxu0 0.0
  %2318 = vmatprep.subr.mxu0 0.0
  %2319 = vmatpush1.msra.mxu0 0.0
  %2320 = vmatprep.subr.mxu0 0.0
  %2321 = vmatpush1.msra.mxu0 0.0
  %2322 = vmatprep.subr.mxu0 0.0
  %2323 = vmatpush1.msra.mxu0 0.0
  %2324 = vmatprep.subr.mxu0 0.0
  %2325 = vmatpush1.msra.mxu0 0.0
  %2326 = vmatprep.subr.mxu0 0.0
  %2327 = vmatpush1.msra.mxu0 0.0
  %2328 = vmatprep.subr.mxu0 0.0
  %2329 = vmatpush1.msra.mxu0 0.0
  %2330 = vmatprep.subr.mxu0 0.0
  %2331 = vmatpush1.msra.mxu0 0.0
  %2332 = vmatprep.subr.mxu0 0.0
  %2333 = vmatpush1.msra.mxu0 0.0
  %2334 = vmatprep.subr.mxu0 0.0
  %2335 = vmatpush1.msra.mxu0 0.0
  %2336 = vmatprep.subr.mxu0 0.0
  %2337 = vmatpush1.msra.mxu0 0.0
  %2338 = vmatprep.subr.mxu0 0.0
  %2339 = vmatpush1.msra.mxu0 0.0
  %2340 = vmatprep.subr.mxu0 0.0
  %2341 = vmatpush1.msra.mxu0 0.0
  %2342 = vmatprep.mubr.f32.mxu0 0.0
  %2343 = vmatmul.mubr.f32.gmra.mrb[0].mxu0 %v2276
  %v2344 = vpop.f32.mrb[0].mxu0
  %v2345 = vadd.f32 %v1761, %v2344
  %v2346 = vpop.f32.mrb[0].mxu0
  %2347 = vdwg.mxu0
  %v2349 = vsel %vm1471, %v1442, 0
  %2351 = vmatprep.subr.mxu0 0.0
  %2352 = vmatpush1.msra.mxu0 %v1450
  %2353 = vmatprep.subr.mxu0 0.0
  %2354 = vmatpush1.msra.mxu0 0.0
  %2355 = vmatprep.subr.mxu0 0.0
  %2356 = vmatpush1.msra.mxu0 0.0
  %2357 = vmatprep.subr.mxu0 0.0
  %2358 = vmatpush1.msra.mxu0 0.0
  %2359 = vmatprep.subr.mxu0 0.0
  %2360 = vmatpush1.msra.mxu0 0.0
  %2361 = vmatprep.subr.mxu0 0.0
  %2362 = vmatpush1.msra.mxu0 0.0
  %2363 = vmatprep.subr.mxu0 0.0
  %2364 = vmatpush1.msra.mxu0 0.0
  %2365 = vmatprep.subr.mxu0 0.0
  %2366 = vmatpush1.msra.mxu0 0.0
  %2367 = vmatprep.subr.mxu0 0.0
  %2368 = vmatpush1.msra.mxu0 0.0
  %2369 = vmatprep.subr.mxu0 0.0
  %2370 = vmatpush1.msra.mxu0 0.0
  %2371 = vmatprep.subr.mxu0 0.0
  %2372 = vmatpush1.msra.mxu0 0.0
  %2373 = vmatprep.subr.mxu0 0.0
  %2374 = vmatpush1.msra.mxu0 0.0
  %2375 = vmatprep.subr.mxu0 0.0
  %2376 = vmatpush1.msra.mxu0 0.0
  %2377 = vmatprep.subr.mxu0 0.0
  %2378 = vmatpush1.msra.mxu0 0.0
  %2379 = vmatprep.subr.mxu0 0.0
  %2380 = vmatpush1.msra.mxu0 0.0
  %2381 = vmatprep.subr.mxu0 0.0
  %2382 = vmatpush1.msra.mxu0 0.0
  %2383 = vmatprep.subr.mxu0 0.0
  %2384 = vmatpush1.msra.mxu0 0.0
  %2385 = vmatprep.subr.mxu0 0.0
  %2386 = vmatpush1.msra.mxu0 0.0
  %2387 = vmatprep.subr.mxu0 0.0
  %2388 = vmatpush1.msra.mxu0 0.0
  %2389 = vmatprep.subr.mxu0 0.0
  %2390 = vmatpush1.msra.mxu0 0.0
  %2391 = vmatprep.subr.mxu0 0.0
  %2392 = vmatpush1.msra.mxu0 0.0
  %2393 = vmatprep.subr.mxu0 0.0
  %2394 = vmatpush1.msra.mxu0 0.0
  %2395 = vmatprep.subr.mxu0 0.0
  %2396 = vmatpush1.msra.mxu0 0.0
  %2397 = vmatprep.subr.mxu0 0.0
  %2398 = vmatpush1.msra.mxu0 0.0
  %2399 = vmatprep.subr.mxu0 0.0
  %2400 = vmatpush1.msra.mxu0 0.0
  %2401 = vmatprep.subr.mxu0 0.0
  %2402 = vmatpush1.msra.mxu0 0.0
  %2403 = vmatprep.subr.mxu0 0.0
  %2404 = vmatpush1.msra.mxu0 0.0
  %2405 = vmatprep.subr.mxu0 0.0
  %2406 = vmatpush1.msra.mxu0 0.0
  %2407 = vmatprep.subr.mxu0 0.0
  %2408 = vmatpush1.msra.mxu0 0.0
  %2409 = vmatprep.subr.mxu0 0.0
  %2410 = vmatpush1.msra.mxu0 0.0
  %2411 = vmatprep.subr.mxu0 0.0
  %2412 = vmatpush1.msra.mxu0 0.0
  %2413 = vmatprep.subr.mxu0 0.0
  %2414 = vmatpush1.msra.mxu0 0.0
  %2415 = vmatprep.mubr.f32.mxu0 0.0
  %2416 = vmatmul.mubr.f32.gmra.mrb[0].mxu0 %v2349
  %v2417 = vpop.f32.mrb[0].mxu0
  %v2418 = vadd.f32 %v1834, %v2417
  %v2419 = vpop.f32.mrb[0].mxu0
  %2420 = vdwg.mxu0
  %v2422 = vsel %vm1471, %v1443, 0
  %2424 = vmatprep.subr.mxu0 0.0
  %2425 = vmatpush1.msra.mxu0 %v1451
  %2426 = vmatprep.subr.mxu0 0.0
  %2427 = vmatpush1.msra.mxu0 0.0
  %2428 = vmatprep.subr.mxu0 0.0
  %2429 = vmatpush1.msra.mxu0 0.0
  %2430 = vmatprep.subr.mxu0 0.0
  %2431 = vmatpush1.msra.mxu0 0.0
  %2432 = vmatprep.subr.mxu0 0.0
  %2433 = vmatpush1.msra.mxu0 0.0
  %2434 = vmatprep.subr.mxu0 0.0
  %2435 = vmatpush1.msra.mxu0 0.0
  %2436 = vmatprep.subr.mxu0 0.0
  %2437 = vmatpush1.msra.mxu0 0.0
  %2438 = vmatprep.subr.mxu0 0.0
  %2439 = vmatpush1.msra.mxu0 0.0
  %2440 = vmatprep.subr.mxu0 0.0
  %2441 = vmatpush1.msra.mxu0 0.0
  %2442 = vmatprep.subr.mxu0 0.0
  %2443 = vmatpush1.msra.mxu0 0.0
  %2444 = vmatprep.subr.mxu0 0.0
  %2445 = vmatpush1.msra.mxu0 0.0
  %2446 = vmatprep.subr.mxu0 0.0
  %2447 = vmatpush1.msra.mxu0 0.0
  %2448 = vmatprep.subr.mxu0 0.0
  %2449 = vmatpush1.msra.mxu0 0.0
  %2450 = vmatprep.subr.mxu0 0.0
  %2451 = vmatpush1.msra.mxu0 0.0
  %2452 = vmatprep.subr.mxu0 0.0
  %2453 = vmatpush1.msra.mxu0 0.0
  %2454 = vmatprep.subr.mxu0 0.0
  %2455 = vmatpush1.msra.mxu0 0.0
  %2456 = vmatprep.subr.mxu0 0.0
  %2457 = vmatpush1.msra.mxu0 0.0
  %2458 = vmatprep.subr.mxu0 0.0
  %2459 = vmatpush1.msra.mxu0 0.0
  %2460 = vmatprep.subr.mxu0 0.0
  %2461 = vmatpush1.msra.mxu0 0.0
  %2462 = vmatprep.subr.mxu0 0.0
  %2463 = vmatpush1.msra.mxu0 0.0
  %2464 = vmatprep.subr.mxu0 0.0
  %2465 = vmatpush1.msra.mxu0 0.0
  %2466 = vmatprep.subr.mxu0 0.0
  %2467 = vmatpush1.msra.mxu0 0.0
  %2468 = vmatprep.subr.mxu0 0.0
  %2469 = vmatpush1.msra.mxu0 0.0
  %2470 = vmatprep.subr.mxu0 0.0
  %2471 = vmatpush1.msra.mxu0 0.0
  %2472 = vmatprep.subr.mxu0 0.0
  %2473 = vmatpush1.msra.mxu0 0.0
  %2474 = vmatprep.subr.mxu0 0.0
  %2475 = vmatpush1.msra.mxu0 0.0
  %2476 = vmatprep.subr.mxu0 0.0
  %2477 = vmatpush1.msra.mxu0 0.0
  %2478 = vmatprep.subr.mxu0 0.0
  %2479 = vmatpush1.msra.mxu0 0.0
  %2480 = vmatprep.subr.mxu0 0.0
  %2481 = vmatpush1.msra.mxu0 0.0
  %2482 = vmatprep.subr.mxu0 0.0
  %2483 = vmatpush1.msra.mxu0 0.0
  %2484 = vmatprep.subr.mxu0 0.0
  %2485 = vmatpush1.msra.mxu0 0.0
  %2486 = vmatprep.subr.mxu0 0.0
  %2487 = vmatpush1.msra.mxu0 0.0
  %2488 = vmatprep.mubr.f32.mxu0 0.0
  %2489 = vmatmul.mubr.f32.gmra.mrb[0].mxu0 %v2422
  %v2490 = vpop.f32.mrb[0].mxu0
  %v2491 = vadd.f32 %v1907, %v2490
  %v2492 = vpop.f32.mrb[0].mxu0
  %2493 = vdwg.mxu0
  %v2495 = vsel %vm1471, %v1444, 0
  %2497 = vmatprep.subr.mxu0 0.0
  %2498 = vmatpush1.msra.mxu0 %v1452
  %2499 = vmatprep.subr.mxu0 0.0
  %2500 = vmatpush1.msra.mxu0 0.0
  %2501 = vmatprep.subr.mxu0 0.0
  %2502 = vmatpush1.msra.mxu0 0.0
  %2503 = vmatprep.subr.mxu0 0.0
  %2504 = vmatpush1.msra.mxu0 0.0
  %2505 = vmatprep.subr.mxu0 0.0
  %2506 = vmatpush1.msra.mxu0 0.0
  %2507 = vmatprep.subr.mxu0 0.0
  %2508 = vmatpush1.msra.mxu0 0.0
  %2509 = vmatprep.subr.mxu0 0.0
  %2510 = vmatpush1.msra.mxu0 0.0
  %2511 = vmatprep.subr.mxu0 0.0
  %2512 = vmatpush1.msra.mxu0 0.0
  %2513 = vmatprep.subr.mxu0 0.0
  %2514 = vmatpush1.msra.mxu0 0.0
  %2515 = vmatprep.subr.mxu0 0.0
  %2516 = vmatpush1.msra.mxu0 0.0
  %2517 = vmatprep.subr.mxu0 0.0
  %2518 = vmatpush1.msra.mxu0 0.0
  %2519 = vmatprep.subr.mxu0 0.0
  %2520 = vmatpush1.msra.mxu0 0.0
  %2521 = vmatprep.subr.mxu0 0.0
  %2522 = vmatpush1.msra.mxu0 0.0
  %2523 = vmatprep.subr.mxu0 0.0
  %2524 = vmatpush1.msra.mxu0 0.0
  %2525 = vmatprep.subr.mxu0 0.0
  %2526 = vmatpush1.msra.mxu0 0.0
  %2527 = vmatprep.subr.mxu0 0.0
  %2528 = vmatpush1.msra.mxu0 0.0
  %2529 = vmatprep.subr.mxu0 0.0
  %2530 = vmatpush1.msra.mxu0 0.0
  %2531 = vmatprep.subr.mxu0 0.0
  %2532 = vmatpush1.msra.mxu0 0.0
  %2533 = vmatprep.subr.mxu0 0.0
  %2534 = vmatpush1.msra.mxu0 0.0
  %2535 = vmatprep.subr.mxu0 0.0
  %2536 = vmatpush1.msra.mxu0 0.0
  %2537 = vmatprep.subr.mxu0 0.0
  %2538 = vmatpush1.msra.mxu0 0.0
  %2539 = vmatprep.subr.mxu0 0.0
  %2540 = vmatpush1.msra.mxu0 0.0
  %2541 = vmatprep.subr.mxu0 0.0
  %2542 = vmatpush1.msra.mxu0 0.0
  %2543 = vmatprep.subr.mxu0 0.0
  %2544 = vmatpush1.msra.mxu0 0.0
  %2545 = vmatprep.subr.mxu0 0.0
  %2546 = vmatpush1.msra.mxu0 0.0
  %2547 = vmatprep.subr.mxu0 0.0
  %2548 = vmatpush1.msra.mxu0 0.0
  %2549 = vmatprep.subr.mxu0 0.0
  %2550 = vmatpush1.msra.mxu0 0.0
  %2551 = vmatprep.subr.mxu0 0.0
  %2552 = vmatpush1.msra.mxu0 0.0
  %2553 = vmatprep.subr.mxu0 0.0
  %2554 = vmatpush1.msra.mxu0 0.0
  %2555 = vmatprep.subr.mxu0 0.0
  %2556 = vmatpush1.msra.mxu0 0.0
  %2557 = vmatprep.subr.mxu0 0.0
  %2558 = vmatpush1.msra.mxu0 0.0
  %2559 = vmatprep.subr.mxu0 0.0
  %2560 = vmatpush1.msra.mxu0 0.0
  %2561 = vmatprep.mubr.f32.mxu0 0.0
  %2562 = vmatmul.mubr.f32.gmra.mrb[0].mxu0 %v2495
  %v2563 = vpop.f32.mrb[0].mxu0
  %v2564 = vadd.f32 %v1980, %v2563
  %v2565 = vpop.f32.mrb[0].mxu0
  %2566 = vdwg.mxu0
  %v2568 = vsel %vm1471, %v1445, 0
  %2570 = vmatprep.subr.mxu0 0.0
  %2571 = vmatpush1.msra.mxu0 %v1453
  %2572 = vmatprep.subr.mxu0 0.0
  %2573 = vmatpush1.msra.mxu0 0.0
  %2574 = vmatprep.subr.mxu0 0.0
  %2575 = vmatpush1.msra.mxu0 0.0
  %2576 = vmatprep.subr.mxu0 0.0
  %2577 = vmatpush1.msra.mxu0 0.0
  %2578 = vmatprep.subr.mxu0 0.0
  %2579 = vmatpush1.msra.mxu0 0.0
  %2580 = vmatprep.subr.mxu0 0.0
  %2581 = vmatpush1.msra.mxu0 0.0
  %2582 = vmatprep.subr.mxu0 0.0
  %2583 = vmatpush1.msra.mxu0 0.0
  %2584 = vmatprep.subr.mxu0 0.0
  %2585 = vmatpush1.msra.mxu0 0.0
  %2586 = vmatprep.subr.mxu0 0.0
  %2587 = vmatpush1.msra.mxu0 0.0
  %2588 = vmatprep.subr.mxu0 0.0
  %2589 = vmatpush1.msra.mxu0 0.0
  %2590 = vmatprep.subr.mxu0 0.0
  %2591 = vmatpush1.msra.mxu0 0.0
  %2592 = vmatprep.subr.mxu0 0.0
  %2593 = vmatpush1.msra.mxu0 0.0
  %2594 = vmatprep.subr.mxu0 0.0
  %2595 = vmatpush1.msra.mxu0 0.0
  %2596 = vmatprep.subr.mxu0 0.0
  %2597 = vmatpush1.msra.mxu0 0.0
  %2598 = vmatprep.subr.mxu0 0.0
  %2599 = vmatpush1.msra.mxu0 0.0
  %2600 = vmatprep.subr.mxu0 0.0
  %2601 = vmatpush1.msra.mxu0 0.0
  %2602 = vmatprep.subr.mxu0 0.0
  %2603 = vmatpush1.msra.mxu0 0.0
  %2604 = vmatprep.subr.mxu0 0.0
  %2605 = vmatpush1.msra.mxu0 0.0
  %2606 = vmatprep.subr.mxu0 0.0
  %2607 = vmatpush1.msra.mxu0 0.0
  %2608 = vmatprep.subr.mxu0 0.0
  %2609 = vmatpush1.msra.mxu0 0.0
  %2610 = vmatprep.subr.mxu0 0.0
  %2611 = vmatpush1.msra.mxu0 0.0
  %2612 = vmatprep.subr.mxu0 0.0
  %2613 = vmatpush1.msra.mxu0 0.0
  %2614 = vmatprep.subr.mxu0 0.0
  %2615 = vmatpush1.msra.mxu0 0.0
  %2616 = vmatprep.subr.mxu0 0.0
  %2617 = vmatpush1.msra.mxu0 0.0
  %2618 = vmatprep.subr.mxu0 0.0
  %2619 = vmatpush1.msra.mxu0 0.0
  %2620 = vmatprep.subr.mxu0 0.0
  %2621 = vmatpush1.msra.mxu0 0.0
  %2622 = vmatprep.subr.mxu0 0.0
  %2623 = vmatpush1.msra.mxu0 0.0
  %2624 = vmatprep.subr.mxu0 0.0
  %2625 = vmatpush1.msra.mxu0 0.0
  %2626 = vmatprep.subr.mxu0 0.0
  %2627 = vmatpush1.msra.mxu0 0.0
  %2628 = vmatprep.subr.mxu0 0.0
  %2629 = vmatpush1.msra.mxu0 0.0
  %2630 = vmatprep.subr.mxu0 0.0
  %2631 = vmatpush1.msra.mxu0 0.0
  %2632 = vmatprep.subr.mxu0 0.0
  %2633 = vmatpush1.msra.mxu0 0.0
  %2634 = vmatprep.mubr.f32.mxu0 0.0
  %2635 = vmatmul.mubr.f32.gmra.mrb[0].mxu0 %v2568
  %v2636 = vpop.f32.mrb[0].mxu0
  %v2637 = vadd.f32 %v2053, %v2636
  %v2638 = vpop.f32.mrb[0].mxu0
  %2639 = vdwg.mxu0
  %v2640 = vld [vmem:[#allocation2 + $0x2] sm:$0x1f]
  %v2641 = vld [vmem:[#allocation2 + $0xa] sm:$0x1f]
  %v2642 = vld [vmem:[#allocation2 + $0x12] sm:$0x1f]
  %v2643 = vld [vmem:[#allocation2 + $0x1a] sm:$0x1f]
  %v2644 = vld [vmem:[#allocation2 + $0x22] sm:$0x1f]
  %v2645 = vld [vmem:[#allocation2 + $0x2a] sm:$0x1f]
  %v2646 = vld [vmem:[#allocation2 + $0x32] sm:$0x1f]
  %v2647 = vld [vmem:[#allocation2 + $0x3a] sm:$0x1f]
  %s2648 = scalar_lea.vmem %s3, 128
  %v2649 = vld [vmem:[%s2648] sm:$0xff]
  %v2650 = vld [vmem:[%s2648 + $0x8] sm:$0xff]
  %v2651 = vld [vmem:[%s2648 + $0x10] sm:$0xff]
  %v2652 = vld [vmem:[%s2648 + $0x18] sm:$0xff]
  %v2653 = vld [vmem:[%s2648 + $0x20] sm:$0xff]
  %v2654 = vld [vmem:[%s2648 + $0x28] sm:$0xff]
  %v2655 = vld [vmem:[%s2648 + $0x30] sm:$0xff]
  %v2656 = vld [vmem:[%s2648 + $0x38] sm:$0xff]
  %v2658 = vsel %vm1471, %v2640, 0
  %2660 = vmatprep.subr.mxu0 0.0
  %2661 = vmatpush1.msra.mxu0 %v2649
  %2662 = vmatprep.subr.mxu0 0.0
  %2663 = vmatpush1.msra.mxu0 0.0
  %2664 = vmatprep.subr.mxu0 0.0
  %2665 = vmatpush1.msra.mxu0 0.0
  %2666 = vmatprep.subr.mxu0 0.0
  %2667 = vmatpush1.msra.mxu0 0.0
  %2668 = vmatprep.subr.mxu0 0.0
  %2669 = vmatpush1.msra.mxu0 0.0
  %2670 = vmatprep.subr.mxu0 0.0
  %2671 = vmatpush1.msra.mxu0 0.0
  %2672 = vmatprep.subr.mxu0 0.0
  %2673 = vmatpush1.msra.mxu0 0.0
  %2674 = vmatprep.subr.mxu0 0.0
  %2675 = vmatpush1.msra.mxu0 0.0
  %2676 = vmatprep.subr.mxu0 0.0
  %2677 = vmatpush1.msra.mxu0 0.0
  %2678 = vmatprep.subr.mxu0 0.0
  %2679 = vmatpush1.msra.mxu0 0.0
  %2680 = vmatprep.subr.mxu0 0.0
  %2681 = vmatpush1.msra.mxu0 0.0
  %2682 = vmatprep.subr.mxu0 0.0
  %2683 = vmatpush1.msra.mxu0 0.0
  %2684 = vmatprep.subr.mxu0 0.0
  %2685 = vmatpush1.msra.mxu0 0.0
  %2686 = vmatprep.subr.mxu0 0.0
  %2687 = vmatpush1.msra.mxu0 0.0
  %2688 = vmatprep.subr.mxu0 0.0
  %2689 = vmatpush1.msra.mxu0 0.0
  %2690 = vmatprep.subr.mxu0 0.0
  %2691 = vmatpush1.msra.mxu0 0.0
  %2692 = vmatprep.subr.mxu0 0.0
  %2693 = vmatpush1.msra.mxu0 0.0
  %2694 = vmatprep.subr.mxu0 0.0
  %2695 = vmatpush1.msra.mxu0 0.0
  %2696 = vmatprep.subr.mxu0 0.0
  %2697 = vmatpush1.msra.mxu0 0.0
  %2698 = vmatprep.subr.mxu0 0.0
  %2699 = vmatpush1.msra.mxu0 0.0
  %2700 = vmatprep.subr.mxu0 0.0
  %2701 = vmatpush1.msra.mxu0 0.0
  %2702 = vmatprep.subr.mxu0 0.0
  %2703 = vmatpush1.msra.mxu0 0.0
  %2704 = vmatprep.subr.mxu0 0.0
  %2705 = vmatpush1.msra.mxu0 0.0
  %2706 = vmatprep.subr.mxu0 0.0
  %2707 = vmatpush1.msra.mxu0 0.0
  %2708 = vmatprep.subr.mxu0 0.0
  %2709 = vmatpush1.msra.mxu0 0.0
  %2710 = vmatprep.subr.mxu0 0.0
  %2711 = vmatpush1.msra.mxu0 0.0
  %2712 = vmatprep.subr.mxu0 0.0
  %2713 = vmatpush1.msra.mxu0 0.0
  %2714 = vmatprep.subr.mxu0 0.0
  %2715 = vmatpush1.msra.mxu0 0.0
  %2716 = vmatprep.subr.mxu0 0.0
  %2717 = vmatpush1.msra.mxu0 0.0
  %2718 = vmatprep.subr.mxu0 0.0
  %2719 = vmatpush1.msra.mxu0 0.0
  %2720 = vmatprep.subr.mxu0 0.0
  %2721 = vmatpush1.msra.mxu0 0.0
  %2722 = vmatprep.subr.mxu0 0.0
  %2723 = vmatpush1.msra.mxu0 0.0
  %2724 = vmatprep.mubr.f32.mxu0 0.0
  %2725 = vmatmul.mubr.f32.gmra.mrb[0].mxu0 %v2658
  %v2726 = vpop.f32.mrb[0].mxu0
  %v2727 = vadd.f32 0.0, %v2726
  %v2728 = vpop.f32.mrb[0].mxu0
  %2729 = vdwg.mxu0
  %v2731 = vsel %vm1471, %v2641, 0
  %2733 = vmatprep.subr.mxu0 0.0
  %2734 = vmatpush1.msra.mxu0 %v2650
  %2735 = vmatprep.subr.mxu0 0.0
  %2736 = vmatpush1.msra.mxu0 0.0
  %2737 = vmatprep.subr.mxu0 0.0
  %2738 = vmatpush1.msra.mxu0 0.0
  %2739 = vmatprep.subr.mxu0 0.0
  %2740 = vmatpush1.msra.mxu0 0.0
  %2741 = vmatprep.subr.mxu0 0.0
  %2742 = vmatpush1.msra.mxu0 0.0
  %2743 = vmatprep.subr.mxu0 0.0
  %2744 = vmatpush1.msra.mxu0 0.0
  %2745 = vmatprep.subr.mxu0 0.0
  %2746 = vmatpush1.msra.mxu0 0.0
  %2747 = vmatprep.subr.mxu0 0.0
  %2748 = vmatpush1.msra.mxu0 0.0
  %2749 = vmatprep.subr.mxu0 0.0
  %2750 = vmatpush1.msra.mxu0 0.0
  %2751 = vmatprep.subr.mxu0 0.0
  %2752 = vmatpush1.msra.mxu0 0.0
  %2753 = vmatprep.subr.mxu0 0.0
  %2754 = vmatpush1.msra.mxu0 0.0
  %2755 = vmatprep.subr.mxu0 0.0
  %2756 = vmatpush1.msra.mxu0 0.0
  %2757 = vmatprep.subr.mxu0 0.0
  %2758 = vmatpush1.msra.mxu0 0.0
  %2759 = vmatprep.subr.mxu0 0.0
  %2760 = vmatpush1.msra.mxu0 0.0
  %2761 = vmatprep.subr.mxu0 0.0
  %2762 = vmatpush1.msra.mxu0 0.0
  %2763 = vmatprep.subr.mxu0 0.0
  %2764 = vmatpush1.msra.mxu0 0.0
  %2765 = vmatprep.subr.mxu0 0.0
  %2766 = vmatpush1.msra.mxu0 0.0
  %2767 = vmatprep.subr.mxu0 0.0
  %2768 = vmatpush1.msra.mxu0 0.0
  %2769 = vmatprep.subr.mxu0 0.0
  %2770 = vmatpush1.msra.mxu0 0.0
  %2771 = vmatprep.subr.mxu0 0.0
  %2772 = vmatpush1.msra.mxu0 0.0
  %2773 = vmatprep.subr.mxu0 0.0
  %2774 = vmatpush1.msra.mxu0 0.0
  %2775 = vmatprep.subr.mxu0 0.0
  %2776 = vmatpush1.msra.mxu0 0.0
  %2777 = vmatprep.subr.mxu0 0.0
  %2778 = vmatpush1.msra.mxu0 0.0
  %2779 = vmatprep.subr.mxu0 0.0
  %2780 = vmatpush1.msra.mxu0 0.0
  %2781 = vmatprep.subr.mxu0 0.0
  %2782 = vmatpush1.msra.mxu0 0.0
  %2783 = vmatprep.subr.mxu0 0.0
  %2784 = vmatpush1.msra.mxu0 0.0
  %2785 = vmatprep.subr.mxu0 0.0
  %2786 = vmatpush1.msra.mxu0 0.0
  %2787 = vmatprep.subr.mxu0 0.0
  %2788 = vmatpush1.msra.mxu0 0.0
  %2789 = vmatprep.subr.mxu0 0.0
  %2790 = vmatpush1.msra.mxu0 0.0
  %2791 = vmatprep.subr.mxu0 0.0
  %2792 = vmatpush1.msra.mxu0 0.0
  %2793 = vmatprep.subr.mxu0 0.0
  %2794 = vmatpush1.msra.mxu0 0.0
  %2795 = vmatprep.subr.mxu0 0.0
  %2796 = vmatpush1.msra.mxu0 0.0
  %2797 = vmatprep.mubr.f32.mxu0 0.0
  %2798 = vmatmul.mubr.f32.gmra.mrb[0].mxu0 %v2731
  %v2799 = vpop.f32.mrb[0].mxu0
  %v2800 = vadd.f32 0.0, %v2799
  %v2801 = vpop.f32.mrb[0].mxu0
  %2802 = vdwg.mxu0
  %v2804 = vsel %vm1471, %v2642, 0
  %2806 = vmatprep.subr.mxu0 0.0
  %2807 = vmatpush1.msra.mxu0 %v2651
  %2808 = vmatprep.subr.mxu0 0.0
  %2809 = vmatpush1.msra.mxu0 0.0
  %2810 = vmatprep.subr.mxu0 0.0
  %2811 = vmatpush1.msra.mxu0 0.0
  %2812 = vmatprep.subr.mxu0 0.0
  %2813 = vmatpush1.msra.mxu0 0.0
  %2814 = vmatprep.subr.mxu0 0.0
  %2815 = vmatpush1.msra.mxu0 0.0
  %2816 = vmatprep.subr.mxu0 0.0
  %2817 = vmatpush1.msra.mxu0 0.0
  %2818 = vmatprep.subr.mxu0 0.0
  %2819 = vmatpush1.msra.mxu0 0.0
  %2820 = vmatprep.subr.mxu0 0.0
  %2821 = vmatpush1.msra.mxu0 0.0
  %2822 = vmatprep.subr.mxu0 0.0
  %2823 = vmatpush1.msra.mxu0 0.0
  %2824 = vmatprep.subr.mxu0 0.0
  %2825 = vmatpush1.msra.mxu0 0.0
  %2826 = vmatprep.subr.mxu0 0.0
  %2827 = vmatpush1.msra.mxu0 0.0
  %2828 = vmatprep.subr.mxu0 0.0
  %2829 = vmatpush1.msra.mxu0 0.0
  %2830 = vmatprep.subr.mxu0 0.0
  %2831 = vmatpush1.msra.mxu0 0.0
  %2832 = vmatprep.subr.mxu0 0.0
  %2833 = vmatpush1.msra.mxu0 0.0
  %2834 = vmatprep.subr.mxu0 0.0
  %2835 = vmatpush1.msra.mxu0 0.0
  %2836 = vmatprep.subr.mxu0 0.0
  %2837 = vmatpush1.msra.mxu0 0.0
  %2838 = vmatprep.subr.mxu0 0.0
  %2839 = vmatpush1.msra.mxu0 0.0
  %2840 = vmatprep.subr.mxu0 0.0
  %2841 = vmatpush1.msra.mxu0 0.0
  %2842 = vmatprep.subr.mxu0 0.0
  %2843 = vmatpush1.msra.mxu0 0.0
  %2844 = vmatprep.subr.mxu0 0.0
  %2845 = vmatpush1.msra.mxu0 0.0
  %2846 = vmatprep.subr.mxu0 0.0
  %2847 = vmatpush1.msra.mxu0 0.0
  %2848 = vmatprep.subr.mxu0 0.0
  %2849 = vmatpush1.msra.mxu0 0.0
  %2850 = vmatprep.subr.mxu0 0.0
  %2851 = vmatpush1.msra.mxu0 0.0
  %2852 = vmatprep.subr.mxu0 0.0
  %2853 = vmatpush1.msra.mxu0 0.0
  %2854 = vmatprep.subr.mxu0 0.0
  %2855 = vmatpush1.msra.mxu0 0.0
  %2856 = vmatprep.subr.mxu0 0.0
  %2857 = vmatpush1.msra.mxu0 0.0
  %2858 = vmatprep.subr.mxu0 0.0
  %2859 = vmatpush1.msra.mxu0 0.0
  %2860 = vmatprep.subr.mxu0 0.0
  %2861 = vmatpush1.msra.mxu0 0.0
  %2862 = vmatprep.subr.mxu0 0.0
  %2863 = vmatpush1.msra.mxu0 0.0
  %2864 = vmatprep.subr.mxu0 0.0
  %2865 = vmatpush1.msra.mxu0 0.0
  %2866 = vmatprep.subr.mxu0 0.0
  %2867 = vmatpush1.msra.mxu0 0.0
  %2868 = vmatprep.subr.mxu0 0.0
  %2869 = vmatpush1.msra.mxu0 0.0
  %2870 = vmatprep.mubr.f32.mxu0 0.0
  %2871 = vmatmul.mubr.f32.gmra.mrb[0].mxu0 %v2804
  %v2872 = vpop.f32.mrb[0].mxu0
  %v2873 = vadd.f32 0.0, %v2872
  %v2874 = vpop.f32.mrb[0].mxu0
  %2875 = vdwg.mxu0
  %v2877 = vsel %vm1471, %v2643, 0
  %2879 = vmatprep.subr.mxu0 0.0
  %2880 = vmatpush1.msra.mxu0 %v2652
  %2881 = vmatprep.subr.mxu0 0.0
  %2882 = vmatpush1.msra.mxu0 0.0
  %2883 = vmatprep.subr.mxu0 0.0
  %2884 = vmatpush1.msra.mxu0 0.0
  %2885 = vmatprep.subr.mxu0 0.0
  %2886 = vmatpush1.msra.mxu0 0.0
  %2887 = vmatprep.subr.mxu0 0.0
  %2888 = vmatpush1.msra.mxu0 0.0
  %2889 = vmatprep.subr.mxu0 0.0
  %2890 = vmatpush1.msra.mxu0 0.0
  %2891 = vmatprep.subr.mxu0 0.0
  %2892 = vmatpush1.msra.mxu0 0.0
  %2893 = vmatprep.subr.mxu0 0.0
  %2894 = vmatpush1.msra.mxu0 0.0
  %2895 = vmatprep.subr.mxu0 0.0
  %2896 = vmatpush1.msra.mxu0 0.0
  %2897 = vmatprep.subr.mxu0 0.0
  %2898 = vmatpush1.msra.mxu0 0.0
  %2899 = vmatprep.subr.mxu0 0.0
  %2900 = vmatpush1.msra.mxu0 0.0
  %2901 = vmatprep.subr.mxu0 0.0
  %2902 = vmatpush1.msra.mxu0 0.0
  %2903 = vmatprep.subr.mxu0 0.0
  %2904 = vmatpush1.msra.mxu0 0.0
  %2905 = vmatprep.subr.mxu0 0.0
  %2906 = vmatpush1.msra.mxu0 0.0
  %2907 = vmatprep.subr.mxu0 0.0
  %2908 = vmatpush1.msra.mxu0 0.0
  %2909 = vmatprep.subr.mxu0 0.0
  %2910 = vmatpush1.msra.mxu0 0.0
  %2911 = vmatprep.subr.mxu0 0.0
  %2912 = vmatpush1.msra.mxu0 0.0
  %2913 = vmatprep.subr.mxu0 0.0
  %2914 = vmatpush1.msra.mxu0 0.0
  %2915 = vmatprep.subr.mxu0 0.0
  %2916 = vmatpush1.msra.mxu0 0.0
  %2917 = vmatprep.subr.mxu0 0.0
  %2918 = vmatpush1.msra.mxu0 0.0
  %2919 = vmatprep.subr.mxu0 0.0
  %2920 = vmatpush1.msra.mxu0 0.0
  %2921 = vmatprep.subr.mxu0 0.0
  %2922 = vmatpush1.msra.mxu0 0.0
  %2923 = vmatprep.subr.mxu0 0.0
  %2924 = vmatpush1.msra.mxu0 0.0
  %2925 = vmatprep.subr.mxu0 0.0
  %2926 = vmatpush1.msra.mxu0 0.0
  %2927 = vmatprep.subr.mxu0 0.0
  %2928 = vmatpush1.msra.mxu0 0.0
  %2929 = vmatprep.subr.mxu0 0.0
  %2930 = vmatpush1.msra.mxu0 0.0
  %2931 = vmatprep.subr.mxu0 0.0
  %2932 = vmatpush1.msra.mxu0 0.0
  %2933 = vmatprep.subr.mxu0 0.0
  %2934 = vmatpush1.msra.mxu0 0.0
  %2935 = vmatprep.subr.mxu0 0.0
  %2936 = vmatpush1.msra.mxu0 0.0
  %2937 = vmatprep.subr.mxu0 0.0
  %2938 = vmatpush1.msra.mxu0 0.0
  %2939 = vmatprep.subr.mxu0 0.0
  %2940 = vmatpush1.msra.mxu0 0.0
  %2941 = vmatprep.subr.mxu0 0.0
  %2942 = vmatpush1.msra.mxu0 0.0
  %2943 = vmatprep.mubr.f32.mxu0 0.0
  %2944 = vmatmul.mubr.f32.gmra.mrb[0].mxu0 %v2877
  %v2945 = vpop.f32.mrb[0].mxu0
  %v2946 = vadd.f32 0.0, %v2945
  %v2947 = vpop.f32.mrb[0].mxu0
  %2948 = vdwg.mxu0
  %v2950 = vsel %vm1471, %v2644, 0
  %2952 = vmatprep.subr.mxu0 0.0
  %2953 = vmatpush1.msra.mxu0 %v2653
  %2954 = vmatprep.subr.mxu0 0.0
  %2955 = vmatpush1.msra.mxu0 0.0
  %2956 = vmatprep.subr.mxu0 0.0
  %2957 = vmatpush1.msra.mxu0 0.0
  %2958 = vmatprep.subr.mxu0 0.0
  %2959 = vmatpush1.msra.mxu0 0.0
  %2960 = vmatprep.subr.mxu0 0.0
  %2961 = vmatpush1.msra.mxu0 0.0
  %2962 = vmatprep.subr.mxu0 0.0
  %2963 = vmatpush1.msra.mxu0 0.0
  %2964 = vmatprep.subr.mxu0 0.0
  %2965 = vmatpush1.msra.mxu0 0.0
  %2966 = vmatprep.subr.mxu0 0.0
  %2967 = vmatpush1.msra.mxu0 0.0
  %2968 = vmatprep.subr.mxu0 0.0
  %2969 = vmatpush1.msra.mxu0 0.0
  %2970 = vmatprep.subr.mxu0 0.0
  %2971 = vmatpush1.msra.mxu0 0.0
  %2972 = vmatprep.subr.mxu0 0.0
  %2973 = vmatpush1.msra.mxu0 0.0
  %2974 = vmatprep.subr.mxu0 0.0
  %2975 = vmatpush1.msra.mxu0 0.0
  %2976 = vmatprep.subr.mxu0 0.0
  %2977 = vmatpush1.msra.mxu0 0.0
  %2978 = vmatprep.subr.mxu0 0.0
  %2979 = vmatpush1.msra.mxu0 0.0
  %2980 = vmatprep.subr.mxu0 0.0
  %2981 = vmatpush1.msra.mxu0 0.0
  %2982 = vmatprep.subr.mxu0 0.0
  %2983 = vmatpush1.msra.mxu0 0.0
  %2984 = vmatprep.subr.mxu0 0.0
  %2985 = vmatpush1.msra.mxu0 0.0
  %2986 = vmatprep.subr.mxu0 0.0
  %2987 = vmatpush1.msra.mxu0 0.0
  %2988 = vmatprep.subr.mxu0 0.0
  %2989 = vmatpush1.msra.mxu0 0.0
  %2990 = vmatprep.subr.mxu0 0.0
  %2991 = vmatpush1.msra.mxu0 0.0
  %2992 = vmatprep.subr.mxu0 0.0
  %2993 = vmatpush1.msra.mxu0 0.0
  %2994 = vmatprep.subr.mxu0 0.0
  %2995 = vmatpush1.msra.mxu0 0.0
  %2996 = vmatprep.subr.mxu0 0.0
  %2997 = vmatpush1.msra.mxu0 0.0
  %2998 = vmatprep.subr.mxu0 0.0
  %2999 = vmatpush1.msra.mxu0 0.0
  %3000 = vmatprep.subr.mxu0 0.0
  %3001 = vmatpush1.msra.mxu0 0.0
  %3002 = vmatprep.subr.mxu0 0.0
  %3003 = vmatpush1.msra.mxu0 0.0
  %3004 = vmatprep.subr.mxu0 0.0
  %3005 = vmatpush1.msra.mxu0 0.0
  %3006 = vmatprep.subr.mxu0 0.0
  %3007 = vmatpush1.msra.mxu0 0.0
  %3008 = vmatprep.subr.mxu0 0.0
  %3009 = vmatpush1.msra.mxu0 0.0
  %3010 = vmatprep.subr.mxu0 0.0
  %3011 = vmatpush1.msra.mxu0 0.0
  %3012 = vmatprep.subr.mxu0 0.0
  %3013 = vmatpush1.msra.mxu0 0.0
  %3014 = vmatprep.subr.mxu0 0.0
  %3015 = vmatpush1.msra.mxu0 0.0
  %3016 = vmatprep.mubr.f32.mxu0 0.0
  %3017 = vmatmul.mubr.f32.gmra.mrb[0].mxu0 %v2950
  %v3018 = vpop.f32.mrb[0].mxu0
  %v3019 = vadd.f32 0.0, %v3018
  %v3020 = vpop.f32.mrb[0].mxu0
  %3021 = vdwg.mxu0
  %v3023 = vsel %vm1471, %v2645, 0
  %3025 = vmatprep.subr.mxu0 0.0
  %3026 = vmatpush1.msra.mxu0 %v2654
  %3027 = vmatprep.subr.mxu0 0.0
  %3028 = vmatpush1.msra.mxu0 0.0
  %3029 = vmatprep.subr.mxu0 0.0
  %3030 = vmatpush1.msra.mxu0 0.0
  %3031 = vmatprep.subr.mxu0 0.0
  %3032 = vmatpush1.msra.mxu0 0.0
  %3033 = vmatprep.subr.mxu0 0.0
  %3034 = vmatpush1.msra.mxu0 0.0
  %3035 = vmatprep.subr.mxu0 0.0
  %3036 = vmatpush1.msra.mxu0 0.0
  %3037 = vmatprep.subr.mxu0 0.0
  %3038 = vmatpush1.msra.mxu0 0.0
  %3039 = vmatprep.subr.mxu0 0.0
  %3040 = vmatpush1.msra.mxu0 0.0
  %3041 = vmatprep.subr.mxu0 0.0
  %3042 = vmatpush1.msra.mxu0 0.0
  %3043 = vmatprep.subr.mxu0 0.0
  %3044 = vmatpush1.msra.mxu0 0.0
  %3045 = vmatprep.subr.mxu0 0.0
  %3046 = vmatpush1.msra.mxu0 0.0
  %3047 = vmatprep.subr.mxu0 0.0
  %3048 = vmatpush1.msra.mxu0 0.0
  %3049 = vmatprep.subr.mxu0 0.0
  %3050 = vmatpush1.msra.mxu0 0.0
  %3051 = vmatprep.subr.mxu0 0.0
  %3052 = vmatpush1.msra.mxu0 0.0
  %3053 = vmatprep.subr.mxu0 0.0
  %3054 = vmatpush1.msra.mxu0 0.0
  %3055 = vmatprep.subr.mxu0 0.0
  %3056 = vmatpush1.msra.mxu0 0.0
  %3057 = vmatprep.subr.mxu0 0.0
  %3058 = vmatpush1.msra.mxu0 0.0
  %3059 = vmatprep.subr.mxu0 0.0
  %3060 = vmatpush1.msra.mxu0 0.0
  %3061 = vmatprep.subr.mxu0 0.0
  %3062 = vmatpush1.msra.mxu0 0.0
  %3063 = vmatprep.subr.mxu0 0.0
  %3064 = vmatpush1.msra.mxu0 0.0
  %3065 = vmatprep.subr.mxu0 0.0
  %3066 = vmatpush1.msra.mxu0 0.0
  %3067 = vmatprep.subr.mxu0 0.0
  %3068 = vmatpush1.msra.mxu0 0.0
  %3069 = vmatprep.subr.mxu0 0.0
  %3070 = vmatpush1.msra.mxu0 0.0
  %3071 = vmatprep.subr.mxu0 0.0
  %3072 = vmatpush1.msra.mxu0 0.0
  %3073 = vmatprep.subr.mxu0 0.0
  %3074 = vmatpush1.msra.mxu0 0.0
  %3075 = vmatprep.subr.mxu0 0.0
  %3076 = vmatpush1.msra.mxu0 0.0
  %3077 = vmatprep.subr.mxu0 0.0
  %3078 = vmatpush1.msra.mxu0 0.0
  %3079 = vmatprep.subr.mxu0 0.0
  %3080 = vmatpush1.msra.mxu0 0.0
  %3081 = vmatprep.subr.mxu0 0.0
  %3082 = vmatpush1.msra.mxu0 0.0
  %3083 = vmatprep.subr.mxu0 0.0
  %3084 = vmatpush1.msra.mxu0 0.0
  %3085 = vmatprep.subr.mxu0 0.0
  %3086 = vmatpush1.msra.mxu0 0.0
  %3087 = vmatprep.subr.mxu0 0.0
  %3088 = vmatpush1.msra.mxu0 0.0
  %3089 = vmatprep.mubr.f32.mxu0 0.0
  %3090 = vmatmul.mubr.f32.gmra.mrb[0].mxu0 %v3023
  %v3091 = vpop.f32.mrb[0].mxu0
  %v3092 = vadd.f32 0.0, %v3091
  %v3093 = vpop.f32.mrb[0].mxu0
  %3094 = vdwg.mxu0
  %v3096 = vsel %vm1471, %v2646, 0
  %3098 = vmatprep.subr.mxu0 0.0
  %3099 = vmatpush1.msra.mxu0 %v2655
  %3100 = vmatprep.subr.mxu0 0.0
  %3101 = vmatpush1.msra.mxu0 0.0
  %3102 = vmatprep.subr.mxu0 0.0
  %3103 = vmatpush1.msra.mxu0 0.0
  %3104 = vmatprep.subr.mxu0 0.0
  %3105 = vmatpush1.msra.mxu0 0.0
  %3106 = vmatprep.subr.mxu0 0.0
  %3107 = vmatpush1.msra.mxu0 0.0
  %3108 = vmatprep.subr.mxu0 0.0
  %3109 = vmatpush1.msra.mxu0 0.0
  %3110 = vmatprep.subr.mxu0 0.0
  %3111 = vmatpush1.msra.mxu0 0.0
  %3112 = vmatprep.subr.mxu0 0.0
  %3113 = vmatpush1.msra.mxu0 0.0
  %3114 = vmatprep.subr.mxu0 0.0
  %3115 = vmatpush1.msra.mxu0 0.0
  %3116 = vmatprep.subr.mxu0 0.0
  %3117 = vmatpush1.msra.mxu0 0.0
  %3118 = vmatprep.subr.mxu0 0.0
  %3119 = vmatpush1.msra.mxu0 0.0
  %3120 = vmatprep.subr.mxu0 0.0
  %3121 = vmatpush1.msra.mxu0 0.0
  %3122 = vmatprep.subr.mxu0 0.0
  %3123 = vmatpush1.msra.mxu0 0.0
  %3124 = vmatprep.subr.mxu0 0.0
  %3125 = vmatpush1.msra.mxu0 0.0
  %3126 = vmatprep.subr.mxu0 0.0
  %3127 = vmatpush1.msra.mxu0 0.0
  %3128 = vmatprep.subr.mxu0 0.0
  %3129 = vmatpush1.msra.mxu0 0.0
  %3130 = vmatprep.subr.mxu0 0.0
  %3131 = vmatpush1.msra.mxu0 0.0
  %3132 = vmatprep.subr.mxu0 0.0
  %3133 = vmatpush1.msra.mxu0 0.0
  %3134 = vmatprep.subr.mxu0 0.0
  %3135 = vmatpush1.msra.mxu0 0.0
  %3136 = vmatprep.subr.mxu0 0.0
  %3137 = vmatpush1.msra.mxu0 0.0
  %3138 = vmatprep.subr.mxu0 0.0
  %3139 = vmatpush1.msra.mxu0 0.0
  %3140 = vmatprep.subr.mxu0 0.0
  %3141 = vmatpush1.msra.mxu0 0.0
  %3142 = vmatprep.subr.mxu0 0.0
  %3143 = vmatpush1.msra.mxu0 0.0
  %3144 = vmatprep.subr.mxu0 0.0
  %3145 = vmatpush1.msra.mxu0 0.0
  %3146 = vmatprep.subr.mxu0 0.0
  %3147 = vmatpush1.msra.mxu0 0.0
  %3148 = vmatprep.subr.mxu0 0.0
  %3149 = vmatpush1.msra.mxu0 0.0
  %3150 = vmatprep.subr.mxu0 0.0
  %3151 = vmatpush1.msra.mxu0 0.0
  %3152 = vmatprep.subr.mxu0 0.0
  %3153 = vmatpush1.msra.mxu0 0.0
  %3154 = vmatprep.subr.mxu0 0.0
  %3155 = vmatpush1.msra.mxu0 0.0
  %3156 = vmatprep.subr.mxu0 0.0
  %3157 = vmatpush1.msra.mxu0 0.0
  %3158 = vmatprep.subr.mxu0 0.0
  %3159 = vmatpush1.msra.mxu0 0.0
  %3160 = vmatprep.subr.mxu0 0.0
  %3161 = vmatpush1.msra.mxu0 0.0
  %3162 = vmatprep.mubr.f32.mxu0 0.0
  %3163 = vmatmul.mubr.f32.gmra.mrb[0].mxu0 %v3096
  %v3164 = vpop.f32.mrb[0].mxu0
  %v3165 = vadd.f32 0.0, %v3164
  %v3166 = vpop.f32.mrb[0].mxu0
  %3167 = vdwg.mxu0
  %v3169 = vsel %vm1471, %v2647, 0
  %3171 = vmatprep.subr.mxu0 0.0
  %3172 = vmatpush1.msra.mxu0 %v2656
  %3173 = vmatprep.subr.mxu0 0.0
  %3174 = vmatpush1.msra.mxu0 0.0
  %3175 = vmatprep.subr.mxu0 0.0
  %3176 = vmatpush1.msra.mxu0 0.0
  %3177 = vmatprep.subr.mxu0 0.0
  %3178 = vmatpush1.msra.mxu0 0.0
  %3179 = vmatprep.subr.mxu0 0.0
  %3180 = vmatpush1.msra.mxu0 0.0
  %3181 = vmatprep.subr.mxu0 0.0
  %3182 = vmatpush1.msra.mxu0 0.0
  %3183 = vmatprep.subr.mxu0 0.0
  %3184 = vmatpush1.msra.mxu0 0.0
  %3185 = vmatprep.subr.mxu0 0.0
  %3186 = vmatpush1.msra.mxu0 0.0
  %3187 = vmatprep.subr.mxu0 0.0
  %3188 = vmatpush1.msra.mxu0 0.0
  %3189 = vmatprep.subr.mxu0 0.0
  %3190 = vmatpush1.msra.mxu0 0.0
  %3191 = vmatprep.subr.mxu0 0.0
  %3192 = vmatpush1.msra.mxu0 0.0
  %3193 = vmatprep.subr.mxu0 0.0
  %3194 = vmatpush1.msra.mxu0 0.0
  %3195 = vmatprep.subr.mxu0 0.0
  %3196 = vmatpush1.msra.mxu0 0.0
  %3197 = vmatprep.subr.mxu0 0.0
  %3198 = vmatpush1.msra.mxu0 0.0
  %3199 = vmatprep.subr.mxu0 0.0
  %3200 = vmatpush1.msra.mxu0 0.0
  %3201 = vmatprep.subr.mxu0 0.0
  %3202 = vmatpush1.msra.mxu0 0.0
  %3203 = vmatprep.subr.mxu0 0.0
  %3204 = vmatpush1.msra.mxu0 0.0
  %3205 = vmatprep.subr.mxu0 0.0
  %3206 = vmatpush1.msra.mxu0 0.0
  %3207 = vmatprep.subr.mxu0 0.0
  %3208 = vmatpush1.msra.mxu0 0.0
  %3209 = vmatprep.subr.mxu0 0.0
  %3210 = vmatpush1.msra.mxu0 0.0
  %3211 = vmatprep.subr.mxu0 0.0
  %3212 = vmatpush1.msra.mxu0 0.0
  %3213 = vmatprep.subr.mxu0 0.0
  %3214 = vmatpush1.msra.mxu0 0.0
  %3215 = vmatprep.subr.mxu0 0.0
  %3216 = vmatpush1.msra.mxu0 0.0
  %3217 = vmatprep.subr.mxu0 0.0
  %3218 = vmatpush1.msra.mxu0 0.0
  %3219 = vmatprep.subr.mxu0 0.0
  %3220 = vmatpush1.msra.mxu0 0.0
  %3221 = vmatprep.subr.mxu0 0.0
  %3222 = vmatpush1.msra.mxu0 0.0
  %3223 = vmatprep.subr.mxu0 0.0
  %3224 = vmatpush1.msra.mxu0 0.0
  %3225 = vmatprep.subr.mxu0 0.0
  %3226 = vmatpush1.msra.mxu0 0.0
  %3227 = vmatprep.subr.mxu0 0.0
  %3228 = vmatpush1.msra.mxu0 0.0
  %3229 = vmatprep.subr.mxu0 0.0
  %3230 = vmatpush1.msra.mxu0 0.0
  %3231 = vmatprep.subr.mxu0 0.0
  %3232 = vmatpush1.msra.mxu0 0.0
  %3233 = vmatprep.subr.mxu0 0.0
  %3234 = vmatpush1.msra.mxu0 0.0
  %3235 = vmatprep.mubr.f32.mxu0 0.0
  %3236 = vmatmul.mubr.f32.gmra.mrb[0].mxu0 %v3169
  %v3237 = vpop.f32.mrb[0].mxu0
  %v3238 = vadd.f32 0.0, %v3237
  %v3239 = vpop.f32.mrb[0].mxu0
  %3240 = vdwg.mxu0
  %v3241 = vadd.f32 %v2126, %v2727
  %v3242 = vadd.f32 %v2199, %v2800
  %v3243 = vadd.f32 %v2272, %v2873
  %v3244 = vadd.f32 %v2345, %v2946
  %v3245 = vadd.f32 %v2418, %v3019
  %v3246 = vadd.f32 %v2491, %v3092
  %v3247 = vadd.f32 %v2564, %v3165
  %v3248 = vadd.f32 %v2637, %v3238
  %v3249 = vld [vmem:[%s4] sm:$0x1]
  %v3250 = vld [vmem:[%s4 + $0x4] sm:$0x1]
  %v3251 = vld [vmem:[%s4 + $0x8] sm:$0x1]
  %v3252 = vld [vmem:[%s4 + $0xc] sm:$0x1]
  %v3253 = vld [vmem:[%s4 + $0x10] sm:$0x1]
  %v3254 = vld [vmem:[%s4 + $0x14] sm:$0x1]
  %v3255 = vld [vmem:[%s4 + $0x18] sm:$0x1]
  %v3256 = vld [vmem:[%s4 + $0x1c] sm:$0x1]
  %v3257 = vlaneseq
  %v3258 = vshrl.u32 %v3257, 7
  %v3259 = vsub.s32 0, %v3258
  %v3260 = vrot.slane %v3249, %v3259
  %v3261 = vlaneseq
  %v3262 = vshrl.u32 %v3261, 7
  %v3263 = vsub.s32 0, %v3262
  %v3264 = vrot.slane %v3250, %v3263
  %v3265 = vlaneseq
  %v3266 = vshrl.u32 %v3265, 7
  %v3267 = vsub.s32 0, %v3266
  %v3268 = vrot.slane %v3251, %v3267
  %v3269 = vlaneseq
  %v3270 = vshrl.u32 %v3269, 7
  %v3271 = vsub.s32 0, %v3270
  %v3272 = vrot.slane %v3252, %v3271
  %v3273 = vlaneseq
  %v3274 = vshrl.u32 %v3273, 7
  %v3275 = vsub.s32 0, %v3274
  %v3276 = vrot.slane %v3253, %v3275
  %v3277 = vlaneseq
  %v3278 = vshrl.u32 %v3277, 7
  %v3279 = vsub.s32 0, %v3278
  %v3280 = vrot.slane %v3254, %v3279
  %v3281 = vlaneseq
  %v3282 = vshrl.u32 %v3281, 7
  %v3283 = vsub.s32 0, %v3282
  %v3284 = vrot.slane %v3255, %v3283
  %v3285 = vlaneseq
  %v3286 = vshrl.u32 %v3285, 7
  %v3287 = vsub.s32 0, %v3286
  %v3288 = vrot.slane %v3256, %v3287
  %v3289 = vadd.f32 %v3241, %v3260
  %v3290 = vadd.f32 %v3242, %v3264
  %v3291 = vadd.f32 %v3243, %v3268
  %v3292 = vadd.f32 %v3244, %v3272
  %v3293 = vadd.f32 %v3245, %v3276
  %v3294 = vadd.f32 %v3246, %v3280
  %v3295 = vadd.f32 %v3247, %v3284
  %v3296 = vadd.f32 %v3248, %v3288
  %v3297 = vmax.f32 %v3289, 0.0
  %v3298 = vmax.f32 %v3290, 0.0
  %v3299 = vmax.f32 %v3291, 0.0
  %v3300 = vmax.f32 %v3292, 0.0
  %v3301 = vmax.f32 %v3293, 0.0
  %v3302 = vmax.f32 %v3294, 0.0
  %v3303 = vmax.f32 %v3295, 0.0
  %v3304 = vmax.f32 %v3296, 0.0
  %v3305 = vld [vmem:[%s4 + $0x1] sm:$0x1]
  %v3306 = vld [vmem:[%s4 + $0x5] sm:$0x1]
  %v3307 = vld [vmem:[%s4 + $0x9] sm:$0x1]
  %v3308 = vld [vmem:[%s4 + $0xd] sm:$0x1]
  %v3309 = vld [vmem:[%s4 + $0x11] sm:$0x1]
  %v3310 = vld [vmem:[%s4 + $0x15] sm:$0x1]
  %v3311 = vld [vmem:[%s4 + $0x19] sm:$0x1]
  %v3312 = vld [vmem:[%s4 + $0x1d] sm:$0x1]
  %v3313 = vlaneseq
  %v3314 = vshrl.u32 %v3313, 7
  %v3315 = vsub.s32 0, %v3314
  %v3316 = vrot.slane %v3305, %v3315
  %v3317 = vlaneseq
  %v3318 = vshrl.u32 %v3317, 7
  %v3319 = vsub.s32 0, %v3318
  %v3320 = vrot.slane %v3306, %v3319
  %v3321 = vlaneseq
  %v3322 = vshrl.u32 %v3321, 7
  %v3323 = vsub.s32 0, %v3322
  %v3324 = vrot.slane %v3307, %v3323
  %v3325 = vlaneseq
  %v3326 = vshrl.u32 %v3325, 7
  %v3327 = vsub.s32 0, %v3326
  %v3328 = vrot.slane %v3308, %v3327
  %v3329 = vlaneseq
  %v3330 = vshrl.u32 %v3329, 7
  %v3331 = vsub.s32 0, %v3330
  %v3332 = vrot.slane %v3309, %v3331
  %v3333 = vlaneseq
  %v3334 = vshrl.u32 %v3333, 7
  %v3335 = vsub.s32 0, %v3334
  %v3336 = vrot.slane %v3310, %v3335
  %v3337 = vlaneseq
  %v3338 = vshrl.u32 %v3337, 7
  %v3339 = vsub.s32 0, %v3338
  %v3340 = vrot.slane %v3311, %v3339
  %v3341 = vlaneseq
  %v3342 = vshrl.u32 %v3341, 7
  %v3343 = vsub.s32 0, %v3342
  %v3344 = vrot.slane %v3312, %v3343
  %v3345 = vmul.f32 %v3297, %v3316
  %v3346 = vmul.f32 %v3298, %v3320
  %v3347 = vmul.f32 %v3299, %v3324
  %v3348 = vmul.f32 %v3300, %v3328
  %v3349 = vmul.f32 %v3301, %v3332
  %v3350 = vmul.f32 %v3302, %v3336
  %v3351 = vmul.f32 %v3303, %v3340
  %v3352 = vmul.f32 %v3304, %v3344
  %v3353 = vld [vmem:[%s4 + $0x2] sm:$0x1]
  %v3354 = vld [vmem:[%s4 + $0x6] sm:$0x1]
  %v3355 = vld [vmem:[%s4 + $0xa] sm:$0x1]
  %v3356 = vld [vmem:[%s4 + $0xe] sm:$0x1]
  %v3357 = vld [vmem:[%s4 + $0x12] sm:$0x1]
  %v3358 = vld [vmem:[%s4 + $0x16] sm:$0x1]
  %v3359 = vld [vmem:[%s4 + $0x1a] sm:$0x1]
  %v3360 = vld [vmem:[%s4 + $0x1e] sm:$0x1]
  %v3361 = vlaneseq
  %v3362 = vshrl.u32 %v3361, 7
  %v3363 = vsub.s32 0, %v3362
  %v3364 = vrot.slane %v3353, %v3363
  %v3365 = vlaneseq
  %v3366 = vshrl.u32 %v3365, 7
  %v3367 = vsub.s32 0, %v3366
  %v3368 = vrot.slane %v3354, %v3367
  %v3369 = vlaneseq
  %v3370 = vshrl.u32 %v3369, 7
  %v3371 = vsub.s32 0, %v3370
  %v3372 = vrot.slane %v3355, %v3371
  %v3373 = vlaneseq
  %v3374 = vshrl.u32 %v3373, 7
  %v3375 = vsub.s32 0, %v3374
  %v3376 = vrot.slane %v3356, %v3375
  %v3377 = vlaneseq
  %v3378 = vshrl.u32 %v3377, 7
  %v3379 = vsub.s32 0, %v3378
  %v3380 = vrot.slane %v3357, %v3379
  %v3381 = vlaneseq
  %v3382 = vshrl.u32 %v3381, 7
  %v3383 = vsub.s32 0, %v3382
  %v3384 = vrot.slane %v3358, %v3383
  %v3385 = vlaneseq
  %v3386 = vshrl.u32 %v3385, 7
  %v3387 = vsub.s32 0, %v3386
  %v3388 = vrot.slane %v3359, %v3387
  %v3389 = vlaneseq
  %v3390 = vshrl.u32 %v3389, 7
  %v3391 = vsub.s32 0, %v3390
  %v3392 = vrot.slane %v3360, %v3391
  %v3393 = vadd.f32 %v3345, %v3364
  %v3394 = vadd.f32 %v3346, %v3368
  %v3395 = vadd.f32 %v3347, %v3372
  %v3396 = vadd.f32 %v3348, %v3376
  %v3397 = vadd.f32 %v3349, %v3380
  %v3398 = vadd.f32 %v3350, %v3384
  %v3399 = vadd.f32 %v3351, %v3388
  %v3400 = vadd.f32 %v3352, %v3392
  %vm3401 = vcmask 61440
  %3402 = vst.msk [vmem:[#allocation3] sm:$0x1f] %vm3401, %v3393
  %3403 = vst.msk [vmem:[#allocation3 + $0x8] sm:$0x1f] %vm3401, %v3394
  %3404 = vst.msk [vmem:[#allocation3 + $0x10] sm:$0x1f] %vm3401, %v3395
  %3405 = vst.msk [vmem:[#allocation3 + $0x18] sm:$0x1f] %vm3401, %v3396
  %3406 = vst.msk [vmem:[#allocation3 + $0x20] sm:$0x1f] %vm3401, %v3397
  %3407 = vst.msk [vmem:[#allocation3 + $0x28] sm:$0x1f] %vm3401, %v3398
  %3408 = vst.msk [vmem:[#allocation3 + $0x30] sm:$0x1f] %vm3401, %v3399
  %3409 = vst.msk [vmem:[#allocation3 + $0x38] sm:$0x1f] %vm3401, %v3400
  %v3410 = vld [vmem:[#allocation3] sm:$0xf]
  %v3411 = vld [vmem:[#allocation3 + $0x8] sm:$0xf]
  %v3412 = vld [vmem:[#allocation3 + $0x10] sm:$0xf]
  %v3413 = vld [vmem:[#allocation3 + $0x18] sm:$0xf]
  %v3414 = vld [vmem:[#allocation3 + $0x20] sm:$0xf]
  %v3415 = vld [vmem:[#allocation3 + $0x28] sm:$0xf]
  %v3416 = vld [vmem:[#allocation3 + $0x30] sm:$0xf]
  %v3417 = vld [vmem:[#allocation3 + $0x38] sm:$0xf]
  %v3418 = vld [vmem:[%s5] sm:$0xff]
  %v3419 = vld [vmem:[%s5 + $0x8] sm:$0xff]
  %v3420 = vld [vmem:[%s5 + $0x10] sm:$0xff]
  %v3421 = vld [vmem:[%s5 + $0x18] sm:$0xff]
  %v3422 = vld [vmem:[%s5 + $0x20] sm:$0xff]
  %v3423 = vld [vmem:[%s5 + $0x28] sm:$0xff]
  %v3424 = vld [vmem:[%s5 + $0x30] sm:$0xff]
  %v3425 = vld [vmem:[%s5 + $0x38] sm:$0xff]
  %v3426 = vld [vmem:[#allocation3 + $0x1] sm:$0xf]
  %v3427 = vld [vmem:[#allocation3 + $0x9] sm:$0xf]
  %v3428 = vld [vmem:[#allocation3 + $0x11] sm:$0xf]
  %v3429 = vld [vmem:[#allocation3 + $0x19] sm:$0xf]
  %v3430 = vld [vmem:[#allocation3 + $0x21] sm:$0xf]
  %v3431 = vld [vmem:[#allocation3 + $0x29] sm:$0xf]
  %v3432 = vld [vmem:[#allocation3 + $0x31] sm:$0xf]
  %v3433 = vld [vmem:[#allocation3 + $0x39] sm:$0xf]
  %s3434 = scalar_lea.vmem %s5, 64
  %v3435 = vld [vmem:[%s3434] sm:$0xff]
  %v3436 = vld [vmem:[%s3434 + $0x8] sm:$0xff]
  %v3437 = vld [vmem:[%s3434 + $0x10] sm:$0xff]
  %v3438 = vld [vmem:[%s3434 + $0x18] sm:$0xff]
  %v3439 = vld [vmem:[%s3434 + $0x20] sm:$0xff]
  %v3440 = vld [vmem:[%s3434 + $0x28] sm:$0xff]
  %v3441 = vld [vmem:[%s3434 + $0x30] sm:$0xff]
  %v3442 = vld [vmem:[%s3434 + $0x38] sm:$0xff]
  %v3444 = vsel %vm1471, %v3426, 0
  %3446 = vmatprep.subr.mxu0 0.0
  %3447 = vmatpush1.msra.mxu0 %v3435
  %3448 = vmatprep.subr.mxu0 0.0
  %3449 = vmatpush1.msra.mxu0 0.0
  %3450 = vmatprep.subr.mxu0 0.0
  %3451 = vmatpush1.msra.mxu0 0.0
  %3452 = vmatprep.subr.mxu0 0.0
  %3453 = vmatpush1.msra.mxu0 0.0
  %3454 = vmatprep.subr.mxu0 0.0
  %3455 = vmatpush1.msra.mxu0 0.0
  %3456 = vmatprep.subr.mxu0 0.0
  %3457 = vmatpush1.msra.mxu0 0.0
  %3458 = vmatprep.subr.mxu0 0.0
  %3459 = vmatpush1.msra.mxu0 0.0
  %3460 = vmatprep.subr.mxu0 0.0
  %3461 = vmatpush1.msra.mxu0 0.0
  %3462 = vmatprep.subr.mxu0 0.0
  %3463 = vmatpush1.msra.mxu0 0.0
  %3464 = vmatprep.subr.mxu0 0.0
  %3465 = vmatpush1.msra.mxu0 0.0
  %3466 = vmatprep.subr.mxu0 0.0
  %3467 = vmatpush1.msra.mxu0 0.0
  %3468 = vmatprep.subr.mxu0 0.0
  %3469 = vmatpush1.msra.mxu0 0.0
  %3470 = vmatprep.subr.mxu0 0.0
  %3471 = vmatpush1.msra.mxu0 0.0
  %3472 = vmatprep.subr.mxu0 0.0
  %3473 = vmatpush1.msra.mxu0 0.0
  %3474 = vmatprep.subr.mxu0 0.0
  %3475 = vmatpush1.msra.mxu0 0.0
  %3476 = vmatprep.subr.mxu0 0.0
  %3477 = vmatpush1.msra.mxu0 0.0
  %3478 = vmatprep.subr.mxu0 0.0
  %3479 = vmatpush1.msra.mxu0 0.0
  %3480 = vmatprep.subr.mxu0 0.0
  %3481 = vmatpush1.msra.mxu0 0.0
  %3482 = vmatprep.subr.mxu0 0.0
  %3483 = vmatpush1.msra.mxu0 0.0
  %3484 = vmatprep.subr.mxu0 0.0
  %3485 = vmatpush1.msra.mxu0 0.0
  %3486 = vmatprep.subr.mxu0 0.0
  %3487 = vmatpush1.msra.mxu0 0.0
  %3488 = vmatprep.subr.mxu0 0.0
  %3489 = vmatpush1.msra.mxu0 0.0
  %3490 = vmatprep.subr.mxu0 0.0
  %3491 = vmatpush1.msra.mxu0 0.0
  %3492 = vmatprep.subr.mxu0 0.0
  %3493 = vmatpush1.msra.mxu0 0.0
  %3494 = vmatprep.subr.mxu0 0.0
  %3495 = vmatpush1.msra.mxu0 0.0
  %3496 = vmatprep.subr.mxu0 0.0
  %3497 = vmatpush1.msra.mxu0 0.0
  %3498 = vmatprep.subr.mxu0 0.0
  %3499 = vmatpush1.msra.mxu0 0.0
  %3500 = vmatprep.subr.mxu0 0.0
  %3501 = vmatpush1.msra.mxu0 0.0
  %3502 = vmatprep.subr.mxu0 0.0
  %3503 = vmatpush1.msra.mxu0 0.0
  %3504 = vmatprep.subr.mxu0 0.0
  %3505 = vmatpush1.msra.mxu0 0.0
  %3506 = vmatprep.subr.mxu0 0.0
  %3507 = vmatpush1.msra.mxu0 0.0
  %3508 = vmatprep.subr.mxu0 0.0
  %3509 = vmatpush1.msra.mxu0 0.0
  %3510 = vmatprep.mubr.f32.mxu0 0.0
  %3511 = vmatmul.mubr.f32.gmra.mrb[0].mxu0 %v3444
  %v3512 = vpop.f32.mrb[0].mxu0
  %v3513 = vadd.f32 0.0, %v3512
  %v3514 = vpop.f32.mrb[0].mxu0
  %3515 = vdwg.mxu0
  %v3517 = vsel %vm1471, %v3427, 0
  %3519 = vmatprep.subr.mxu0 0.0
  %3520 = vmatpush1.msra.mxu0 %v3436
  %3521 = vmatprep.subr.mxu0 0.0
  %3522 = vmatpush1.msra.mxu0 0.0
  %3523 = vmatprep.subr.mxu0 0.0
  %3524 = vmatpush1.msra.mxu0 0.0
  %3525 = vmatprep.subr.mxu0 0.0
  %3526 = vmatpush1.msra.mxu0 0.0
  %3527 = vmatprep.subr.mxu0 0.0
  %3528 = vmatpush1.msra.mxu0 0.0
  %3529 = vmatprep.subr.mxu0 0.0
  %3530 = vmatpush1.msra.mxu0 0.0
  %3531 = vmatprep.subr.mxu0 0.0
  %3532 = vmatpush1.msra.mxu0 0.0
  %3533 = vmatprep.subr.mxu0 0.0
  %3534 = vmatpush1.msra.mxu0 0.0
  %3535 = vmatprep.subr.mxu0 0.0
  %3536 = vmatpush1.msra.mxu0 0.0
  %3537 = vmatprep.subr.mxu0 0.0
  %3538 = vmatpush1.msra.mxu0 0.0
  %3539 = vmatprep.subr.mxu0 0.0
  %3540 = vmatpush1.msra.mxu0 0.0
  %3541 = vmatprep.subr.mxu0 0.0
  %3542 = vmatpush1.msra.mxu0 0.0
  %3543 = vmatprep.subr.mxu0 0.0
  %3544 = vmatpush1.msra.mxu0 0.0
  %3545 = vmatprep.subr.mxu0 0.0
  %3546 = vmatpush1.msra.mxu0 0.0
  %3547 = vmatprep.subr.mxu0 0.0
  %3548 = vmatpush1.msra.mxu0 0.0
  %3549 = vmatprep.subr.mxu0 0.0
  %3550 = vmatpush1.msra.mxu0 0.0
  %3551 = vmatprep.subr.mxu0 0.0
  %3552 = vmatpush1.msra.mxu0 0.0
  %3553 = vmatprep.subr.mxu0 0.0
  %3554 = vmatpush1.msra.mxu0 0.0
  %3555 = vmatprep.subr.mxu0 0.0
  %3556 = vmatpush1.msra.mxu0 0.0
  %3557 = vmatprep.subr.mxu0 0.0
  %3558 = vmatpush1.msra.mxu0 0.0
  %3559 = vmatprep.subr.mxu0 0.0
  %3560 = vmatpush1.msra.mxu0 0.0
  %3561 = vmatprep.subr.mxu0 0.0
  %3562 = vmatpush1.msra.mxu0 0.0
  %3563 = vmatprep.subr.mxu0 0.0
  %3564 = vmatpush1.msra.mxu0 0.0
  %3565 = vmatprep.subr.mxu0 0.0
  %3566 = vmatpush1.msra.mxu0 0.0
  %3567 = vmatprep.subr.mxu0 0.0
  %3568 = vmatpush1.msra.mxu0 0.0
  %3569 = vmatprep.subr.mxu0 0.0
  %3570 = vmatpush1.msra.mxu0 0.0
  %3571 = vmatprep.subr.mxu0 0.0
  %3572 = vmatpush1.msra.mxu0 0.0
  %3573 = vmatprep.subr.mxu0 0.0
  %3574 = vmatpush1.msra.mxu0 0.0
  %3575 = vmatprep.subr.mxu0 0.0
  %3576 = vmatpush1.msra.mxu0 0.0
  %3577 = vmatprep.subr.mxu0 0.0
  %3578 = vmatpush1.msra.mxu0 0.0
  %3579 = vmatprep.subr.mxu0 0.0
  %3580 = vmatpush1.msra.mxu0 0.0
  %3581 = vmatprep.subr.mxu0 0.0
  %3582 = vmatpush1.msra.mxu0 0.0
  %3583 = vmatprep.mubr.f32.mxu0 0.0
  %3584 = vmatmul.mubr.f32.gmra.mrb[0].mxu0 %v3517
  %v3585 = vpop.f32.mrb[0].mxu0
  %v3586 = vadd.f32 0.0, %v3585
  %v3587 = vpop.f32.mrb[0].mxu0
  %3588 = vdwg.mxu0
  %v3590 = vsel %vm1471, %v3428, 0
  %3592 = vmatprep.subr.mxu0 0.0
  %3593 = vmatpush1.msra.mxu0 %v3437
  %3594 = vmatprep.subr.mxu0 0.0
  %3595 = vmatpush1.msra.mxu0 0.0
  %3596 = vmatprep.subr.mxu0 0.0
  %3597 = vmatpush1.msra.mxu0 0.0
  %3598 = vmatprep.subr.mxu0 0.0
  %3599 = vmatpush1.msra.mxu0 0.0
  %3600 = vmatprep.subr.mxu0 0.0
  %3601 = vmatpush1.msra.mxu0 0.0
  %3602 = vmatprep.subr.mxu0 0.0
  %3603 = vmatpush1.msra.mxu0 0.0
  %3604 = vmatprep.subr.mxu0 0.0
  %3605 = vmatpush1.msra.mxu0 0.0
  %3606 = vmatprep.subr.mxu0 0.0
  %3607 = vmatpush1.msra.mxu0 0.0
  %3608 = vmatprep.subr.mxu0 0.0
  %3609 = vmatpush1.msra.mxu0 0.0
  %3610 = vmatprep.subr.mxu0 0.0
  %3611 = vmatpush1.msra.mxu0 0.0
  %3612 = vmatprep.subr.mxu0 0.0
  %3613 = vmatpush1.msra.mxu0 0.0
  %3614 = vmatprep.subr.mxu0 0.0
  %3615 = vmatpush1.msra.mxu0 0.0
  %3616 = vmatprep.subr.mxu0 0.0
  %3617 = vmatpush1.msra.mxu0 0.0
  %3618 = vmatprep.subr.mxu0 0.0
  %3619 = vmatpush1.msra.mxu0 0.0
  %3620 = vmatprep.subr.mxu0 0.0
  %3621 = vmatpush1.msra.mxu0 0.0
  %3622 = vmatprep.subr.mxu0 0.0
  %3623 = vmatpush1.msra.mxu0 0.0
  %3624 = vmatprep.subr.mxu0 0.0
  %3625 = vmatpush1.msra.mxu0 0.0
  %3626 = vmatprep.subr.mxu0 0.0
  %3627 = vmatpush1.msra.mxu0 0.0
  %3628 = vmatprep.subr.mxu0 0.0
  %3629 = vmatpush1.msra.mxu0 0.0
  %3630 = vmatprep.subr.mxu0 0.0
  %3631 = vmatpush1.msra.mxu0 0.0
  %3632 = vmatprep.subr.mxu0 0.0
  %3633 = vmatpush1.msra.mxu0 0.0
  %3634 = vmatprep.subr.mxu0 0.0
  %3635 = vmatpush1.msra.mxu0 0.0
  %3636 = vmatprep.subr.mxu0 0.0
  %3637 = vmatpush1.msra.mxu0 0.0
  %3638 = vmatprep.subr.mxu0 0.0
  %3639 = vmatpush1.msra.mxu0 0.0
  %3640 = vmatprep.subr.mxu0 0.0
  %3641 = vmatpush1.msra.mxu0 0.0
  %3642 = vmatprep.subr.mxu0 0.0
  %3643 = vmatpush1.msra.mxu0 0.0
  %3644 = vmatprep.subr.mxu0 0.0
  %3645 = vmatpush1.msra.mxu0 0.0
  %3646 = vmatprep.subr.mxu0 0.0
  %3647 = vmatpush1.msra.mxu0 0.0
  %3648 = vmatprep.subr.mxu0 0.0
  %3649 = vmatpush1.msra.mxu0 0.0
  %3650 = vmatprep.subr.mxu0 0.0
  %3651 = vmatpush1.msra.mxu0 0.0
  %3652 = vmatprep.subr.mxu0 0.0
  %3653 = vmatpush1.msra.mxu0 0.0
  %3654 = vmatprep.subr.mxu0 0.0
  %3655 = vmatpush1.msra.mxu0 0.0
  %3656 = vmatprep.mubr.f32.mxu0 0.0
  %3657 = vmatmul.mubr.f32.gmra.mrb[0].mxu0 %v3590
  %v3658 = vpop.f32.mrb[0].mxu0
  %v3659 = vadd.f32 0.0, %v3658
  %v3660 = vpop.f32.mrb[0].mxu0
  %3661 = vdwg.mxu0
  %v3663 = vsel %vm1471, %v3429, 0
  %3665 = vmatprep.subr.mxu0 0.0
  %3666 = vmatpush1.msra.mxu0 %v3438
  %3667 = vmatprep.subr.mxu0 0.0
  %3668 = vmatpush1.msra.mxu0 0.0
  %3669 = vmatprep.subr.mxu0 0.0
  %3670 = vmatpush1.msra.mxu0 0.0
  %3671 = vmatprep.subr.mxu0 0.0
  %3672 = vmatpush1.msra.mxu0 0.0
  %3673 = vmatprep.subr.mxu0 0.0
  %3674 = vmatpush1.msra.mxu0 0.0
  %3675 = vmatprep.subr.mxu0 0.0
  %3676 = vmatpush1.msra.mxu0 0.0
  %3677 = vmatprep.subr.mxu0 0.0
  %3678 = vmatpush1.msra.mxu0 0.0
  %3679 = vmatprep.subr.mxu0 0.0
  %3680 = vmatpush1.msra.mxu0 0.0
  %3681 = vmatprep.subr.mxu0 0.0
  %3682 = vmatpush1.msra.mxu0 0.0
  %3683 = vmatprep.subr.mxu0 0.0
  %3684 = vmatpush1.msra.mxu0 0.0
  %3685 = vmatprep.subr.mxu0 0.0
  %3686 = vmatpush1.msra.mxu0 0.0
  %3687 = vmatprep.subr.mxu0 0.0
  %3688 = vmatpush1.msra.mxu0 0.0
  %3689 = vmatprep.subr.mxu0 0.0
  %3690 = vmatpush1.msra.mxu0 0.0
  %3691 = vmatprep.subr.mxu0 0.0
  %3692 = vmatpush1.msra.mxu0 0.0
  %3693 = vmatprep.subr.mxu0 0.0
  %3694 = vmatpush1.msra.mxu0 0.0
  %3695 = vmatprep.subr.mxu0 0.0
  %3696 = vmatpush1.msra.mxu0 0.0
  %3697 = vmatprep.subr.mxu0 0.0
  %3698 = vmatpush1.msra.mxu0 0.0
  %3699 = vmatprep.subr.mxu0 0.0
  %3700 = vmatpush1.msra.mxu0 0.0
  %3701 = vmatprep.subr.mxu0 0.0
  %3702 = vmatpush1.msra.mxu0 0.0
  %3703 = vmatprep.subr.mxu0 0.0
  %3704 = vmatpush1.msra.mxu0 0.0
  %3705 = vmatprep.subr.mxu0 0.0
  %3706 = vmatpush1.msra.mxu0 0.0
  %3707 = vmatprep.subr.mxu0 0.0
  %3708 = vmatpush1.msra.mxu0 0.0
  %3709 = vmatprep.subr.mxu0 0.0
  %3710 = vmatpush1.msra.mxu0 0.0
  %3711 = vmatprep.subr.mxu0 0.0
  %3712 = vmatpush1.msra.mxu0 0.0
  %3713 = vmatprep.subr.mxu0 0.0
  %3714 = vmatpush1.msra.mxu0 0.0
  %3715 = vmatprep.subr.mxu0 0.0
  %3716 = vmatpush1.msra.mxu0 0.0
  %3717 = vmatprep.subr.mxu0 0.0
  %3718 = vmatpush1.msra.mxu0 0.0
  %3719 = vmatprep.subr.mxu0 0.0
  %3720 = vmatpush1.msra.mxu0 0.0
  %3721 = vmatprep.subr.mxu0 0.0
  %3722 = vmatpush1.msra.mxu0 0.0
  %3723 = vmatprep.subr.mxu0 0.0
  %3724 = vmatpush1.msra.mxu0 0.0
  %3725 = vmatprep.subr.mxu0 0.0
  %3726 = vmatpush1.msra.mxu0 0.0
  %3727 = vmatprep.subr.mxu0 0.0
  %3728 = vmatpush1.msra.mxu0 0.0
  %3729 = vmatprep.mubr.f32.mxu0 0.0
  %3730 = vmatmul.mubr.f32.gmra.mrb[0].mxu0 %v3663
  %v3731 = vpop.f32.mrb[0].mxu0
  %v3732 = vadd.f32 0.0, %v3731
  %v3733 = vpop.f32.mrb[0].mxu0
  %3734 = vdwg.mxu0
  %v3736 = vsel %vm1471, %v3430, 0
  %3738 = vmatprep.subr.mxu0 0.0
  %3739 = vmatpush1.msra.mxu0 %v3439
  %3740 = vmatprep.subr.mxu0 0.0
  %3741 = vmatpush1.msra.mxu0 0.0
  %3742 = vmatprep.subr.mxu0 0.0
  %3743 = vmatpush1.msra.mxu0 0.0
  %3744 = vmatprep.subr.mxu0 0.0
  %3745 = vmatpush1.msra.mxu0 0.0
  %3746 = vmatprep.subr.mxu0 0.0
  %3747 = vmatpush1.msra.mxu0 0.0
  %3748 = vmatprep.subr.mxu0 0.0
  %3749 = vmatpush1.msra.mxu0 0.0
  %3750 = vmatprep.subr.mxu0 0.0
  %3751 = vmatpush1.msra.mxu0 0.0
  %3752 = vmatprep.subr.mxu0 0.0
  %3753 = vmatpush1.msra.mxu0 0.0
  %3754 = vmatprep.subr.mxu0 0.0
  %3755 = vmatpush1.msra.mxu0 0.0
  %3756 = vmatprep.subr.mxu0 0.0
  %3757 = vmatpush1.msra.mxu0 0.0
  %3758 = vmatprep.subr.mxu0 0.0
  %3759 = vmatpush1.msra.mxu0 0.0
  %3760 = vmatprep.subr.mxu0 0.0
  %3761 = vmatpush1.msra.mxu0 0.0
  %3762 = vmatprep.subr.mxu0 0.0
  %3763 = vmatpush1.msra.mxu0 0.0
  %3764 = vmatprep.subr.mxu0 0.0
  %3765 = vmatpush1.msra.mxu0 0.0
  %3766 = vmatprep.subr.mxu0 0.0
  %3767 = vmatpush1.msra.mxu0 0.0
  %3768 = vmatprep.subr.mxu0 0.0
  %3769 = vmatpush1.msra.mxu0 0.0
  %3770 = vmatprep.subr.mxu0 0.0
  %3771 = vmatpush1.msra.mxu0 0.0
  %3772 = vmatprep.subr.mxu0 0.0
  %3773 = vmatpush1.msra.mxu0 0.0
  %3774 = vmatprep.subr.mxu0 0.0
  %3775 = vmatpush1.msra.mxu0 0.0
  %3776 = vmatprep.subr.mxu0 0.0
  %3777 = vmatpush1.msra.mxu0 0.0
  %3778 = vmatprep.subr.mxu0 0.0
  %3779 = vmatpush1.msra.mxu0 0.0
  %3780 = vmatprep.subr.mxu0 0.0
  %3781 = vmatpush1.msra.mxu0 0.0
  %3782 = vmatprep.subr.mxu0 0.0
  %3783 = vmatpush1.msra.mxu0 0.0
  %3784 = vmatprep.subr.mxu0 0.0
  %3785 = vmatpush1.msra.mxu0 0.0
  %3786 = vmatprep.subr.mxu0 0.0
  %3787 = vmatpush1.msra.mxu0 0.0
  %3788 = vmatprep.subr.mxu0 0.0
  %3789 = vmatpush1.msra.mxu0 0.0
  %3790 = vmatprep.subr.mxu0 0.0
  %3791 = vmatpush1.msra.mxu0 0.0
  %3792 = vmatprep.subr.mxu0 0.0
  %3793 = vmatpush1.msra.mxu0 0.0
  %3794 = vmatprep.subr.mxu0 0.0
  %3795 = vmatpush1.msra.mxu0 0.0
  %3796 = vmatprep.subr.mxu0 0.0
  %3797 = vmatpush1.msra.mxu0 0.0
  %3798 = vmatprep.subr.mxu0 0.0
  %3799 = vmatpush1.msra.mxu0 0.0
  %3800 = vmatprep.subr.mxu0 0.0
  %3801 = vmatpush1.msra.mxu0 0.0
  %3802 = vmatprep.mubr.f32.mxu0 0.0
  %3803 = vmatmul.mubr.f32.gmra.mrb[0].mxu0 %v3736
  %v3804 = vpop.f32.mrb[0].mxu0
  %v3805 = vadd.f32 0.0, %v3804
  %v3806 = vpop.f32.mrb[0].mxu0
  %3807 = vdwg.mxu0
  %v3809 = vsel %vm1471, %v3431, 0
  %3811 = vmatprep.subr.mxu0 0.0
  %3812 = vmatpush1.msra.mxu0 %v3440
  %3813 = vmatprep.subr.mxu0 0.0
  %3814 = vmatpush1.msra.mxu0 0.0
  %3815 = vmatprep.subr.mxu0 0.0
  %3816 = vmatpush1.msra.mxu0 0.0
  %3817 = vmatprep.subr.mxu0 0.0
  %3818 = vmatpush1.msra.mxu0 0.0
  %3819 = vmatprep.subr.mxu0 0.0
  %3820 = vmatpush1.msra.mxu0 0.0
  %3821 = vmatprep.subr.mxu0 0.0
  %3822 = vmatpush1.msra.mxu0 0.0
  %3823 = vmatprep.subr.mxu0 0.0
  %3824 = vmatpush1.msra.mxu0 0.0
  %3825 = vmatprep.subr.mxu0 0.0
  %3826 = vmatpush1.msra.mxu0 0.0
  %3827 = vmatprep.subr.mxu0 0.0
  %3828 = vmatpush1.msra.mxu0 0.0
  %3829 = vmatprep.subr.mxu0 0.0
  %3830 = vmatpush1.msra.mxu0 0.0
  %3831 = vmatprep.subr.mxu0 0.0
  %3832 = vmatpush1.msra.mxu0 0.0
  %3833 = vmatprep.subr.mxu0 0.0
  %3834 = vmatpush1.msra.mxu0 0.0
  %3835 = vmatprep.subr.mxu0 0.0
  %3836 = vmatpush1.msra.mxu0 0.0
  %3837 = vmatprep.subr.mxu0 0.0
  %3838 = vmatpush1.msra.mxu0 0.0
  %3839 = vmatprep.subr.mxu0 0.0
  %3840 = vmatpush1.msra.mxu0 0.0
  %3841 = vmatprep.subr.mxu0 0.0
  %3842 = vmatpush1.msra.mxu0 0.0
  %3843 = vmatprep.subr.mxu0 0.0
  %3844 = vmatpush1.msra.mxu0 0.0
  %3845 = vmatprep.subr.mxu0 0.0
  %3846 = vmatpush1.msra.mxu0 0.0
  %3847 = vmatprep.subr.mxu0 0.0
  %3848 = vmatpush1.msra.mxu0 0.0
  %3849 = vmatprep.subr.mxu0 0.0
  %3850 = vmatpush1.msra.mxu0 0.0
  %3851 = vmatprep.subr.mxu0 0.0
  %3852 = vmatpush1.msra.mxu0 0.0
  %3853 = vmatprep.subr.mxu0 0.0
  %3854 = vmatpush1.msra.mxu0 0.0
  %3855 = vmatprep.subr.mxu0 0.0
  %3856 = vmatpush1.msra.mxu0 0.0
  %3857 = vmatprep.subr.mxu0 0.0
  %3858 = vmatpush1.msra.mxu0 0.0
  %3859 = vmatprep.subr.mxu0 0.0
  %3860 = vmatpush1.msra.mxu0 0.0
  %3861 = vmatprep.subr.mxu0 0.0
  %3862 = vmatpush1.msra.mxu0 0.0
  %3863 = vmatprep.subr.mxu0 0.0
  %3864 = vmatpush1.msra.mxu0 0.0
  %3865 = vmatprep.subr.mxu0 0.0
  %3866 = vmatpush1.msra.mxu0 0.0
  %3867 = vmatprep.subr.mxu0 0.0
  %3868 = vmatpush1.msra.mxu0 0.0
  %3869 = vmatprep.subr.mxu0 0.0
  %3870 = vmatpush1.msra.mxu0 0.0
  %3871 = vmatprep.subr.mxu0 0.0
  %3872 = vmatpush1.msra.mxu0 0.0
  %3873 = vmatprep.subr.mxu0 0.0
  %3874 = vmatpush1.msra.mxu0 0.0
  %3875 = vmatprep.mubr.f32.mxu0 0.0
  %3876 = vmatmul.mubr.f32.gmra.mrb[0].mxu0 %v3809
  %v3877 = vpop.f32.mrb[0].mxu0
  %v3878 = vadd.f32 0.0, %v3877
  %v3879 = vpop.f32.mrb[0].mxu0
  %3880 = vdwg.mxu0
  %v3882 = vsel %vm1471, %v3432, 0
  %3884 = vmatprep.subr.mxu0 0.0
  %3885 = vmatpush1.msra.mxu0 %v3441
  %3886 = vmatprep.subr.mxu0 0.0
  %3887 = vmatpush1.msra.mxu0 0.0
  %3888 = vmatprep.subr.mxu0 0.0
  %3889 = vmatpush1.msra.mxu0 0.0
  %3890 = vmatprep.subr.mxu0 0.0
  %3891 = vmatpush1.msra.mxu0 0.0
  %3892 = vmatprep.subr.mxu0 0.0
  %3893 = vmatpush1.msra.mxu0 0.0
  %3894 = vmatprep.subr.mxu0 0.0
  %3895 = vmatpush1.msra.mxu0 0.0
  %3896 = vmatprep.subr.mxu0 0.0
  %3897 = vmatpush1.msra.mxu0 0.0
  %3898 = vmatprep.subr.mxu0 0.0
  %3899 = vmatpush1.msra.mxu0 0.0
  %3900 = vmatprep.subr.mxu0 0.0
  %3901 = vmatpush1.msra.mxu0 0.0
  %3902 = vmatprep.subr.mxu0 0.0
  %3903 = vmatpush1.msra.mxu0 0.0
  %3904 = vmatprep.subr.mxu0 0.0
  %3905 = vmatpush1.msra.mxu0 0.0
  %3906 = vmatprep.subr.mxu0 0.0
  %3907 = vmatpush1.msra.mxu0 0.0
  %3908 = vmatprep.subr.mxu0 0.0
  %3909 = vmatpush1.msra.mxu0 0.0
  %3910 = vmatprep.subr.mxu0 0.0
  %3911 = vmatpush1.msra.mxu0 0.0
  %3912 = vmatprep.subr.mxu0 0.0
  %3913 = vmatpush1.msra.mxu0 0.0
  %3914 = vmatprep.subr.mxu0 0.0
  %3915 = vmatpush1.msra.mxu0 0.0
  %3916 = vmatprep.subr.mxu0 0.0
  %3917 = vmatpush1.msra.mxu0 0.0
  %3918 = vmatprep.subr.mxu0 0.0
  %3919 = vmatpush1.msra.mxu0 0.0
  %3920 = vmatprep.subr.mxu0 0.0
  %3921 = vmatpush1.msra.mxu0 0.0
  %3922 = vmatprep.subr.mxu0 0.0
  %3923 = vmatpush1.msra.mxu0 0.0
  %3924 = vmatprep.subr.mxu0 0.0
  %3925 = vmatpush1.msra.mxu0 0.0
  %3926 = vmatprep.subr.mxu0 0.0
  %3927 = vmatpush1.msra.mxu0 0.0
  %3928 = vmatprep.subr.mxu0 0.0
  %3929 = vmatpush1.msra.mxu0 0.0
  %3930 = vmatprep.subr.mxu0 0.0
  %3931 = vmatpush1.msra.mxu0 0.0
  %3932 = vmatprep.subr.mxu0 0.0
  %3933 = vmatpush1.msra.mxu0 0.0
  %3934 = vmatprep.subr.mxu0 0.0
  %3935 = vmatpush1.msra.mxu0 0.0
  %3936 = vmatprep.subr.mxu0 0.0
  %3937 = vmatpush1.msra.mxu0 0.0
  %3938 = vmatprep.subr.mxu0 0.0
  %3939 = vmatpush1.msra.mxu0 0.0
  %3940 = vmatprep.subr.mxu0 0.0
  %3941 = vmatpush1.msra.mxu0 0.0
  %3942 = vmatprep.subr.mxu0 0.0
  %3943 = vmatpush1.msra.mxu0 0.0
  %3944 = vmatprep.subr.mxu0 0.0
  %3945 = vmatpush1.msra.mxu0 0.0
  %3946 = vmatprep.subr.mxu0 0.0
  %3947 = vmatpush1.msra.mxu0 0.0
  %3948 = vmatprep.mubr.f32.mxu0 0.0
  %3949 = vmatmul.mubr.f32.gmra.mrb[0].mxu0 %v3882
  %v3950 = vpop.f32.mrb[0].mxu0
  %v3951 = vadd.f32 0.0, %v3950
  %v3952 = vpop.f32.mrb[0].mxu0
  %3953 = vdwg.mxu0
  %v3955 = vsel %vm1471, %v3433, 0
  %3957 = vmatprep.subr.mxu0 0.0
  %3958 = vmatpush1.msra.mxu0 %v3442
  %3959 = vmatprep.subr.mxu0 0.0
  %3960 = vmatpush1.msra.mxu0 0.0
  %3961 = vmatprep.subr.mxu0 0.0
  %3962 = vmatpush1.msra.mxu0 0.0
  %3963 = vmatprep.subr.mxu0 0.0
  %3964 = vmatpush1.msra.mxu0 0.0
  %3965 = vmatprep.subr.mxu0 0.0
  %3966 = vmatpush1.msra.mxu0 0.0
  %3967 = vmatprep.subr.mxu0 0.0
  %3968 = vmatpush1.msra.mxu0 0.0
  %3969 = vmatprep.subr.mxu0 0.0
  %3970 = vmatpush1.msra.mxu0 0.0
  %3971 = vmatprep.subr.mxu0 0.0
  %3972 = vmatpush1.msra.mxu0 0.0
  %3973 = vmatprep.subr.mxu0 0.0
  %3974 = vmatpush1.msra.mxu0 0.0
  %3975 = vmatprep.subr.mxu0 0.0
  %3976 = vmatpush1.msra.mxu0 0.0
  %3977 = vmatprep.subr.mxu0 0.0
  %3978 = vmatpush1.msra.mxu0 0.0
  %3979 = vmatprep.subr.mxu0 0.0
  %3980 = vmatpush1.msra.mxu0 0.0
  %3981 = vmatprep.subr.mxu0 0.0
  %3982 = vmatpush1.msra.mxu0 0.0
  %3983 = vmatprep.subr.mxu0 0.0
  %3984 = vmatpush1.msra.mxu0 0.0
  %3985 = vmatprep.subr.mxu0 0.0
  %3986 = vmatpush1.msra.mxu0 0.0
  %3987 = vmatprep.subr.mxu0 0.0
  %3988 = vmatpush1.msra.mxu0 0.0
  %3989 = vmatprep.subr.mxu0 0.0
  %3990 = vmatpush1.msra.mxu0 0.0
  %3991 = vmatprep.subr.mxu0 0.0
  %3992 = vmatpush1.msra.mxu0 0.0
  %3993 = vmatprep.subr.mxu0 0.0
  %3994 = vmatpush1.msra.mxu0 0.0
  %3995 = vmatprep.subr.mxu0 0.0
  %3996 = vmatpush1.msra.mxu0 0.0
  %3997 = vmatprep.subr.mxu0 0.0
  %3998 = vmatpush1.msra.mxu0 0.0
  %3999 = vmatprep.subr.mxu0 0.0
  %4000 = vmatpush1.msra.mxu0 0.0
  %4001 = vmatprep.subr.mxu0 0.0
  %4002 = vmatpush1.msra.mxu0 0.0
  %4003 = vmatprep.subr.mxu0 0.0
  %4004 = vmatpush1.msra.mxu0 0.0
  %4005 = vmatprep.subr.mxu0 0.0
  %4006 = vmatpush1.msra.mxu0 0.0
  %4007 = vmatprep.subr.mxu0 0.0
  %4008 = vmatpush1.msra.mxu0 0.0
  %4009 = vmatprep.subr.mxu0 0.0
  %4010 = vmatpush1.msra.mxu0 0.0
  %4011 = vmatprep.subr.mxu0 0.0
  %4012 = vmatpush1.msra.mxu0 0.0
  %4013 = vmatprep.subr.mxu0 0.0
  %4014 = vmatpush1.msra.mxu0 0.0
  %4015 = vmatprep.subr.mxu0 0.0
  %4016 = vmatpush1.msra.mxu0 0.0
  %4017 = vmatprep.subr.mxu0 0.0
  %4018 = vmatpush1.msra.mxu0 0.0
  %4019 = vmatprep.subr.mxu0 0.0
  %4020 = vmatpush1.msra.mxu0 0.0
  %4021 = vmatprep.mubr.f32.mxu0 0.0
  %4022 = vmatmul.mubr.f32.gmra.mrb[0].mxu0 %v3955
  %v4023 = vpop.f32.mrb[0].mxu0
  %v4024 = vadd.f32 0.0, %v4023
  %v4025 = vpop.f32.mrb[0].mxu0
  %4026 = vdwg.mxu0
  %v4028 = vsel %vm1471, %v3410, 0
  %4030 = vmatprep.subr.mxu0 0.0
  %4031 = vmatpush1.msra.mxu0 %v3418
  %4032 = vmatprep.subr.mxu0 0.0
  %4033 = vmatpush1.msra.mxu0 0.0
  %4034 = vmatprep.subr.mxu0 0.0
  %4035 = vmatpush1.msra.mxu0 0.0
  %4036 = vmatprep.subr.mxu0 0.0
  %4037 = vmatpush1.msra.mxu0 0.0
  %4038 = vmatprep.subr.mxu0 0.0
  %4039 = vmatpush1.msra.mxu0 0.0
  %4040 = vmatprep.subr.mxu0 0.0
  %4041 = vmatpush1.msra.mxu0 0.0
  %4042 = vmatprep.subr.mxu0 0.0
  %4043 = vmatpush1.msra.mxu0 0.0
  %4044 = vmatprep.subr.mxu0 0.0
  %4045 = vmatpush1.msra.mxu0 0.0
  %4046 = vmatprep.subr.mxu0 0.0
  %4047 = vmatpush1.msra.mxu0 0.0
  %4048 = vmatprep.subr.mxu0 0.0
  %4049 = vmatpush1.msra.mxu0 0.0
  %4050 = vmatprep.subr.mxu0 0.0
  %4051 = vmatpush1.msra.mxu0 0.0
  %4052 = vmatprep.subr.mxu0 0.0
  %4053 = vmatpush1.msra.mxu0 0.0
  %4054 = vmatprep.subr.mxu0 0.0
  %4055 = vmatpush1.msra.mxu0 0.0
  %4056 = vmatprep.subr.mxu0 0.0
  %4057 = vmatpush1.msra.mxu0 0.0
  %4058 = vmatprep.subr.mxu0 0.0
  %4059 = vmatpush1.msra.mxu0 0.0
  %4060 = vmatprep.subr.mxu0 0.0
  %4061 = vmatpush1.msra.mxu0 0.0
  %4062 = vmatprep.subr.mxu0 0.0
  %4063 = vmatpush1.msra.mxu0 0.0
  %4064 = vmatprep.subr.mxu0 0.0
  %4065 = vmatpush1.msra.mxu0 0.0
  %4066 = vmatprep.subr.mxu0 0.0
  %4067 = vmatpush1.msra.mxu0 0.0
  %4068 = vmatprep.subr.mxu0 0.0
  %4069 = vmatpush1.msra.mxu0 0.0
  %4070 = vmatprep.subr.mxu0 0.0
  %4071 = vmatpush1.msra.mxu0 0.0
  %4072 = vmatprep.subr.mxu0 0.0
  %4073 = vmatpush1.msra.mxu0 0.0
  %4074 = vmatprep.subr.mxu0 0.0
  %4075 = vmatpush1.msra.mxu0 0.0
  %4076 = vmatprep.subr.mxu0 0.0
  %4077 = vmatpush1.msra.mxu0 0.0
  %4078 = vmatprep.subr.mxu0 0.0
  %4079 = vmatpush1.msra.mxu0 0.0
  %4080 = vmatprep.subr.mxu0 0.0
  %4081 = vmatpush1.msra.mxu0 0.0
  %4082 = vmatprep.subr.mxu0 0.0
  %4083 = vmatpush1.msra.mxu0 0.0
  %4084 = vmatprep.subr.mxu0 0.0
  %4085 = vmatpush1.msra.mxu0 0.0
  %4086 = vmatprep.subr.mxu0 0.0
  %4087 = vmatpush1.msra.mxu0 0.0
  %4088 = vmatprep.subr.mxu0 0.0
  %4089 = vmatpush1.msra.mxu0 0.0
  %4090 = vmatprep.subr.mxu0 0.0
  %4091 = vmatpush1.msra.mxu0 0.0
  %4092 = vmatprep.subr.mxu0 0.0
  %4093 = vmatpush1.msra.mxu0 0.0
  %4094 = vmatprep.mubr.f32.mxu0 0.0
  %4095 = vmatmul.mubr.f32.gmra.mrb[0].mxu0 %v4028
  %v4096 = vpop.f32.mrb[0].mxu0
  %v4097 = vadd.f32 %v3513, %v4096
  %v4098 = vpop.f32.mrb[0].mxu0
  %4099 = vdwg.mxu0
  %v4101 = vsel %vm1471, %v3411, 0
  %4103 = vmatprep.subr.mxu0 0.0
  %4104 = vmatpush1.msra.mxu0 %v3419
  %4105 = vmatprep.subr.mxu0 0.0
  %4106 = vmatpush1.msra.mxu0 0.0
  %4107 = vmatprep.subr.mxu0 0.0
  %4108 = vmatpush1.msra.mxu0 0.0
  %4109 = vmatprep.subr.mxu0 0.0
  %4110 = vmatpush1.msra.mxu0 0.0
  %4111 = vmatprep.subr.mxu0 0.0
  %4112 = vmatpush1.msra.mxu0 0.0
  %4113 = vmatprep.subr.mxu0 0.0
  %4114 = vmatpush1.msra.mxu0 0.0
  %4115 = vmatprep.subr.mxu0 0.0
  %4116 = vmatpush1.msra.mxu0 0.0
  %4117 = vmatprep.subr.mxu0 0.0
  %4118 = vmatpush1.msra.mxu0 0.0
  %4119 = vmatprep.subr.mxu0 0.0
  %4120 = vmatpush1.msra.mxu0 0.0
  %4121 = vmatprep.subr.mxu0 0.0
  %4122 = vmatpush1.msra.mxu0 0.0
  %4123 = vmatprep.subr.mxu0 0.0
  %4124 = vmatpush1.msra.mxu0 0.0
  %4125 = vmatprep.subr.mxu0 0.0
  %4126 = vmatpush1.msra.mxu0 0.0
  %4127 = vmatprep.subr.mxu0 0.0
  %4128 = vmatpush1.msra.mxu0 0.0
  %4129 = vmatprep.subr.mxu0 0.0
  %4130 = vmatpush1.msra.mxu0 0.0
  %4131 = vmatprep.subr.mxu0 0.0
  %4132 = vmatpush1.msra.mxu0 0.0
  %4133 = vmatprep.subr.mxu0 0.0
  %4134 = vmatpush1.msra.mxu0 0.0
  %4135 = vmatprep.subr.mxu0 0.0
  %4136 = vmatpush1.msra.mxu0 0.0
  %4137 = vmatprep.subr.mxu0 0.0
  %4138 = vmatpush1.msra.mxu0 0.0
  %4139 = vmatprep.subr.mxu0 0.0
  %4140 = vmatpush1.msra.mxu0 0.0
  %4141 = vmatprep.subr.mxu0 0.0
  %4142 = vmatpush1.msra.mxu0 0.0
  %4143 = vmatprep.subr.mxu0 0.0
  %4144 = vmatpush1.msra.mxu0 0.0
  %4145 = vmatprep.subr.mxu0 0.0
  %4146 = vmatpush1.msra.mxu0 0.0
  %4147 = vmatprep.subr.mxu0 0.0
  %4148 = vmatpush1.msra.mxu0 0.0
  %4149 = vmatprep.subr.mxu0 0.0
  %4150 = vmatpush1.msra.mxu0 0.0
  %4151 = vmatprep.subr.mxu0 0.0
  %4152 = vmatpush1.msra.mxu0 0.0
  %4153 = vmatprep.subr.mxu0 0.0
  %4154 = vmatpush1.msra.mxu0 0.0
  %4155 = vmatprep.subr.mxu0 0.0
  %4156 = vmatpush1.msra.mxu0 0.0
  %4157 = vmatprep.subr.mxu0 0.0
  %4158 = vmatpush1.msra.mxu0 0.0
  %4159 = vmatprep.subr.mxu0 0.0
  %4160 = vmatpush1.msra.mxu0 0.0
  %4161 = vmatprep.subr.mxu0 0.0
  %4162 = vmatpush1.msra.mxu0 0.0
  %4163 = vmatprep.subr.mxu0 0.0
  %4164 = vmatpush1.msra.mxu0 0.0
  %4165 = vmatprep.subr.mxu0 0.0
  %4166 = vmatpush1.msra.mxu0 0.0
  %4167 = vmatprep.mubr.f32.mxu0 0.0
  %4168 = vmatmul.mubr.f32.gmra.mrb[0].mxu0 %v4101
  %v4169 = vpop.f32.mrb[0].mxu0
  %v4170 = vadd.f32 %v3586, %v4169
  %v4171 = vpop.f32.mrb[0].mxu0
  %4172 = vdwg.mxu0
  %v4174 = vsel %vm1471, %v3412, 0
  %4176 = vmatprep.subr.mxu0 0.0
  %4177 = vmatpush1.msra.mxu0 %v3420
  %4178 = vmatprep.subr.mxu0 0.0
  %4179 = vmatpush1.msra.mxu0 0.0
  %4180 = vmatprep.subr.mxu0 0.0
  %4181 = vmatpush1.msra.mxu0 0.0
  %4182 = vmatprep.subr.mxu0 0.0
  %4183 = vmatpush1.msra.mxu0 0.0
  %4184 = vmatprep.subr.mxu0 0.0
  %4185 = vmatpush1.msra.mxu0 0.0
  %4186 = vmatprep.subr.mxu0 0.0
  %4187 = vmatpush1.msra.mxu0 0.0
  %4188 = vmatprep.subr.mxu0 0.0
  %4189 = vmatpush1.msra.mxu0 0.0
  %4190 = vmatprep.subr.mxu0 0.0
  %4191 = vmatpush1.msra.mxu0 0.0
  %4192 = vmatprep.subr.mxu0 0.0
  %4193 = vmatpush1.msra.mxu0 0.0
  %4194 = vmatprep.subr.mxu0 0.0
  %4195 = vmatpush1.msra.mxu0 0.0
  %4196 = vmatprep.subr.mxu0 0.0
  %4197 = vmatpush1.msra.mxu0 0.0
  %4198 = vmatprep.subr.mxu0 0.0
  %4199 = vmatpush1.msra.mxu0 0.0
  %4200 = vmatprep.subr.mxu0 0.0
  %4201 = vmatpush1.msra.mxu0 0.0
  %4202 = vmatprep.subr.mxu0 0.0
  %4203 = vmatpush1.msra.mxu0 0.0
  %4204 = vmatprep.subr.mxu0 0.0
  %4205 = vmatpush1.msra.mxu0 0.0
  %4206 = vmatprep.subr.mxu0 0.0
  %4207 = vmatpush1.msra.mxu0 0.0
  %4208 = vmatprep.subr.mxu0 0.0
  %4209 = vmatpush1.msra.mxu0 0.0
  %4210 = vmatprep.subr.mxu0 0.0
  %4211 = vmatpush1.msra.mxu0 0.0
  %4212 = vmatprep.subr.mxu0 0.0
  %4213 = vmatpush1.msra.mxu0 0.0
  %4214 = vmatprep.subr.mxu0 0.0
  %4215 = vmatpush1.msra.mxu0 0.0
  %4216 = vmatprep.subr.mxu0 0.0
  %4217 = vmatpush1.msra.mxu0 0.0
  %4218 = vmatprep.subr.mxu0 0.0
  %4219 = vmatpush1.msra.mxu0 0.0
  %4220 = vmatprep.subr.mxu0 0.0
  %4221 = vmatpush1.msra.mxu0 0.0
  %4222 = vmatprep.subr.mxu0 0.0
  %4223 = vmatpush1.msra.mxu0 0.0
  %4224 = vmatprep.subr.mxu0 0.0
  %4225 = vmatpush1.msra.mxu0 0.0
  %4226 = vmatprep.subr.mxu0 0.0
  %4227 = vmatpush1.msra.mxu0 0.0
  %4228 = vmatprep.subr.mxu0 0.0
  %4229 = vmatpush1.msra.mxu0 0.0
  %4230 = vmatprep.subr.mxu0 0.0
  %4231 = vmatpush1.msra.mxu0 0.0
  %4232 = vmatprep.subr.mxu0 0.0
  %4233 = vmatpush1.msra.mxu0 0.0
  %4234 = vmatprep.subr.mxu0 0.0
  %4235 = vmatpush1.msra.mxu0 0.0
  %4236 = vmatprep.subr.mxu0 0.0
  %4237 = vmatpush1.msra.mxu0 0.0
  %4238 = vmatprep.subr.mxu0 0.0
  %4239 = vmatpush1.msra.mxu0 0.0
  %4240 = vmatprep.mubr.f32.mxu0 0.0
  %4241 = vmatmul.mubr.f32.gmra.mrb[0].mxu0 %v4174
  %v4242 = vpop.f32.mrb[0].mxu0
  %v4243 = vadd.f32 %v3659, %v4242
  %v4244 = vpop.f32.mrb[0].mxu0
  %4245 = vdwg.mxu0
  %v4247 = vsel %vm1471, %v3413, 0
  %4249 = vmatprep.subr.mxu0 0.0
  %4250 = vmatpush1.msra.mxu0 %v3421
  %4251 = vmatprep.subr.mxu0 0.0
  %4252 = vmatpush1.msra.mxu0 0.0
  %4253 = vmatprep.subr.mxu0 0.0
  %4254 = vmatpush1.msra.mxu0 0.0
  %4255 = vmatprep.subr.mxu0 0.0
  %4256 = vmatpush1.msra.mxu0 0.0
  %4257 = vmatprep.subr.mxu0 0.0
  %4258 = vmatpush1.msra.mxu0 0.0
  %4259 = vmatprep.subr.mxu0 0.0
  %4260 = vmatpush1.msra.mxu0 0.0
  %4261 = vmatprep.subr.mxu0 0.0
  %4262 = vmatpush1.msra.mxu0 0.0
  %4263 = vmatprep.subr.mxu0 0.0
  %4264 = vmatpush1.msra.mxu0 0.0
  %4265 = vmatprep.subr.mxu0 0.0
  %4266 = vmatpush1.msra.mxu0 0.0
  %4267 = vmatprep.subr.mxu0 0.0
  %4268 = vmatpush1.msra.mxu0 0.0
  %4269 = vmatprep.subr.mxu0 0.0
  %4270 = vmatpush1.msra.mxu0 0.0
  %4271 = vmatprep.subr.mxu0 0.0
  %4272 = vmatpush1.msra.mxu0 0.0
  %4273 = vmatprep.subr.mxu0 0.0
  %4274 = vmatpush1.msra.mxu0 0.0
  %4275 = vmatprep.subr.mxu0 0.0
  %4276 = vmatpush1.msra.mxu0 0.0
  %4277 = vmatprep.subr.mxu0 0.0
  %4278 = vmatpush1.msra.mxu0 0.0
  %4279 = vmatprep.subr.mxu0 0.0
  %4280 = vmatpush1.msra.mxu0 0.0
  %4281 = vmatprep.subr.mxu0 0.0
  %4282 = vmatpush1.msra.mxu0 0.0
  %4283 = vmatprep.subr.mxu0 0.0
  %4284 = vmatpush1.msra.mxu0 0.0
  %4285 = vmatprep.subr.mxu0 0.0
  %4286 = vmatpush1.msra.mxu0 0.0
  %4287 = vmatprep.subr.mxu0 0.0
  %4288 = vmatpush1.msra.mxu0 0.0
  %4289 = vmatprep.subr.mxu0 0.0
  %4290 = vmatpush1.msra.mxu0 0.0
  %4291 = vmatprep.subr.mxu0 0.0
  %4292 = vmatpush1.msra.mxu0 0.0
  %4293 = vmatprep.subr.mxu0 0.0
  %4294 = vmatpush1.msra.mxu0 0.0
  %4295 = vmatprep.subr.mxu0 0.0
  %4296 = vmatpush1.msra.mxu0 0.0
  %4297 = vmatprep.subr.mxu0 0.0
  %4298 = vmatpush1.msra.mxu0 0.0
  %4299 = vmatprep.subr.mxu0 0.0
  %4300 = vmatpush1.msra.mxu0 0.0
  %4301 = vmatprep.subr.mxu0 0.0
  %4302 = vmatpush1.msra.mxu0 0.0
  %4303 = vmatprep.subr.mxu0 0.0
  %4304 = vmatpush1.msra.mxu0 0.0
  %4305 = vmatprep.subr.mxu0 0.0
  %4306 = vmatpush1.msra.mxu0 0.0
  %4307 = vmatprep.subr.mxu0 0.0
  %4308 = vmatpush1.msra.mxu0 0.0
  %4309 = vmatprep.subr.mxu0 0.0
  %4310 = vmatpush1.msra.mxu0 0.0
  %4311 = vmatprep.subr.mxu0 0.0
  %4312 = vmatpush1.msra.mxu0 0.0
  %4313 = vmatprep.mubr.f32.mxu0 0.0
  %4314 = vmatmul.mubr.f32.gmra.mrb[0].mxu0 %v4247
  %v4315 = vpop.f32.mrb[0].mxu0
  %v4316 = vadd.f32 %v3732, %v4315
  %v4317 = vpop.f32.mrb[0].mxu0
  %4318 = vdwg.mxu0
  %v4320 = vsel %vm1471, %v3414, 0
  %4322 = vmatprep.subr.mxu0 0.0
  %4323 = vmatpush1.msra.mxu0 %v3422
  %4324 = vmatprep.subr.mxu0 0.0
  %4325 = vmatpush1.msra.mxu0 0.0
  %4326 = vmatprep.subr.mxu0 0.0
  %4327 = vmatpush1.msra.mxu0 0.0
  %4328 = vmatprep.subr.mxu0 0.0
  %4329 = vmatpush1.msra.mxu0 0.0
  %4330 = vmatprep.subr.mxu0 0.0
  %4331 = vmatpush1.msra.mxu0 0.0
  %4332 = vmatprep.subr.mxu0 0.0
  %4333 = vmatpush1.msra.mxu0 0.0
  %4334 = vmatprep.subr.mxu0 0.0
  %4335 = vmatpush1.msra.mxu0 0.0
  %4336 = vmatprep.subr.mxu0 0.0
  %4337 = vmatpush1.msra.mxu0 0.0
  %4338 = vmatprep.subr.mxu0 0.0
  %4339 = vmatpush1.msra.mxu0 0.0
  %4340 = vmatprep.subr.mxu0 0.0
  %4341 = vmatpush1.msra.mxu0 0.0
  %4342 = vmatprep.subr.mxu0 0.0
  %4343 = vmatpush1.msra.mxu0 0.0
  %4344 = vmatprep.subr.mxu0 0.0
  %4345 = vmatpush1.msra.mxu0 0.0
  %4346 = vmatprep.subr.mxu0 0.0
  %4347 = vmatpush1.msra.mxu0 0.0
  %4348 = vmatprep.subr.mxu0 0.0
  %4349 = vmatpush1.msra.mxu0 0.0
  %4350 = vmatprep.subr.mxu0 0.0
  %4351 = vmatpush1.msra.mxu0 0.0
  %4352 = vmatprep.subr.mxu0 0.0
  %4353 = vmatpush1.msra.mxu0 0.0
  %4354 = vmatprep.subr.mxu0 0.0
  %4355 = vmatpush1.msra.mxu0 0.0
  %4356 = vmatprep.subr.mxu0 0.0
  %4357 = vmatpush1.msra.mxu0 0.0
  %4358 = vmatprep.subr.mxu0 0.0
  %4359 = vmatpush1.msra.mxu0 0.0
  %4360 = vmatprep.subr.mxu0 0.0
  %4361 = vmatpush1.msra.mxu0 0.0
  %4362 = vmatprep.subr.mxu0 0.0
  %4363 = vmatpush1.msra.mxu0 0.0
  %4364 = vmatprep.subr.mxu0 0.0
  %4365 = vmatpush1.msra.mxu0 0.0
  %4366 = vmatprep.subr.mxu0 0.0
  %4367 = vmatpush1.msra.mxu0 0.0
  %4368 = vmatprep.subr.mxu0 0.0
  %4369 = vmatpush1.msra.mxu0 0.0
  %4370 = vmatprep.subr.mxu0 0.0
  %4371 = vmatpush1.msra.mxu0 0.0
  %4372 = vmatprep.subr.mxu0 0.0
  %4373 = vmatpush1.msra.mxu0 0.0
  %4374 = vmatprep.subr.mxu0 0.0
  %4375 = vmatpush1.msra.mxu0 0.0
  %4376 = vmatprep.subr.mxu0 0.0
  %4377 = vmatpush1.msra.mxu0 0.0
  %4378 = vmatprep.subr.mxu0 0.0
  %4379 = vmatpush1.msra.mxu0 0.0
  %4380 = vmatprep.subr.mxu0 0.0
  %4381 = vmatpush1.msra.mxu0 0.0
  %4382 = vmatprep.subr.mxu0 0.0
  %4383 = vmatpush1.msra.mxu0 0.0
  %4384 = vmatprep.subr.mxu0 0.0
  %4385 = vmatpush1.msra.mxu0 0.0
  %4386 = vmatprep.mubr.f32.mxu0 0.0
  %4387 = vmatmul.mubr.f32.gmra.mrb[0].mxu0 %v4320
  %v4388 = vpop.f32.mrb[0].mxu0
  %v4389 = vadd.f32 %v3805, %v4388
  %v4390 = vpop.f32.mrb[0].mxu0
  %4391 = vdwg.mxu0
  %v4393 = vsel %vm1471, %v3415, 0
  %4395 = vmatprep.subr.mxu0 0.0
  %4396 = vmatpush1.msra.mxu0 %v3423
  %4397 = vmatprep.subr.mxu0 0.0
  %4398 = vmatpush1.msra.mxu0 0.0
  %4399 = vmatprep.subr.mxu0 0.0
  %4400 = vmatpush1.msra.mxu0 0.0
  %4401 = vmatprep.subr.mxu0 0.0
  %4402 = vmatpush1.msra.mxu0 0.0
  %4403 = vmatprep.subr.mxu0 0.0
  %4404 = vmatpush1.msra.mxu0 0.0
  %4405 = vmatprep.subr.mxu0 0.0
  %4406 = vmatpush1.msra.mxu0 0.0
  %4407 = vmatprep.subr.mxu0 0.0
  %4408 = vmatpush1.msra.mxu0 0.0
  %4409 = vmatprep.subr.mxu0 0.0
  %4410 = vmatpush1.msra.mxu0 0.0
  %4411 = vmatprep.subr.mxu0 0.0
  %4412 = vmatpush1.msra.mxu0 0.0
  %4413 = vmatprep.subr.mxu0 0.0
  %4414 = vmatpush1.msra.mxu0 0.0
  %4415 = vmatprep.subr.mxu0 0.0
  %4416 = vmatpush1.msra.mxu0 0.0
  %4417 = vmatprep.subr.mxu0 0.0
  %4418 = vmatpush1.msra.mxu0 0.0
  %4419 = vmatprep.subr.mxu0 0.0
  %4420 = vmatpush1.msra.mxu0 0.0
  %4421 = vmatprep.subr.mxu0 0.0
  %4422 = vmatpush1.msra.mxu0 0.0
  %4423 = vmatprep.subr.mxu0 0.0
  %4424 = vmatpush1.msra.mxu0 0.0
  %4425 = vmatprep.subr.mxu0 0.0
  %4426 = vmatpush1.msra.mxu0 0.0
  %4427 = vmatprep.subr.mxu0 0.0
  %4428 = vmatpush1.msra.mxu0 0.0
  %4429 = vmatprep.subr.mxu0 0.0
  %4430 = vmatpush1.msra.mxu0 0.0
  %4431 = vmatprep.subr.mxu0 0.0
  %4432 = vmatpush1.msra.mxu0 0.0
  %4433 = vmatprep.subr.mxu0 0.0
  %4434 = vmatpush1.msra.mxu0 0.0
  %4435 = vmatprep.subr.mxu0 0.0
  %4436 = vmatpush1.msra.mxu0 0.0
  %4437 = vmatprep.subr.mxu0 0.0
  %4438 = vmatpush1.msra.mxu0 0.0
  %4439 = vmatprep.subr.mxu0 0.0
  %4440 = vmatpush1.msra.mxu0 0.0
  %4441 = vmatprep.subr.mxu0 0.0
  %4442 = vmatpush1.msra.mxu0 0.0
  %4443 = vmatprep.subr.mxu0 0.0
  %4444 = vmatpush1.msra.mxu0 0.0
  %4445 = vmatprep.subr.mxu0 0.0
  %4446 = vmatpush1.msra.mxu0 0.0
  %4447 = vmatprep.subr.mxu0 0.0
  %4448 = vmatpush1.msra.mxu0 0.0
  %4449 = vmatprep.subr.mxu0 0.0
  %4450 = vmatpush1.msra.mxu0 0.0
  %4451 = vmatprep.subr.mxu0 0.0
  %4452 = vmatpush1.msra.mxu0 0.0
  %4453 = vmatprep.subr.mxu0 0.0
  %4454 = vmatpush1.msra.mxu0 0.0
  %4455 = vmatprep.subr.mxu0 0.0
  %4456 = vmatpush1.msra.mxu0 0.0
  %4457 = vmatprep.subr.mxu0 0.0
  %4458 = vmatpush1.msra.mxu0 0.0
  %4459 = vmatprep.mubr.f32.mxu0 0.0
  %4460 = vmatmul.mubr.f32.gmra.mrb[0].mxu0 %v4393
  %v4461 = vpop.f32.mrb[0].mxu0
  %v4462 = vadd.f32 %v3878, %v4461
  %v4463 = vpop.f32.mrb[0].mxu0
  %4464 = vdwg.mxu0
  %v4466 = vsel %vm1471, %v3416, 0
  %4468 = vmatprep.subr.mxu0 0.0
  %4469 = vmatpush1.msra.mxu0 %v3424
  %4470 = vmatprep.subr.mxu0 0.0
  %4471 = vmatpush1.msra.mxu0 0.0
  %4472 = vmatprep.subr.mxu0 0.0
  %4473 = vmatpush1.msra.mxu0 0.0
  %4474 = vmatprep.subr.mxu0 0.0
  %4475 = vmatpush1.msra.mxu0 0.0
  %4476 = vmatprep.subr.mxu0 0.0
  %4477 = vmatpush1.msra.mxu0 0.0
  %4478 = vmatprep.subr.mxu0 0.0
  %4479 = vmatpush1.msra.mxu0 0.0
  %4480 = vmatprep.subr.mxu0 0.0
  %4481 = vmatpush1.msra.mxu0 0.0
  %4482 = vmatprep.subr.mxu0 0.0
  %4483 = vmatpush1.msra.mxu0 0.0
  %4484 = vmatprep.subr.mxu0 0.0
  %4485 = vmatpush1.msra.mxu0 0.0
  %4486 = vmatprep.subr.mxu0 0.0
  %4487 = vmatpush1.msra.mxu0 0.0
  %4488 = vmatprep.subr.mxu0 0.0
  %4489 = vmatpush1.msra.mxu0 0.0
  %4490 = vmatprep.subr.mxu0 0.0
  %4491 = vmatpush1.msra.mxu0 0.0
  %4492 = vmatprep.subr.mxu0 0.0
  %4493 = vmatpush1.msra.mxu0 0.0
  %4494 = vmatprep.subr.mxu0 0.0
  %4495 = vmatpush1.msra.mxu0 0.0
  %4496 = vmatprep.subr.mxu0 0.0
  %4497 = vmatpush1.msra.mxu0 0.0
  %4498 = vmatprep.subr.mxu0 0.0
  %4499 = vmatpush1.msra.mxu0 0.0
  %4500 = vmatprep.subr.mxu0 0.0
  %4501 = vmatpush1.msra.mxu0 0.0
  %4502 = vmatprep.subr.mxu0 0.0
  %4503 = vmatpush1.msra.mxu0 0.0
  %4504 = vmatprep.subr.mxu0 0.0
  %4505 = vmatpush1.msra.mxu0 0.0
  %4506 = vmatprep.subr.mxu0 0.0
  %4507 = vmatpush1.msra.mxu0 0.0
  %4508 = vmatprep.subr.mxu0 0.0
  %4509 = vmatpush1.msra.mxu0 0.0
  %4510 = vmatprep.subr.mxu0 0.0
  %4511 = vmatpush1.msra.mxu0 0.0
  %4512 = vmatprep.subr.mxu0 0.0
  %4513 = vmatpush1.msra.mxu0 0.0
  %4514 = vmatprep.subr.mxu0 0.0
  %4515 = vmatpush1.msra.mxu0 0.0
  %4516 = vmatprep.subr.mxu0 0.0
  %4517 = vmatpush1.msra.mxu0 0.0
  %4518 = vmatprep.subr.mxu0 0.0
  %4519 = vmatpush1.msra.mxu0 0.0
  %4520 = vmatprep.subr.mxu0 0.0
  %4521 = vmatpush1.msra.mxu0 0.0
  %4522 = vmatprep.subr.mxu0 0.0
  %4523 = vmatpush1.msra.mxu0 0.0
  %4524 = vmatprep.subr.mxu0 0.0
  %4525 = vmatpush1.msra.mxu0 0.0
  %4526 = vmatprep.subr.mxu0 0.0
  %4527 = vmatpush1.msra.mxu0 0.0
  %4528 = vmatprep.subr.mxu0 0.0
  %4529 = vmatpush1.msra.mxu0 0.0
  %4530 = vmatprep.subr.mxu0 0.0
  %4531 = vmatpush1.msra.mxu0 0.0
  %4532 = vmatprep.mubr.f32.mxu0 0.0
  %4533 = vmatmul.mubr.f32.gmra.mrb[0].mxu0 %v4466
  %v4534 = vpop.f32.mrb[0].mxu0
  %v4535 = vadd.f32 %v3951, %v4534
  %v4536 = vpop.f32.mrb[0].mxu0
  %4537 = vdwg.mxu0
  %v4539 = vsel %vm1471, %v3417, 0
  %4541 = vmatprep.subr.mxu0 0.0
  %4542 = vmatpush1.msra.mxu0 %v3425
  %4543 = vmatprep.subr.mxu0 0.0
  %4544 = vmatpush1.msra.mxu0 0.0
  %4545 = vmatprep.subr.mxu0 0.0
  %4546 = vmatpush1.msra.mxu0 0.0
  %4547 = vmatprep.subr.mxu0 0.0
  %4548 = vmatpush1.msra.mxu0 0.0
  %4549 = vmatprep.subr.mxu0 0.0
  %4550 = vmatpush1.msra.mxu0 0.0
  %4551 = vmatprep.subr.mxu0 0.0
  %4552 = vmatpush1.msra.mxu0 0.0
  %4553 = vmatprep.subr.mxu0 0.0
  %4554 = vmatpush1.msra.mxu0 0.0
  %4555 = vmatprep.subr.mxu0 0.0
  %4556 = vmatpush1.msra.mxu0 0.0
  %4557 = vmatprep.subr.mxu0 0.0
  %4558 = vmatpush1.msra.mxu0 0.0
  %4559 = vmatprep.subr.mxu0 0.0
  %4560 = vmatpush1.msra.mxu0 0.0
  %4561 = vmatprep.subr.mxu0 0.0
  %4562 = vmatpush1.msra.mxu0 0.0
  %4563 = vmatprep.subr.mxu0 0.0
  %4564 = vmatpush1.msra.mxu0 0.0
  %4565 = vmatprep.subr.mxu0 0.0
  %4566 = vmatpush1.msra.mxu0 0.0
  %4567 = vmatprep.subr.mxu0 0.0
  %4568 = vmatpush1.msra.mxu0 0.0
  %4569 = vmatprep.subr.mxu0 0.0
  %4570 = vmatpush1.msra.mxu0 0.0
  %4571 = vmatprep.subr.mxu0 0.0
  %4572 = vmatpush1.msra.mxu0 0.0
  %4573 = vmatprep.subr.mxu0 0.0
  %4574 = vmatpush1.msra.mxu0 0.0
  %4575 = vmatprep.subr.mxu0 0.0
  %4576 = vmatpush1.msra.mxu0 0.0
  %4577 = vmatprep.subr.mxu0 0.0
  %4578 = vmatpush1.msra.mxu0 0.0
  %4579 = vmatprep.subr.mxu0 0.0
  %4580 = vmatpush1.msra.mxu0 0.0
  %4581 = vmatprep.subr.mxu0 0.0
  %4582 = vmatpush1.msra.mxu0 0.0
  %4583 = vmatprep.subr.mxu0 0.0
  %4584 = vmatpush1.msra.mxu0 0.0
  %4585 = vmatprep.subr.mxu0 0.0
  %4586 = vmatpush1.msra.mxu0 0.0
  %4587 = vmatprep.subr.mxu0 0.0
  %4588 = vmatpush1.msra.mxu0 0.0
  %4589 = vmatprep.subr.mxu0 0.0
  %4590 = vmatpush1.msra.mxu0 0.0
  %4591 = vmatprep.subr.mxu0 0.0
  %4592 = vmatpush1.msra.mxu0 0.0
  %4593 = vmatprep.subr.mxu0 0.0
  %4594 = vmatpush1.msra.mxu0 0.0
  %4595 = vmatprep.subr.mxu0 0.0
  %4596 = vmatpush1.msra.mxu0 0.0
  %4597 = vmatprep.subr.mxu0 0.0
  %4598 = vmatpush1.msra.mxu0 0.0
  %4599 = vmatprep.subr.mxu0 0.0
  %4600 = vmatpush1.msra.mxu0 0.0
  %4601 = vmatprep.subr.mxu0 0.0
  %4602 = vmatpush1.msra.mxu0 0.0
  %4603 = vmatprep.subr.mxu0 0.0
  %4604 = vmatpush1.msra.mxu0 0.0
  %4605 = vmatprep.mubr.f32.mxu0 0.0
  %4606 = vmatmul.mubr.f32.gmra.mrb[0].mxu0 %v4539
  %v4607 = vpop.f32.mrb[0].mxu0
  %v4608 = vadd.f32 %v4024, %v4607
  %v4609 = vpop.f32.mrb[0].mxu0
  %4610 = vdwg.mxu0
  %v4611 = vld [vmem:[%s6] sm:$0x1]
  %v4612 = vld [vmem:[%s6 + $0x4] sm:$0x1]
  %v4613 = vld [vmem:[%s6 + $0x8] sm:$0x1]
  %v4614 = vld [vmem:[%s6 + $0xc] sm:$0x1]
  %v4615 = vld [vmem:[%s6 + $0x10] sm:$0x1]
  %v4616 = vld [vmem:[%s6 + $0x14] sm:$0x1]
  %v4617 = vld [vmem:[%s6 + $0x18] sm:$0x1]
  %v4618 = vld [vmem:[%s6 + $0x1c] sm:$0x1]
  %v4619 = vlaneseq
  %v4620 = vshrl.u32 %v4619, 7
  %v4621 = vsub.s32 0, %v4620
  %v4622 = vrot.slane %v4611, %v4621
  %v4623 = vlaneseq
  %v4624 = vshrl.u32 %v4623, 7
  %v4625 = vsub.s32 0, %v4624
  %v4626 = vrot.slane %v4612, %v4625
  %v4627 = vlaneseq
  %v4628 = vshrl.u32 %v4627, 7
  %v4629 = vsub.s32 0, %v4628
  %v4630 = vrot.slane %v4613, %v4629
  %v4631 = vlaneseq
  %v4632 = vshrl.u32 %v4631, 7
  %v4633 = vsub.s32 0, %v4632
  %v4634 = vrot.slane %v4614, %v4633
  %v4635 = vlaneseq
  %v4636 = vshrl.u32 %v4635, 7
  %v4637 = vsub.s32 0, %v4636
  %v4638 = vrot.slane %v4615, %v4637
  %v4639 = vlaneseq
  %v4640 = vshrl.u32 %v4639, 7
  %v4641 = vsub.s32 0, %v4640
  %v4642 = vrot.slane %v4616, %v4641
  %v4643 = vlaneseq
  %v4644 = vshrl.u32 %v4643, 7
  %v4645 = vsub.s32 0, %v4644
  %v4646 = vrot.slane %v4617, %v4645
  %v4647 = vlaneseq
  %v4648 = vshrl.u32 %v4647, 7
  %v4649 = vsub.s32 0, %v4648
  %v4650 = vrot.slane %v4618, %v4649
  %v4651 = vadd.f32 %v4097, %v4622
  %v4652 = vadd.f32 %v4170, %v4626
  %v4653 = vadd.f32 %v4243, %v4630
  %v4654 = vadd.f32 %v4316, %v4634
  %v4655 = vadd.f32 %v4389, %v4638
  %v4656 = vadd.f32 %v4462, %v4642
  %v4657 = vadd.f32 %v4535, %v4646
  %v4658 = vadd.f32 %v4608, %v4650
  %v4659 = vmax.f32 %v4651, 0.0
  %v4660 = vmax.f32 %v4652, 0.0
  %v4661 = vmax.f32 %v4653, 0.0
  %v4662 = vmax.f32 %v4654, 0.0
  %v4663 = vmax.f32 %v4655, 0.0
  %v4664 = vmax.f32 %v4656, 0.0
  %v4665 = vmax.f32 %v4657, 0.0
  %v4666 = vmax.f32 %v4658, 0.0
  %v4667 = vld [vmem:[%s6 + $0x1] sm:$0x1]
  %v4668 = vld [vmem:[%s6 + $0x5] sm:$0x1]
  %v4669 = vld [vmem:[%s6 + $0x9] sm:$0x1]
  %v4670 = vld [vmem:[%s6 + $0xd] sm:$0x1]
  %v4671 = vld [vmem:[%s6 + $0x11] sm:$0x1]
  %v4672 = vld [vmem:[%s6 + $0x15] sm:$0x1]
  %v4673 = vld [vmem:[%s6 + $0x19] sm:$0x1]
  %v4674 = vld [vmem:[%s6 + $0x1d] sm:$0x1]
  %v4675 = vlaneseq
  %v4676 = vshrl.u32 %v4675, 7
  %v4677 = vsub.s32 0, %v4676
  %v4678 = vrot.slane %v4667, %v4677
  %v4679 = vlaneseq
  %v4680 = vshrl.u32 %v4679, 7
  %v4681 = vsub.s32 0, %v4680
  %v4682 = vrot.slane %v4668, %v4681
  %v4683 = vlaneseq
  %v4684 = vshrl.u32 %v4683, 7
  %v4685 = vsub.s32 0, %v4684
  %v4686 = vrot.slane %v4669, %v4685
  %v4687 = vlaneseq
  %v4688 = vshrl.u32 %v4687, 7
  %v4689 = vsub.s32 0, %v4688
  %v4690 = vrot.slane %v4670, %v4689
  %v4691 = vlaneseq
  %v4692 = vshrl.u32 %v4691, 7
  %v4693 = vsub.s32 0, %v4692
  %v4694 = vrot.slane %v4671, %v4693
  %v4695 = vlaneseq
  %v4696 = vshrl.u32 %v4695, 7
  %v4697 = vsub.s32 0, %v4696
  %v4698 = vrot.slane %v4672, %v4697
  %v4699 = vlaneseq
  %v4700 = vshrl.u32 %v4699, 7
  %v4701 = vsub.s32 0, %v4700
  %v4702 = vrot.slane %v4673, %v4701
  %v4703 = vlaneseq
  %v4704 = vshrl.u32 %v4703, 7
  %v4705 = vsub.s32 0, %v4704
  %v4706 = vrot.slane %v4674, %v4705
  %v4707 = vmul.f32 %v4659, %v4678
  %v4708 = vmul.f32 %v4660, %v4682
  %v4709 = vmul.f32 %v4661, %v4686
  %v4710 = vmul.f32 %v4662, %v4690
  %v4711 = vmul.f32 %v4663, %v4694
  %v4712 = vmul.f32 %v4664, %v4698
  %v4713 = vmul.f32 %v4665, %v4702
  %v4714 = vmul.f32 %v4666, %v4706
  %v4715 = vld [vmem:[%s6 + $0x2] sm:$0x1]
  %v4716 = vld [vmem:[%s6 + $0x6] sm:$0x1]
  %v4717 = vld [vmem:[%s6 + $0xa] sm:$0x1]
  %v4718 = vld [vmem:[%s6 + $0xe] sm:$0x1]
  %v4719 = vld [vmem:[%s6 + $0x12] sm:$0x1]
  %v4720 = vld [vmem:[%s6 + $0x16] sm:$0x1]
  %v4721 = vld [vmem:[%s6 + $0x1a] sm:$0x1]
  %v4722 = vld [vmem:[%s6 + $0x1e] sm:$0x1]
  %v4723 = vlaneseq
  %v4724 = vshrl.u32 %v4723, 7
  %v4725 = vsub.s32 0, %v4724
  %v4726 = vrot.slane %v4715, %v4725
  %v4727 = vlaneseq
  %v4728 = vshrl.u32 %v4727, 7
  %v4729 = vsub.s32 0, %v4728
  %v4730 = vrot.slane %v4716, %v4729
  %v4731 = vlaneseq
  %v4732 = vshrl.u32 %v4731, 7
  %v4733 = vsub.s32 0, %v4732
  %v4734 = vrot.slane %v4717, %v4733
  %v4735 = vlaneseq
  %v4736 = vshrl.u32 %v4735, 7
  %v4737 = vsub.s32 0, %v4736
  %v4738 = vrot.slane %v4718, %v4737
  %v4739 = vlaneseq
  %v4740 = vshrl.u32 %v4739, 7
  %v4741 = vsub.s32 0, %v4740
  %v4742 = vrot.slane %v4719, %v4741
  %v4743 = vlaneseq
  %v4744 = vshrl.u32 %v4743, 7
  %v4745 = vsub.s32 0, %v4744
  %v4746 = vrot.slane %v4720, %v4745
  %v4747 = vlaneseq
  %v4748 = vshrl.u32 %v4747, 7
  %v4749 = vsub.s32 0, %v4748
  %v4750 = vrot.slane %v4721, %v4749
  %v4751 = vlaneseq
  %v4752 = vshrl.u32 %v4751, 7
  %v4753 = vsub.s32 0, %v4752
  %v4754 = vrot.slane %v4722, %v4753
  %v4755 = vadd.f32 %v4707, %v4726
  %v4756 = vadd.f32 %v4708, %v4730
  %v4757 = vadd.f32 %v4709, %v4734
  %v4758 = vadd.f32 %v4710, %v4738
  %v4759 = vadd.f32 %v4711, %v4742
  %v4760 = vadd.f32 %v4712, %v4746
  %v4761 = vadd.f32 %v4713, %v4750
  %v4762 = vadd.f32 %v4714, %v4754
  %vm4763 = vcmask 60416
  %4764 = vst.msk [vmem:[%s7] sm:$0xf] %vm4763, %v4755
  %4765 = vst.msk [vmem:[%s7 + $0x4] sm:$0xf] %vm4763, %v4756
  %4766 = vst.msk [vmem:[%s7 + $0x8] sm:$0xf] %vm4763, %v4757
  %4767 = vst.msk [vmem:[%s7 + $0xc] sm:$0xf] %vm4763, %v4758
  %4768 = vst.msk [vmem:[%s7 + $0x10] sm:$0xf] %vm4763, %v4759
  %4769 = vst.msk [vmem:[%s7 + $0x14] sm:$0xf] %vm4763, %v4760
  %4770 = vst.msk [vmem:[%s7 + $0x18] sm:$0xf] %vm4763, %v4761
  %4771 = vst.msk [vmem:[%s7 + $0x1c] sm:$0xf] %vm4763, %v4762
  // Predicated region
  $region30: #{_lambda_.2} parent=0 // pred_check
    _
  $region31: #{_lambda_.2} parent=0 // pred_check_branch
    %4773 = sbr.rel (0) target = $region33
  $region32: #{_lambda_.2} parent=0 // pred_region
    _
  $region33: #{_lambda_.2} parent=0 // pred_fallthru
    _
  // Predicated region
  $region34: #{_lambda_.2} parent=0 // pred_check
    _
  $region35: #{_lambda_.2} parent=0 // pred_check_branch
    %4775 = sbr.rel (0) target = $region37
  $region36: #{_lambda_.2} parent=0 // pred_region
    _
  $region37: #{_lambda_.2} parent=0 // pred_fallthru
    _

// kernel: _lambda_.3
$region0: #{_lambda_.3}
  #allocation0 [shape = 'u32[]', space=smem, size = 0x4, offset = 0x4, fixed_abs, tag = 'smem constant byte address 0x4 - core index']
  #allocation1 [shape = 'u32[144,128]{1,0:T(1,128)}', space=vmem, size = 0x12000, scoped, tag = 'internal scratch']
  #allocation2 [shape = 'f32[2,31,8]{2,1,0:T(8,128)}', space=vmem, size = 0x8000, scoped, tag = 'scratch operand']
  #allocation3 [shape = 'f32[2,29,8]{2,1,0:T(8,128)}', space=vmem, size = 0x8000, scoped, tag = 'scratch operand']
  #allocation4 [shape = 'f32[2,28,8]{2,1,0:T(8,128)}', space=vmem, size = 0x8000, scoped, tag = 'scratch operand']
  %s0 = inlined_call_operand.vmem [shape: f32[2,32,4], index: 0, kind: input, shape index: {}]
  %s1 = inlined_call_operand.vmem [shape: f32[2,2,4,8], index: 1, kind: input, shape index: {}]
  %s2 = inlined_call_operand.vmem [shape: f32[2,3,8], index: 2, kind: input, shape index: {}]
  %s3 = inlined_call_operand.vmem [shape: f32[3,2,8,8], index: 3, kind: input, shape index: {}]
  %s4 = inlined_call_operand.vmem [shape: f32[2,3,8], index: 4, kind: input, shape index: {}]
  %s5 = inlined_call_operand.vmem [shape: f32[2,2,8,8], index: 5, kind: input, shape index: {}]
  %s6 = inlined_call_operand.vmem [shape: f32[2,3,8], index: 6, kind: input, shape index: {}]
  %s7 = inlined_call_operand.vmem [shape: f32[28,2,8,12], index: 7, kind: input, shape index: {}]
  %s8 = inlined_call_operand.vmem [shape: f32[1,1,12], index: 8, kind: input, shape index: {}]
  %s9 = inlined_call_operand.vmem [shape: f32[2,12,6], index: 9, kind: input, shape index: {}]
  %s10 = inlined_call_operand.vmem [shape: f32[1,1,6], index: 10, kind: input, shape index: {}]
  %s11 = inlined_call_operand.hbm [shape: f32[2,1,6], index: 11, kind: output, shape index: {}]
  %s12 = sld [smem:[#allocation0]]
  $region54: #{_lambda_.3} parent=0
    _
  %s14 = ssub.s32 1, %s12
  %s15 = scalar_select 0, %s14, %s12
  $region1: #{_lambda_.3} parent=0
    #allocation5 [shape = 'u8[1024]{0}', space=vmem, size = 0x400, scoped, tag = 'output window, operand 0, single buffered']
    #allocation6 [shape = 's32[1]{0}', space=sflag, size = 0x4, scoped, tag = 'scoped memory for _lambda_.3']
    %16 = vsyncpa [#allocation6], 0
    // Predicated region
    $region2: #{_lambda_.3} parent=1 // pred_check
      _
    $region3: #{_lambda_.3} parent=1 // pred_check_branch
      %18 = sbr.rel (0) target = $region5
    $region4: #{_lambda_.3} parent=1 // pred_region
      _
    $region5: #{_lambda_.3} parent=1 // pred_fallthru
      _
    // Predicated region
    $region6: #{_lambda_.3} parent=1 // pred_check
      _
    $region7: #{_lambda_.3} parent=1 // pred_check_branch
      %20 = sbr.rel (0) target = $region9
    $region8: #{_lambda_.3} parent=1 // pred_region
      _
    $region9: #{_lambda_.3} parent=1 // pred_fallthru
      _
    // Predicated region
    $region10: #{_lambda_.3} parent=1 // pred_check
      _
    $region11: #{_lambda_.3} parent=1 // pred_check_branch
      %22 = sbr.rel (0) target = $region13
    $region12: #{_lambda_.3} parent=1 // pred_region
      _
    $region13: #{_lambda_.3} parent=1 // pred_fallthru
      _
    // Predicated region
    $region14: #{_lambda_.3} parent=1 // pred_check
      _
    $region15: #{_lambda_.3} parent=1 // pred_check_branch
      %24 = sbr.rel (0) target = $region17
    $region16: #{_lambda_.3} parent=1 // pred_region
      _
    $region17: #{_lambda_.3} parent=1 // pred_fallthru
      _
    // Predicated region
    $region18: #{_lambda_.3} parent=1 // pred_check
      _
    $region19: #{_lambda_.3} parent=1 // pred_check_branch
      %26 = sbr.rel (0) target = $region21
    $region20: #{_lambda_.3} parent=1 // pred_region
      _
    $region21: #{_lambda_.3} parent=1 // pred_fallthru
      _
    // Predicated region
    $region22: #{_lambda_.3} parent=1 // pred_check
      _
    $region23: #{_lambda_.3} parent=1 // pred_check_branch
      %28 = sbr.rel (0) target = $region25
    $region24: #{_lambda_.3} parent=1 // pred_region
      _
    $region25: #{_lambda_.3} parent=1 // pred_fallthru
      _
    // Predicated region
    $region26: #{_lambda_.3} parent=1 // pred_check
      _
    $region27: #{_lambda_.3} parent=1 // pred_check_branch
      %30 = sbr.rel (0) target = $region29
    $region28: #{_lambda_.3} parent=1 // pred_region
      _
    $region29: #{_lambda_.3} parent=1 // pred_fallthru
      _
    // Predicated region
    $region30: #{_lambda_.3} parent=1 // pred_check
      _
    $region31: #{_lambda_.3} parent=1 // pred_check_branch
      %32 = sbr.rel (0) target = $region33
    $region32: #{_lambda_.3} parent=1 // pred_region
      _
    $region33: #{_lambda_.3} parent=1 // pred_fallthru
      _
    // Predicated region
    $region34: #{_lambda_.3} parent=1 // pred_check
      _
    $region35: #{_lambda_.3} parent=1 // pred_check_branch
      %34 = sbr.rel (0) target = $region37
    $region36: #{_lambda_.3} parent=1 // pred_region
      _
    $region37: #{_lambda_.3} parent=1 // pred_fallthru
      _
    // Predicated region
    $region38: #{_lambda_.3} parent=1 // pred_check
      _
    $region39: #{_lambda_.3} parent=1 // pred_check_branch
      %36 = sbr.rel (0) target = $region41
    $region40: #{_lambda_.3} parent=1 // pred_region
      _
    $region41: #{_lambda_.3} parent=1 // pred_fallthru
      _
    // Predicated region
    $region42: #{_lambda_.3} parent=1 // pred_check
      _
    $region43: #{_lambda_.3} parent=1 // pred_check_branch
      %38 = sbr.rel (0) target = $region45
    $region44: #{_lambda_.3} parent=1 // pred_region
      _
    $region45: #{_lambda_.3} parent=1 // pred_fallthru
      _
    %v39 = vld [vmem:[%s0] sm:$0xff]
    %v40 = vld [vmem:[%s0 + $0x8] sm:$0xff]
    %v41 = vld [vmem:[%s0 + $0x10] sm:$0xff]
    %v42 = vld [vmem:[%s0 + $0x18] sm:$0x7f]
    %v43 = vld [vmem:[%s0 + $0x20] sm:$0xff]
    %v44 = vld [vmem:[%s0 + $0x28] sm:$0xff]
    %v45 = vld [vmem:[%s0 + $0x30] sm:$0xff]
    %v46 = vld [vmem:[%s0 + $0x38] sm:$0x7f]
    %v47 = vld [vmem:[%s1] sm:$0xf]
    %v48 = vld [vmem:[%s1 + $0x4] sm:$0xf]
    %v49 = vld [vmem:[%s0 + $0x1] sm:$0xff]
    %v50 = vld [vmem:[%s0 + $0x9] sm:$0xff]
    %v51 = vld [vmem:[%s0 + $0x11] sm:$0xff]
    %v52 = vld [vmem:[%s0 + $0x19] sm:$0x7f]
    %v53 = vld [vmem:[%s0 + $0x21] sm:$0xff]
    %v54 = vld [vmem:[%s0 + $0x29] sm:$0xff]
    %v55 = vld [vmem:[%s0 + $0x31] sm:$0xff]
    %v56 = vld [vmem:[%s0 + $0x39] sm:$0x7f]
    %s57 = scalar_lea.vmem %s1, 8
    %v58 = vld [vmem:[%s57] sm:$0xf]
    %v59 = vld [vmem:[%s57 + $0x4] sm:$0xf]
    %vm60 = vcmask 31744
    %v62 = vsel %vm60, %v49, 0
    %v65 = vsel %vm60, %v50, 0
    %v68 = vsel %vm60, %v51, 0
    %v71 = vsel %vm60, %v52, 0
    %vm73 = vcmask 1043456
    %v75 = vsel %vm73, %v58, 0
    %77 = vmatprep.subr.mxu0 0.0
    %78 = vmatpush1.msra.mxu0 %v75
    %79 = vmatprep.subr.mxu0 0.0
    %80 = vmatpush1.msra.mxu0 0.0
    %81 = vmatprep.subr.mxu0 0.0
    %82 = vmatpush1.msra.mxu0 0.0
    %83 = vmatprep.subr.mxu0 0.0
    %84 = vmatpush1.msra.mxu0 0.0
    %85 = vmatprep.subr.mxu0 0.0
    %86 = vmatpush1.msra.mxu0 0.0
    %87 = vmatprep.subr.mxu0 0.0
    %88 = vmatpush1.msra.mxu0 0.0
    %89 = vmatprep.subr.mxu0 0.0
    %90 = vmatpush1.msra.mxu0 0.0
    %91 = vmatprep.subr.mxu0 0.0
    %92 = vmatpush1.msra.mxu0 0.0
    %93 = vmatprep.subr.mxu0 0.0
    %94 = vmatpush1.msra.mxu0 0.0
    %95 = vmatprep.subr.mxu0 0.0
    %96 = vmatpush1.msra.mxu0 0.0
    %97 = vmatprep.subr.mxu0 0.0
    %98 = vmatpush1.msra.mxu0 0.0
    %99 = vmatprep.subr.mxu0 0.0
    %100 = vmatpush1.msra.mxu0 0.0
    %101 = vmatprep.subr.mxu0 0.0
    %102 = vmatpush1.msra.mxu0 0.0
    %103 = vmatprep.subr.mxu0 0.0
    %104 = vmatpush1.msra.mxu0 0.0
    %105 = vmatprep.subr.mxu0 0.0
    %106 = vmatpush1.msra.mxu0 0.0
    %107 = vmatprep.subr.mxu0 0.0
    %108 = vmatpush1.msra.mxu0 0.0
    %109 = vmatprep.subr.mxu0 0.0
    %110 = vmatpush1.msra.mxu0 0.0
    %111 = vmatprep.subr.mxu0 0.0
    %112 = vmatpush1.msra.mxu0 0.0
    %113 = vmatprep.subr.mxu0 0.0
    %114 = vmatpush1.msra.mxu0 0.0
    %115 = vmatprep.subr.mxu0 0.0
    %116 = vmatpush1.msra.mxu0 0.0
    %117 = vmatprep.subr.mxu0 0.0
    %118 = vmatpush1.msra.mxu0 0.0
    %119 = vmatprep.subr.mxu0 0.0
    %120 = vmatpush1.msra.mxu0 0.0
    %121 = vmatprep.subr.mxu0 0.0
    %122 = vmatpush1.msra.mxu0 0.0
    %123 = vmatprep.subr.mxu0 0.0
    %124 = vmatpush1.msra.mxu0 0.0
    %125 = vmatprep.subr.mxu0 0.0
    %126 = vmatpush1.msra.mxu0 0.0
    %127 = vmatprep.subr.mxu0 0.0
    %128 = vmatpush1.msra.mxu0 0.0
    %129 = vmatprep.subr.mxu0 0.0
    %130 = vmatpush1.msra.mxu0 0.0
    %131 = vmatprep.subr.mxu0 0.0
    %132 = vmatpush1.msra.mxu0 0.0
    %133 = vmatprep.subr.mxu0 0.0
    %134 = vmatpush1.msra.mxu0 0.0
    %135 = vmatprep.subr.mxu0 0.0
    %136 = vmatpush1.msra.mxu0 0.0
    %137 = vmatprep.subr.mxu0 0.0
    %138 = vmatpush1.msra.mxu0 0.0
    %139 = vmatprep.subr.mxu0 0.0
    %140 = vmatpush1.msra.mxu0 0.0
    %141 = vmatprep.mubr.f32.mxu0 0.0
    %142 = vmatmul.mubr.f32.gmra.mrb[0].mxu0 %v62
    %v143 = vpop.f32.mrb[0].mxu0
    %v144 = vadd.f32 0.0, %v143
    %v145 = vpop.f32.mrb[0].mxu0
    %146 = vmatprep.mubr.f32.mxu0 0.0
    %147 = vmatmul.mubr.f32.gmra.mrb[0].mxu0 %v65
    %v148 = vpop.f32.mrb[0].mxu0
    %v149 = vadd.f32 0.0, %v148
    %v150 = vpop.f32.mrb[0].mxu0
    %151 = vmatprep.mubr.f32.mxu0 0.0
    %152 = vmatmul.mubr.f32.gmra.mrb[0].mxu0 %v68
    %v153 = vpop.f32.mrb[0].mxu0
    %v154 = vadd.f32 0.0, %v153
    %v155 = vpop.f32.mrb[0].mxu0
    %156 = vmatprep.mubr.f32.mxu0 0.0
    %157 = vmatmul.mubr.f32.gmra.mrb[0].mxu0 %v71
    %v158 = vpop.f32.mrb[0].mxu0
    %v159 = vadd.f32 0.0, %v158
    %v160 = vpop.f32.mrb[0].mxu0
    %161 = vdwg.mxu0
    %v163 = vsel %vm60, %v53, 0
    %v166 = vsel %vm60, %v54, 0
    %v169 = vsel %vm60, %v55, 0
    %v172 = vsel %vm60, %v56, 0
    %v175 = vsel %vm73, %v59, 0
    %177 = vmatprep.subr.mxu0 0.0
    %178 = vmatpush1.msra.mxu0 %v175
    %179 = vmatprep.subr.mxu0 0.0
    %180 = vmatpush1.msra.mxu0 0.0
    %181 = vmatprep.subr.mxu0 0.0
    %182 = vmatpush1.msra.mxu0 0.0
    %183 = vmatprep.subr.mxu0 0.0
    %184 = vmatpush1.msra.mxu0 0.0
    %185 = vmatprep.subr.mxu0 0.0
    %186 = vmatpush1.msra.mxu0 0.0
    %187 = vmatprep.subr.mxu0 0.0
    %188 = vmatpush1.msra.mxu0 0.0
    %189 = vmatprep.subr.mxu0 0.0
    %190 = vmatpush1.msra.mxu0 0.0
    %191 = vmatprep.subr.mxu0 0.0
    %192 = vmatpush1.msra.mxu0 0.0
    %193 = vmatprep.subr.mxu0 0.0
    %194 = vmatpush1.msra.mxu0 0.0
    %195 = vmatprep.subr.mxu0 0.0
    %196 = vmatpush1.msra.mxu0 0.0
    %197 = vmatprep.subr.mxu0 0.0
    %198 = vmatpush1.msra.mxu0 0.0
    %199 = vmatprep.subr.mxu0 0.0
    %200 = vmatpush1.msra.mxu0 0.0
    %201 = vmatprep.subr.mxu0 0.0
    %202 = vmatpush1.msra.mxu0 0.0
    %203 = vmatprep.subr.mxu0 0.0
    %204 = vmatpush1.msra.mxu0 0.0
    %205 = vmatprep.subr.mxu0 0.0
    %206 = vmatpush1.msra.mxu0 0.0
    %207 = vmatprep.subr.mxu0 0.0
    %208 = vmatpush1.msra.mxu0 0.0
    %209 = vmatprep.subr.mxu0 0.0
    %210 = vmatpush1.msra.mxu0 0.0
    %211 = vmatprep.subr.mxu0 0.0
    %212 = vmatpush1.msra.mxu0 0.0
    %213 = vmatprep.subr.mxu0 0.0
    %214 = vmatpush1.msra.mxu0 0.0
    %215 = vmatprep.subr.mxu0 0.0
    %216 = vmatpush1.msra.mxu0 0.0
    %217 = vmatprep.subr.mxu0 0.0
    %218 = vmatpush1.msra.mxu0 0.0
    %219 = vmatprep.subr.mxu0 0.0
    %220 = vmatpush1.msra.mxu0 0.0
    %221 = vmatprep.subr.mxu0 0.0
    %222 = vmatpush1.msra.mxu0 0.0
    %223 = vmatprep.subr.mxu0 0.0
    %224 = vmatpush1.msra.mxu0 0.0
    %225 = vmatprep.subr.mxu0 0.0
    %226 = vmatpush1.msra.mxu0 0.0
    %227 = vmatprep.subr.mxu0 0.0
    %228 = vmatpush1.msra.mxu0 0.0
    %229 = vmatprep.subr.mxu0 0.0
    %230 = vmatpush1.msra.mxu0 0.0
    %231 = vmatprep.subr.mxu0 0.0
    %232 = vmatpush1.msra.mxu0 0.0
    %233 = vmatprep.subr.mxu0 0.0
    %234 = vmatpush1.msra.mxu0 0.0
    %235 = vmatprep.subr.mxu0 0.0
    %236 = vmatpush1.msra.mxu0 0.0
    %237 = vmatprep.subr.mxu0 0.0
    %238 = vmatpush1.msra.mxu0 0.0
    %239 = vmatprep.subr.mxu0 0.0
    %240 = vmatpush1.msra.mxu0 0.0
    %241 = vmatprep.mubr.f32.mxu0 0.0
    %242 = vmatmul.mubr.f32.gmra.mrb[0].mxu0 %v163
    %v243 = vpop.f32.mrb[0].mxu0
    %v244 = vadd.f32 0.0, %v243
    %v245 = vpop.f32.mrb[0].mxu0
    %246 = vmatprep.mubr.f32.mxu0 0.0
    %247 = vmatmul.mubr.f32.gmra.mrb[0].mxu0 %v166
    %v248 = vpop.f32.mrb[0].mxu0
    %v249 = vadd.f32 0.0, %v248
    %v250 = vpop.f32.mrb[0].mxu0
    %251 = vmatprep.mubr.f32.mxu0 0.0
    %252 = vmatmul.mubr.f32.gmra.mrb[0].mxu0 %v169
    %v253 = vpop.f32.mrb[0].mxu0
    %v254 = vadd.f32 0.0, %v253
    %v255 = vpop.f32.mrb[0].mxu0
    %256 = vmatprep.mubr.f32.mxu0 0.0
    %257 = vmatmul.mubr.f32.gmra.mrb[0].mxu0 %v172
    %v258 = vpop.f32.mrb[0].mxu0
    %v259 = vadd.f32 0.0, %v258
    %v260 = vpop.f32.mrb[0].mxu0
    %261 = vdwg.mxu0
    %v263 = vsel %vm60, %v39, 0
    %v266 = vsel %vm60, %v40, 0
    %v269 = vsel %vm60, %v41, 0
    %v272 = vsel %vm60, %v42, 0
    %v275 = vsel %vm73, %v47, 0
    %277 = vmatprep.subr.mxu0 0.0
    %278 = vmatpush1.msra.mxu0 %v275
    %279 = vmatprep.subr.mxu0 0.0
    %280 = vmatpush1.msra.mxu0 0.0
    %281 = vmatprep.subr.mxu0 0.0
    %282 = vmatpush1.msra.mxu0 0.0
    %283 = vmatprep.subr.mxu0 0.0
    %284 = vmatpush1.msra.mxu0 0.0
    %285 = vmatprep.subr.mxu0 0.0
    %286 = vmatpush1.msra.mxu0 0.0
    %287 = vmatprep.subr.mxu0 0.0
    %288 = vmatpush1.msra.mxu0 0.0
    %289 = vmatprep.subr.mxu0 0.0
    %290 = vmatpush1.msra.mxu0 0.0
    %291 = vmatprep.subr.mxu0 0.0
    %292 = vmatpush1.msra.mxu0 0.0
    %293 = vmatprep.subr.mxu0 0.0
    %294 = vmatpush1.msra.mxu0 0.0
    %295 = vmatprep.subr.mxu0 0.0
    %296 = vmatpush1.msra.mxu0 0.0
    %297 = vmatprep.subr.mxu0 0.0
    %298 = vmatpush1.msra.mxu0 0.0
    %299 = vmatprep.subr.mxu0 0.0
    %300 = vmatpush1.msra.mxu0 0.0
    %301 = vmatprep.subr.mxu0 0.0
    %302 = vmatpush1.msra.mxu0 0.0
    %303 = vmatprep.subr.mxu0 0.0
    %304 = vmatpush1.msra.mxu0 0.0
    %305 = vmatprep.subr.mxu0 0.0
    %306 = vmatpush1.msra.mxu0 0.0
    %307 = vmatprep.subr.mxu0 0.0
    %308 = vmatpush1.msra.mxu0 0.0
    %309 = vmatprep.subr.mxu0 0.0
    %310 = vmatpush1.msra.mxu0 0.0
    %311 = vmatprep.subr.mxu0 0.0
    %312 = vmatpush1.msra.mxu0 0.0
    %313 = vmatprep.subr.mxu0 0.0
    %314 = vmatpush1.msra.mxu0 0.0
    %315 = vmatprep.subr.mxu0 0.0
    %316 = vmatpush1.msra.mxu0 0.0
    %317 = vmatprep.subr.mxu0 0.0
    %318 = vmatpush1.msra.mxu0 0.0
    %319 = vmatprep.subr.mxu0 0.0
    %320 = vmatpush1.msra.mxu0 0.0
    %321 = vmatprep.subr.mxu0 0.0
    %322 = vmatpush1.msra.mxu0 0.0
    %323 = vmatprep.subr.mxu0 0.0
    %324 = vmatpush1.msra.mxu0 0.0
    %325 = vmatprep.subr.mxu0 0.0
    %326 = vmatpush1.msra.mxu0 0.0
    %327 = vmatprep.subr.mxu0 0.0
    %328 = vmatpush1.msra.mxu0 0.0
    %329 = vmatprep.subr.mxu0 0.0
    %330 = vmatpush1.msra.mxu0 0.0
    %331 = vmatprep.subr.mxu0 0.0
    %332 = vmatpush1.msra.mxu0 0.0
    %333 = vmatprep.subr.mxu0 0.0
    %334 = vmatpush1.msra.mxu0 0.0
    %335 = vmatprep.subr.mxu0 0.0
    %336 = vmatpush1.msra.mxu0 0.0
    %337 = vmatprep.subr.mxu0 0.0
    %338 = vmatpush1.msra.mxu0 0.0
    %339 = vmatprep.subr.mxu0 0.0
    %340 = vmatpush1.msra.mxu0 0.0
    %341 = vmatprep.mubr.f32.mxu0 0.0
    %342 = vmatmul.mubr.f32.gmra.mrb[0].mxu0 %v263
    %v343 = vpop.f32.mrb[0].mxu0
    %v344 = vadd.f32 %v144, %v343
    %v345 = vpop.f32.mrb[0].mxu0
    %346 = vmatprep.mubr.f32.mxu0 0.0
    %347 = vmatmul.mubr.f32.gmra.mrb[0].mxu0 %v266
    %v348 = vpop.f32.mrb[0].mxu0
    %v349 = vadd.f32 %v149, %v348
    %v350 = vpop.f32.mrb[0].mxu0
    %351 = vmatprep.mubr.f32.mxu0 0.0
    %352 = vmatmul.mubr.f32.gmra.mrb[0].mxu0 %v269
    %v353 = vpop.f32.mrb[0].mxu0
    %v354 = vadd.f32 %v154, %v353
    %v355 = vpop.f32.mrb[0].mxu0
    %356 = vmatprep.mubr.f32.mxu0 0.0
    %357 = vmatmul.mubr.f32.gmra.mrb[0].mxu0 %v272
    %v358 = vpop.f32.mrb[0].mxu0
    %v359 = vadd.f32 %v159, %v358
    %v360 = vpop.f32.mrb[0].mxu0
    %361 = vdwg.mxu0
    %v363 = vsel %vm60, %v43, 0
    %v366 = vsel %vm60, %v44, 0
    %v369 = vsel %vm60, %v45, 0
    %v372 = vsel %vm60, %v46, 0
    %v375 = vsel %vm73, %v48, 0
    %377 = vmatprep.subr.mxu0 0.0
    %378 = vmatpush1.msra.mxu0 %v375
    %379 = vmatprep.subr.mxu0 0.0
    %380 = vmatpush1.msra.mxu0 0.0
    %381 = vmatprep.subr.mxu0 0.0
    %382 = vmatpush1.msra.mxu0 0.0
    %383 = vmatprep.subr.mxu0 0.0
    %384 = vmatpush1.msra.mxu0 0.0
    %385 = vmatprep.subr.mxu0 0.0
    %386 = vmatpush1.msra.mxu0 0.0
    %387 = vmatprep.subr.mxu0 0.0
    %388 = vmatpush1.msra.mxu0 0.0
    %389 = vmatprep.subr.mxu0 0.0
    %390 = vmatpush1.msra.mxu0 0.0
    %391 = vmatprep.subr.mxu0 0.0
    %392 = vmatpush1.msra.mxu0 0.0
    %393 = vmatprep.subr.mxu0 0.0
    %394 = vmatpush1.msra.mxu0 0.0
    %395 = vmatprep.subr.mxu0 0.0
    %396 = vmatpush1.msra.mxu0 0.0
    %397 = vmatprep.subr.mxu0 0.0
    %398 = vmatpush1.msra.mxu0 0.0
    %399 = vmatprep.subr.mxu0 0.0
    %400 = vmatpush1.msra.mxu0 0.0
    %401 = vmatprep.subr.mxu0 0.0
    %402 = vmatpush1.msra.mxu0 0.0
    %403 = vmatprep.subr.mxu0 0.0
    %404 = vmatpush1.msra.mxu0 0.0
    %405 = vmatprep.subr.mxu0 0.0
    %406 = vmatpush1.msra.mxu0 0.0
    %407 = vmatprep.subr.mxu0 0.0
    %408 = vmatpush1.msra.mxu0 0.0
    %409 = vmatprep.subr.mxu0 0.0
    %410 = vmatpush1.msra.mxu0 0.0
    %411 = vmatprep.subr.mxu0 0.0
    %412 = vmatpush1.msra.mxu0 0.0
    %413 = vmatprep.subr.mxu0 0.0
    %414 = vmatpush1.msra.mxu0 0.0
    %415 = vmatprep.subr.mxu0 0.0
    %416 = vmatpush1.msra.mxu0 0.0
    %417 = vmatprep.subr.mxu0 0.0
    %418 = vmatpush1.msra.mxu0 0.0
    %419 = vmatprep.subr.mxu0 0.0
    %420 = vmatpush1.msra.mxu0 0.0
    %421 = vmatprep.subr.mxu0 0.0
    %422 = vmatpush1.msra.mxu0 0.0
    %423 = vmatprep.subr.mxu0 0.0
    %424 = vmatpush1.msra.mxu0 0.0
    %425 = vmatprep.subr.mxu0 0.0
    %426 = vmatpush1.msra.mxu0 0.0
    %427 = vmatprep.subr.mxu0 0.0
    %428 = vmatpush1.msra.mxu0 0.0
    %429 = vmatprep.subr.mxu0 0.0
    %430 = vmatpush1.msra.mxu0 0.0
    %431 = vmatprep.subr.mxu0 0.0
    %432 = vmatpush1.msra.mxu0 0.0
    %433 = vmatprep.subr.mxu0 0.0
    %434 = vmatpush1.msra.mxu0 0.0
    %435 = vmatprep.subr.mxu0 0.0
    %436 = vmatpush1.msra.mxu0 0.0
    %437 = vmatprep.subr.mxu0 0.0
    %438 = vmatpush1.msra.mxu0 0.0
    %439 = vmatprep.subr.mxu0 0.0
    %440 = vmatpush1.msra.mxu0 0.0
    %441 = vmatprep.mubr.f32.mxu0 0.0
    %442 = vmatmul.mubr.f32.gmra.mrb[0].mxu0 %v363
    %v443 = vpop.f32.mrb[0].mxu0
    %v444 = vadd.f32 %v244, %v443
    %v445 = vpop.f32.mrb[0].mxu0
    %446 = vmatprep.mubr.f32.mxu0 0.0
    %447 = vmatmul.mubr.f32.gmra.mrb[0].mxu0 %v366
    %v448 = vpop.f32.mrb[0].mxu0
    %v449 = vadd.f32 %v249, %v448
    %v450 = vpop.f32.mrb[0].mxu0
    %451 = vmatprep.mubr.f32.mxu0 0.0
    %452 = vmatmul.mubr.f32.gmra.mrb[0].mxu0 %v369
    %v453 = vpop.f32.mrb[0].mxu0
    %v454 = vadd.f32 %v254, %v453
    %v455 = vpop.f32.mrb[0].mxu0
    %456 = vmatprep.mubr.f32.mxu0 0.0
    %457 = vmatmul.mubr.f32.gmra.mrb[0].mxu0 %v372
    %v458 = vpop.f32.mrb[0].mxu0
    %v459 = vadd.f32 %v259, %v458
    %v460 = vpop.f32.mrb[0].mxu0
    %461 = vdwg.mxu0
    %v462 = vld [vmem:[%s2] sm:$0x1]
    %v463 = vld [vmem:[%s2 + $0x4] sm:$0x1]
    %v464 = vlaneseq
    %v465 = vshrl.u32 %v464, 7
    %v466 = vsub.s32 0, %v465
    %v467 = vrot.slane %v462, %v466
    %v468 = vlaneseq
    %v469 = vshrl.u32 %v468, 7
    %v470 = vsub.s32 0, %v469
    %v471 = vrot.slane %v463, %v470
    %v472 = vadd.f32 %v344, %v467
    %v473 = vadd.f32 %v349, %v467
    %v474 = vadd.f32 %v354, %v467
    %v475 = vadd.f32 %v359, %v467
    %v476 = vadd.f32 %v444, %v471
    %v477 = vadd.f32 %v449, %v471
    %v478 = vadd.f32 %v454, %v471
    %v479 = vadd.f32 %v459, %v471
    %v480 = vmax.f32 %v472, 0.0
    %v481 = vmax.f32 %v473, 0.0
    %v482 = vmax.f32 %v474, 0.0
    %v483 = vmax.f32 %v475, 0.0
    %v484 = vmax.f32 %v476, 0.0
    %v485 = vmax.f32 %v477, 0.0
    %v486 = vmax.f32 %v478, 0.0
    %v487 = vmax.f32 %v479, 0.0
    %v488 = vld [vmem:[%s2 + $0x1] sm:$0x1]
    %v489 = vld [vmem:[%s2 + $0x5] sm:$0x1]
    %v490 = vlaneseq
    %v491 = vshrl.u32 %v490, 7
    %v492 = vsub.s32 0, %v491
    %v493 = vrot.slane %v488, %v492
    %v494 = vlaneseq
    %v495 = vshrl.u32 %v494, 7
    %v496 = vsub.s32 0, %v495
    %v497 = vrot.slane %v489, %v496
    %v498 = vmul.f32 %v480, %v493
    %v499 = vmul.f32 %v481, %v493
    %v500 = vmul.f32 %v482, %v493
    %v501 = vmul.f32 %v483, %v493
    %v502 = vmul.f32 %v484, %v497
    %v503 = vmul.f32 %v485, %v497
    %v504 = vmul.f32 %v486, %v497
    %v505 = vmul.f32 %v487, %v497
    %v506 = vld [vmem:[%s2 + $0x2] sm:$0x1]
    %v507 = vld [vmem:[%s2 + $0x6] sm:$0x1]
    %v508 = vlaneseq
    %v509 = vshrl.u32 %v508, 7
    %v510 = vsub.s32 0, %v509
    %v511 = vrot.slane %v506, %v510
    %v512 = vlaneseq
    %v513 = vshrl.u32 %v512, 7
    %v514 = vsub.s32 0, %v513
    %v515 = vrot.slane %v507, %v514
    %v516 = vadd.f32 %v498, %v511
    %v517 = vadd.f32 %v499, %v511
    %v518 = vadd.f32 %v500, %v511
    %v519 = vadd.f32 %v501, %v511
    %v520 = vadd.f32 %v502, %v515
    %v521 = vadd.f32 %v503, %v515
    %v522 = vadd.f32 %v504, %v515
    %v523 = vadd.f32 %v505, %v515
    %vm524 = vcmask 64512
    %525 = vst.msk [vmem:[#allocation2] sm:$0xff] %vm524, %v516
    %526 = vst.msk [vmem:[#allocation2 + $0x8] sm:$0xff] %vm524, %v517
    %527 = vst.msk [vmem:[#allocation2 + $0x10] sm:$0xff] %vm524, %v518
    %vm528 = vcmask 63488
    %529 = vst.msk [vmem:[#allocation2 + $0x18] sm:$0x7f] %vm528, %v519
    %530 = vst.msk [vmem:[#allocation2 + $0x20] sm:$0xff] %vm524, %v520
    %531 = vst.msk [vmem:[#allocation2 + $0x28] sm:$0xff] %vm524, %v521
    %532 = vst.msk [vmem:[#allocation2 + $0x30] sm:$0xff] %vm524, %v522
    %533 = vst.msk [vmem:[#allocation2 + $0x38] sm:$0x7f] %vm528, %v523
    %v534 = vld [vmem:[#allocation2] sm:$0xff]
    %v535 = vld [vmem:[#allocation2 + $0x8] sm:$0xff]
    %v536 = vld [vmem:[#allocation2 + $0x10] sm:$0xff]
    %v537 = vld [vmem:[#allocation2 + $0x18] sm:$0x1f]
    %v538 = vld [vmem:[#allocation2 + $0x20] sm:$0xff]
    %v539 = vld [vmem:[#allocation2 + $0x28] sm:$0xff]
    %v540 = vld [vmem:[#allocation2 + $0x30] sm:$0xff]
    %v541 = vld [vmem:[#allocation2 + $0x38] sm:$0x1f]
    %v542 = vld [vmem:[%s3] sm:$0xff]
    %v543 = vld [vmem:[%s3 + $0x8] sm:$0xff]
    %v544 = vld [vmem:[#allocation2 + $0x1] sm:$0xff]
    %v545 = vld [vmem:[#allocation2 + $0x9] sm:$0xff]
    %v546 = vld [vmem:[#allocation2 + $0x11] sm:$0xff]
    %v547 = vld [vmem:[#allocation2 + $0x19] sm:$0x1f]
    %v548 = vld [vmem:[#allocation2 + $0x21] sm:$0xff]
    %v549 = vld [vmem:[#allocation2 + $0x29] sm:$0xff]
    %v550 = vld [vmem:[#allocation2 + $0x31] sm:$0xff]
    %v551 = vld [vmem:[#allocation2 + $0x39] sm:$0x1f]
    %s552 = scalar_lea.vmem %s3, 16
    %v553 = vld [vmem:[%s552] sm:$0xff]
    %v554 = vld [vmem:[%s552 + $0x8] sm:$0xff]
    %v556 = vsel %vm524, %v544, 0
    %v559 = vsel %vm524, %v545, 0
    %v562 = vsel %vm524, %v546, 0
    %v565 = vsel %vm524, %v547, 0
    %567 = vmatprep.subr.mxu0 0.0
    %568 = vmatpush1.msra.mxu0 %v553
    %569 = vmatprep.subr.mxu0 0.0
    %570 = vmatpush1.msra.mxu0 0.0
    %571 = vmatprep.subr.mxu0 0.0
    %572 = vmatpush1.msra.mxu0 0.0
    %573 = vmatprep.subr.mxu0 0.0
    %574 = vmatpush1.msra.mxu0 0.0
    %575 = vmatprep.subr.mxu0 0.0
    %576 = vmatpush1.msra.mxu0 0.0
    %577 = vmatprep.subr.mxu0 0.0
    %578 = vmatpush1.msra.mxu0 0.0
    %579 = vmatprep.subr.mxu0 0.0
    %580 = vmatpush1.msra.mxu0 0.0
    %581 = vmatprep.subr.mxu0 0.0
    %582 = vmatpush1.msra.mxu0 0.0
    %583 = vmatprep.subr.mxu0 0.0
    %584 = vmatpush1.msra.mxu0 0.0
    %585 = vmatprep.subr.mxu0 0.0
    %586 = vmatpush1.msra.mxu0 0.0
    %587 = vmatprep.subr.mxu0 0.0
    %588 = vmatpush1.msra.mxu0 0.0
    %589 = vmatprep.subr.mxu0 0.0
    %590 = vmatpush1.msra.mxu0 0.0
    %591 = vmatprep.subr.mxu0 0.0
    %592 = vmatpush1.msra.mxu0 0.0
    %593 = vmatprep.subr.mxu0 0.0
    %594 = vmatpush1.msra.mxu0 0.0
    %595 = vmatprep.subr.mxu0 0.0
    %596 = vmatpush1.msra.mxu0 0.0
    %597 = vmatprep.subr.mxu0 0.0
    %598 = vmatpush1.msra.mxu0 0.0
    %599 = vmatprep.subr.mxu0 0.0
    %600 = vmatpush1.msra.mxu0 0.0
    %601 = vmatprep.subr.mxu0 0.0
    %602 = vmatpush1.msra.mxu0 0.0
    %603 = vmatprep.subr.mxu0 0.0
    %604 = vmatpush1.msra.mxu0 0.0
    %605 = vmatprep.subr.mxu0 0.0
    %606 = vmatpush1.msra.mxu0 0.0
    %607 = vmatprep.subr.mxu0 0.0
    %608 = vmatpush1.msra.mxu0 0.0
    %609 = vmatprep.subr.mxu0 0.0
    %610 = vmatpush1.msra.mxu0 0.0
    %611 = vmatprep.subr.mxu0 0.0
    %612 = vmatpush1.msra.mxu0 0.0
    %613 = vmatprep.subr.mxu0 0.0
    %614 = vmatpush1.msra.mxu0 0.0
    %615 = vmatprep.subr.mxu0 0.0
    %616 = vmatpush1.msra.mxu0 0.0
    %617 = vmatprep.subr.mxu0 0.0
    %618 = vmatpush1.msra.mxu0 0.0
    %619 = vmatprep.subr.mxu0 0.0
    %620 = vmatpush1.msra.mxu0 0.0
    %621 = vmatprep.subr.mxu0 0.0
    %622 = vmatpush1.msra.mxu0 0.0
    %623 = vmatprep.subr.mxu0 0.0
    %624 = vmatpush1.msra.mxu0 0.0
    %625 = vmatprep.subr.mxu0 0.0
    %626 = vmatpush1.msra.mxu0 0.0
    %627 = vmatprep.subr.mxu0 0.0
    %628 = vmatpush1.msra.mxu0 0.0
    %629 = vmatprep.subr.mxu0 0.0
    %630 = vmatpush1.msra.mxu0 0.0
    %631 = vmatprep.mubr.f32.mxu0 0.0
    %632 = vmatmul.mubr.f32.gmra.mrb[0].mxu0 %v556
    %v633 = vpop.f32.mrb[0].mxu0
    %v634 = vadd.f32 0.0, %v633
    %v635 = vpop.f32.mrb[0].mxu0
    %636 = vmatprep.mubr.f32.mxu0 0.0
    %637 = vmatmul.mubr.f32.gmra.mrb[0].mxu0 %v559
    %v638 = vpop.f32.mrb[0].mxu0
    %v639 = vadd.f32 0.0, %v638
    %v640 = vpop.f32.mrb[0].mxu0
    %641 = vmatprep.mubr.f32.mxu0 0.0
    %642 = vmatmul.mubr.f32.gmra.mrb[0].mxu0 %v562
    %v643 = vpop.f32.mrb[0].mxu0
    %v644 = vadd.f32 0.0, %v643
    %v645 = vpop.f32.mrb[0].mxu0
    %646 = vmatprep.mubr.f32.mxu0 0.0
    %647 = vmatmul.mubr.f32.gmra.mrb[0].mxu0 %v565
    %v648 = vpop.f32.mrb[0].mxu0
    %v649 = vadd.f32 0.0, %v648
    %v650 = vpop.f32.mrb[0].mxu0
    %651 = vdwg.mxu0
    %v653 = vsel %vm524, %v548, 0
    %v656 = vsel %vm524, %v549, 0
    %v659 = vsel %vm524, %v550, 0
    %v662 = vsel %vm524, %v551, 0
    %664 = vmatprep.subr.mxu0 0.0
    %665 = vmatpush1.msra.mxu0 %v554
    %666 = vmatprep.subr.mxu0 0.0
    %667 = vmatpush1.msra.mxu0 0.0
    %668 = vmatprep.subr.mxu0 0.0
    %669 = vmatpush1.msra.mxu0 0.0
    %670 = vmatprep.subr.mxu0 0.0
    %671 = vmatpush1.msra.mxu0 0.0
    %672 = vmatprep.subr.mxu0 0.0
    %673 = vmatpush1.msra.mxu0 0.0
    %674 = vmatprep.subr.mxu0 0.0
    %675 = vmatpush1.msra.mxu0 0.0
    %676 = vmatprep.subr.mxu0 0.0
    %677 = vmatpush1.msra.mxu0 0.0
    %678 = vmatprep.subr.mxu0 0.0
    %679 = vmatpush1.msra.mxu0 0.0
    %680 = vmatprep.subr.mxu0 0.0
    %681 = vmatpush1.msra.mxu0 0.0
    %682 = vmatprep.subr.mxu0 0.0
    %683 = vmatpush1.msra.mxu0 0.0
    %684 = vmatprep.subr.mxu0 0.0
    %685 = vmatpush1.msra.mxu0 0.0
    %686 = vmatprep.subr.mxu0 0.0
    %687 = vmatpush1.msra.mxu0 0.0
    %688 = vmatprep.subr.mxu0 0.0
    %689 = vmatpush1.msra.mxu0 0.0
    %690 = vmatprep.subr.mxu0 0.0
    %691 = vmatpush1.msra.mxu0 0.0
    %692 = vmatprep.subr.mxu0 0.0
    %693 = vmatpush1.msra.mxu0 0.0
    %694 = vmatprep.subr.mxu0 0.0
    %695 = vmatpush1.msra.mxu0 0.0
    %696 = vmatprep.subr.mxu0 0.0
    %697 = vmatpush1.msra.mxu0 0.0
    %698 = vmatprep.subr.mxu0 0.0
    %699 = vmatpush1.msra.mxu0 0.0
    %700 = vmatprep.subr.mxu0 0.0
    %701 = vmatpush1.msra.mxu0 0.0
    %702 = vmatprep.subr.mxu0 0.0
    %703 = vmatpush1.msra.mxu0 0.0
    %704 = vmatprep.subr.mxu0 0.0
    %705 = vmatpush1.msra.mxu0 0.0
    %706 = vmatprep.subr.mxu0 0.0
    %707 = vmatpush1.msra.mxu0 0.0
    %708 = vmatprep.subr.mxu0 0.0
    %709 = vmatpush1.msra.mxu0 0.0
    %710 = vmatprep.subr.mxu0 0.0
    %711 = vmatpush1.msra.mxu0 0.0
    %712 = vmatprep.subr.mxu0 0.0
    %713 = vmatpush1.msra.mxu0 0.0
    %714 = vmatprep.subr.mxu0 0.0
    %715 = vmatpush1.msra.mxu0 0.0
    %716 = vmatprep.subr.mxu0 0.0
    %717 = vmatpush1.msra.mxu0 0.0
    %718 = vmatprep.subr.mxu0 0.0
    %719 = vmatpush1.msra.mxu0 0.0
    %720 = vmatprep.subr.mxu0 0.0
    %721 = vmatpush1.msra.mxu0 0.0
    %722 = vmatprep.subr.mxu0 0.0
    %723 = vmatpush1.msra.mxu0 0.0
    %724 = vmatprep.subr.mxu0 0.0
    %725 = vmatpush1.msra.mxu0 0.0
    %726 = vmatprep.subr.mxu0 0.0
    %727 = vmatpush1.msra.mxu0 0.0
    %728 = vmatprep.mubr.f32.mxu0 0.0
    %729 = vmatmul.mubr.f32.gmra.mrb[0].mxu0 %v653
    %v730 = vpop.f32.mrb[0].mxu0
    %v731 = vadd.f32 0.0, %v730
    %v732 = vpop.f32.mrb[0].mxu0
    %733 = vmatprep.mubr.f32.mxu0 0.0
    %734 = vmatmul.mubr.f32.gmra.mrb[0].mxu0 %v656
    %v735 = vpop.f32.mrb[0].mxu0
    %v736 = vadd.f32 0.0, %v735
    %v737 = vpop.f32.mrb[0].mxu0
    %738 = vmatprep.mubr.f32.mxu0 0.0
    %739 = vmatmul.mubr.f32.gmra.mrb[0].mxu0 %v659
    %v740 = vpop.f32.mrb[0].mxu0
    %v741 = vadd.f32 0.0, %v740
    %v742 = vpop.f32.mrb[0].mxu0
    %743 = vmatprep.mubr.f32.mxu0 0.0
    %744 = vmatmul.mubr.f32.gmra.mrb[0].mxu0 %v662
    %v745 = vpop.f32.mrb[0].mxu0
    %v746 = vadd.f32 0.0, %v745
    %v747 = vpop.f32.mrb[0].mxu0
    %748 = vdwg.mxu0
    %v750 = vsel %vm524, %v534, 0
    %v753 = vsel %vm524, %v535, 0
    %v756 = vsel %vm524, %v536, 0
    %v759 = vsel %vm524, %v537, 0
    %761 = vmatprep.subr.mxu0 0.0
    %762 = vmatpush1.msra.mxu0 %v542
    %763 = vmatprep.subr.mxu0 0.0
    %764 = vmatpush1.msra.mxu0 0.0
    %765 = vmatprep.subr.mxu0 0.0
    %766 = vmatpush1.msra.mxu0 0.0
    %767 = vmatprep.subr.mxu0 0.0
    %768 = vmatpush1.msra.mxu0 0.0
    %769 = vmatprep.subr.mxu0 0.0
    %770 = vmatpush1.msra.mxu0 0.0
    %771 = vmatprep.subr.mxu0 0.0
    %772 = vmatpush1.msra.mxu0 0.0
    %773 = vmatprep.subr.mxu0 0.0
    %774 = vmatpush1.msra.mxu0 0.0
    %775 = vmatprep.subr.mxu0 0.0
    %776 = vmatpush1.msra.mxu0 0.0
    %777 = vmatprep.subr.mxu0 0.0
    %778 = vmatpush1.msra.mxu0 0.0
    %779 = vmatprep.subr.mxu0 0.0
    %780 = vmatpush1.msra.mxu0 0.0
    %781 = vmatprep.subr.mxu0 0.0
    %782 = vmatpush1.msra.mxu0 0.0
    %783 = vmatprep.subr.mxu0 0.0
    %784 = vmatpush1.msra.mxu0 0.0
    %785 = vmatprep.subr.mxu0 0.0
    %786 = vmatpush1.msra.mxu0 0.0
    %787 = vmatprep.subr.mxu0 0.0
    %788 = vmatpush1.msra.mxu0 0.0
    %789 = vmatprep.subr.mxu0 0.0
    %790 = vmatpush1.msra.mxu0 0.0
    %791 = vmatprep.subr.mxu0 0.0
    %792 = vmatpush1.msra.mxu0 0.0
    %793 = vmatprep.subr.mxu0 0.0
    %794 = vmatpush1.msra.mxu0 0.0
    %795 = vmatprep.subr.mxu0 0.0
    %796 = vmatpush1.msra.mxu0 0.0
    %797 = vmatprep.subr.mxu0 0.0
    %798 = vmatpush1.msra.mxu0 0.0
    %799 = vmatprep.subr.mxu0 0.0
    %800 = vmatpush1.msra.mxu0 0.0
    %801 = vmatprep.subr.mxu0 0.0
    %802 = vmatpush1.msra.mxu0 0.0
    %803 = vmatprep.subr.mxu0 0.0
    %804 = vmatpush1.msra.mxu0 0.0
    %805 = vmatprep.subr.mxu0 0.0
    %806 = vmatpush1.msra.mxu0 0.0
    %807 = vmatprep.subr.mxu0 0.0
    %808 = vmatpush1.msra.mxu0 0.0
    %809 = vmatprep.subr.mxu0 0.0
    %810 = vmatpush1.msra.mxu0 0.0
    %811 = vmatprep.subr.mxu0 0.0
    %812 = vmatpush1.msra.mxu0 0.0
    %813 = vmatprep.subr.mxu0 0.0
    %814 = vmatpush1.msra.mxu0 0.0
    %815 = vmatprep.subr.mxu0 0.0
    %816 = vmatpush1.msra.mxu0 0.0
    %817 = vmatprep.subr.mxu0 0.0
    %818 = vmatpush1.msra.mxu0 0.0
    %819 = vmatprep.subr.mxu0 0.0
    %820 = vmatpush1.msra.mxu0 0.0
    %821 = vmatprep.subr.mxu0 0.0
    %822 = vmatpush1.msra.mxu0 0.0
    %823 = vmatprep.subr.mxu0 0.0
    %824 = vmatpush1.msra.mxu0 0.0
    %825 = vmatprep.mubr.f32.mxu0 0.0
    %826 = vmatmul.mubr.f32.gmra.mrb[0].mxu0 %v750
    %v827 = vpop.f32.mrb[0].mxu0
    %v828 = vadd.f32 %v634, %v827
    %v829 = vpop.f32.mrb[0].mxu0
    %830 = vmatprep.mubr.f32.mxu0 0.0
    %831 = vmatmul.mubr.f32.gmra.mrb[0].mxu0 %v753
    %v832 = vpop.f32.mrb[0].mxu0
    %v833 = vadd.f32 %v639, %v832
    %v834 = vpop.f32.mrb[0].mxu0
    %835 = vmatprep.mubr.f32.mxu0 0.0
    %836 = vmatmul.mubr.f32.gmra.mrb[0].mxu0 %v756
    %v837 = vpop.f32.mrb[0].mxu0
    %v838 = vadd.f32 %v644, %v837
    %v839 = vpop.f32.mrb[0].mxu0
    %840 = vmatprep.mubr.f32.mxu0 0.0
    %841 = vmatmul.mubr.f32.gmra.mrb[0].mxu0 %v759
    %v842 = vpop.f32.mrb[0].mxu0
    %v843 = vadd.f32 %v649, %v842
    %v844 = vpop.f32.mrb[0].mxu0
    %845 = vdwg.mxu0
    %v847 = vsel %vm524, %v538, 0
    %v850 = vsel %vm524, %v539, 0
    %v853 = vsel %vm524, %v540, 0
    %v856 = vsel %vm524, %v541, 0
    %858 = vmatprep.subr.mxu0 0.0
    %859 = vmatpush1.msra.mxu0 %v543
    %860 = vmatprep.subr.mxu0 0.0
    %861 = vmatpush1.msra.mxu0 0.0
    %862 = vmatprep.subr.mxu0 0.0
    %863 = vmatpush1.msra.mxu0 0.0
    %864 = vmatprep.subr.mxu0 0.0
    %865 = vmatpush1.msra.mxu0 0.0
    %866 = vmatprep.subr.mxu0 0.0
    %867 = vmatpush1.msra.mxu0 0.0
    %868 = vmatprep.subr.mxu0 0.0
    %869 = vmatpush1.msra.mxu0 0.0
    %870 = vmatprep.subr.mxu0 0.0
    %871 = vmatpush1.msra.mxu0 0.0
    %872 = vmatprep.subr.mxu0 0.0
    %873 = vmatpush1.msra.mxu0 0.0
    %874 = vmatprep.subr.mxu0 0.0
    %875 = vmatpush1.msra.mxu0 0.0
    %876 = vmatprep.subr.mxu0 0.0
    %877 = vmatpush1.msra.mxu0 0.0
    %878 = vmatprep.subr.mxu0 0.0
    %879 = vmatpush1.msra.mxu0 0.0
    %880 = vmatprep.subr.mxu0 0.0
    %881 = vmatpush1.msra.mxu0 0.0
    %882 = vmatprep.subr.mxu0 0.0
    %883 = vmatpush1.msra.mxu0 0.0
    %884 = vmatprep.subr.mxu0 0.0
    %885 = vmatpush1.msra.mxu0 0.0
    %886 = vmatprep.subr.mxu0 0.0
    %887 = vmatpush1.msra.mxu0 0.0
    %888 = vmatprep.subr.mxu0 0.0
    %889 = vmatpush1.msra.mxu0 0.0
    %890 = vmatprep.subr.mxu0 0.0
    %891 = vmatpush1.msra.mxu0 0.0
    %892 = vmatprep.subr.mxu0 0.0
    %893 = vmatpush1.msra.mxu0 0.0
    %894 = vmatprep.subr.mxu0 0.0
    %895 = vmatpush1.msra.mxu0 0.0
    %896 = vmatprep.subr.mxu0 0.0
    %897 = vmatpush1.msra.mxu0 0.0
    %898 = vmatprep.subr.mxu0 0.0
    %899 = vmatpush1.msra.mxu0 0.0
    %900 = vmatprep.subr.mxu0 0.0
    %901 = vmatpush1.msra.mxu0 0.0
    %902 = vmatprep.subr.mxu0 0.0
    %903 = vmatpush1.msra.mxu0 0.0
    %904 = vmatprep.subr.mxu0 0.0
    %905 = vmatpush1.msra.mxu0 0.0
    %906 = vmatprep.subr.mxu0 0.0
    %907 = vmatpush1.msra.mxu0 0.0
    %908 = vmatprep.subr.mxu0 0.0
    %909 = vmatpush1.msra.mxu0 0.0
    %910 = vmatprep.subr.mxu0 0.0
    %911 = vmatpush1.msra.mxu0 0.0
    %912 = vmatprep.subr.mxu0 0.0
    %913 = vmatpush1.msra.mxu0 0.0
    %914 = vmatprep.subr.mxu0 0.0
    %915 = vmatpush1.msra.mxu0 0.0
    %916 = vmatprep.subr.mxu0 0.0
    %917 = vmatpush1.msra.mxu0 0.0
    %918 = vmatprep.subr.mxu0 0.0
    %919 = vmatpush1.msra.mxu0 0.0
    %920 = vmatprep.subr.mxu0 0.0
    %921 = vmatpush1.msra.mxu0 0.0
    %922 = vmatprep.mubr.f32.mxu0 0.0
    %923 = vmatmul.mubr.f32.gmra.mrb[0].mxu0 %v847
    %v924 = vpop.f32.mrb[0].mxu0
    %v925 = vadd.f32 %v731, %v924
    %v926 = vpop.f32.mrb[0].mxu0
    %927 = vmatprep.mubr.f32.mxu0 0.0
    %928 = vmatmul.mubr.f32.gmra.mrb[0].mxu0 %v850
    %v929 = vpop.f32.mrb[0].mxu0
    %v930 = vadd.f32 %v736, %v929
    %v931 = vpop.f32.mrb[0].mxu0
    %932 = vmatprep.mubr.f32.mxu0 0.0
    %933 = vmatmul.mubr.f32.gmra.mrb[0].mxu0 %v853
    %v934 = vpop.f32.mrb[0].mxu0
    %v935 = vadd.f32 %v741, %v934
    %v936 = vpop.f32.mrb[0].mxu0
    %937 = vmatprep.mubr.f32.mxu0 0.0
    %938 = vmatmul.mubr.f32.gmra.mrb[0].mxu0 %v856
    %v939 = vpop.f32.mrb[0].mxu0
    %v940 = vadd.f32 %v746, %v939
    %v941 = vpop.f32.mrb[0].mxu0
    %942 = vdwg.mxu0
    %v943 = vld [vmem:[#allocation2 + $0x2] sm:$0xff]
    %v944 = vld [vmem:[#allocation2 + $0xa] sm:$0xff]
    %v945 = vld [vmem:[#allocation2 + $0x12] sm:$0xff]
    %v946 = vld [vmem:[#allocation2 + $0x1a] sm:$0x1f]
    %v947 = vld [vmem:[#allocation2 + $0x22] sm:$0xff]
    %v948 = vld [vmem:[#allocation2 + $0x2a] sm:$0xff]
    %v949 = vld [vmem:[#allocation2 + $0x32] sm:$0xff]
    %v950 = vld [vmem:[#allocation2 + $0x3a] sm:$0x1f]
    %s951 = scalar_lea.vmem %s3, 32
    %v952 = vld [vmem:[%s951] sm:$0xff]
    %v953 = vld [vmem:[%s951 + $0x8] sm:$0xff]
    %v955 = vsel %vm524, %v943, 0
    %v958 = vsel %vm524, %v944, 0
    %v961 = vsel %vm524, %v945, 0
    %v964 = vsel %vm524, %v946, 0
    %966 = vmatprep.subr.mxu0 0.0
    %967 = vmatpush1.msra.mxu0 %v952
    %968 = vmatprep.subr.mxu0 0.0
    %969 = vmatpush1.msra.mxu0 0.0
    %970 = vmatprep.subr.mxu0 0.0
    %971 = vmatpush1.msra.mxu0 0.0
    %972 = vmatprep.subr.mxu0 0.0
    %973 = vmatpush1.msra.mxu0 0.0
    %974 = vmatprep.subr.mxu0 0.0
    %975 = vmatpush1.msra.mxu0 0.0
    %976 = vmatprep.subr.mxu0 0.0
    %977 = vmatpush1.msra.mxu0 0.0
    %978 = vmatprep.subr.mxu0 0.0
    %979 = vmatpush1.msra.mxu0 0.0
    %980 = vmatprep.subr.mxu0 0.0
    %981 = vmatpush1.msra.mxu0 0.0
    %982 = vmatprep.subr.mxu0 0.0
    %983 = vmatpush1.msra.mxu0 0.0
    %984 = vmatprep.subr.mxu0 0.0
    %985 = vmatpush1.msra.mxu0 0.0
    %986 = vmatprep.subr.mxu0 0.0
    %987 = vmatpush1.msra.mxu0 0.0
    %988 = vmatprep.subr.mxu0 0.0
    %989 = vmatpush1.msra.mxu0 0.0
    %990 = vmatprep.subr.mxu0 0.0
    %991 = vmatpush1.msra.mxu0 0.0
    %992 = vmatprep.subr.mxu0 0.0
    %993 = vmatpush1.msra.mxu0 0.0
    %994 = vmatprep.subr.mxu0 0.0
    %995 = vmatpush1.msra.mxu0 0.0
    %996 = vmatprep.subr.mxu0 0.0
    %997 = vmatpush1.msra.mxu0 0.0
    %998 = vmatprep.subr.mxu0 0.0
    %999 = vmatpush1.msra.mxu0 0.0
    %1000 = vmatprep.subr.mxu0 0.0
    %1001 = vmatpush1.msra.mxu0 0.0
    %1002 = vmatprep.subr.mxu0 0.0
    %1003 = vmatpush1.msra.mxu0 0.0
    %1004 = vmatprep.subr.mxu0 0.0
    %1005 = vmatpush1.msra.mxu0 0.0
    %1006 = vmatprep.subr.mxu0 0.0
    %1007 = vmatpush1.msra.mxu0 0.0
    %1008 = vmatprep.subr.mxu0 0.0
    %1009 = vmatpush1.msra.mxu0 0.0
    %1010 = vmatprep.subr.mxu0 0.0
    %1011 = vmatpush1.msra.mxu0 0.0
    %1012 = vmatprep.subr.mxu0 0.0
    %1013 = vmatpush1.msra.mxu0 0.0
    %1014 = vmatprep.subr.mxu0 0.0
    %1015 = vmatpush1.msra.mxu0 0.0
    %1016 = vmatprep.subr.mxu0 0.0
    %1017 = vmatpush1.msra.mxu0 0.0
    %1018 = vmatprep.subr.mxu0 0.0
    %1019 = vmatpush1.msra.mxu0 0.0
    %1020 = vmatprep.subr.mxu0 0.0
    %1021 = vmatpush1.msra.mxu0 0.0
    %1022 = vmatprep.subr.mxu0 0.0
    %1023 = vmatpush1.msra.mxu0 0.0
    %1024 = vmatprep.subr.mxu0 0.0
    %1025 = vmatpush1.msra.mxu0 0.0
    %1026 = vmatprep.subr.mxu0 0.0
    %1027 = vmatpush1.msra.mxu0 0.0
    %1028 = vmatprep.subr.mxu0 0.0
    %1029 = vmatpush1.msra.mxu0 0.0
    %1030 = vmatprep.mubr.f32.mxu0 0.0
    %1031 = vmatmul.mubr.f32.gmra.mrb[0].mxu0 %v955
    %v1032 = vpop.f32.mrb[0].mxu0
    %v1033 = vadd.f32 0.0, %v1032
    %v1034 = vpop.f32.mrb[0].mxu0
    %1035 = vmatprep.mubr.f32.mxu0 0.0
    %1036 = vmatmul.mubr.f32.gmra.mrb[0].mxu0 %v958
    %v1037 = vpop.f32.mrb[0].mxu0
    %v1038 = vadd.f32 0.0, %v1037
    %v1039 = vpop.f32.mrb[0].mxu0
    %1040 = vmatprep.mubr.f32.mxu0 0.0
    %1041 = vmatmul.mubr.f32.gmra.mrb[0].mxu0 %v961
    %v1042 = vpop.f32.mrb[0].mxu0
    %v1043 = vadd.f32 0.0, %v1042
    %v1044 = vpop.f32.mrb[0].mxu0
    %1045 = vmatprep.mubr.f32.mxu0 0.0
    %1046 = vmatmul.mubr.f32.gmra.mrb[0].mxu0 %v964
    %v1047 = vpop.f32.mrb[0].mxu0
    %v1048 = vadd.f32 0.0, %v1047
    %v1049 = vpop.f32.mrb[0].mxu0
    %1050 = vdwg.mxu0
    %v1052 = vsel %vm524, %v947, 0
    %v1055 = vsel %vm524, %v948, 0
    %v1058 = vsel %vm524, %v949, 0
    %v1061 = vsel %vm524, %v950, 0
    %1063 = vmatprep.subr.mxu0 0.0
    %1064 = vmatpush1.msra.mxu0 %v953
    %1065 = vmatprep.subr.mxu0 0.0
    %1066 = vmatpush1.msra.mxu0 0.0
    %1067 = vmatprep.subr.mxu0 0.0
    %1068 = vmatpush1.msra.mxu0 0.0
    %1069 = vmatprep.subr.mxu0 0.0
    %1070 = vmatpush1.msra.mxu0 0.0
    %1071 = vmatprep.subr.mxu0 0.0
    %1072 = vmatpush1.msra.mxu0 0.0
    %1073 = vmatprep.subr.mxu0 0.0
    %1074 = vmatpush1.msra.mxu0 0.0
    %1075 = vmatprep.subr.mxu0 0.0
    %1076 = vmatpush1.msra.mxu0 0.0
    %1077 = vmatprep.subr.mxu0 0.0
    %1078 = vmatpush1.msra.mxu0 0.0
    %1079 = vmatprep.subr.mxu0 0.0
    %1080 = vmatpush1.msra.mxu0 0.0
    %1081 = vmatprep.subr.mxu0 0.0
    %1082 = vmatpush1.msra.mxu0 0.0
    %1083 = vmatprep.subr.mxu0 0.0
    %1084 = vmatpush1.msra.mxu0 0.0
    %1085 = vmatprep.subr.mxu0 0.0
    %1086 = vmatpush1.msra.mxu0 0.0
    %1087 = vmatprep.subr.mxu0 0.0
    %1088 = vmatpush1.msra.mxu0 0.0
    %1089 = vmatprep.subr.mxu0 0.0
    %1090 = vmatpush1.msra.mxu0 0.0
    %1091 = vmatprep.subr.mxu0 0.0
    %1092 = vmatpush1.msra.mxu0 0.0
    %1093 = vmatprep.subr.mxu0 0.0
    %1094 = vmatpush1.msra.mxu0 0.0
    %1095 = vmatprep.subr.mxu0 0.0
    %1096 = vmatpush1.msra.mxu0 0.0
    %1097 = vmatprep.subr.mxu0 0.0
    %1098 = vmatpush1.msra.mxu0 0.0
    %1099 = vmatprep.subr.mxu0 0.0
    %1100 = vmatpush1.msra.mxu0 0.0
    %1101 = vmatprep.subr.mxu0 0.0
    %1102 = vmatpush1.msra.mxu0 0.0
    %1103 = vmatprep.subr.mxu0 0.0
    %1104 = vmatpush1.msra.mxu0 0.0
    %1105 = vmatprep.subr.mxu0 0.0
    %1106 = vmatpush1.msra.mxu0 0.0
    %1107 = vmatprep.subr.mxu0 0.0
    %1108 = vmatpush1.msra.mxu0 0.0
    %1109 = vmatprep.subr.mxu0 0.0
    %1110 = vmatpush1.msra.mxu0 0.0
    %1111 = vmatprep.subr.mxu0 0.0
    %1112 = vmatpush1.msra.mxu0 0.0
    %1113 = vmatprep.subr.mxu0 0.0
    %1114 = vmatpush1.msra.mxu0 0.0
    %1115 = vmatprep.subr.mxu0 0.0
    %1116 = vmatpush1.msra.mxu0 0.0
    %1117 = vmatprep.subr.mxu0 0.0
    %1118 = vmatpush1.msra.mxu0 0.0
    %1119 = vmatprep.subr.mxu0 0.0
    %1120 = vmatpush1.msra.mxu0 0.0
    %1121 = vmatprep.subr.mxu0 0.0
    %1122 = vmatpush1.msra.mxu0 0.0
    %1123 = vmatprep.subr.mxu0 0.0
    %1124 = vmatpush1.msra.mxu0 0.0
    %1125 = vmatprep.subr.mxu0 0.0
    %1126 = vmatpush1.msra.mxu0 0.0
    %1127 = vmatprep.mubr.f32.mxu0 0.0
    %1128 = vmatmul.mubr.f32.gmra.mrb[0].mxu0 %v1052
    %v1129 = vpop.f32.mrb[0].mxu0
    %v1130 = vadd.f32 0.0, %v1129
    %v1131 = vpop.f32.mrb[0].mxu0
    %1132 = vmatprep.mubr.f32.mxu0 0.0
    %1133 = vmatmul.mubr.f32.gmra.mrb[0].mxu0 %v1055
    %v1134 = vpop.f32.mrb[0].mxu0
    %v1135 = vadd.f32 0.0, %v1134
    %v1136 = vpop.f32.mrb[0].mxu0
    %1137 = vmatprep.mubr.f32.mxu0 0.0
    %1138 = vmatmul.mubr.f32.gmra.mrb[0].mxu0 %v1058
    %v1139 = vpop.f32.mrb[0].mxu0
    %v1140 = vadd.f32 0.0, %v1139
    %v1141 = vpop.f32.mrb[0].mxu0
    %1142 = vmatprep.mubr.f32.mxu0 0.0
    %1143 = vmatmul.mubr.f32.gmra.mrb[0].mxu0 %v1061
    %v1144 = vpop.f32.mrb[0].mxu0
    %v1145 = vadd.f32 0.0, %v1144
    %v1146 = vpop.f32.mrb[0].mxu0
    %1147 = vdwg.mxu0
    %v1148 = vadd.f32 %v828, %v1033
    %v1149 = vadd.f32 %v833, %v1038
    %v1150 = vadd.f32 %v838, %v1043
    %v1151 = vadd.f32 %v843, %v1048
    %v1152 = vadd.f32 %v925, %v1130
    %v1153 = vadd.f32 %v930, %v1135
    %v1154 = vadd.f32 %v935, %v1140
    %v1155 = vadd.f32 %v940, %v1145
    %v1156 = vld [vmem:[%s4] sm:$0x1]
    %v1157 = vld [vmem:[%s4 + $0x4] sm:$0x1]
    %v1158 = vlaneseq
    %v1159 = vshrl.u32 %v1158, 7
    %v1160 = vsub.s32 0, %v1159
    %v1161 = vrot.slane %v1156, %v1160
    %v1162 = vlaneseq
    %v1163 = vshrl.u32 %v1162, 7
    %v1164 = vsub.s32 0, %v1163
    %v1165 = vrot.slane %v1157, %v1164
    %v1166 = vadd.f32 %v1148, %v1161
    %v1167 = vadd.f32 %v1149, %v1161
    %v1168 = vadd.f32 %v1150, %v1161
    %v1169 = vadd.f32 %v1151, %v1161
    %v1170 = vadd.f32 %v1152, %v1165
    %v1171 = vadd.f32 %v1153, %v1165
    %v1172 = vadd.f32 %v1154, %v1165
    %v1173 = vadd.f32 %v1155, %v1165
    %v1174 = vmax.f32 %v1166, 0.0
    %v1175 = vmax.f32 %v1167, 0.0
    %v1176 = vmax.f32 %v1168, 0.0
    %v1177 = vmax.f32 %v1169, 0.0
    %v1178 = vmax.f32 %v1170, 0.0
    %v1179 = vmax.f32 %v1171, 0.0
    %v1180 = vmax.f32 %v1172, 0.0
    %v1181 = vmax.f32 %v1173, 0.0
    %v1182 = vld [vmem:[%s4 + $0x1] sm:$0x1]
    %v1183 = vld [vmem:[%s4 + $0x5] sm:$0x1]
    %v1184 = vlaneseq
    %v1185 = vshrl.u32 %v1184, 7
    %v1186 = vsub.s32 0, %v1185
    %v1187 = vrot.slane %v1182, %v1186
    %v1188 = vlaneseq
    %v1189 = vshrl.u32 %v1188, 7
    %v1190 = vsub.s32 0, %v1189
    %v1191 = vrot.slane %v1183, %v1190
    %v1192 = vmul.f32 %v1174, %v1187
    %v1193 = vmul.f32 %v1175, %v1187
    %v1194 = vmul.f32 %v1176, %v1187
    %v1195 = vmul.f32 %v1177, %v1187
    %v1196 = vmul.f32 %v1178, %v1191
    %v1197 = vmul.f32 %v1179, %v1191
    %v1198 = vmul.f32 %v1180, %v1191
    %v1199 = vmul.f32 %v1181, %v1191
    %v1200 = vld [vmem:[%s4 + $0x2] sm:$0x1]
    %v1201 = vld [vmem:[%s4 + $0x6] sm:$0x1]
    %v1202 = vlaneseq
    %v1203 = vshrl.u32 %v1202, 7
    %v1204 = vsub.s32 0, %v1203
    %v1205 = vrot.slane %v1200, %v1204
    %v1206 = vlaneseq
    %v1207 = vshrl.u32 %v1206, 7
    %v1208 = vsub.s32 0, %v1207
    %v1209 = vrot.slane %v1201, %v1208
    %v1210 = vadd.f32 %v1192, %v1205
    %v1211 = vadd.f32 %v1193, %v1205
    %v1212 = vadd.f32 %v1194, %v1205
    %v1213 = vadd.f32 %v1195, %v1205
    %v1214 = vadd.f32 %v1196, %v1209
    %v1215 = vadd.f32 %v1197, %v1209
    %v1216 = vadd.f32 %v1198, %v1209
    %v1217 = vadd.f32 %v1199, %v1209
    %1218 = vst.msk [vmem:[#allocation3] sm:$0xff] %vm524, %v1210
    %1219 = vst.msk [vmem:[#allocation3 + $0x8] sm:$0xff] %vm524, %v1211
    %1220 = vst.msk [vmem:[#allocation3 + $0x10] sm:$0xff] %vm524, %v1212
    %vm1221 = vcmask 61440
    %1222 = vst.msk [vmem:[#allocation3 + $0x18] sm:$0x1f] %vm1221, %v1213
    %1223 = vst.msk [vmem:[#allocation3 + $0x20] sm:$0xff] %vm524, %v1214
    %1224 = vst.msk [vmem:[#allocation3 + $0x28] sm:$0xff] %vm524, %v1215
    %1225 = vst.msk [vmem:[#allocation3 + $0x30] sm:$0xff] %vm524, %v1216
    %1226 = vst.msk [vmem:[#allocation3 + $0x38] sm:$0x1f] %vm1221, %v1217
    %v1227 = vld [vmem:[#allocation3] sm:$0xff]
    %v1228 = vld [vmem:[#allocation3 + $0x8] sm:$0xff]
    %v1229 = vld [vmem:[#allocation3 + $0x10] sm:$0xff]
    %v1230 = vld [vmem:[#allocation3 + $0x18] sm:$0xf]
    %v1231 = vld [vmem:[#allocation3 + $0x20] sm:$0xff]
    %v1232 = vld [vmem:[#allocation3 + $0x28] sm:$0xff]
    %v1233 = vld [vmem:[#allocation3 + $0x30] sm:$0xff]
    %v1234 = vld [vmem:[#allocation3 + $0x38] sm:$0xf]
    %v1235 = vld [vmem:[%s5] sm:$0xff]
    %v1236 = vld [vmem:[%s5 + $0x8] sm:$0xff]
    %v1237 = vld [vmem:[#allocation3 + $0x1] sm:$0xff]
    %v1238 = vld [vmem:[#allocation3 + $0x9] sm:$0xff]
    %v1239 = vld [vmem:[#allocation3 + $0x11] sm:$0xff]
    %v1240 = vld [vmem:[#allocation3 + $0x19] sm:$0xf]
    %v1241 = vld [vmem:[#allocation3 + $0x21] sm:$0xff]
    %v1242 = vld [vmem:[#allocation3 + $0x29] sm:$0xff]
    %v1243 = vld [vmem:[#allocation3 + $0x31] sm:$0xff]
    %v1244 = vld [vmem:[#allocation3 + $0x39] sm:$0xf]
    %s1245 = scalar_lea.vmem %s5, 16
    %v1246 = vld [vmem:[%s1245] sm:$0xff]
    %v1247 = vld [vmem:[%s1245 + $0x8] sm:$0xff]
    %v1249 = vsel %vm524, %v1237, 0
    %v1252 = vsel %vm524, %v1238, 0
    %v1255 = vsel %vm524, %v1239, 0
    %v1258 = vsel %vm524, %v1240, 0
    %1260 = vmatprep.subr.mxu0 0.0
    %1261 = vmatpush1.msra.mxu0 %v1246
    %1262 = vmatprep.subr.mxu0 0.0
    %1263 = vmatpush1.msra.mxu0 0.0
    %1264 = vmatprep.subr.mxu0 0.0
    %1265 = vmatpush1.msra.mxu0 0.0
    %1266 = vmatprep.subr.mxu0 0.0
    %1267 = vmatpush1.msra.mxu0 0.0
    %1268 = vmatprep.subr.mxu0 0.0
    %1269 = vmatpush1.msra.mxu0 0.0
    %1270 = vmatprep.subr.mxu0 0.0
    %1271 = vmatpush1.msra.mxu0 0.0
    %1272 = vmatprep.subr.mxu0 0.0
    %1273 = vmatpush1.msra.mxu0 0.0
    %1274 = vmatprep.subr.mxu0 0.0
    %1275 = vmatpush1.msra.mxu0 0.0
    %1276 = vmatprep.subr.mxu0 0.0
    %1277 = vmatpush1.msra.mxu0 0.0
    %1278 = vmatprep.subr.mxu0 0.0
    %1279 = vmatpush1.msra.mxu0 0.0
    %1280 = vmatprep.subr.mxu0 0.0
    %1281 = vmatpush1.msra.mxu0 0.0
    %1282 = vmatprep.subr.mxu0 0.0
    %1283 = vmatpush1.msra.mxu0 0.0
    %1284 = vmatprep.subr.mxu0 0.0
    %1285 = vmatpush1.msra.mxu0 0.0
    %1286 = vmatprep.subr.mxu0 0.0
    %1287 = vmatpush1.msra.mxu0 0.0
    %1288 = vmatprep.subr.mxu0 0.0
    %1289 = vmatpush1.msra.mxu0 0.0
    %1290 = vmatprep.subr.mxu0 0.0
    %1291 = vmatpush1.msra.mxu0 0.0
    %1292 = vmatprep.subr.mxu0 0.0
    %1293 = vmatpush1.msra.mxu0 0.0
    %1294 = vmatprep.subr.mxu0 0.0
    %1295 = vmatpush1.msra.mxu0 0.0
    %1296 = vmatprep.subr.mxu0 0.0
    %1297 = vmatpush1.msra.mxu0 0.0
    %1298 = vmatprep.subr.mxu0 0.0
    %1299 = vmatpush1.msra.mxu0 0.0
    %1300 = vmatprep.subr.mxu0 0.0
    %1301 = vmatpush1.msra.mxu0 0.0
    %1302 = vmatprep.subr.mxu0 0.0
    %1303 = vmatpush1.msra.mxu0 0.0
    %1304 = vmatprep.subr.mxu0 0.0
    %1305 = vmatpush1.msra.mxu0 0.0
    %1306 = vmatprep.subr.mxu0 0.0
    %1307 = vmatpush1.msra.mxu0 0.0
    %1308 = vmatprep.subr.mxu0 0.0
    %1309 = vmatpush1.msra.mxu0 0.0
    %1310 = vmatprep.subr.mxu0 0.0
    %1311 = vmatpush1.msra.mxu0 0.0
    %1312 = vmatprep.subr.mxu0 0.0
    %1313 = vmatpush1.msra.mxu0 0.0
    %1314 = vmatprep.subr.mxu0 0.0
    %1315 = vmatpush1.msra.mxu0 0.0
    %1316 = vmatprep.subr.mxu0 0.0
    %1317 = vmatpush1.msra.mxu0 0.0
    %1318 = vmatprep.subr.mxu0 0.0
    %1319 = vmatpush1.msra.mxu0 0.0
    %1320 = vmatprep.subr.mxu0 0.0
    %1321 = vmatpush1.msra.mxu0 0.0
    %1322 = vmatprep.subr.mxu0 0.0
    %1323 = vmatpush1.msra.mxu0 0.0
    %1324 = vmatprep.mubr.f32.mxu0 0.0
    %1325 = vmatmul.mubr.f32.gmra.mrb[0].mxu0 %v1249
    %v1326 = vpop.f32.mrb[0].mxu0
    %v1327 = vadd.f32 0.0, %v1326
    %v1328 = vpop.f32.mrb[0].mxu0
    %1329 = vmatprep.mubr.f32.mxu0 0.0
    %1330 = vmatmul.mubr.f32.gmra.mrb[0].mxu0 %v1252
    %v1331 = vpop.f32.mrb[0].mxu0
    %v1332 = vadd.f32 0.0, %v1331
    %v1333 = vpop.f32.mrb[0].mxu0
    %1334 = vmatprep.mubr.f32.mxu0 0.0
    %1335 = vmatmul.mubr.f32.gmra.mrb[0].mxu0 %v1255
    %v1336 = vpop.f32.mrb[0].mxu0
    %v1337 = vadd.f32 0.0, %v1336
    %v1338 = vpop.f32.mrb[0].mxu0
    %1339 = vmatprep.mubr.f32.mxu0 0.0
    %1340 = vmatmul.mubr.f32.gmra.mrb[0].mxu0 %v1258
    %v1341 = vpop.f32.mrb[0].mxu0
    %v1342 = vadd.f32 0.0, %v1341
    %v1343 = vpop.f32.mrb[0].mxu0
    %1344 = vdwg.mxu0
    %v1346 = vsel %vm524, %v1241, 0
    %v1349 = vsel %vm524, %v1242, 0
    %v1352 = vsel %vm524, %v1243, 0
    %v1355 = vsel %vm524, %v1244, 0
    %1357 = vmatprep.subr.mxu0 0.0
    %1358 = vmatpush1.msra.mxu0 %v1247
    %1359 = vmatprep.subr.mxu0 0.0
    %1360 = vmatpush1.msra.mxu0 0.0
    %1361 = vmatprep.subr.mxu0 0.0
    %1362 = vmatpush1.msra.mxu0 0.0
    %1363 = vmatprep.subr.mxu0 0.0
    %1364 = vmatpush1.msra.mxu0 0.0
    %1365 = vmatprep.subr.mxu0 0.0
    %1366 = vmatpush1.msra.mxu0 0.0
    %1367 = vmatprep.subr.mxu0 0.0
    %1368 = vmatpush1.msra.mxu0 0.0
    %1369 = vmatprep.subr.mxu0 0.0
    %1370 = vmatpush1.msra.mxu0 0.0
    %1371 = vmatprep.subr.mxu0 0.0
    %1372 = vmatpush1.msra.mxu0 0.0
    %1373 = vmatprep.subr.mxu0 0.0
    %1374 = vmatpush1.msra.mxu0 0.0
    %1375 = vmatprep.subr.mxu0 0.0
    %1376 = vmatpush1.msra.mxu0 0.0
    %1377 = vmatprep.subr.mxu0 0.0
    %1378 = vmatpush1.msra.mxu0 0.0
    %1379 = vmatprep.subr.mxu0 0.0
    %1380 = vmatpush1.msra.mxu0 0.0
    %1381 = vmatprep.subr.mxu0 0.0
    %1382 = vmatpush1.msra.mxu0 0.0
    %1383 = vmatprep.subr.mxu0 0.0
    %1384 = vmatpush1.msra.mxu0 0.0
    %1385 = vmatprep.subr.mxu0 0.0
    %1386 = vmatpush1.msra.mxu0 0.0
    %1387 = vmatprep.subr.mxu0 0.0
    %1388 = vmatpush1.msra.mxu0 0.0
    %1389 = vmatprep.subr.mxu0 0.0
    %1390 = vmatpush1.msra.mxu0 0.0
    %1391 = vmatprep.subr.mxu0 0.0
    %1392 = vmatpush1.msra.mxu0 0.0
    %1393 = vmatprep.subr.mxu0 0.0
    %1394 = vmatpush1.msra.mxu0 0.0
    %1395 = vmatprep.subr.mxu0 0.0
    %1396 = vmatpush1.msra.mxu0 0.0
    %1397 = vmatprep.subr.mxu0 0.0
    %1398 = vmatpush1.msra.mxu0 0.0
    %1399 = vmatprep.subr.mxu0 0.0
    %1400 = vmatpush1.msra.mxu0 0.0
    %1401 = vmatprep.subr.mxu0 0.0
    %1402 = vmatpush1.msra.mxu0 0.0
    %1403 = vmatprep.subr.mxu0 0.0
    %1404 = vmatpush1.msra.mxu0 0.0
    %1405 = vmatprep.subr.mxu0 0.0
    %1406 = vmatpush1.msra.mxu0 0.0
    %1407 = vmatprep.subr.mxu0 0.0
    %1408 = vmatpush1.msra.mxu0 0.0
    %1409 = vmatprep.subr.mxu0 0.0
    %1410 = vmatpush1.msra.mxu0 0.0
    %1411 = vmatprep.subr.mxu0 0.0
    %1412 = vmatpush1.msra.mxu0 0.0
    %1413 = vmatprep.subr.mxu0 0.0
    %1414 = vmatpush1.msra.mxu0 0.0
    %1415 = vmatprep.subr.mxu0 0.0
    %1416 = vmatpush1.msra.mxu0 0.0
    %1417 = vmatprep.subr.mxu0 0.0
    %1418 = vmatpush1.msra.mxu0 0.0
    %1419 = vmatprep.subr.mxu0 0.0
    %1420 = vmatpush1.msra.mxu0 0.0
    %1421 = vmatprep.mubr.f32.mxu0 0.0
    %1422 = vmatmul.mubr.f32.gmra.mrb[0].mxu0 %v1346
    %v1423 = vpop.f32.mrb[0].mxu0
    %v1424 = vadd.f32 0.0, %v1423
    %v1425 = vpop.f32.mrb[0].mxu0
    %1426 = vmatprep.mubr.f32.mxu0 0.0
    %1427 = vmatmul.mubr.f32.gmra.mrb[0].mxu0 %v1349
    %v1428 = vpop.f32.mrb[0].mxu0
    %v1429 = vadd.f32 0.0, %v1428
    %v1430 = vpop.f32.mrb[0].mxu0
    %1431 = vmatprep.mubr.f32.mxu0 0.0
    %1432 = vmatmul.mubr.f32.gmra.mrb[0].mxu0 %v1352
    %v1433 = vpop.f32.mrb[0].mxu0
    %v1434 = vadd.f32 0.0, %v1433
    %v1435 = vpop.f32.mrb[0].mxu0
    %1436 = vmatprep.mubr.f32.mxu0 0.0
    %1437 = vmatmul.mubr.f32.gmra.mrb[0].mxu0 %v1355
    %v1438 = vpop.f32.mrb[0].mxu0
    %v1439 = vadd.f32 0.0, %v1438
    %v1440 = vpop.f32.mrb[0].mxu0
    %1441 = vdwg.mxu0
    %v1443 = vsel %vm524, %v1227, 0
    %v1446 = vsel %vm524, %v1228, 0
    %v1449 = vsel %vm524, %v1229, 0
    %v1452 = vsel %vm524, %v1230, 0
    %1454 = vmatprep.subr.mxu0 0.0
    %1455 = vmatpush1.msra.mxu0 %v1235
    %1456 = vmatprep.subr.mxu0 0.0
    %1457 = vmatpush1.msra.mxu0 0.0
    %1458 = vmatprep.subr.mxu0 0.0
    %1459 = vmatpush1.msra.mxu0 0.0
    %1460 = vmatprep.subr.mxu0 0.0
    %1461 = vmatpush1.msra.mxu0 0.0
    %1462 = vmatprep.subr.mxu0 0.0
    %1463 = vmatpush1.msra.mxu0 0.0
    %1464 = vmatprep.subr.mxu0 0.0
    %1465 = vmatpush1.msra.mxu0 0.0
    %1466 = vmatprep.subr.mxu0 0.0
    %1467 = vmatpush1.msra.mxu0 0.0
    %1468 = vmatprep.subr.mxu0 0.0
    %1469 = vmatpush1.msra.mxu0 0.0
    %1470 = vmatprep.subr.mxu0 0.0
    %1471 = vmatpush1.msra.mxu0 0.0
    %1472 = vmatprep.subr.mxu0 0.0
    %1473 = vmatpush1.msra.mxu0 0.0
    %1474 = vmatprep.subr.mxu0 0.0
    %1475 = vmatpush1.msra.mxu0 0.0
    %1476 = vmatprep.subr.mxu0 0.0
    %1477 = vmatpush1.msra.mxu0 0.0
    %1478 = vmatprep.subr.mxu0 0.0
    %1479 = vmatpush1.msra.mxu0 0.0
    %1480 = vmatprep.subr.mxu0 0.0
    %1481 = vmatpush1.msra.mxu0 0.0
    %1482 = vmatprep.subr.mxu0 0.0
    %1483 = vmatpush1.msra.mxu0 0.0
    %1484 = vmatprep.subr.mxu0 0.0
    %1485 = vmatpush1.msra.mxu0 0.0
    %1486 = vmatprep.subr.mxu0 0.0
    %1487 = vmatpush1.msra.mxu0 0.0
    %1488 = vmatprep.subr.mxu0 0.0
    %1489 = vmatpush1.msra.mxu0 0.0
    %1490 = vmatprep.subr.mxu0 0.0
    %1491 = vmatpush1.msra.mxu0 0.0
    %1492 = vmatprep.subr.mxu0 0.0
    %1493 = vmatpush1.msra.mxu0 0.0
    %1494 = vmatprep.subr.mxu0 0.0
    %1495 = vmatpush1.msra.mxu0 0.0
    %1496 = vmatprep.subr.mxu0 0.0
    %1497 = vmatpush1.msra.mxu0 0.0
    %1498 = vmatprep.subr.mxu0 0.0
    %1499 = vmatpush1.msra.mxu0 0.0
    %1500 = vmatprep.subr.mxu0 0.0
    %1501 = vmatpush1.msra.mxu0 0.0
    %1502 = vmatprep.subr.mxu0 0.0
    %1503 = vmatpush1.msra.mxu0 0.0
    %1504 = vmatprep.subr.mxu0 0.0
    %1505 = vmatpush1.msra.mxu0 0.0
    %1506 = vmatprep.subr.mxu0 0.0
    %1507 = vmatpush1.msra.mxu0 0.0
    %1508 = vmatprep.subr.mxu0 0.0
    %1509 = vmatpush1.msra.mxu0 0.0
    %1510 = vmatprep.subr.mxu0 0.0
    %1511 = vmatpush1.msra.mxu0 0.0
    %1512 = vmatprep.subr.mxu0 0.0
    %1513 = vmatpush1.msra.mxu0 0.0
    %1514 = vmatprep.subr.mxu0 0.0
    %1515 = vmatpush1.msra.mxu0 0.0
    %1516 = vmatprep.subr.mxu0 0.0
    %1517 = vmatpush1.msra.mxu0 0.0
    %1518 = vmatprep.mubr.f32.mxu0 0.0
    %1519 = vmatmul.mubr.f32.gmra.mrb[0].mxu0 %v1443
    %v1520 = vpop.f32.mrb[0].mxu0
    %v1521 = vadd.f32 %v1327, %v1520
    %v1522 = vpop.f32.mrb[0].mxu0
    %1523 = vmatprep.mubr.f32.mxu0 0.0
    %1524 = vmatmul.mubr.f32.gmra.mrb[0].mxu0 %v1446
    %v1525 = vpop.f32.mrb[0].mxu0
    %v1526 = vadd.f32 %v1332, %v1525
    %v1527 = vpop.f32.mrb[0].mxu0
    %1528 = vmatprep.mubr.f32.mxu0 0.0
    %1529 = vmatmul.mubr.f32.gmra.mrb[0].mxu0 %v1449
    %v1530 = vpop.f32.mrb[0].mxu0
    %v1531 = vadd.f32 %v1337, %v1530
    %v1532 = vpop.f32.mrb[0].mxu0
    %1533 = vmatprep.mubr.f32.mxu0 0.0
    %1534 = vmatmul.mubr.f32.gmra.mrb[0].mxu0 %v1452
    %v1535 = vpop.f32.mrb[0].mxu0
    %v1536 = vadd.f32 %v1342, %v1535
    %v1537 = vpop.f32.mrb[0].mxu0
    %1538 = vdwg.mxu0
    %v1540 = vsel %vm524, %v1231, 0
    %v1543 = vsel %vm524, %v1232, 0
    %v1546 = vsel %vm524, %v1233, 0
    %v1549 = vsel %vm524, %v1234, 0
    %1551 = vmatprep.subr.mxu0 0.0
    %1552 = vmatpush1.msra.mxu0 %v1236
    %1553 = vmatprep.subr.mxu0 0.0
    %1554 = vmatpush1.msra.mxu0 0.0
    %1555 = vmatprep.subr.mxu0 0.0
    %1556 = vmatpush1.msra.mxu0 0.0
    %1557 = vmatprep.subr.mxu0 0.0
    %1558 = vmatpush1.msra.mxu0 0.0
    %1559 = vmatprep.subr.mxu0 0.0
    %1560 = vmatpush1.msra.mxu0 0.0
    %1561 = vmatprep.subr.mxu0 0.0
    %1562 = vmatpush1.msra.mxu0 0.0
    %1563 = vmatprep.subr.mxu0 0.0
    %1564 = vmatpush1.msra.mxu0 0.0
    %1565 = vmatprep.subr.mxu0 0.0
    %1566 = vmatpush1.msra.mxu0 0.0
    %1567 = vmatprep.subr.mxu0 0.0
    %1568 = vmatpush1.msra.mxu0 0.0
    %1569 = vmatprep.subr.mxu0 0.0
    %1570 = vmatpush1.msra.mxu0 0.0
    %1571 = vmatprep.subr.mxu0 0.0
    %1572 = vmatpush1.msra.mxu0 0.0
    %1573 = vmatprep.subr.mxu0 0.0
    %1574 = vmatpush1.msra.mxu0 0.0
    %1575 = vmatprep.subr.mxu0 0.0
    %1576 = vmatpush1.msra.mxu0 0.0
    %1577 = vmatprep.subr.mxu0 0.0
    %1578 = vmatpush1.msra.mxu0 0.0
    %1579 = vmatprep.subr.mxu0 0.0
    %1580 = vmatpush1.msra.mxu0 0.0
    %1581 = vmatprep.subr.mxu0 0.0
    %1582 = vmatpush1.msra.mxu0 0.0
    %1583 = vmatprep.subr.mxu0 0.0
    %1584 = vmatpush1.msra.mxu0 0.0
    %1585 = vmatprep.subr.mxu0 0.0
    %1586 = vmatpush1.msra.mxu0 0.0
    %1587 = vmatprep.subr.mxu0 0.0
    %1588 = vmatpush1.msra.mxu0 0.0
    %1589 = vmatprep.subr.mxu0 0.0
    %1590 = vmatpush1.msra.mxu0 0.0
    %1591 = vmatprep.subr.mxu0 0.0
    %1592 = vmatpush1.msra.mxu0 0.0
    %1593 = vmatprep.subr.mxu0 0.0
    %1594 = vmatpush1.msra.mxu0 0.0
    %1595 = vmatprep.subr.mxu0 0.0
    %1596 = vmatpush1.msra.mxu0 0.0
    %1597 = vmatprep.subr.mxu0 0.0
    %1598 = vmatpush1.msra.mxu0 0.0
    %1599 = vmatprep.subr.mxu0 0.0
    %1600 = vmatpush1.msra.mxu0 0.0
    %1601 = vmatprep.subr.mxu0 0.0
    %1602 = vmatpush1.msra.mxu0 0.0
    %1603 = vmatprep.subr.mxu0 0.0
    %1604 = vmatpush1.msra.mxu0 0.0
    %1605 = vmatprep.subr.mxu0 0.0
    %1606 = vmatpush1.msra.mxu0 0.0
    %1607 = vmatprep.subr.mxu0 0.0
    %1608 = vmatpush1.msra.mxu0 0.0
    %1609 = vmatprep.subr.mxu0 0.0
    %1610 = vmatpush1.msra.mxu0 0.0
    %1611 = vmatprep.subr.mxu0 0.0
    %1612 = vmatpush1.msra.mxu0 0.0
    %1613 = vmatprep.subr.mxu0 0.0
    %1614 = vmatpush1.msra.mxu0 0.0
    %1615 = vmatprep.mubr.f32.mxu0 0.0
    %1616 = vmatmul.mubr.f32.gmra.mrb[0].mxu0 %v1540
    %v1617 = vpop.f32.mrb[0].mxu0
    %v1618 = vadd.f32 %v1424, %v1617
    %v1619 = vpop.f32.mrb[0].mxu0
    %1620 = vmatprep.mubr.f32.mxu0 0.0
    %1621 = vmatmul.mubr.f32.gmra.mrb[0].mxu0 %v1543
    %v1622 = vpop.f32.mrb[0].mxu0
    %v1623 = vadd.f32 %v1429, %v1622
    %v1624 = vpop.f32.mrb[0].mxu0
    %1625 = vmatprep.mubr.f32.mxu0 0.0
    %1626 = vmatmul.mubr.f32.gmra.mrb[0].mxu0 %v1546
    %v1627 = vpop.f32.mrb[0].mxu0
    %v1628 = vadd.f32 %v1434, %v1627
    %v1629 = vpop.f32.mrb[0].mxu0
    %1630 = vmatprep.mubr.f32.mxu0 0.0
    %1631 = vmatmul.mubr.f32.gmra.mrb[0].mxu0 %v1549
    %v1632 = vpop.f32.mrb[0].mxu0
    %v1633 = vadd.f32 %v1439, %v1632
    %v1634 = vpop.f32.mrb[0].mxu0
    %1635 = vdwg.mxu0
    %v1636 = vld [vmem:[%s6] sm:$0x1]
    %v1637 = vld [vmem:[%s6 + $0x4] sm:$0x1]
    %v1638 = vlaneseq
    %v1639 = vshrl.u32 %v1638, 7
    %v1640 = vsub.s32 0, %v1639
    %v1641 = vrot.slane %v1636, %v1640
    %v1642 = vlaneseq
    %v1643 = vshrl.u32 %v1642, 7
    %v1644 = vsub.s32 0, %v1643
    %v1645 = vrot.slane %v1637, %v1644
    %v1646 = vadd.f32 %v1521, %v1641
    %v1647 = vadd.f32 %v1526, %v1641
    %v1648 = vadd.f32 %v1531, %v1641
    %v1649 = vadd.f32 %v1536, %v1641
    %v1650 = vadd.f32 %v1618, %v1645
    %v1651 = vadd.f32 %v1623, %v1645
    %v1652 = vadd.f32 %v1628, %v1645
    %v1653 = vadd.f32 %v1633, %v1645
    %v1654 = vmax.f32 %v1646, 0.0
    %v1655 = vmax.f32 %v1647, 0.0
    %v1656 = vmax.f32 %v1648, 0.0
    %v1657 = vmax.f32 %v1649, 0.0
    %v1658 = vmax.f32 %v1650, 0.0
    %v1659 = vmax.f32 %v1651, 0.0
    %v1660 = vmax.f32 %v1652, 0.0
    %v1661 = vmax.f32 %v1653, 0.0
    %v1662 = vld [vmem:[%s6 + $0x1] sm:$0x1]
    %v1663 = vld [vmem:[%s6 + $0x5] sm:$0x1]
    %v1664 = vlaneseq
    %v1665 = vshrl.u32 %v1664, 7
    %v1666 = vsub.s32 0, %v1665
    %v1667 = vrot.slane %v1662, %v1666
    %v1668 = vlaneseq
    %v1669 = vshrl.u32 %v1668, 7
    %v1670 = vsub.s32 0, %v1669
    %v1671 = vrot.slane %v1663, %v1670
    %v1672 = vmul.f32 %v1654, %v1667
    %v1673 = vmul.f32 %v1655, %v1667
    %v1674 = vmul.f32 %v1656, %v1667
    %v1675 = vmul.f32 %v1657, %v1667
    %v1676 = vmul.f32 %v1658, %v1671
    %v1677 = vmul.f32 %v1659, %v1671
    %v1678 = vmul.f32 %v1660, %v1671
    %v1679 = vmul.f32 %v1661, %v1671
    %v1680 = vld [vmem:[%s6 + $0x2] sm:$0x1]
    %v1681 = vld [vmem:[%s6 + $0x6] sm:$0x1]
    %v1682 = vlaneseq
    %v1683 = vshrl.u32 %v1682, 7
    %v1684 = vsub.s32 0, %v1683
    %v1685 = vrot.slane %v1680, %v1684
    %v1686 = vlaneseq
    %v1687 = vshrl.u32 %v1686, 7
    %v1688 = vsub.s32 0, %v1687
    %v1689 = vrot.slane %v1681, %v1688
    %v1690 = vadd.f32 %v1672, %v1685
    %v1691 = vadd.f32 %v1673, %v1685
    %v1692 = vadd.f32 %v1674, %v1685
    %v1693 = vadd.f32 %v1675, %v1685
    %v1694 = vadd.f32 %v1676, %v1689
    %v1695 = vadd.f32 %v1677, %v1689
    %v1696 = vadd.f32 %v1678, %v1689
    %v1697 = vadd.f32 %v1679, %v1689
    %1698 = vst.msk [vmem:[#allocation4] sm:$0xff] %vm524, %v1690
    %1699 = vst.msk [vmem:[#allocation4 + $0x8] sm:$0xff] %vm524, %v1691
    %1700 = vst.msk [vmem:[#allocation4 + $0x10] sm:$0xff] %vm524, %v1692
    %vm1701 = vcmask 60416
    %1702 = vst.msk [vmem:[#allocation4 + $0x18] sm:$0xf] %vm1701, %v1693
    %1703 = vst.msk [vmem:[#allocation4 + $0x20] sm:$0xff] %vm524, %v1694
    %1704 = vst.msk [vmem:[#allocation4 + $0x28] sm:$0xff] %vm524, %v1695
    %1705 = vst.msk [vmem:[#allocation4 + $0x30] sm:$0xff] %vm524, %v1696
    %1706 = vst.msk [vmem:[#allocation4 + $0x38] sm:$0xf] %vm1701, %v1697
    %v1707 = vld [vmem:[#allocation4] sm:$0x1]
    %v1708 = vld [vmem:[#allocation4 + $0x20] sm:$0x1]
    %v1709 = vld [vmem:[%s7] sm:$0xff]
    %v1710 = vld [vmem:[%s7 + $0x8] sm:$0xff]
    %v1711 = vld [vmem:[#allocation4 + $0x1] sm:$0x1]
    %v1712 = vld [vmem:[#allocation4 + $0x21] sm:$0x1]
    %s1713 = scalar_lea.vmem %s7, 16
    %v1714 = vld [vmem:[%s1713] sm:$0xff]
    %v1715 = vld [vmem:[%s1713 + $0x8] sm:$0xff]
    %v1717 = vsel %vm524, %v1711, 0
    %1719 = vmatprep.subr.mxu0 0.0
    %1720 = vmatpush1.msra.mxu0 %v1714
    %1721 = vmatprep.subr.mxu0 0.0
    %1722 = vmatpush1.msra.mxu0 0.0
    %1723 = vmatprep.subr.mxu0 0.0
    %1724 = vmatpush1.msra.mxu0 0.0
    %1725 = vmatprep.subr.mxu0 0.0
    %1726 = vmatpush1.msra.mxu0 0.0
    %1727 = vmatprep.subr.mxu0 0.0
    %1728 = vmatpush1.msra.mxu0 0.0
    %1729 = vmatprep.subr.mxu0 0.0
    %1730 = vmatpush1.msra.mxu0 0.0
    %1731 = vmatprep.subr.mxu0 0.0
    %1732 = vmatpush1.msra.mxu0 0.0
    %1733 = vmatprep.subr.mxu0 0.0
    %1734 = vmatpush1.msra.mxu0 0.0
    %1735 = vmatprep.subr.mxu0 0.0
    %1736 = vmatpush1.msra.mxu0 0.0
    %1737 = vmatprep.subr.mxu0 0.0
    %1738 = vmatpush1.msra.mxu0 0.0
    %1739 = vmatprep.subr.mxu0 0.0
    %1740 = vmatpush1.msra.mxu0 0.0
    %1741 = vmatprep.subr.mxu0 0.0
    %1742 = vmatpush1.msra.mxu0 0.0
    %1743 = vmatprep.subr.mxu0 0.0
    %1744 = vmatpush1.msra.mxu0 0.0
    %1745 = vmatprep.subr.mxu0 0.0
    %1746 = vmatpush1.msra.mxu0 0.0
    %1747 = vmatprep.subr.mxu0 0.0
    %1748 = vmatpush1.msra.mxu0 0.0
    %1749 = vmatprep.subr.mxu0 0.0
    %1750 = vmatpush1.msra.mxu0 0.0
    %1751 = vmatprep.subr.mxu0 0.0
    %1752 = vmatpush1.msra.mxu0 0.0
    %1753 = vmatprep.subr.mxu0 0.0
    %1754 = vmatpush1.msra.mxu0 0.0
    %1755 = vmatprep.subr.mxu0 0.0
    %1756 = vmatpush1.msra.mxu0 0.0
    %1757 = vmatprep.subr.mxu0 0.0
    %1758 = vmatpush1.msra.mxu0 0.0
    %1759 = vmatprep.subr.mxu0 0.0
    %1760 = vmatpush1.msra.mxu0 0.0
    %1761 = vmatprep.subr.mxu0 0.0
    %1762 = vmatpush1.msra.mxu0 0.0
    %1763 = vmatprep.subr.mxu0 0.0
    %1764 = vmatpush1.msra.mxu0 0.0
    %1765 = vmatprep.subr.mxu0 0.0
    %1766 = vmatpush1.msra.mxu0 0.0
    %1767 = vmatprep.subr.mxu0 0.0
    %1768 = vmatpush1.msra.mxu0 0.0
    %1769 = vmatprep.subr.mxu0 0.0
    %1770 = vmatpush1.msra.mxu0 0.0
    %1771 = vmatprep.subr.mxu0 0.0
    %1772 = vmatpush1.msra.mxu0 0.0
    %1773 = vmatprep.subr.mxu0 0.0
    %1774 = vmatpush1.msra.mxu0 0.0
    %1775 = vmatprep.subr.mxu0 0.0
    %1776 = vmatpush1.msra.mxu0 0.0
    %1777 = vmatprep.subr.mxu0 0.0
    %1778 = vmatpush1.msra.mxu0 0.0
    %1779 = vmatprep.subr.mxu0 0.0
    %1780 = vmatpush1.msra.mxu0 0.0
    %1781 = vmatprep.subr.mxu0 0.0
    %1782 = vmatpush1.msra.mxu0 0.0
    %1783 = vmatprep.mubr.f32.mxu0 0.0
    %1784 = vmatmul.mubr.f32.gmra.mrb[0].mxu0 %v1717
    %v1785 = vpop.f32.mrb[0].mxu0
    %v1786 = vadd.f32 0.0, %v1785
    %v1787 = vpop.f32.mrb[0].mxu0
    %1788 = vdwg.mxu0
    %v1790 = vsel %vm524, %v1712, 0
    %1792 = vmatprep.subr.mxu0 0.0
    %1793 = vmatpush1.msra.mxu0 %v1715
    %1794 = vmatprep.subr.mxu0 0.0
    %1795 = vmatpush1.msra.mxu0 0.0
    %1796 = vmatprep.subr.mxu0 0.0
    %1797 = vmatpush1.msra.mxu0 0.0
    %1798 = vmatprep.subr.mxu0 0.0
    %1799 = vmatpush1.msra.mxu0 0.0
    %1800 = vmatprep.subr.mxu0 0.0
    %1801 = vmatpush1.msra.mxu0 0.0
    %1802 = vmatprep.subr.mxu0 0.0
    %1803 = vmatpush1.msra.mxu0 0.0
    %1804 = vmatprep.subr.mxu0 0.0
    %1805 = vmatpush1.msra.mxu0 0.0
    %1806 = vmatprep.subr.mxu0 0.0
    %1807 = vmatpush1.msra.mxu0 0.0
    %1808 = vmatprep.subr.mxu0 0.0
    %1809 = vmatpush1.msra.mxu0 0.0
    %1810 = vmatprep.subr.mxu0 0.0
    %1811 = vmatpush1.msra.mxu0 0.0
    %1812 = vmatprep.subr.mxu0 0.0
    %1813 = vmatpush1.msra.mxu0 0.0
    %1814 = vmatprep.subr.mxu0 0.0
    %1815 = vmatpush1.msra.mxu0 0.0
    %1816 = vmatprep.subr.mxu0 0.0
    %1817 = vmatpush1.msra.mxu0 0.0
    %1818 = vmatprep.subr.mxu0 0.0
    %1819 = vmatpush1.msra.mxu0 0.0
    %1820 = vmatprep.subr.mxu0 0.0
    %1821 = vmatpush1.msra.mxu0 0.0
    %1822 = vmatprep.subr.mxu0 0.0
    %1823 = vmatpush1.msra.mxu0 0.0
    %1824 = vmatprep.subr.mxu0 0.0
    %1825 = vmatpush1.msra.mxu0 0.0
    %1826 = vmatprep.subr.mxu0 0.0
    %1827 = vmatpush1.msra.mxu0 0.0
    %1828 = vmatprep.subr.mxu0 0.0
    %1829 = vmatpush1.msra.mxu0 0.0
    %1830 = vmatprep.subr.mxu0 0.0
    %1831 = vmatpush1.msra.mxu0 0.0
    %1832 = vmatprep.subr.mxu0 0.0
    %1833 = vmatpush1.msra.mxu0 0.0
    %1834 = vmatprep.subr.mxu0 0.0
    %1835 = vmatpush1.msra.mxu0 0.0
    %1836 = vmatprep.subr.mxu0 0.0
    %1837 = vmatpush1.msra.mxu0 0.0
    %1838 = vmatprep.subr.mxu0 0.0
    %1839 = vmatpush1.msra.mxu0 0.0
    %1840 = vmatprep.subr.mxu0 0.0
    %1841 = vmatpush1.msra.mxu0 0.0
    %1842 = vmatprep.subr.mxu0 0.0
    %1843 = vmatpush1.msra.mxu0 0.0
    %1844 = vmatprep.subr.mxu0 0.0
    %1845 = vmatpush1.msra.mxu0 0.0
    %1846 = vmatprep.subr.mxu0 0.0
    %1847 = vmatpush1.msra.mxu0 0.0
    %1848 = vmatprep.subr.mxu0 0.0
    %1849 = vmatpush1.msra.mxu0 0.0
    %1850 = vmatprep.subr.mxu0 0.0
    %1851 = vmatpush1.msra.mxu0 0.0
    %1852 = vmatprep.subr.mxu0 0.0
    %1853 = vmatpush1.msra.mxu0 0.0
    %1854 = vmatprep.subr.mxu0 0.0
    %1855 = vmatpush1.msra.mxu0 0.0
    %1856 = vmatprep.mubr.f32.mxu0 0.0
    %1857 = vmatmul.mubr.f32.gmra.mrb[0].mxu0 %v1790
    %v1858 = vpop.f32.mrb[0].mxu0
    %v1859 = vadd.f32 0.0, %v1858
    %v1860 = vpop.f32.mrb[0].mxu0
    %1861 = vdwg.mxu0
    %v1863 = vsel %vm524, %v1707, 0
    %1865 = vmatprep.subr.mxu0 0.0
    %1866 = vmatpush1.msra.mxu0 %v1709
    %1867 = vmatprep.subr.mxu0 0.0
    %1868 = vmatpush1.msra.mxu0 0.0
    %1869 = vmatprep.subr.mxu0 0.0
    %1870 = vmatpush1.msra.mxu0 0.0
    %1871 = vmatprep.subr.mxu0 0.0
    %1872 = vmatpush1.msra.mxu0 0.0
    %1873 = vmatprep.subr.mxu0 0.0
    %1874 = vmatpush1.msra.mxu0 0.0
    %1875 = vmatprep.subr.mxu0 0.0
    %1876 = vmatpush1.msra.mxu0 0.0
    %1877 = vmatprep.subr.mxu0 0.0
    %1878 = vmatpush1.msra.mxu0 0.0
    %1879 = vmatprep.subr.mxu0 0.0
    %1880 = vmatpush1.msra.mxu0 0.0
    %1881 = vmatprep.subr.mxu0 0.0
    %1882 = vmatpush1.msra.mxu0 0.0
    %1883 = vmatprep.subr.mxu0 0.0
    %1884 = vmatpush1.msra.mxu0 0.0
    %1885 = vmatprep.subr.mxu0 0.0
    %1886 = vmatpush1.msra.mxu0 0.0
    %1887 = vmatprep.subr.mxu0 0.0
    %1888 = vmatpush1.msra.mxu0 0.0
    %1889 = vmatprep.subr.mxu0 0.0
    %1890 = vmatpush1.msra.mxu0 0.0
    %1891 = vmatprep.subr.mxu0 0.0
    %1892 = vmatpush1.msra.mxu0 0.0
    %1893 = vmatprep.subr.mxu0 0.0
    %1894 = vmatpush1.msra.mxu0 0.0
    %1895 = vmatprep.subr.mxu0 0.0
    %1896 = vmatpush1.msra.mxu0 0.0
    %1897 = vmatprep.subr.mxu0 0.0
    %1898 = vmatpush1.msra.mxu0 0.0
    %1899 = vmatprep.subr.mxu0 0.0
    %1900 = vmatpush1.msra.mxu0 0.0
    %1901 = vmatprep.subr.mxu0 0.0
    %1902 = vmatpush1.msra.mxu0 0.0
    %1903 = vmatprep.subr.mxu0 0.0
    %1904 = vmatpush1.msra.mxu0 0.0
    %1905 = vmatprep.subr.mxu0 0.0
    %1906 = vmatpush1.msra.mxu0 0.0
    %1907 = vmatprep.subr.mxu0 0.0
    %1908 = vmatpush1.msra.mxu0 0.0
    %1909 = vmatprep.subr.mxu0 0.0
    %1910 = vmatpush1.msra.mxu0 0.0
    %1911 = vmatprep.subr.mxu0 0.0
    %1912 = vmatpush1.msra.mxu0 0.0
    %1913 = vmatprep.subr.mxu0 0.0
    %1914 = vmatpush1.msra.mxu0 0.0
    %1915 = vmatprep.subr.mxu0 0.0
    %1916 = vmatpush1.msra.mxu0 0.0
    %1917 = vmatprep.subr.mxu0 0.0
    %1918 = vmatpush1.msra.mxu0 0.0
    %1919 = vmatprep.subr.mxu0 0.0
    %1920 = vmatpush1.msra.mxu0 0.0
    %1921 = vmatprep.subr.mxu0 0.0
    %1922 = vmatpush1.msra.mxu0 0.0
    %1923 = vmatprep.subr.mxu0 0.0
    %1924 = vmatpush1.msra.mxu0 0.0
    %1925 = vmatprep.subr.mxu0 0.0
    %1926 = vmatpush1.msra.mxu0 0.0
    %1927 = vmatprep.subr.mxu0 0.0
    %1928 = vmatpush1.msra.mxu0 0.0
    %1929 = vmatprep.mubr.f32.mxu0 0.0
    %1930 = vmatmul.mubr.f32.gmra.mrb[0].mxu0 %v1863
    %v1931 = vpop.f32.mrb[0].mxu0
    %v1932 = vadd.f32 %v1786, %v1931
    %v1933 = vpop.f32.mrb[0].mxu0
    %1934 = vdwg.mxu0
    %v1936 = vsel %vm524, %v1708, 0
    %1938 = vmatprep.subr.mxu0 0.0
    %1939 = vmatpush1.msra.mxu0 %v1710
    %1940 = vmatprep.subr.mxu0 0.0
    %1941 = vmatpush1.msra.mxu0 0.0
    %1942 = vmatprep.subr.mxu0 0.0
    %1943 = vmatpush1.msra.mxu0 0.0
    %1944 = vmatprep.subr.mxu0 0.0
    %1945 = vmatpush1.msra.mxu0 0.0
    %1946 = vmatprep.subr.mxu0 0.0
    %1947 = vmatpush1.msra.mxu0 0.0
    %1948 = vmatprep.subr.mxu0 0.0
    %1949 = vmatpush1.msra.mxu0 0.0
    %1950 = vmatprep.subr.mxu0 0.0
    %1951 = vmatpush1.msra.mxu0 0.0
    %1952 = vmatprep.subr.mxu0 0.0
    %1953 = vmatpush1.msra.mxu0 0.0
    %1954 = vmatprep.subr.mxu0 0.0
    %1955 = vmatpush1.msra.mxu0 0.0
    %1956 = vmatprep.subr.mxu0 0.0
    %1957 = vmatpush1.msra.mxu0 0.0
    %1958 = vmatprep.subr.mxu0 0.0
    %1959 = vmatpush1.msra.mxu0 0.0
    %1960 = vmatprep.subr.mxu0 0.0
    %1961 = vmatpush1.msra.mxu0 0.0
    %1962 = vmatprep.subr.mxu0 0.0
    %1963 = vmatpush1.msra.mxu0 0.0
    %1964 = vmatprep.subr.mxu0 0.0
    %1965 = vmatpush1.msra.mxu0 0.0
    %1966 = vmatprep.subr.mxu0 0.0
    %1967 = vmatpush1.msra.mxu0 0.0
    %1968 = vmatprep.subr.mxu0 0.0
    %1969 = vmatpush1.msra.mxu0 0.0
    %1970 = vmatprep.subr.mxu0 0.0
    %1971 = vmatpush1.msra.mxu0 0.0
    %1972 = vmatprep.subr.mxu0 0.0
    %1973 = vmatpush1.msra.mxu0 0.0
    %1974 = vmatprep.subr.mxu0 0.0
    %1975 = vmatpush1.msra.mxu0 0.0
    %1976 = vmatprep.subr.mxu0 0.0
    %1977 = vmatpush1.msra.mxu0 0.0
    %1978 = vmatprep.subr.mxu0 0.0
    %1979 = vmatpush1.msra.mxu0 0.0
    %1980 = vmatprep.subr.mxu0 0.0
    %1981 = vmatpush1.msra.mxu0 0.0
    %1982 = vmatprep.subr.mxu0 0.0
    %1983 = vmatpush1.msra.mxu0 0.0
    %1984 = vmatprep.subr.mxu0 0.0
    %1985 = vmatpush1.msra.mxu0 0.0
    %1986 = vmatprep.subr.mxu0 0.0
    %1987 = vmatpush1.msra.mxu0 0.0
    %1988 = vmatprep.subr.mxu0 0.0
    %1989 = vmatpush1.msra.mxu0 0.0
    %1990 = vmatprep.subr.mxu0 0.0
    %1991 = vmatpush1.msra.mxu0 0.0
    %1992 = vmatprep.subr.mxu0 0.0
    %1993 = vmatpush1.msra.mxu0 0.0
    %1994 = vmatprep.subr.mxu0 0.0
    %1995 = vmatpush1.msra.mxu0 0.0
    %1996 = vmatprep.subr.mxu0 0.0
    %1997 = vmatpush1.msra.mxu0 0.0
    %1998 = vmatprep.subr.mxu0 0.0
    %1999 = vmatpush1.msra.mxu0 0.0
    %2000 = vmatprep.subr.mxu0 0.0
    %2001 = vmatpush1.msra.mxu0 0.0
    %2002 = vmatprep.mubr.f32.mxu0 0.0
    %2003 = vmatmul.mubr.f32.gmra.mrb[0].mxu0 %v1936
    %v2004 = vpop.f32.mrb[0].mxu0
    %v2005 = vadd.f32 %v1859, %v2004
    %v2006 = vpop.f32.mrb[0].mxu0
    %2007 = vdwg.mxu0
    %v2008 = vld [vmem:[#allocation4 + $0x2] sm:$0x1]
    %v2009 = vld [vmem:[#allocation4 + $0x22] sm:$0x1]
    %s2010 = scalar_lea.vmem %s7, 32
    %v2011 = vld [vmem:[%s2010] sm:$0xff]
    %v2012 = vld [vmem:[%s2010 + $0x8] sm:$0xff]
    %v2014 = vsel %vm524, %v2008, 0
    %2016 = vmatprep.subr.mxu0 0.0
    %2017 = vmatpush1.msra.mxu0 %v2011
    %2018 = vmatprep.subr.mxu0 0.0
    %2019 = vmatpush1.msra.mxu0 0.0
    %2020 = vmatprep.subr.mxu0 0.0
    %2021 = vmatpush1.msra.mxu0 0.0
    %2022 = vmatprep.subr.mxu0 0.0
    %2023 = vmatpush1.msra.mxu0 0.0
    %2024 = vmatprep.subr.mxu0 0.0
    %2025 = vmatpush1.msra.mxu0 0.0
    %2026 = vmatprep.subr.mxu0 0.0
    %2027 = vmatpush1.msra.mxu0 0.0
    %2028 = vmatprep.subr.mxu0 0.0
    %2029 = vmatpush1.msra.mxu0 0.0
    %2030 = vmatprep.subr.mxu0 0.0
    %2031 = vmatpush1.msra.mxu0 0.0
    %2032 = vmatprep.subr.mxu0 0.0
    %2033 = vmatpush1.msra.mxu0 0.0
    %2034 = vmatprep.subr.mxu0 0.0
    %2035 = vmatpush1.msra.mxu0 0.0
    %2036 = vmatprep.subr.mxu0 0.0
    %2037 = vmatpush1.msra.mxu0 0.0
    %2038 = vmatprep.subr.mxu0 0.0
    %2039 = vmatpush1.msra.mxu0 0.0
    %2040 = vmatprep.subr.mxu0 0.0
    %2041 = vmatpush1.msra.mxu0 0.0
    %2042 = vmatprep.subr.mxu0 0.0
    %2043 = vmatpush1.msra.mxu0 0.0
    %2044 = vmatprep.subr.mxu0 0.0
    %2045 = vmatpush1.msra.mxu0 0.0
    %2046 = vmatprep.subr.mxu0 0.0
    %2047 = vmatpush1.msra.mxu0 0.0
    %2048 = vmatprep.subr.mxu0 0.0
    %2049 = vmatpush1.msra.mxu0 0.0
    %2050 = vmatprep.subr.mxu0 0.0
    %2051 = vmatpush1.msra.mxu0 0.0
    %2052 = vmatprep.subr.mxu0 0.0
    %2053 = vmatpush1.msra.mxu0 0.0
    %2054 = vmatprep.subr.mxu0 0.0
    %2055 = vmatpush1.msra.mxu0 0.0
    %2056 = vmatprep.subr.mxu0 0.0
    %2057 = vmatpush1.msra.mxu0 0.0
    %2058 = vmatprep.subr.mxu0 0.0
    %2059 = vmatpush1.msra.mxu0 0.0
    %2060 = vmatprep.subr.mxu0 0.0
    %2061 = vmatpush1.msra.mxu0 0.0
    %2062 = vmatprep.subr.mxu0 0.0
    %2063 = vmatpush1.msra.mxu0 0.0
    %2064 = vmatprep.subr.mxu0 0.0
    %2065 = vmatpush1.msra.mxu0 0.0
    %2066 = vmatprep.subr.mxu0 0.0
    %2067 = vmatpush1.msra.mxu0 0.0
    %2068 = vmatprep.subr.mxu0 0.0
    %2069 = vmatpush1.msra.mxu0 0.0
    %2070 = vmatprep.subr.mxu0 0.0
    %2071 = vmatpush1.msra.mxu0 0.0
    %2072 = vmatprep.subr.mxu0 0.0
    %2073 = vmatpush1.msra.mxu0 0.0
    %2074 = vmatprep.subr.mxu0 0.0
    %2075 = vmatpush1.msra.mxu0 0.0
    %2076 = vmatprep.subr.mxu0 0.0
    %2077 = vmatpush1.msra.mxu0 0.0
    %2078 = vmatprep.subr.mxu0 0.0
    %2079 = vmatpush1.msra.mxu0 0.0
    %2080 = vmatprep.mubr.f32.mxu0 0.0
    %2081 = vmatmul.mubr.f32.gmra.mrb[0].mxu0 %v2014
    %v2082 = vpop.f32.mrb[0].mxu0
    %v2083 = vadd.f32 0.0, %v2082
    %v2084 = vpop.f32.mrb[0].mxu0
    %2085 = vdwg.mxu0
    %v2087 = vsel %vm524, %v2009, 0
    %2089 = vmatprep.subr.mxu0 0.0
    %2090 = vmatpush1.msra.mxu0 %v2012
    %2091 = vmatprep.subr.mxu0 0.0
    %2092 = vmatpush1.msra.mxu0 0.0
    %2093 = vmatprep.subr.mxu0 0.0
    %2094 = vmatpush1.msra.mxu0 0.0
    %2095 = vmatprep.subr.mxu0 0.0
    %2096 = vmatpush1.msra.mxu0 0.0
    %2097 = vmatprep.subr.mxu0 0.0
    %2098 = vmatpush1.msra.mxu0 0.0
    %2099 = vmatprep.subr.mxu0 0.0
    %2100 = vmatpush1.msra.mxu0 0.0
    %2101 = vmatprep.subr.mxu0 0.0
    %2102 = vmatpush1.msra.mxu0 0.0
    %2103 = vmatprep.subr.mxu0 0.0
    %2104 = vmatpush1.msra.mxu0 0.0
    %2105 = vmatprep.subr.mxu0 0.0
    %2106 = vmatpush1.msra.mxu0 0.0
    %2107 = vmatprep.subr.mxu0 0.0
    %2108 = vmatpush1.msra.mxu0 0.0
    %2109 = vmatprep.subr.mxu0 0.0
    %2110 = vmatpush1.msra.mxu0 0.0
    %2111 = vmatprep.subr.mxu0 0.0
    %2112 = vmatpush1.msra.mxu0 0.0
    %2113 = vmatprep.subr.mxu0 0.0
    %2114 = vmatpush1.msra.mxu0 0.0
    %2115 = vmatprep.subr.mxu0 0.0
    %2116 = vmatpush1.msra.mxu0 0.0
    %2117 = vmatprep.subr.mxu0 0.0
    %2118 = vmatpush1.msra.mxu0 0.0
    %2119 = vmatprep.subr.mxu0 0.0
    %2120 = vmatpush1.msra.mxu0 0.0
    %2121 = vmatprep.subr.mxu0 0.0
    %2122 = vmatpush1.msra.mxu0 0.0
    %2123 = vmatprep.subr.mxu0 0.0
    %2124 = vmatpush1.msra.mxu0 0.0
    %2125 = vmatprep.subr.mxu0 0.0
    %2126 = vmatpush1.msra.mxu0 0.0
    %2127 = vmatprep.subr.mxu0 0.0
    %2128 = vmatpush1.msra.mxu0 0.0
    %2129 = vmatprep.subr.mxu0 0.0
    %2130 = vmatpush1.msra.mxu0 0.0
    %2131 = vmatprep.subr.mxu0 0.0
    %2132 = vmatpush1.msra.mxu0 0.0
    %2133 = vmatprep.subr.mxu0 0.0
    %2134 = vmatpush1.msra.mxu0 0.0
    %2135 = vmatprep.subr.mxu0 0.0
    %2136 = vmatpush1.msra.mxu0 0.0
    %2137 = vmatprep.subr.mxu0 0.0
    %2138 = vmatpush1.msra.mxu0 0.0
    %2139 = vmatprep.subr.mxu0 0.0
    %2140 = vmatpush1.msra.mxu0 0.0
    %2141 = vmatprep.subr.mxu0 0.0
    %2142 = vmatpush1.msra.mxu0 0.0
    %2143 = vmatprep.subr.mxu0 0.0
    %2144 = vmatpush1.msra.mxu0 0.0
    %2145 = vmatprep.subr.mxu0 0.0
    %2146 = vmatpush1.msra.mxu0 0.0
    %2147 = vmatprep.subr.mxu0 0.0
    %2148 = vmatpush1.msra.mxu0 0.0
    %2149 = vmatprep.subr.mxu0 0.0
    %2150 = vmatpush1.msra.mxu0 0.0
    %2151 = vmatprep.subr.mxu0 0.0
    %2152 = vmatpush1.msra.mxu0 0.0
    %2153 = vmatprep.mubr.f32.mxu0 0.0
    %2154 = vmatmul.mubr.f32.gmra.mrb[0].mxu0 %v2087
    %v2155 = vpop.f32.mrb[0].mxu0
    %v2156 = vadd.f32 0.0, %v2155
    %v2157 = vpop.f32.mrb[0].mxu0
    %2158 = vdwg.mxu0
    %v2159 = vadd.f32 %v1932, %v2083
    %v2160 = vadd.f32 %v2005, %v2156
    %v2161 = vld [vmem:[#allocation4 + $0x3] sm:$0x1]
    %v2162 = vld [vmem:[#allocation4 + $0x23] sm:$0x1]
    %s2163 = scalar_lea.vmem %s7, 48
    %v2164 = vld [vmem:[%s2163] sm:$0xff]
    %v2165 = vld [vmem:[%s2163 + $0x8] sm:$0xff]
    %v2167 = vsel %vm524, %v2161, 0
    %2169 = vmatprep.subr.mxu0 0.0
    %2170 = vmatpush1.msra.mxu0 %v2164
    %2171 = vmatprep.subr.mxu0 0.0
    %2172 = vmatpush1.msra.mxu0 0.0
    %2173 = vmatprep.subr.mxu0 0.0
    %2174 = vmatpush1.msra.mxu0 0.0
    %2175 = vmatprep.subr.mxu0 0.0
    %2176 = vmatpush1.msra.mxu0 0.0
    %2177 = vmatprep.subr.mxu0 0.0
    %2178 = vmatpush1.msra.mxu0 0.0
    %2179 = vmatprep.subr.mxu0 0.0
    %2180 = vmatpush1.msra.mxu0 0.0
    %2181 = vmatprep.subr.mxu0 0.0
    %2182 = vmatpush1.msra.mxu0 0.0
    %2183 = vmatprep.subr.mxu0 0.0
    %2184 = vmatpush1.msra.mxu0 0.0
    %2185 = vmatprep.subr.mxu0 0.0
    %2186 = vmatpush1.msra.mxu0 0.0
    %2187 = vmatprep.subr.mxu0 0.0
    %2188 = vmatpush1.msra.mxu0 0.0
    %2189 = vmatprep.subr.mxu0 0.0
    %2190 = vmatpush1.msra.mxu0 0.0
    %2191 = vmatprep.subr.mxu0 0.0
    %2192 = vmatpush1.msra.mxu0 0.0
    %2193 = vmatprep.subr.mxu0 0.0
    %2194 = vmatpush1.msra.mxu0 0.0
    %2195 = vmatprep.subr.mxu0 0.0
    %2196 = vmatpush1.msra.mxu0 0.0
    %2197 = vmatprep.subr.mxu0 0.0
    %2198 = vmatpush1.msra.mxu0 0.0
    %2199 = vmatprep.subr.mxu0 0.0
    %2200 = vmatpush1.msra.mxu0 0.0
    %2201 = vmatprep.subr.mxu0 0.0
    %2202 = vmatpush1.msra.mxu0 0.0
    %2203 = vmatprep.subr.mxu0 0.0
    %2204 = vmatpush1.msra.mxu0 0.0
    %2205 = vmatprep.subr.mxu0 0.0
    %2206 = vmatpush1.msra.mxu0 0.0
    %2207 = vmatprep.subr.mxu0 0.0
    %2208 = vmatpush1.msra.mxu0 0.0
    %2209 = vmatprep.subr.mxu0 0.0
    %2210 = vmatpush1.msra.mxu0 0.0
    %2211 = vmatprep.subr.mxu0 0.0
    %2212 = vmatpush1.msra.mxu0 0.0
    %2213 = vmatprep.subr.mxu0 0.0
    %2214 = vmatpush1.msra.mxu0 0.0
    %2215 = vmatprep.subr.mxu0 0.0
    %2216 = vmatpush1.msra.mxu0 0.0
    %2217 = vmatprep.subr.mxu0 0.0
    %2218 = vmatpush1.msra.mxu0 0.0
    %2219 = vmatprep.subr.mxu0 0.0
    %2220 = vmatpush1.msra.mxu0 0.0
    %2221 = vmatprep.subr.mxu0 0.0
    %2222 = vmatpush1.msra.mxu0 0.0
    %2223 = vmatprep.subr.mxu0 0.0
    %2224 = vmatpush1.msra.mxu0 0.0
    %2225 = vmatprep.subr.mxu0 0.0
    %2226 = vmatpush1.msra.mxu0 0.0
    %2227 = vmatprep.subr.mxu0 0.0
    %2228 = vmatpush1.msra.mxu0 0.0
    %2229 = vmatprep.subr.mxu0 0.0
    %2230 = vmatpush1.msra.mxu0 0.0
    %2231 = vmatprep.subr.mxu0 0.0
    %2232 = vmatpush1.msra.mxu0 0.0
    %2233 = vmatprep.mubr.f32.mxu0 0.0
    %2234 = vmatmul.mubr.f32.gmra.mrb[0].mxu0 %v2167
    %v2235 = vpop.f32.mrb[0].mxu0
    %v2236 = vadd.f32 0.0, %v2235
    %v2237 = vpop.f32.mrb[0].mxu0
    %2238 = vdwg.mxu0
    %v2240 = vsel %vm524, %v2162, 0
    %2242 = vmatprep.subr.mxu0 0.0
    %2243 = vmatpush1.msra.mxu0 %v2165
    %2244 = vmatprep.subr.mxu0 0.0
    %2245 = vmatpush1.msra.mxu0 0.0
    %2246 = vmatprep.subr.mxu0 0.0
    %2247 = vmatpush1.msra.mxu0 0.0
    %2248 = vmatprep.subr.mxu0 0.0
    %2249 = vmatpush1.msra.mxu0 0.0
    %2250 = vmatprep.subr.mxu0 0.0
    %2251 = vmatpush1.msra.mxu0 0.0
    %2252 = vmatprep.subr.mxu0 0.0
    %2253 = vmatpush1.msra.mxu0 0.0
    %2254 = vmatprep.subr.mxu0 0.0
    %2255 = vmatpush1.msra.mxu0 0.0
    %2256 = vmatprep.subr.mxu0 0.0
    %2257 = vmatpush1.msra.mxu0 0.0
    %2258 = vmatprep.subr.mxu0 0.0
    %2259 = vmatpush1.msra.mxu0 0.0
    %2260 = vmatprep.subr.mxu0 0.0
    %2261 = vmatpush1.msra.mxu0 0.0
    %2262 = vmatprep.subr.mxu0 0.0
    %2263 = vmatpush1.msra.mxu0 0.0
    %2264 = vmatprep.subr.mxu0 0.0
    %2265 = vmatpush1.msra.mxu0 0.0
    %2266 = vmatprep.subr.mxu0 0.0
    %2267 = vmatpush1.msra.mxu0 0.0
    %2268 = vmatprep.subr.mxu0 0.0
    %2269 = vmatpush1.msra.mxu0 0.0
    %2270 = vmatprep.subr.mxu0 0.0
    %2271 = vmatpush1.msra.mxu0 0.0
    %2272 = vmatprep.subr.mxu0 0.0
    %2273 = vmatpush1.msra.mxu0 0.0
    %2274 = vmatprep.subr.mxu0 0.0
    %2275 = vmatpush1.msra.mxu0 0.0
    %2276 = vmatprep.subr.mxu0 0.0
    %2277 = vmatpush1.msra.mxu0 0.0
    %2278 = vmatprep.subr.mxu0 0.0
    %2279 = vmatpush1.msra.mxu0 0.0
    %2280 = vmatprep.subr.mxu0 0.0
    %2281 = vmatpush1.msra.mxu0 0.0
    %2282 = vmatprep.subr.mxu0 0.0
    %2283 = vmatpush1.msra.mxu0 0.0
    %2284 = vmatprep.subr.mxu0 0.0
    %2285 = vmatpush1.msra.mxu0 0.0
    %2286 = vmatprep.subr.mxu0 0.0
    %2287 = vmatpush1.msra.mxu0 0.0
    %2288 = vmatprep.subr.mxu0 0.0
    %2289 = vmatpush1.msra.mxu0 0.0
    %2290 = vmatprep.subr.mxu0 0.0
    %2291 = vmatpush1.msra.mxu0 0.0
    %2292 = vmatprep.subr.mxu0 0.0
    %2293 = vmatpush1.msra.mxu0 0.0
    %2294 = vmatprep.subr.mxu0 0.0
    %2295 = vmatpush1.msra.mxu0 0.0
    %2296 = vmatprep.subr.mxu0 0.0
    %2297 = vmatpush1.msra.mxu0 0.0
    %2298 = vmatprep.subr.mxu0 0.0
    %2299 = vmatpush1.msra.mxu0 0.0
    %2300 = vmatprep.subr.mxu0 0.0
    %2301 = vmatpush1.msra.mxu0 0.0
    %2302 = vmatprep.subr.mxu0 0.0
    %2303 = vmatpush1.msra.mxu0 0.0
    %2304 = vmatprep.subr.mxu0 0.0
    %2305 = vmatpush1.msra.mxu0 0.0
    %2306 = vmatprep.mubr.f32.mxu0 0.0
    %2307 = vmatmul.mubr.f32.gmra.mrb[0].mxu0 %v2240
    %v2308 = vpop.f32.mrb[0].mxu0
    %v2309 = vadd.f32 0.0, %v2308
    %v2310 = vpop.f32.mrb[0].mxu0
    %2311 = vdwg.mxu0
    %v2312 = vadd.f32 %v2159, %v2236
    %v2313 = vadd.f32 %v2160, %v2309
    %v2314 = vld [vmem:[#allocation4 + $0x4] sm:$0x1]
    %v2315 = vld [vmem:[#allocation4 + $0x24] sm:$0x1]
    %s2316 = scalar_lea.vmem %s7, 64
    %v2317 = vld [vmem:[%s2316] sm:$0xff]
    %v2318 = vld [vmem:[%s2316 + $0x8] sm:$0xff]
    %v2320 = vsel %vm524, %v2314, 0
    %2322 = vmatprep.subr.mxu0 0.0
    %2323 = vmatpush1.msra.mxu0 %v2317
    %2324 = vmatprep.subr.mxu0 0.0
    %2325 = vmatpush1.msra.mxu0 0.0
    %2326 = vmatprep.subr.mxu0 0.0
    %2327 = vmatpush1.msra.mxu0 0.0
    %2328 = vmatprep.subr.mxu0 0.0
    %2329 = vmatpush1.msra.mxu0 0.0
    %2330 = vmatprep.subr.mxu0 0.0
    %2331 = vmatpush1.msra.mxu0 0.0
    %2332 = vmatprep.subr.mxu0 0.0
    %2333 = vmatpush1.msra.mxu0 0.0
    %2334 = vmatprep.subr.mxu0 0.0
    %2335 = vmatpush1.msra.mxu0 0.0
    %2336 = vmatprep.subr.mxu0 0.0
    %2337 = vmatpush1.msra.mxu0 0.0
    %2338 = vmatprep.subr.mxu0 0.0
    %2339 = vmatpush1.msra.mxu0 0.0
    %2340 = vmatprep.subr.mxu0 0.0
    %2341 = vmatpush1.msra.mxu0 0.0
    %2342 = vmatprep.subr.mxu0 0.0
    %2343 = vmatpush1.msra.mxu0 0.0
    %2344 = vmatprep.subr.mxu0 0.0
    %2345 = vmatpush1.msra.mxu0 0.0
    %2346 = vmatprep.subr.mxu0 0.0
    %2347 = vmatpush1.msra.mxu0 0.0
    %2348 = vmatprep.subr.mxu0 0.0
    %2349 = vmatpush1.msra.mxu0 0.0
    %2350 = vmatprep.subr.mxu0 0.0
    %2351 = vmatpush1.msra.mxu0 0.0
    %2352 = vmatprep.subr.mxu0 0.0
    %2353 = vmatpush1.msra.mxu0 0.0
    %2354 = vmatprep.subr.mxu0 0.0
    %2355 = vmatpush1.msra.mxu0 0.0
    %2356 = vmatprep.subr.mxu0 0.0
    %2357 = vmatpush1.msra.mxu0 0.0
    %2358 = vmatprep.subr.mxu0 0.0
    %2359 = vmatpush1.msra.mxu0 0.0
    %2360 = vmatprep.subr.mxu0 0.0
    %2361 = vmatpush1.msra.mxu0 0.0
    %2362 = vmatprep.subr.mxu0 0.0
    %2363 = vmatpush1.msra.mxu0 0.0
    %2364 = vmatprep.subr.mxu0 0.0
    %2365 = vmatpush1.msra.mxu0 0.0
    %2366 = vmatprep.subr.mxu0 0.0
    %2367 = vmatpush1.msra.mxu0 0.0
    %2368 = vmatprep.subr.mxu0 0.0
    %2369 = vmatpush1.msra.mxu0 0.0
    %2370 = vmatprep.subr.mxu0 0.0
    %2371 = vmatpush1.msra.mxu0 0.0
    %2372 = vmatprep.subr.mxu0 0.0
    %2373 = vmatpush1.msra.mxu0 0.0
    %2374 = vmatprep.subr.mxu0 0.0
    %2375 = vmatpush1.msra.mxu0 0.0
    %2376 = vmatprep.subr.mxu0 0.0
    %2377 = vmatpush1.msra.mxu0 0.0
    %2378 = vmatprep.subr.mxu0 0.0
    %2379 = vmatpush1.msra.mxu0 0.0
    %2380 = vmatprep.subr.mxu0 0.0
    %2381 = vmatpush1.msra.mxu0 0.0
    %2382 = vmatprep.subr.mxu0 0.0
    %2383 = vmatpush1.msra.mxu0 0.0
    %2384 = vmatprep.subr.mxu0 0.0
    %2385 = vmatpush1.msra.mxu0 0.0
    %2386 = vmatprep.mubr.f32.mxu0 0.0
    %2387 = vmatmul.mubr.f32.gmra.mrb[0].mxu0 %v2320
    %v2388 = vpop.f32.mrb[0].mxu0
    %v2389 = vadd.f32 0.0, %v2388
    %v2390 = vpop.f32.mrb[0].mxu0
    %2391 = vdwg.mxu0
    %v2393 = vsel %vm524, %v2315, 0
    %2395 = vmatprep.subr.mxu0 0.0
    %2396 = vmatpush1.msra.mxu0 %v2318
    %2397 = vmatprep.subr.mxu0 0.0
    %2398 = vmatpush1.msra.mxu0 0.0
    %2399 = vmatprep.subr.mxu0 0.0
    %2400 = vmatpush1.msra.mxu0 0.0
    %2401 = vmatprep.subr.mxu0 0.0
    %2402 = vmatpush1.msra.mxu0 0.0
    %2403 = vmatprep.subr.mxu0 0.0
    %2404 = vmatpush1.msra.mxu0 0.0
    %2405 = vmatprep.subr.mxu0 0.0
    %2406 = vmatpush1.msra.mxu0 0.0
    %2407 = vmatprep.subr.mxu0 0.0
    %2408 = vmatpush1.msra.mxu0 0.0
    %2409 = vmatprep.subr.mxu0 0.0
    %2410 = vmatpush1.msra.mxu0 0.0
    %2411 = vmatprep.subr.mxu0 0.0
    %2412 = vmatpush1.msra.mxu0 0.0
    %2413 = vmatprep.subr.mxu0 0.0
    %2414 = vmatpush1.msra.mxu0 0.0
    %2415 = vmatprep.subr.mxu0 0.0
    %2416 = vmatpush1.msra.mxu0 0.0
    %2417 = vmatprep.subr.mxu0 0.0
    %2418 = vmatpush1.msra.mxu0 0.0
    %2419 = vmatprep.subr.mxu0 0.0
    %2420 = vmatpush1.msra.mxu0 0.0
    %2421 = vmatprep.subr.mxu0 0.0
    %2422 = vmatpush1.msra.mxu0 0.0
    %2423 = vmatprep.subr.mxu0 0.0
    %2424 = vmatpush1.msra.mxu0 0.0
    %2425 = vmatprep.subr.mxu0 0.0
    %2426 = vmatpush1.msra.mxu0 0.0
    %2427 = vmatprep.subr.mxu0 0.0
    %2428 = vmatpush1.msra.mxu0 0.0
    %2429 = vmatprep.subr.mxu0 0.0
    %2430 = vmatpush1.msra.mxu0 0.0
    %2431 = vmatprep.subr.mxu0 0.0
    %2432 = vmatpush1.msra.mxu0 0.0
    %2433 = vmatprep.subr.mxu0 0.0
    %2434 = vmatpush1.msra.mxu0 0.0
    %2435 = vmatprep.subr.mxu0 0.0
    %2436 = vmatpush1.msra.mxu0 0.0
    %2437 = vmatprep.subr.mxu0 0.0
    %2438 = vmatpush1.msra.mxu0 0.0
    %2439 = vmatprep.subr.mxu0 0.0
    %2440 = vmatpush1.msra.mxu0 0.0
    %2441 = vmatprep.subr.mxu0 0.0
    %2442 = vmatpush1.msra.mxu0 0.0
    %2443 = vmatprep.subr.mxu0 0.0
    %2444 = vmatpush1.msra.mxu0 0.0
    %2445 = vmatprep.subr.mxu0 0.0
    %2446 = vmatpush1.msra.mxu0 0.0
    %2447 = vmatprep.subr.mxu0 0.0
    %2448 = vmatpush1.msra.mxu0 0.0
    %2449 = vmatprep.subr.mxu0 0.0
    %2450 = vmatpush1.msra.mxu0 0.0
    %2451 = vmatprep.subr.mxu0 0.0
    %2452 = vmatpush1.msra.mxu0 0.0
    %2453 = vmatprep.subr.mxu0 0.0
    %2454 = vmatpush1.msra.mxu0 0.0
    %2455 = vmatprep.subr.mxu0 0.0
    %2456 = vmatpush1.msra.mxu0 0.0
    %2457 = vmatprep.subr.mxu0 0.0
    %2458 = vmatpush1.msra.mxu0 0.0
    %2459 = vmatprep.mubr.f32.mxu0 0.0
    %2460 = vmatmul.mubr.f32.gmra.mrb[0].mxu0 %v2393
    %v2461 = vpop.f32.mrb[0].mxu0
    %v2462 = vadd.f32 0.0, %v2461
    %v2463 = vpop.f32.mrb[0].mxu0
    %2464 = vdwg.mxu0
    %v2465 = vadd.f32 %v2312, %v2389
    %v2466 = vadd.f32 %v2313, %v2462
    %v2467 = vld [vmem:[#allocation4 + $0x5] sm:$0x1]
    %v2468 = vld [vmem:[#allocation4 + $0x25] sm:$0x1]
    %s2469 = scalar_lea.vmem %s7, 80
    %v2470 = vld [vmem:[%s2469] sm:$0xff]
    %v2471 = vld [vmem:[%s2469 + $0x8] sm:$0xff]
    %v2473 = vsel %vm524, %v2467, 0
    %2475 = vmatprep.subr.mxu0 0.0
    %2476 = vmatpush1.msra.mxu0 %v2470
    %2477 = vmatprep.subr.mxu0 0.0
    %2478 = vmatpush1.msra.mxu0 0.0
    %2479 = vmatprep.subr.mxu0 0.0
    %2480 = vmatpush1.msra.mxu0 0.0
    %2481 = vmatprep.subr.mxu0 0.0
    %2482 = vmatpush1.msra.mxu0 0.0
    %2483 = vmatprep.subr.mxu0 0.0
    %2484 = vmatpush1.msra.mxu0 0.0
    %2485 = vmatprep.subr.mxu0 0.0
    %2486 = vmatpush1.msra.mxu0 0.0
    %2487 = vmatprep.subr.mxu0 0.0
    %2488 = vmatpush1.msra.mxu0 0.0
    %2489 = vmatprep.subr.mxu0 0.0
    %2490 = vmatpush1.msra.mxu0 0.0
    %2491 = vmatprep.subr.mxu0 0.0
    %2492 = vmatpush1.msra.mxu0 0.0
    %2493 = vmatprep.subr.mxu0 0.0
    %2494 = vmatpush1.msra.mxu0 0.0
    %2495 = vmatprep.subr.mxu0 0.0
    %2496 = vmatpush1.msra.mxu0 0.0
    %2497 = vmatprep.subr.mxu0 0.0
    %2498 = vmatpush1.msra.mxu0 0.0
    %2499 = vmatprep.subr.mxu0 0.0
    %2500 = vmatpush1.msra.mxu0 0.0
    %2501 = vmatprep.subr.mxu0 0.0
    %2502 = vmatpush1.msra.mxu0 0.0
    %2503 = vmatprep.subr.mxu0 0.0
    %2504 = vmatpush1.msra.mxu0 0.0
    %2505 = vmatprep.subr.mxu0 0.0
    %2506 = vmatpush1.msra.mxu0 0.0
    %2507 = vmatprep.subr.mxu0 0.0
    %2508 = vmatpush1.msra.mxu0 0.0
    %2509 = vmatprep.subr.mxu0 0.0
    %2510 = vmatpush1.msra.mxu0 0.0
    %2511 = vmatprep.subr.mxu0 0.0
    %2512 = vmatpush1.msra.mxu0 0.0
    %2513 = vmatprep.subr.mxu0 0.0
    %2514 = vmatpush1.msra.mxu0 0.0
    %2515 = vmatprep.subr.mxu0 0.0
    %2516 = vmatpush1.msra.mxu0 0.0
    %2517 = vmatprep.subr.mxu0 0.0
    %2518 = vmatpush1.msra.mxu0 0.0
    %2519 = vmatprep.subr.mxu0 0.0
    %2520 = vmatpush1.msra.mxu0 0.0
    %2521 = vmatprep.subr.mxu0 0.0
    %2522 = vmatpush1.msra.mxu0 0.0
    %2523 = vmatprep.subr.mxu0 0.0
    %2524 = vmatpush1.msra.mxu0 0.0
    %2525 = vmatprep.subr.mxu0 0.0
    %2526 = vmatpush1.msra.mxu0 0.0
    %2527 = vmatprep.subr.mxu0 0.0
    %2528 = vmatpush1.msra.mxu0 0.0
    %2529 = vmatprep.subr.mxu0 0.0
    %2530 = vmatpush1.msra.mxu0 0.0
    %2531 = vmatprep.subr.mxu0 0.0
    %2532 = vmatpush1.msra.mxu0 0.0
    %2533 = vmatprep.subr.mxu0 0.0
    %2534 = vmatpush1.msra.mxu0 0.0
    %2535 = vmatprep.subr.mxu0 0.0
    %2536 = vmatpush1.msra.mxu0 0.0
    %2537 = vmatprep.subr.mxu0 0.0
    %2538 = vmatpush1.msra.mxu0 0.0
    %2539 = vmatprep.mubr.f32.mxu0 0.0
    %2540 = vmatmul.mubr.f32.gmra.mrb[0].mxu0 %v2473
    %v2541 = vpop.f32.mrb[0].mxu0
    %v2542 = vadd.f32 0.0, %v2541
    %v2543 = vpop.f32.mrb[0].mxu0
    %2544 = vdwg.mxu0
    %v2546 = vsel %vm524, %v2468, 0
    %2548 = vmatprep.subr.mxu0 0.0
    %2549 = vmatpush1.msra.mxu0 %v2471
    %2550 = vmatprep.subr.mxu0 0.0
    %2551 = vmatpush1.msra.mxu0 0.0
    %2552 = vmatprep.subr.mxu0 0.0
    %2553 = vmatpush1.msra.mxu0 0.0
    %2554 = vmatprep.subr.mxu0 0.0
    %2555 = vmatpush1.msra.mxu0 0.0
    %2556 = vmatprep.subr.mxu0 0.0
    %2557 = vmatpush1.msra.mxu0 0.0
    %2558 = vmatprep.subr.mxu0 0.0
    %2559 = vmatpush1.msra.mxu0 0.0
    %2560 = vmatprep.subr.mxu0 0.0
    %2561 = vmatpush1.msra.mxu0 0.0
    %2562 = vmatprep.subr.mxu0 0.0
    %2563 = vmatpush1.msra.mxu0 0.0
    %2564 = vmatprep.subr.mxu0 0.0
    %2565 = vmatpush1.msra.mxu0 0.0
    %2566 = vmatprep.subr.mxu0 0.0
    %2567 = vmatpush1.msra.mxu0 0.0
    %2568 = vmatprep.subr.mxu0 0.0
    %2569 = vmatpush1.msra.mxu0 0.0
    %2570 = vmatprep.subr.mxu0 0.0
    %2571 = vmatpush1.msra.mxu0 0.0
    %2572 = vmatprep.subr.mxu0 0.0
    %2573 = vmatpush1.msra.mxu0 0.0
    %2574 = vmatprep.subr.mxu0 0.0
    %2575 = vmatpush1.msra.mxu0 0.0
    %2576 = vmatprep.subr.mxu0 0.0
    %2577 = vmatpush1.msra.mxu0 0.0
    %2578 = vmatprep.subr.mxu0 0.0
    %2579 = vmatpush1.msra.mxu0 0.0
    %2580 = vmatprep.subr.mxu0 0.0
    %2581 = vmatpush1.msra.mxu0 0.0
    %2582 = vmatprep.subr.mxu0 0.0
    %2583 = vmatpush1.msra.mxu0 0.0
    %2584 = vmatprep.subr.mxu0 0.0
    %2585 = vmatpush1.msra.mxu0 0.0
    %2586 = vmatprep.subr.mxu0 0.0
    %2587 = vmatpush1.msra.mxu0 0.0
    %2588 = vmatprep.subr.mxu0 0.0
    %2589 = vmatpush1.msra.mxu0 0.0
    %2590 = vmatprep.subr.mxu0 0.0
    %2591 = vmatpush1.msra.mxu0 0.0
    %2592 = vmatprep.subr.mxu0 0.0
    %2593 = vmatpush1.msra.mxu0 0.0
    %2594 = vmatprep.subr.mxu0 0.0
    %2595 = vmatpush1.msra.mxu0 0.0
    %2596 = vmatprep.subr.mxu0 0.0
    %2597 = vmatpush1.msra.mxu0 0.0
    %2598 = vmatprep.subr.mxu0 0.0
    %2599 = vmatpush1.msra.mxu0 0.0
    %2600 = vmatprep.subr.mxu0 0.0
    %2601 = vmatpush1.msra.mxu0 0.0
    %2602 = vmatprep.subr.mxu0 0.0
    %2603 = vmatpush1.msra.mxu0 0.0
    %2604 = vmatprep.subr.mxu0 0.0
    %2605 = vmatpush1.msra.mxu0 0.0
    %2606 = vmatprep.subr.mxu0 0.0
    %2607 = vmatpush1.msra.mxu0 0.0
    %2608 = vmatprep.subr.mxu0 0.0
    %2609 = vmatpush1.msra.mxu0 0.0
    %2610 = vmatprep.subr.mxu0 0.0
    %2611 = vmatpush1.msra.mxu0 0.0
    %2612 = vmatprep.mubr.f32.mxu0 0.0
    %2613 = vmatmul.mubr.f32.gmra.mrb[0].mxu0 %v2546
    %v2614 = vpop.f32.mrb[0].mxu0
    %v2615 = vadd.f32 0.0, %v2614
    %v2616 = vpop.f32.mrb[0].mxu0
    %2617 = vdwg.mxu0
    %v2618 = vadd.f32 %v2465, %v2542
    %v2619 = vadd.f32 %v2466, %v2615
    %v2620 = vld [vmem:[#allocation4 + $0x6] sm:$0x1]
    %v2621 = vld [vmem:[#allocation4 + $0x26] sm:$0x1]
    %s2622 = scalar_lea.vmem %s7, 96
    %v2623 = vld [vmem:[%s2622] sm:$0xff]
    %v2624 = vld [vmem:[%s2622 + $0x8] sm:$0xff]
    %v2626 = vsel %vm524, %v2620, 0
    %2628 = vmatprep.subr.mxu0 0.0
    %2629 = vmatpush1.msra.mxu0 %v2623
    %2630 = vmatprep.subr.mxu0 0.0
    %2631 = vmatpush1.msra.mxu0 0.0
    %2632 = vmatprep.subr.mxu0 0.0
    %2633 = vmatpush1.msra.mxu0 0.0
    %2634 = vmatprep.subr.mxu0 0.0
    %2635 = vmatpush1.msra.mxu0 0.0
    %2636 = vmatprep.subr.mxu0 0.0
    %2637 = vmatpush1.msra.mxu0 0.0
    %2638 = vmatprep.subr.mxu0 0.0
    %2639 = vmatpush1.msra.mxu0 0.0
    %2640 = vmatprep.subr.mxu0 0.0
    %2641 = vmatpush1.msra.mxu0 0.0
    %2642 = vmatprep.subr.mxu0 0.0
    %2643 = vmatpush1.msra.mxu0 0.0
    %2644 = vmatprep.subr.mxu0 0.0
    %2645 = vmatpush1.msra.mxu0 0.0
    %2646 = vmatprep.subr.mxu0 0.0
    %2647 = vmatpush1.msra.mxu0 0.0
    %2648 = vmatprep.subr.mxu0 0.0
    %2649 = vmatpush1.msra.mxu0 0.0
    %2650 = vmatprep.subr.mxu0 0.0
    %2651 = vmatpush1.msra.mxu0 0.0
    %2652 = vmatprep.subr.mxu0 0.0
    %2653 = vmatpush1.msra.mxu0 0.0
    %2654 = vmatprep.subr.mxu0 0.0
    %2655 = vmatpush1.msra.mxu0 0.0
    %2656 = vmatprep.subr.mxu0 0.0
    %2657 = vmatpush1.msra.mxu0 0.0
    %2658 = vmatprep.subr.mxu0 0.0
    %2659 = vmatpush1.msra.mxu0 0.0
    %2660 = vmatprep.subr.mxu0 0.0
    %2661 = vmatpush1.msra.mxu0 0.0
    %2662 = vmatprep.subr.mxu0 0.0
    %2663 = vmatpush1.msra.mxu0 0.0
    %2664 = vmatprep.subr.mxu0 0.0
    %2665 = vmatpush1.msra.mxu0 0.0
    %2666 = vmatprep.subr.mxu0 0.0
    %2667 = vmatpush1.msra.mxu0 0.0
    %2668 = vmatprep.subr.mxu0 0.0
    %2669 = vmatpush1.msra.mxu0 0.0
    %2670 = vmatprep.subr.mxu0 0.0
    %2671 = vmatpush1.msra.mxu0 0.0
    %2672 = vmatprep.subr.mxu0 0.0
    %2673 = vmatpush1.msra.mxu0 0.0
    %2674 = vmatprep.subr.mxu0 0.0
    %2675 = vmatpush1.msra.mxu0 0.0
    %2676 = vmatprep.subr.mxu0 0.0
    %2677 = vmatpush1.msra.mxu0 0.0
    %2678 = vmatprep.subr.mxu0 0.0
    %2679 = vmatpush1.msra.mxu0 0.0
    %2680 = vmatprep.subr.mxu0 0.0
    %2681 = vmatpush1.msra.mxu0 0.0
    %2682 = vmatprep.subr.mxu0 0.0
    %2683 = vmatpush1.msra.mxu0 0.0
    %2684 = vmatprep.subr.mxu0 0.0
    %2685 = vmatpush1.msra.mxu0 0.0
    %2686 = vmatprep.subr.mxu0 0.0
    %2687 = vmatpush1.msra.mxu0 0.0
    %2688 = vmatprep.subr.mxu0 0.0
    %2689 = vmatpush1.msra.mxu0 0.0
    %2690 = vmatprep.subr.mxu0 0.0
    %2691 = vmatpush1.msra.mxu0 0.0
    %2692 = vmatprep.mubr.f32.mxu0 0.0
    %2693 = vmatmul.mubr.f32.gmra.mrb[0].mxu0 %v2626
    %v2694 = vpop.f32.mrb[0].mxu0
    %v2695 = vadd.f32 0.0, %v2694
    %v2696 = vpop.f32.mrb[0].mxu0
    %2697 = vdwg.mxu0
    %v2699 = vsel %vm524, %v2621, 0
    %2701 = vmatprep.subr.mxu0 0.0
    %2702 = vmatpush1.msra.mxu0 %v2624
    %2703 = vmatprep.subr.mxu0 0.0
    %2704 = vmatpush1.msra.mxu0 0.0
    %2705 = vmatprep.subr.mxu0 0.0
    %2706 = vmatpush1.msra.mxu0 0.0
    %2707 = vmatprep.subr.mxu0 0.0
    %2708 = vmatpush1.msra.mxu0 0.0
    %2709 = vmatprep.subr.mxu0 0.0
    %2710 = vmatpush1.msra.mxu0 0.0
    %2711 = vmatprep.subr.mxu0 0.0
    %2712 = vmatpush1.msra.mxu0 0.0
    %2713 = vmatprep.subr.mxu0 0.0
    %2714 = vmatpush1.msra.mxu0 0.0
    %2715 = vmatprep.subr.mxu0 0.0
    %2716 = vmatpush1.msra.mxu0 0.0
    %2717 = vmatprep.subr.mxu0 0.0
    %2718 = vmatpush1.msra.mxu0 0.0
    %2719 = vmatprep.subr.mxu0 0.0
    %2720 = vmatpush1.msra.mxu0 0.0
    %2721 = vmatprep.subr.mxu0 0.0
    %2722 = vmatpush1.msra.mxu0 0.0
    %2723 = vmatprep.subr.mxu0 0.0
    %2724 = vmatpush1.msra.mxu0 0.0
    %2725 = vmatprep.subr.mxu0 0.0
    %2726 = vmatpush1.msra.mxu0 0.0
    %2727 = vmatprep.subr.mxu0 0.0
    %2728 = vmatpush1.msra.mxu0 0.0
    %2729 = vmatprep.subr.mxu0 0.0
    %2730 = vmatpush1.msra.mxu0 0.0
    %2731 = vmatprep.subr.mxu0 0.0
    %2732 = vmatpush1.msra.mxu0 0.0
    %2733 = vmatprep.subr.mxu0 0.0
    %2734 = vmatpush1.msra.mxu0 0.0
    %2735 = vmatprep.subr.mxu0 0.0
    %2736 = vmatpush1.msra.mxu0 0.0
    %2737 = vmatprep.subr.mxu0 0.0
    %2738 = vmatpush1.msra.mxu0 0.0
    %2739 = vmatprep.subr.mxu0 0.0
    %2740 = vmatpush1.msra.mxu0 0.0
    %2741 = vmatprep.subr.mxu0 0.0
    %2742 = vmatpush1.msra.mxu0 0.0
    %2743 = vmatprep.subr.mxu0 0.0
    %2744 = vmatpush1.msra.mxu0 0.0
    %2745 = vmatprep.subr.mxu0 0.0
    %2746 = vmatpush1.msra.mxu0 0.0
    %2747 = vmatprep.subr.mxu0 0.0
    %2748 = vmatpush1.msra.mxu0 0.0
    %2749 = vmatprep.subr.mxu0 0.0
    %2750 = vmatpush1.msra.mxu0 0.0
    %2751 = vmatprep.subr.mxu0 0.0
    %2752 = vmatpush1.msra.mxu0 0.0
    %2753 = vmatprep.subr.mxu0 0.0
    %2754 = vmatpush1.msra.mxu0 0.0
    %2755 = vmatprep.subr.mxu0 0.0
    %2756 = vmatpush1.msra.mxu0 0.0
    %2757 = vmatprep.subr.mxu0 0.0
    %2758 = vmatpush1.msra.mxu0 0.0
    %2759 = vmatprep.subr.mxu0 0.0
    %2760 = vmatpush1.msra.mxu0 0.0
    %2761 = vmatprep.subr.mxu0 0.0
    %2762 = vmatpush1.msra.mxu0 0.0
    %2763 = vmatprep.subr.mxu0 0.0
    %2764 = vmatpush1.msra.mxu0 0.0
    %2765 = vmatprep.mubr.f32.mxu0 0.0
    %2766 = vmatmul.mubr.f32.gmra.mrb[0].mxu0 %v2699
    %v2767 = vpop.f32.mrb[0].mxu0
    %v2768 = vadd.f32 0.0, %v2767
    %v2769 = vpop.f32.mrb[0].mxu0
    %2770 = vdwg.mxu0
    %v2771 = vadd.f32 %v2618, %v2695
    %v2772 = vadd.f32 %v2619, %v2768
    %v2773 = vld [vmem:[#allocation4 + $0x7] sm:$0x1]
    %v2774 = vld [vmem:[#allocation4 + $0x27] sm:$0x1]
    %s2775 = scalar_lea.vmem %s7, 112
    %v2776 = vld [vmem:[%s2775] sm:$0xff]
    %v2777 = vld [vmem:[%s2775 + $0x8] sm:$0xff]
    %v2779 = vsel %vm524, %v2773, 0
    %2781 = vmatprep.subr.mxu0 0.0
    %2782 = vmatpush1.msra.mxu0 %v2776
    %2783 = vmatprep.subr.mxu0 0.0
    %2784 = vmatpush1.msra.mxu0 0.0
    %2785 = vmatprep.subr.mxu0 0.0
    %2786 = vmatpush1.msra.mxu0 0.0
    %2787 = vmatprep.subr.mxu0 0.0
    %2788 = vmatpush1.msra.mxu0 0.0
    %2789 = vmatprep.subr.mxu0 0.0
    %2790 = vmatpush1.msra.mxu0 0.0
    %2791 = vmatprep.subr.mxu0 0.0
    %2792 = vmatpush1.msra.mxu0 0.0
    %2793 = vmatprep.subr.mxu0 0.0
    %2794 = vmatpush1.msra.mxu0 0.0
    %2795 = vmatprep.subr.mxu0 0.0
    %2796 = vmatpush1.msra.mxu0 0.0
    %2797 = vmatprep.subr.mxu0 0.0
    %2798 = vmatpush1.msra.mxu0 0.0
    %2799 = vmatprep.subr.mxu0 0.0
    %2800 = vmatpush1.msra.mxu0 0.0
    %2801 = vmatprep.subr.mxu0 0.0
    %2802 = vmatpush1.msra.mxu0 0.0
    %2803 = vmatprep.subr.mxu0 0.0
    %2804 = vmatpush1.msra.mxu0 0.0
    %2805 = vmatprep.subr.mxu0 0.0
    %2806 = vmatpush1.msra.mxu0 0.0
    %2807 = vmatprep.subr.mxu0 0.0
    %2808 = vmatpush1.msra.mxu0 0.0
    %2809 = vmatprep.subr.mxu0 0.0
    %2810 = vmatpush1.msra.mxu0 0.0
    %2811 = vmatprep.subr.mxu0 0.0
    %2812 = vmatpush1.msra.mxu0 0.0
    %2813 = vmatprep.subr.mxu0 0.0
    %2814 = vmatpush1.msra.mxu0 0.0
    %2815 = vmatprep.subr.mxu0 0.0
    %2816 = vmatpush1.msra.mxu0 0.0
    %2817 = vmatprep.subr.mxu0 0.0
    %2818 = vmatpush1.msra.mxu0 0.0
    %2819 = vmatprep.subr.mxu0 0.0
    %2820 = vmatpush1.msra.mxu0 0.0
    %2821 = vmatprep.subr.mxu0 0.0
    %2822 = vmatpush1.msra.mxu0 0.0
    %2823 = vmatprep.subr.mxu0 0.0
    %2824 = vmatpush1.msra.mxu0 0.0
    %2825 = vmatprep.subr.mxu0 0.0
    %2826 = vmatpush1.msra.mxu0 0.0
    %2827 = vmatprep.subr.mxu0 0.0
    %2828 = vmatpush1.msra.mxu0 0.0
    %2829 = vmatprep.subr.mxu0 0.0
    %2830 = vmatpush1.msra.mxu0 0.0
    %2831 = vmatprep.subr.mxu0 0.0
    %2832 = vmatpush1.msra.mxu0 0.0
    %2833 = vmatprep.subr.mxu0 0.0
    %2834 = vmatpush1.msra.mxu0 0.0
    %2835 = vmatprep.subr.mxu0 0.0
    %2836 = vmatpush1.msra.mxu0 0.0
    %2837 = vmatprep.subr.mxu0 0.0
    %2838 = vmatpush1.msra.mxu0 0.0
    %2839 = vmatprep.subr.mxu0 0.0
    %2840 = vmatpush1.msra.mxu0 0.0
    %2841 = vmatprep.subr.mxu0 0.0
    %2842 = vmatpush1.msra.mxu0 0.0
    %2843 = vmatprep.subr.mxu0 0.0
    %2844 = vmatpush1.msra.mxu0 0.0
    %2845 = vmatprep.mubr.f32.mxu0 0.0
    %2846 = vmatmul.mubr.f32.gmra.mrb[0].mxu0 %v2779
    %v2847 = vpop.f32.mrb[0].mxu0
    %v2848 = vadd.f32 0.0, %v2847
    %v2849 = vpop.f32.mrb[0].mxu0
    %2850 = vdwg.mxu0
    %v2852 = vsel %vm524, %v2774, 0
    %2854 = vmatprep.subr.mxu0 0.0
    %2855 = vmatpush1.msra.mxu0 %v2777
    %2856 = vmatprep.subr.mxu0 0.0
    %2857 = vmatpush1.msra.mxu0 0.0
    %2858 = vmatprep.subr.mxu0 0.0
    %2859 = vmatpush1.msra.mxu0 0.0
    %2860 = vmatprep.subr.mxu0 0.0
    %2861 = vmatpush1.msra.mxu0 0.0
    %2862 = vmatprep.subr.mxu0 0.0
    %2863 = vmatpush1.msra.mxu0 0.0
    %2864 = vmatprep.subr.mxu0 0.0
    %2865 = vmatpush1.msra.mxu0 0.0
    %2866 = vmatprep.subr.mxu0 0.0
    %2867 = vmatpush1.msra.mxu0 0.0
    %2868 = vmatprep.subr.mxu0 0.0
    %2869 = vmatpush1.msra.mxu0 0.0
    %2870 = vmatprep.subr.mxu0 0.0
    %2871 = vmatpush1.msra.mxu0 0.0
    %2872 = vmatprep.subr.mxu0 0.0
    %2873 = vmatpush1.msra.mxu0 0.0
    %2874 = vmatprep.subr.mxu0 0.0
    %2875 = vmatpush1.msra.mxu0 0.0
    %2876 = vmatprep.subr.mxu0 0.0
    %2877 = vmatpush1.msra.mxu0 0.0
    %2878 = vmatprep.subr.mxu0 0.0
    %2879 = vmatpush1.msra.mxu0 0.0
    %2880 = vmatprep.subr.mxu0 0.0
    %2881 = vmatpush1.msra.mxu0 0.0
    %2882 = vmatprep.subr.mxu0 0.0
    %2883 = vmatpush1.msra.mxu0 0.0
    %2884 = vmatprep.subr.mxu0 0.0
    %2885 = vmatpush1.msra.mxu0 0.0
    %2886 = vmatprep.subr.mxu0 0.0
    %2887 = vmatpush1.msra.mxu0 0.0
    %2888 = vmatprep.subr.mxu0 0.0
    %2889 = vmatpush1.msra.mxu0 0.0
    %2890 = vmatprep.subr.mxu0 0.0
    %2891 = vmatpush1.msra.mxu0 0.0
    %2892 = vmatprep.subr.mxu0 0.0
    %2893 = vmatpush1.msra.mxu0 0.0
    %2894 = vmatprep.subr.mxu0 0.0
    %2895 = vmatpush1.msra.mxu0 0.0
    %2896 = vmatprep.subr.mxu0 0.0
    %2897 = vmatpush1.msra.mxu0 0.0
    %2898 = vmatprep.subr.mxu0 0.0
    %2899 = vmatpush1.msra.mxu0 0.0
    %2900 = vmatprep.subr.mxu0 0.0
    %2901 = vmatpush1.msra.mxu0 0.0
    %2902 = vmatprep.subr.mxu0 0.0
    %2903 = vmatpush1.msra.mxu0 0.0
    %2904 = vmatprep.subr.mxu0 0.0
    %2905 = vmatpush1.msra.mxu0 0.0
    %2906 = vmatprep.subr.mxu0 0.0
    %2907 = vmatpush1.msra.mxu0 0.0
    %2908 = vmatprep.subr.mxu0 0.0
    %2909 = vmatpush1.msra.mxu0 0.0
    %2910 = vmatprep.subr.mxu0 0.0
    %2911 = vmatpush1.msra.mxu0 0.0
    %2912 = vmatprep.subr.mxu0 0.0
    %2913 = vmatpush1.msra.mxu0 0.0
    %2914 = vmatprep.subr.mxu0 0.0
    %2915 = vmatpush1.msra.mxu0 0.0
    %2916 = vmatprep.subr.mxu0 0.0
    %2917 = vmatpush1.msra.mxu0 0.0
    %2918 = vmatprep.mubr.f32.mxu0 0.0
    %2919 = vmatmul.mubr.f32.gmra.mrb[0].mxu0 %v2852
    %v2920 = vpop.f32.mrb[0].mxu0
    %v2921 = vadd.f32 0.0, %v2920
    %v2922 = vpop.f32.mrb[0].mxu0
    %2923 = vdwg.mxu0
    %v2924 = vadd.f32 %v2771, %v2848
    %v2925 = vadd.f32 %v2772, %v2921
    %v2926 = vld [vmem:[#allocation4 + $0x8] sm:$0x1]
    %v2927 = vld [vmem:[#allocation4 + $0x28] sm:$0x1]
    %s2928 = scalar_lea.vmem %s7, 128
    %v2929 = vld [vmem:[%s2928] sm:$0xff]
    %v2930 = vld [vmem:[%s2928 + $0x8] sm:$0xff]
    %v2932 = vsel %vm524, %v2926, 0
    %2934 = vmatprep.subr.mxu0 0.0
    %2935 = vmatpush1.msra.mxu0 %v2929
    %2936 = vmatprep.subr.mxu0 0.0
    %2937 = vmatpush1.msra.mxu0 0.0
    %2938 = vmatprep.subr.mxu0 0.0
    %2939 = vmatpush1.msra.mxu0 0.0
    %2940 = vmatprep.subr.mxu0 0.0
    %2941 = vmatpush1.msra.mxu0 0.0
    %2942 = vmatprep.subr.mxu0 0.0
    %2943 = vmatpush1.msra.mxu0 0.0
    %2944 = vmatprep.subr.mxu0 0.0
    %2945 = vmatpush1.msra.mxu0 0.0
    %2946 = vmatprep.subr.mxu0 0.0
    %2947 = vmatpush1.msra.mxu0 0.0
    %2948 = vmatprep.subr.mxu0 0.0
    %2949 = vmatpush1.msra.mxu0 0.0
    %2950 = vmatprep.subr.mxu0 0.0
    %2951 = vmatpush1.msra.mxu0 0.0
    %2952 = vmatprep.subr.mxu0 0.0
    %2953 = vmatpush1.msra.mxu0 0.0
    %2954 = vmatprep.subr.mxu0 0.0
    %2955 = vmatpush1.msra.mxu0 0.0
    %2956 = vmatprep.subr.mxu0 0.0
    %2957 = vmatpush1.msra.mxu0 0.0
    %2958 = vmatprep.subr.mxu0 0.0
    %2959 = vmatpush1.msra.mxu0 0.0
    %2960 = vmatprep.subr.mxu0 0.0
    %2961 = vmatpush1.msra.mxu0 0.0
    %2962 = vmatprep.subr.mxu0 0.0
    %2963 = vmatpush1.msra.mxu0 0.0
    %2964 = vmatprep.subr.mxu0 0.0
    %2965 = vmatpush1.msra.mxu0 0.0
    %2966 = vmatprep.subr.mxu0 0.0
    %2967 = vmatpush1.msra.mxu0 0.0
    %2968 = vmatprep.subr.mxu0 0.0
    %2969 = vmatpush1.msra.mxu0 0.0
    %2970 = vmatprep.subr.mxu0 0.0
    %2971 = vmatpush1.msra.mxu0 0.0
    %2972 = vmatprep.subr.mxu0 0.0
    %2973 = vmatpush1.msra.mxu0 0.0
    %2974 = vmatprep.subr.mxu0 0.0
    %2975 = vmatpush1.msra.mxu0 0.0
    %2976 = vmatprep.subr.mxu0 0.0
    %2977 = vmatpush1.msra.mxu0 0.0
    %2978 = vmatprep.subr.mxu0 0.0
    %2979 = vmatpush1.msra.mxu0 0.0
    %2980 = vmatprep.subr.mxu0 0.0
    %2981 = vmatpush1.msra.mxu0 0.0
    %2982 = vmatprep.subr.mxu0 0.0
    %2983 = vmatpush1.msra.mxu0 0.0
    %2984 = vmatprep.subr.mxu0 0.0
    %2985 = vmatpush1.msra.mxu0 0.0
    %2986 = vmatprep.subr.mxu0 0.0
    %2987 = vmatpush1.msra.mxu0 0.0
    %2988 = vmatprep.subr.mxu0 0.0
    %2989 = vmatpush1.msra.mxu0 0.0
    %2990 = vmatprep.subr.mxu0 0.0
    %2991 = vmatpush1.msra.mxu0 0.0
    %2992 = vmatprep.subr.mxu0 0.0
    %2993 = vmatpush1.msra.mxu0 0.0
    %2994 = vmatprep.subr.mxu0 0.0
    %2995 = vmatpush1.msra.mxu0 0.0
    %2996 = vmatprep.subr.mxu0 0.0
    %2997 = vmatpush1.msra.mxu0 0.0
    %2998 = vmatprep.mubr.f32.mxu0 0.0
    %2999 = vmatmul.mubr.f32.gmra.mrb[0].mxu0 %v2932
    %v3000 = vpop.f32.mrb[0].mxu0
    %v3001 = vadd.f32 0.0, %v3000
    %v3002 = vpop.f32.mrb[0].mxu0
    %3003 = vdwg.mxu0
    %v3005 = vsel %vm524, %v2927, 0
    %3007 = vmatprep.subr.mxu0 0.0
    %3008 = vmatpush1.msra.mxu0 %v2930
    %3009 = vmatprep.subr.mxu0 0.0
    %3010 = vmatpush1.msra.mxu0 0.0
    %3011 = vmatprep.subr.mxu0 0.0
    %3012 = vmatpush1.msra.mxu0 0.0
    %3013 = vmatprep.subr.mxu0 0.0
    %3014 = vmatpush1.msra.mxu0 0.0
    %3015 = vmatprep.subr.mxu0 0.0
    %3016 = vmatpush1.msra.mxu0 0.0
    %3017 = vmatprep.subr.mxu0 0.0
    %3018 = vmatpush1.msra.mxu0 0.0
    %3019 = vmatprep.subr.mxu0 0.0
    %3020 = vmatpush1.msra.mxu0 0.0
    %3021 = vmatprep.subr.mxu0 0.0
    %3022 = vmatpush1.msra.mxu0 0.0
    %3023 = vmatprep.subr.mxu0 0.0
    %3024 = vmatpush1.msra.mxu0 0.0
    %3025 = vmatprep.subr.mxu0 0.0
    %3026 = vmatpush1.msra.mxu0 0.0
    %3027 = vmatprep.subr.mxu0 0.0
    %3028 = vmatpush1.msra.mxu0 0.0
    %3029 = vmatprep.subr.mxu0 0.0
    %3030 = vmatpush1.msra.mxu0 0.0
    %3031 = vmatprep.subr.mxu0 0.0
    %3032 = vmatpush1.msra.mxu0 0.0
    %3033 = vmatprep.subr.mxu0 0.0
    %3034 = vmatpush1.msra.mxu0 0.0
    %3035 = vmatprep.subr.mxu0 0.0
    %3036 = vmatpush1.msra.mxu0 0.0
    %3037 = vmatprep.subr.mxu0 0.0
    %3038 = vmatpush1.msra.mxu0 0.0
    %3039 = vmatprep.subr.mxu0 0.0
    %3040 = vmatpush1.msra.mxu0 0.0
    %3041 = vmatprep.subr.mxu0 0.0
    %3042 = vmatpush1.msra.mxu0 0.0
    %3043 = vmatprep.subr.mxu0 0.0
    %3044 = vmatpush1.msra.mxu0 0.0
    %3045 = vmatprep.subr.mxu0 0.0
    %3046 = vmatpush1.msra.mxu0 0.0
    %3047 = vmatprep.subr.mxu0 0.0
    %3048 = vmatpush1.msra.mxu0 0.0
    %3049 = vmatprep.subr.mxu0 0.0
    %3050 = vmatpush1.msra.mxu0 0.0
    %3051 = vmatprep.subr.mxu0 0.0
    %3052 = vmatpush1.msra.mxu0 0.0
    %3053 = vmatprep.subr.mxu0 0.0
    %3054 = vmatpush1.msra.mxu0 0.0
    %3055 = vmatprep.subr.mxu0 0.0
    %3056 = vmatpush1.msra.mxu0 0.0
    %3057 = vmatprep.subr.mxu0 0.0
    %3058 = vmatpush1.msra.mxu0 0.0
    %3059 = vmatprep.subr.mxu0 0.0
    %3060 = vmatpush1.msra.mxu0 0.0
    %3061 = vmatprep.subr.mxu0 0.0
    %3062 = vmatpush1.msra.mxu0 0.0
    %3063 = vmatprep.subr.mxu0 0.0
    %3064 = vmatpush1.msra.mxu0 0.0
    %3065 = vmatprep.subr.mxu0 0.0
    %3066 = vmatpush1.msra.mxu0 0.0
    %3067 = vmatprep.subr.mxu0 0.0
    %3068 = vmatpush1.msra.mxu0 0.0
    %3069 = vmatprep.subr.mxu0 0.0
    %3070 = vmatpush1.msra.mxu0 0.0
    %3071 = vmatprep.mubr.f32.mxu0 0.0
    %3072 = vmatmul.mubr.f32.gmra.mrb[0].mxu0 %v3005
    %v3073 = vpop.f32.mrb[0].mxu0
    %v3074 = vadd.f32 0.0, %v3073
    %v3075 = vpop.f32.mrb[0].mxu0
    %3076 = vdwg.mxu0
    %v3077 = vadd.f32 %v2924, %v3001
    %v3078 = vadd.f32 %v2925, %v3074
    %v3079 = vld [vmem:[#allocation4 + $0x9] sm:$0x1]
    %v3080 = vld [vmem:[#allocation4 + $0x29] sm:$0x1]
    %s3081 = scalar_lea.vmem %s7, 144
    %v3082 = vld [vmem:[%s3081] sm:$0xff]
    %v3083 = vld [vmem:[%s3081 + $0x8] sm:$0xff]
    %v3085 = vsel %vm524, %v3079, 0
    %3087 = vmatprep.subr.mxu0 0.0
    %3088 = vmatpush1.msra.mxu0 %v3082
    %3089 = vmatprep.subr.mxu0 0.0
    %3090 = vmatpush1.msra.mxu0 0.0
    %3091 = vmatprep.subr.mxu0 0.0
    %3092 = vmatpush1.msra.mxu0 0.0
    %3093 = vmatprep.subr.mxu0 0.0
    %3094 = vmatpush1.msra.mxu0 0.0
    %3095 = vmatprep.subr.mxu0 0.0
    %3096 = vmatpush1.msra.mxu0 0.0
    %3097 = vmatprep.subr.mxu0 0.0
    %3098 = vmatpush1.msra.mxu0 0.0
    %3099 = vmatprep.subr.mxu0 0.0
    %3100 = vmatpush1.msra.mxu0 0.0
    %3101 = vmatprep.subr.mxu0 0.0
    %3102 = vmatpush1.msra.mxu0 0.0
    %3103 = vmatprep.subr.mxu0 0.0
    %3104 = vmatpush1.msra.mxu0 0.0
    %3105 = vmatprep.subr.mxu0 0.0
    %3106 = vmatpush1.msra.mxu0 0.0
    %3107 = vmatprep.subr.mxu0 0.0
    %3108 = vmatpush1.msra.mxu0 0.0
    %3109 = vmatprep.subr.mxu0 0.0
    %3110 = vmatpush1.msra.mxu0 0.0
    %3111 = vmatprep.subr.mxu0 0.0
    %3112 = vmatpush1.msra.mxu0 0.0
    %3113 = vmatprep.subr.mxu0 0.0
    %3114 = vmatpush1.msra.mxu0 0.0
    %3115 = vmatprep.subr.mxu0 0.0
    %3116 = vmatpush1.msra.mxu0 0.0
    %3117 = vmatprep.subr.mxu0 0.0
    %3118 = vmatpush1.msra.mxu0 0.0
    %3119 = vmatprep.subr.mxu0 0.0
    %3120 = vmatpush1.msra.mxu0 0.0
    %3121 = vmatprep.subr.mxu0 0.0
    %3122 = vmatpush1.msra.mxu0 0.0
    %3123 = vmatprep.subr.mxu0 0.0
    %3124 = vmatpush1.msra.mxu0 0.0
    %3125 = vmatprep.subr.mxu0 0.0
    %3126 = vmatpush1.msra.mxu0 0.0
    %3127 = vmatprep.subr.mxu0 0.0
    %3128 = vmatpush1.msra.mxu0 0.0
    %3129 = vmatprep.subr.mxu0 0.0
    %3130 = vmatpush1.msra.mxu0 0.0
    %3131 = vmatprep.subr.mxu0 0.0
    %3132 = vmatpush1.msra.mxu0 0.0
    %3133 = vmatprep.subr.mxu0 0.0
    %3134 = vmatpush1.msra.mxu0 0.0
    %3135 = vmatprep.subr.mxu0 0.0
    %3136 = vmatpush1.msra.mxu0 0.0
    %3137 = vmatprep.subr.mxu0 0.0
    %3138 = vmatpush1.msra.mxu0 0.0
    %3139 = vmatprep.subr.mxu0 0.0
    %3140 = vmatpush1.msra.mxu0 0.0
    %3141 = vmatprep.subr.mxu0 0.0
    %3142 = vmatpush1.msra.mxu0 0.0
    %3143 = vmatprep.subr.mxu0 0.0
    %3144 = vmatpush1.msra.mxu0 0.0
    %3145 = vmatprep.subr.mxu0 0.0
    %3146 = vmatpush1.msra.mxu0 0.0
    %3147 = vmatprep.subr.mxu0 0.0
    %3148 = vmatpush1.msra.mxu0 0.0
    %3149 = vmatprep.subr.mxu0 0.0
    %3150 = vmatpush1.msra.mxu0 0.0
    %3151 = vmatprep.mubr.f32.mxu0 0.0
    %3152 = vmatmul.mubr.f32.gmra.mrb[0].mxu0 %v3085
    %v3153 = vpop.f32.mrb[0].mxu0
    %v3154 = vadd.f32 0.0, %v3153
    %v3155 = vpop.f32.mrb[0].mxu0
    %3156 = vdwg.mxu0
    %v3158 = vsel %vm524, %v3080, 0
    %3160 = vmatprep.subr.mxu0 0.0
    %3161 = vmatpush1.msra.mxu0 %v3083
    %3162 = vmatprep.subr.mxu0 0.0
    %3163 = vmatpush1.msra.mxu0 0.0
    %3164 = vmatprep.subr.mxu0 0.0
    %3165 = vmatpush1.msra.mxu0 0.0
    %3166 = vmatprep.subr.mxu0 0.0
    %3167 = vmatpush1.msra.mxu0 0.0
    %3168 = vmatprep.subr.mxu0 0.0
    %3169 = vmatpush1.msra.mxu0 0.0
    %3170 = vmatprep.subr.mxu0 0.0
    %3171 = vmatpush1.msra.mxu0 0.0
    %3172 = vmatprep.subr.mxu0 0.0
    %3173 = vmatpush1.msra.mxu0 0.0
    %3174 = vmatprep.subr.mxu0 0.0
    %3175 = vmatpush1.msra.mxu0 0.0
    %3176 = vmatprep.subr.mxu0 0.0
    %3177 = vmatpush1.msra.mxu0 0.0
    %3178 = vmatprep.subr.mxu0 0.0
    %3179 = vmatpush1.msra.mxu0 0.0
    %3180 = vmatprep.subr.mxu0 0.0
    %3181 = vmatpush1.msra.mxu0 0.0
    %3182 = vmatprep.subr.mxu0 0.0
    %3183 = vmatpush1.msra.mxu0 0.0
    %3184 = vmatprep.subr.mxu0 0.0
    %3185 = vmatpush1.msra.mxu0 0.0
    %3186 = vmatprep.subr.mxu0 0.0
    %3187 = vmatpush1.msra.mxu0 0.0
    %3188 = vmatprep.subr.mxu0 0.0
    %3189 = vmatpush1.msra.mxu0 0.0
    %3190 = vmatprep.subr.mxu0 0.0
    %3191 = vmatpush1.msra.mxu0 0.0
    %3192 = vmatprep.subr.mxu0 0.0
    %3193 = vmatpush1.msra.mxu0 0.0
    %3194 = vmatprep.subr.mxu0 0.0
    %3195 = vmatpush1.msra.mxu0 0.0
    %3196 = vmatprep.subr.mxu0 0.0
    %3197 = vmatpush1.msra.mxu0 0.0
    %3198 = vmatprep.subr.mxu0 0.0
    %3199 = vmatpush1.msra.mxu0 0.0
    %3200 = vmatprep.subr.mxu0 0.0
    %3201 = vmatpush1.msra.mxu0 0.0
    %3202 = vmatprep.subr.mxu0 0.0
    %3203 = vmatpush1.msra.mxu0 0.0
    %3204 = vmatprep.subr.mxu0 0.0
    %3205 = vmatpush1.msra.mxu0 0.0
    %3206 = vmatprep.subr.mxu0 0.0
    %3207 = vmatpush1.msra.mxu0 0.0
    %3208 = vmatprep.subr.mxu0 0.0
    %3209 = vmatpush1.msra.mxu0 0.0
    %3210 = vmatprep.subr.mxu0 0.0
    %3211 = vmatpush1.msra.mxu0 0.0
    %3212 = vmatprep.subr.mxu0 0.0
    %3213 = vmatpush1.msra.mxu0 0.0
    %3214 = vmatprep.subr.mxu0 0.0
    %3215 = vmatpush1.msra.mxu0 0.0
    %3216 = vmatprep.subr.mxu0 0.0
    %3217 = vmatpush1.msra.mxu0 0.0
    %3218 = vmatprep.subr.mxu0 0.0
    %3219 = vmatpush1.msra.mxu0 0.0
    %3220 = vmatprep.subr.mxu0 0.0
    %3221 = vmatpush1.msra.mxu0 0.0
    %3222 = vmatprep.subr.mxu0 0.0
    %3223 = vmatpush1.msra.mxu0 0.0
    %3224 = vmatprep.mubr.f32.mxu0 0.0
    %3225 = vmatmul.mubr.f32.gmra.mrb[0].mxu0 %v3158
    %v3226 = vpop.f32.mrb[0].mxu0
    %v3227 = vadd.f32 0.0, %v3226
    %v3228 = vpop.f32.mrb[0].mxu0
    %3229 = vdwg.mxu0
    %v3230 = vadd.f32 %v3077, %v3154
    %v3231 = vadd.f32 %v3078, %v3227
    %v3232 = vld [vmem:[#allocation4 + $0xa] sm:$0x1]
    %v3233 = vld [vmem:[#allocation4 + $0x2a] sm:$0x1]
    %s3234 = scalar_lea.vmem %s7, 160
    %v3235 = vld [vmem:[%s3234] sm:$0xff]
    %v3236 = vld [vmem:[%s3234 + $0x8] sm:$0xff]
    %v3238 = vsel %vm524, %v3232, 0
    %3240 = vmatprep.subr.mxu0 0.0
    %3241 = vmatpush1.msra.mxu0 %v3235
    %3242 = vmatprep.subr.mxu0 0.0
    %3243 = vmatpush1.msra.mxu0 0.0
    %3244 = vmatprep.subr.mxu0 0.0
    %3245 = vmatpush1.msra.mxu0 0.0
    %3246 = vmatprep.subr.mxu0 0.0
    %3247 = vmatpush1.msra.mxu0 0.0
    %3248 = vmatprep.subr.mxu0 0.0
    %3249 = vmatpush1.msra.mxu0 0.0
    %3250 = vmatprep.subr.mxu0 0.0
    %3251 = vmatpush1.msra.mxu0 0.0
    %3252 = vmatprep.subr.mxu0 0.0
    %3253 = vmatpush1.msra.mxu0 0.0
    %3254 = vmatprep.subr.mxu0 0.0
    %3255 = vmatpush1.msra.mxu0 0.0
    %3256 = vmatprep.subr.mxu0 0.0
    %3257 = vmatpush1.msra.mxu0 0.0
    %3258 = vmatprep.subr.mxu0 0.0
    %3259 = vmatpush1.msra.mxu0 0.0
    %3260 = vmatprep.subr.mxu0 0.0
    %3261 = vmatpush1.msra.mxu0 0.0
    %3262 = vmatprep.subr.mxu0 0.0
    %3263 = vmatpush1.msra.mxu0 0.0
    %3264 = vmatprep.subr.mxu0 0.0
    %3265 = vmatpush1.msra.mxu0 0.0
    %3266 = vmatprep.subr.mxu0 0.0
    %3267 = vmatpush1.msra.mxu0 0.0
    %3268 = vmatprep.subr.mxu0 0.0
    %3269 = vmatpush1.msra.mxu0 0.0
    %3270 = vmatprep.subr.mxu0 0.0
    %3271 = vmatpush1.msra.mxu0 0.0
    %3272 = vmatprep.subr.mxu0 0.0
    %3273 = vmatpush1.msra.mxu0 0.0
    %3274 = vmatprep.subr.mxu0 0.0
    %3275 = vmatpush1.msra.mxu0 0.0
    %3276 = vmatprep.subr.mxu0 0.0
    %3277 = vmatpush1.msra.mxu0 0.0
    %3278 = vmatprep.subr.mxu0 0.0
    %3279 = vmatpush1.msra.mxu0 0.0
    %3280 = vmatprep.subr.mxu0 0.0
    %3281 = vmatpush1.msra.mxu0 0.0
    %3282 = vmatprep.subr.mxu0 0.0
    %3283 = vmatpush1.msra.mxu0 0.0
    %3284 = vmatprep.subr.mxu0 0.0
    %3285 = vmatpush1.msra.mxu0 0.0
    %3286 = vmatprep.subr.mxu0 0.0
    %3287 = vmatpush1.msra.mxu0 0.0
    %3288 = vmatprep.subr.mxu0 0.0
    %3289 = vmatpush1.msra.mxu0 0.0
    %3290 = vmatprep.subr.mxu0 0.0
    %3291 = vmatpush1.msra.mxu0 0.0
    %3292 = vmatprep.subr.mxu0 0.0
    %3293 = vmatpush1.msra.mxu0 0.0
    %3294 = vmatprep.subr.mxu0 0.0
    %3295 = vmatpush1.msra.mxu0 0.0
    %3296 = vmatprep.subr.mxu0 0.0
    %3297 = vmatpush1.msra.mxu0 0.0
    %3298 = vmatprep.subr.mxu0 0.0
    %3299 = vmatpush1.msra.mxu0 0.0
    %3300 = vmatprep.subr.mxu0 0.0
    %3301 = vmatpush1.msra.mxu0 0.0
    %3302 = vmatprep.subr.mxu0 0.0
    %3303 = vmatpush1.msra.mxu0 0.0
    %3304 = vmatprep.mubr.f32.mxu0 0.0
    %3305 = vmatmul.mubr.f32.gmra.mrb[0].mxu0 %v3238
    %v3306 = vpop.f32.mrb[0].mxu0
    %v3307 = vadd.f32 0.0, %v3306
    %v3308 = vpop.f32.mrb[0].mxu0
    %3309 = vdwg.mxu0
    %v3311 = vsel %vm524, %v3233, 0
    %3313 = vmatprep.subr.mxu0 0.0
    %3314 = vmatpush1.msra.mxu0 %v3236
    %3315 = vmatprep.subr.mxu0 0.0
    %3316 = vmatpush1.msra.mxu0 0.0
    %3317 = vmatprep.subr.mxu0 0.0
    %3318 = vmatpush1.msra.mxu0 0.0
    %3319 = vmatprep.subr.mxu0 0.0
    %3320 = vmatpush1.msra.mxu0 0.0
    %3321 = vmatprep.subr.mxu0 0.0
    %3322 = vmatpush1.msra.mxu0 0.0
    %3323 = vmatprep.subr.mxu0 0.0
    %3324 = vmatpush1.msra.mxu0 0.0
    %3325 = vmatprep.subr.mxu0 0.0
    %3326 = vmatpush1.msra.mxu0 0.0
    %3327 = vmatprep.subr.mxu0 0.0
    %3328 = vmatpush1.msra.mxu0 0.0
    %3329 = vmatprep.subr.mxu0 0.0
    %3330 = vmatpush1.msra.mxu0 0.0
    %3331 = vmatprep.subr.mxu0 0.0
    %3332 = vmatpush1.msra.mxu0 0.0
    %3333 = vmatprep.subr.mxu0 0.0
    %3334 = vmatpush1.msra.mxu0 0.0
    %3335 = vmatprep.subr.mxu0 0.0
    %3336 = vmatpush1.msra.mxu0 0.0
    %3337 = vmatprep.subr.mxu0 0.0
    %3338 = vmatpush1.msra.mxu0 0.0
    %3339 = vmatprep.subr.mxu0 0.0
    %3340 = vmatpush1.msra.mxu0 0.0
    %3341 = vmatprep.subr.mxu0 0.0
    %3342 = vmatpush1.msra.mxu0 0.0
    %3343 = vmatprep.subr.mxu0 0.0
    %3344 = vmatpush1.msra.mxu0 0.0
    %3345 = vmatprep.subr.mxu0 0.0
    %3346 = vmatpush1.msra.mxu0 0.0
    %3347 = vmatprep.subr.mxu0 0.0
    %3348 = vmatpush1.msra.mxu0 0.0
    %3349 = vmatprep.subr.mxu0 0.0
    %3350 = vmatpush1.msra.mxu0 0.0
    %3351 = vmatprep.subr.mxu0 0.0
    %3352 = vmatpush1.msra.mxu0 0.0
    %3353 = vmatprep.subr.mxu0 0.0
    %3354 = vmatpush1.msra.mxu0 0.0
    %3355 = vmatprep.subr.mxu0 0.0
    %3356 = vmatpush1.msra.mxu0 0.0
    %3357 = vmatprep.subr.mxu0 0.0
    %3358 = vmatpush1.msra.mxu0 0.0
    %3359 = vmatprep.subr.mxu0 0.0
    %3360 = vmatpush1.msra.mxu0 0.0
    %3361 = vmatprep.subr.mxu0 0.0
    %3362 = vmatpush1.msra.mxu0 0.0
    %3363 = vmatprep.subr.mxu0 0.0
    %3364 = vmatpush1.msra.mxu0 0.0
    %3365 = vmatprep.subr.mxu0 0.0
    %3366 = vmatpush1.msra.mxu0 0.0
    %3367 = vmatprep.subr.mxu0 0.0
    %3368 = vmatpush1.msra.mxu0 0.0
    %3369 = vmatprep.subr.mxu0 0.0
    %3370 = vmatpush1.msra.mxu0 0.0
    %3371 = vmatprep.subr.mxu0 0.0
    %3372 = vmatpush1.msra.mxu0 0.0
    %3373 = vmatprep.subr.mxu0 0.0
    %3374 = vmatpush1.msra.mxu0 0.0
    %3375 = vmatprep.subr.mxu0 0.0
    %3376 = vmatpush1.msra.mxu0 0.0
    %3377 = vmatprep.mubr.f32.mxu0 0.0
    %3378 = vmatmul.mubr.f32.gmra.mrb[0].mxu0 %v3311
    %v3379 = vpop.f32.mrb[0].mxu0
    %v3380 = vadd.f32 0.0, %v3379
    %v3381 = vpop.f32.mrb[0].mxu0
    %3382 = vdwg.mxu0
    %v3383 = vadd.f32 %v3230, %v3307
    %v3384 = vadd.f32 %v3231, %v3380
    %v3385 = vld [vmem:[#allocation4 + $0xb] sm:$0x1]
    %v3386 = vld [vmem:[#allocation4 + $0x2b] sm:$0x1]
    %s3387 = scalar_lea.vmem %s7, 176
    %v3388 = vld [vmem:[%s3387] sm:$0xff]
    %v3389 = vld [vmem:[%s3387 + $0x8] sm:$0xff]
    %v3391 = vsel %vm524, %v3385, 0
    %3393 = vmatprep.subr.mxu0 0.0
    %3394 = vmatpush1.msra.mxu0 %v3388
    %3395 = vmatprep.subr.mxu0 0.0
    %3396 = vmatpush1.msra.mxu0 0.0
    %3397 = vmatprep.subr.mxu0 0.0
    %3398 = vmatpush1.msra.mxu0 0.0
    %3399 = vmatprep.subr.mxu0 0.0
    %3400 = vmatpush1.msra.mxu0 0.0
    %3401 = vmatprep.subr.mxu0 0.0
    %3402 = vmatpush1.msra.mxu0 0.0
    %3403 = vmatprep.subr.mxu0 0.0
    %3404 = vmatpush1.msra.mxu0 0.0
    %3405 = vmatprep.subr.mxu0 0.0
    %3406 = vmatpush1.msra.mxu0 0.0
    %3407 = vmatprep.subr.mxu0 0.0
    %3408 = vmatpush1.msra.mxu0 0.0
    %3409 = vmatprep.subr.mxu0 0.0
    %3410 = vmatpush1.msra.mxu0 0.0
    %3411 = vmatprep.subr.mxu0 0.0
    %3412 = vmatpush1.msra.mxu0 0.0
    %3413 = vmatprep.subr.mxu0 0.0
    %3414 = vmatpush1.msra.mxu0 0.0
    %3415 = vmatprep.subr.mxu0 0.0
    %3416 = vmatpush1.msra.mxu0 0.0
    %3417 = vmatprep.subr.mxu0 0.0
    %3418 = vmatpush1.msra.mxu0 0.0
    %3419 = vmatprep.subr.mxu0 0.0
    %3420 = vmatpush1.msra.mxu0 0.0
    %3421 = vmatprep.subr.mxu0 0.0
    %3422 = vmatpush1.msra.mxu0 0.0
    %3423 = vmatprep.subr.mxu0 0.0
    %3424 = vmatpush1.msra.mxu0 0.0
    %3425 = vmatprep.subr.mxu0 0.0
    %3426 = vmatpush1.msra.mxu0 0.0
    %3427 = vmatprep.subr.mxu0 0.0
    %3428 = vmatpush1.msra.mxu0 0.0
    %3429 = vmatprep.subr.mxu0 0.0
    %3430 = vmatpush1.msra.mxu0 0.0
    %3431 = vmatprep.subr.mxu0 0.0
    %3432 = vmatpush1.msra.mxu0 0.0
    %3433 = vmatprep.subr.mxu0 0.0
    %3434 = vmatpush1.msra.mxu0 0.0
    %3435 = vmatprep.subr.mxu0 0.0
    %3436 = vmatpush1.msra.mxu0 0.0
    %3437 = vmatprep.subr.mxu0 0.0
    %3438 = vmatpush1.msra.mxu0 0.0
    %3439 = vmatprep.subr.mxu0 0.0
    %3440 = vmatpush1.msra.mxu0 0.0
    %3441 = vmatprep.subr.mxu0 0.0
    %3442 = vmatpush1.msra.mxu0 0.0
    %3443 = vmatprep.subr.mxu0 0.0
    %3444 = vmatpush1.msra.mxu0 0.0
    %3445 = vmatprep.subr.mxu0 0.0
    %3446 = vmatpush1.msra.mxu0 0.0
    %3447 = vmatprep.subr.mxu0 0.0
    %3448 = vmatpush1.msra.mxu0 0.0
    %3449 = vmatprep.subr.mxu0 0.0
    %3450 = vmatpush1.msra.mxu0 0.0
    %3451 = vmatprep.subr.mxu0 0.0
    %3452 = vmatpush1.msra.mxu0 0.0
    %3453 = vmatprep.subr.mxu0 0.0
    %3454 = vmatpush1.msra.mxu0 0.0
    %3455 = vmatprep.subr.mxu0 0.0
    %3456 = vmatpush1.msra.mxu0 0.0
    %3457 = vmatprep.mubr.f32.mxu0 0.0
    %3458 = vmatmul.mubr.f32.gmra.mrb[0].mxu0 %v3391
    %v3459 = vpop.f32.mrb[0].mxu0
    %v3460 = vadd.f32 0.0, %v3459
    %v3461 = vpop.f32.mrb[0].mxu0
    %3462 = vdwg.mxu0
    %v3464 = vsel %vm524, %v3386, 0
    %3466 = vmatprep.subr.mxu0 0.0
    %3467 = vmatpush1.msra.mxu0 %v3389
    %3468 = vmatprep.subr.mxu0 0.0
    %3469 = vmatpush1.msra.mxu0 0.0
    %3470 = vmatprep.subr.mxu0 0.0
    %3471 = vmatpush1.msra.mxu0 0.0
    %3472 = vmatprep.subr.mxu0 0.0
    %3473 = vmatpush1.msra.mxu0 0.0
    %3474 = vmatprep.subr.mxu0 0.0
    %3475 = vmatpush1.msra.mxu0 0.0
    %3476 = vmatprep.subr.mxu0 0.0
    %3477 = vmatpush1.msra.mxu0 0.0
    %3478 = vmatprep.subr.mxu0 0.0
    %3479 = vmatpush1.msra.mxu0 0.0
    %3480 = vmatprep.subr.mxu0 0.0
    %3481 = vmatpush1.msra.mxu0 0.0
    %3482 = vmatprep.subr.mxu0 0.0
    %3483 = vmatpush1.msra.mxu0 0.0
    %3484 = vmatprep.subr.mxu0 0.0
    %3485 = vmatpush1.msra.mxu0 0.0
    %3486 = vmatprep.subr.mxu0 0.0
    %3487 = vmatpush1.msra.mxu0 0.0
    %3488 = vmatprep.subr.mxu0 0.0
    %3489 = vmatpush1.msra.mxu0 0.0
    %3490 = vmatprep.subr.mxu0 0.0
    %3491 = vmatpush1.msra.mxu0 0.0
    %3492 = vmatprep.subr.mxu0 0.0
    %3493 = vmatpush1.msra.mxu0 0.0
    %3494 = vmatprep.subr.mxu0 0.0
    %3495 = vmatpush1.msra.mxu0 0.0
    %3496 = vmatprep.subr.mxu0 0.0
    %3497 = vmatpush1.msra.mxu0 0.0
    %3498 = vmatprep.subr.mxu0 0.0
    %3499 = vmatpush1.msra.mxu0 0.0
    %3500 = vmatprep.subr.mxu0 0.0
    %3501 = vmatpush1.msra.mxu0 0.0
    %3502 = vmatprep.subr.mxu0 0.0
    %3503 = vmatpush1.msra.mxu0 0.0
    %3504 = vmatprep.subr.mxu0 0.0
    %3505 = vmatpush1.msra.mxu0 0.0
    %3506 = vmatprep.subr.mxu0 0.0
    %3507 = vmatpush1.msra.mxu0 0.0
    %3508 = vmatprep.subr.mxu0 0.0
    %3509 = vmatpush1.msra.mxu0 0.0
    %3510 = vmatprep.subr.mxu0 0.0
    %3511 = vmatpush1.msra.mxu0 0.0
    %3512 = vmatprep.subr.mxu0 0.0
    %3513 = vmatpush1.msra.mxu0 0.0
    %3514 = vmatprep.subr.mxu0 0.0
    %3515 = vmatpush1.msra.mxu0 0.0
    %3516 = vmatprep.subr.mxu0 0.0
    %3517 = vmatpush1.msra.mxu0 0.0
    %3518 = vmatprep.subr.mxu0 0.0
    %3519 = vmatpush1.msra.mxu0 0.0
    %3520 = vmatprep.subr.mxu0 0.0
    %3521 = vmatpush1.msra.mxu0 0.0
    %3522 = vmatprep.subr.mxu0 0.0
    %3523 = vmatpush1.msra.mxu0 0.0
    %3524 = vmatprep.subr.mxu0 0.0
    %3525 = vmatpush1.msra.mxu0 0.0
    %3526 = vmatprep.subr.mxu0 0.0
    %3527 = vmatpush1.msra.mxu0 0.0
    %3528 = vmatprep.subr.mxu0 0.0
    %3529 = vmatpush1.msra.mxu0 0.0
    %3530 = vmatprep.mubr.f32.mxu0 0.0
    %3531 = vmatmul.mubr.f32.gmra.mrb[0].mxu0 %v3464
    %v3532 = vpop.f32.mrb[0].mxu0
    %v3533 = vadd.f32 0.0, %v3532
    %v3534 = vpop.f32.mrb[0].mxu0
    %3535 = vdwg.mxu0
    %v3536 = vadd.f32 %v3383, %v3460
    %v3537 = vadd.f32 %v3384, %v3533
    %v3538 = vld [vmem:[#allocation4 + $0xc] sm:$0x1]
    %v3539 = vld [vmem:[#allocation4 + $0x2c] sm:$0x1]
    %s3540 = scalar_lea.vmem %s7, 192
    %v3541 = vld [vmem:[%s3540] sm:$0xff]
    %v3542 = vld [vmem:[%s3540 + $0x8] sm:$0xff]
    %v3544 = vsel %vm524, %v3538, 0
    %3546 = vmatprep.subr.mxu0 0.0
    %3547 = vmatpush1.msra.mxu0 %v3541
    %3548 = vmatprep.subr.mxu0 0.0
    %3549 = vmatpush1.msra.mxu0 0.0
    %3550 = vmatprep.subr.mxu0 0.0
    %3551 = vmatpush1.msra.mxu0 0.0
    %3552 = vmatprep.subr.mxu0 0.0
    %3553 = vmatpush1.msra.mxu0 0.0
    %3554 = vmatprep.subr.mxu0 0.0
    %3555 = vmatpush1.msra.mxu0 0.0
    %3556 = vmatprep.subr.mxu0 0.0
    %3557 = vmatpush1.msra.mxu0 0.0
    %3558 = vmatprep.subr.mxu0 0.0
    %3559 = vmatpush1.msra.mxu0 0.0
    %3560 = vmatprep.subr.mxu0 0.0
    %3561 = vmatpush1.msra.mxu0 0.0
    %3562 = vmatprep.subr.mxu0 0.0
    %3563 = vmatpush1.msra.mxu0 0.0
    %3564 = vmatprep.subr.mxu0 0.0
    %3565 = vmatpush1.msra.mxu0 0.0
    %3566 = vmatprep.subr.mxu0 0.0
    %3567 = vmatpush1.msra.mxu0 0.0
    %3568 = vmatprep.subr.mxu0 0.0
    %3569 = vmatpush1.msra.mxu0 0.0
    %3570 = vmatprep.subr.mxu0 0.0
    %3571 = vmatpush1.msra.mxu0 0.0
    %3572 = vmatprep.subr.mxu0 0.0
    %3573 = vmatpush1.msra.mxu0 0.0
    %3574 = vmatprep.subr.mxu0 0.0
    %3575 = vmatpush1.msra.mxu0 0.0
    %3576 = vmatprep.subr.mxu0 0.0
    %3577 = vmatpush1.msra.mxu0 0.0
    %3578 = vmatprep.subr.mxu0 0.0
    %3579 = vmatpush1.msra.mxu0 0.0
    %3580 = vmatprep.subr.mxu0 0.0
    %3581 = vmatpush1.msra.mxu0 0.0
    %3582 = vmatprep.subr.mxu0 0.0
    %3583 = vmatpush1.msra.mxu0 0.0
    %3584 = vmatprep.subr.mxu0 0.0
    %3585 = vmatpush1.msra.mxu0 0.0
    %3586 = vmatprep.subr.mxu0 0.0
    %3587 = vmatpush1.msra.mxu0 0.0
    %3588 = vmatprep.subr.mxu0 0.0
    %3589 = vmatpush1.msra.mxu0 0.0
    %3590 = vmatprep.subr.mxu0 0.0
    %3591 = vmatpush1.msra.mxu0 0.0
    %3592 = vmatprep.subr.mxu0 0.0
    %3593 = vmatpush1.msra.mxu0 0.0
    %3594 = vmatprep.subr.mxu0 0.0
    %3595 = vmatpush1.msra.mxu0 0.0
    %3596 = vmatprep.subr.mxu0 0.0
    %3597 = vmatpush1.msra.mxu0 0.0
    %3598 = vmatprep.subr.mxu0 0.0
    %3599 = vmatpush1.msra.mxu0 0.0
    %3600 = vmatprep.subr.mxu0 0.0
    %3601 = vmatpush1.msra.mxu0 0.0
    %3602 = vmatprep.subr.mxu0 0.0
    %3603 = vmatpush1.msra.mxu0 0.0
    %3604 = vmatprep.subr.mxu0 0.0
    %3605 = vmatpush1.msra.mxu0 0.0
    %3606 = vmatprep.subr.mxu0 0.0
    %3607 = vmatpush1.msra.mxu0 0.0
    %3608 = vmatprep.subr.mxu0 0.0
    %3609 = vmatpush1.msra.mxu0 0.0
    %3610 = vmatprep.mubr.f32.mxu0 0.0
    %3611 = vmatmul.mubr.f32.gmra.mrb[0].mxu0 %v3544
    %v3612 = vpop.f32.mrb[0].mxu0
    %v3613 = vadd.f32 0.0, %v3612
    %v3614 = vpop.f32.mrb[0].mxu0
    %3615 = vdwg.mxu0
    %v3617 = vsel %vm524, %v3539, 0
    %3619 = vmatprep.subr.mxu0 0.0
    %3620 = vmatpush1.msra.mxu0 %v3542
    %3621 = vmatprep.subr.mxu0 0.0
    %3622 = vmatpush1.msra.mxu0 0.0
    %3623 = vmatprep.subr.mxu0 0.0
    %3624 = vmatpush1.msra.mxu0 0.0
    %3625 = vmatprep.subr.mxu0 0.0
    %3626 = vmatpush1.msra.mxu0 0.0
    %3627 = vmatprep.subr.mxu0 0.0
    %3628 = vmatpush1.msra.mxu0 0.0
    %3629 = vmatprep.subr.mxu0 0.0
    %3630 = vmatpush1.msra.mxu0 0.0
    %3631 = vmatprep.subr.mxu0 0.0
    %3632 = vmatpush1.msra.mxu0 0.0
    %3633 = vmatprep.subr.mxu0 0.0
    %3634 = vmatpush1.msra.mxu0 0.0
    %3635 = vmatprep.subr.mxu0 0.0
    %3636 = vmatpush1.msra.mxu0 0.0
    %3637 = vmatprep.subr.mxu0 0.0
    %3638 = vmatpush1.msra.mxu0 0.0
    %3639 = vmatprep.subr.mxu0 0.0
    %3640 = vmatpush1.msra.mxu0 0.0
    %3641 = vmatprep.subr.mxu0 0.0
    %3642 = vmatpush1.msra.mxu0 0.0
    %3643 = vmatprep.subr.mxu0 0.0
    %3644 = vmatpush1.msra.mxu0 0.0
    %3645 = vmatprep.subr.mxu0 0.0
    %3646 = vmatpush1.msra.mxu0 0.0
    %3647 = vmatprep.subr.mxu0 0.0
    %3648 = vmatpush1.msra.mxu0 0.0
    %3649 = vmatprep.subr.mxu0 0.0
    %3650 = vmatpush1.msra.mxu0 0.0
    %3651 = vmatprep.subr.mxu0 0.0
    %3652 = vmatpush1.msra.mxu0 0.0
    %3653 = vmatprep.subr.mxu0 0.0
    %3654 = vmatpush1.msra.mxu0 0.0
    %3655 = vmatprep.subr.mxu0 0.0
    %3656 = vmatpush1.msra.mxu0 0.0
    %3657 = vmatprep.subr.mxu0 0.0
    %3658 = vmatpush1.msra.mxu0 0.0
    %3659 = vmatprep.subr.mxu0 0.0
    %3660 = vmatpush1.msra.mxu0 0.0
    %3661 = vmatprep.subr.mxu0 0.0
    %3662 = vmatpush1.msra.mxu0 0.0
    %3663 = vmatprep.subr.mxu0 0.0
    %3664 = vmatpush1.msra.mxu0 0.0
    %3665 = vmatprep.subr.mxu0 0.0
    %3666 = vmatpush1.msra.mxu0 0.0
    %3667 = vmatprep.subr.mxu0 0.0
    %3668 = vmatpush1.msra.mxu0 0.0
    %3669 = vmatprep.subr.mxu0 0.0
    %3670 = vmatpush1.msra.mxu0 0.0
    %3671 = vmatprep.subr.mxu0 0.0
    %3672 = vmatpush1.msra.mxu0 0.0
    %3673 = vmatprep.subr.mxu0 0.0
    %3674 = vmatpush1.msra.mxu0 0.0
    %3675 = vmatprep.subr.mxu0 0.0
    %3676 = vmatpush1.msra.mxu0 0.0
    %3677 = vmatprep.subr.mxu0 0.0
    %3678 = vmatpush1.msra.mxu0 0.0
    %3679 = vmatprep.subr.mxu0 0.0
    %3680 = vmatpush1.msra.mxu0 0.0
    %3681 = vmatprep.subr.mxu0 0.0
    %3682 = vmatpush1.msra.mxu0 0.0
    %3683 = vmatprep.mubr.f32.mxu0 0.0
    %3684 = vmatmul.mubr.f32.gmra.mrb[0].mxu0 %v3617
    %v3685 = vpop.f32.mrb[0].mxu0
    %v3686 = vadd.f32 0.0, %v3685
    %v3687 = vpop.f32.mrb[0].mxu0
    %3688 = vdwg.mxu0
    %v3689 = vadd.f32 %v3536, %v3613
    %v3690 = vadd.f32 %v3537, %v3686
    %v3691 = vld [vmem:[#allocation4 + $0xd] sm:$0x1]
    %v3692 = vld [vmem:[#allocation4 + $0x2d] sm:$0x1]
    %s3693 = scalar_lea.vmem %s7, 208
    %v3694 = vld [vmem:[%s3693] sm:$0xff]
    %v3695 = vld [vmem:[%s3693 + $0x8] sm:$0xff]
    %v3697 = vsel %vm524, %v3691, 0
    %3699 = vmatprep.subr.mxu0 0.0
    %3700 = vmatpush1.msra.mxu0 %v3694
    %3701 = vmatprep.subr.mxu0 0.0
    %3702 = vmatpush1.msra.mxu0 0.0
    %3703 = vmatprep.subr.mxu0 0.0
    %3704 = vmatpush1.msra.mxu0 0.0
    %3705 = vmatprep.subr.mxu0 0.0
    %3706 = vmatpush1.msra.mxu0 0.0
    %3707 = vmatprep.subr.mxu0 0.0
    %3708 = vmatpush1.msra.mxu0 0.0
    %3709 = vmatprep.subr.mxu0 0.0
    %3710 = vmatpush1.msra.mxu0 0.0
    %3711 = vmatprep.subr.mxu0 0.0
    %3712 = vmatpush1.msra.mxu0 0.0
    %3713 = vmatprep.subr.mxu0 0.0
    %3714 = vmatpush1.msra.mxu0 0.0
    %3715 = vmatprep.subr.mxu0 0.0
    %3716 = vmatpush1.msra.mxu0 0.0
    %3717 = vmatprep.subr.mxu0 0.0
    %3718 = vmatpush1.msra.mxu0 0.0
    %3719 = vmatprep.subr.mxu0 0.0
    %3720 = vmatpush1.msra.mxu0 0.0
    %3721 = vmatprep.subr.mxu0 0.0
    %3722 = vmatpush1.msra.mxu0 0.0
    %3723 = vmatprep.subr.mxu0 0.0
    %3724 = vmatpush1.msra.mxu0 0.0
    %3725 = vmatprep.subr.mxu0 0.0
    %3726 = vmatpush1.msra.mxu0 0.0
    %3727 = vmatprep.subr.mxu0 0.0
    %3728 = vmatpush1.msra.mxu0 0.0
    %3729 = vmatprep.subr.mxu0 0.0
    %3730 = vmatpush1.msra.mxu0 0.0
    %3731 = vmatprep.subr.mxu0 0.0
    %3732 = vmatpush1.msra.mxu0 0.0
    %3733 = vmatprep.subr.mxu0 0.0
    %3734 = vmatpush1.msra.mxu0 0.0
    %3735 = vmatprep.subr.mxu0 0.0
    %3736 = vmatpush1.msra.mxu0 0.0
    %3737 = vmatprep.subr.mxu0 0.0
    %3738 = vmatpush1.msra.mxu0 0.0
    %3739 = vmatprep.subr.mxu0 0.0
    %3740 = vmatpush1.msra.mxu0 0.0
    %3741 = vmatprep.subr.mxu0 0.0
    %3742 = vmatpush1.msra.mxu0 0.0
    %3743 = vmatprep.subr.mxu0 0.0
    %3744 = vmatpush1.msra.mxu0 0.0
    %3745 = vmatprep.subr.mxu0 0.0
    %3746 = vmatpush1.msra.mxu0 0.0
    %3747 = vmatprep.subr.mxu0 0.0
    %3748 = vmatpush1.msra.mxu0 0.0
    %3749 = vmatprep.subr.mxu0 0.0
    %3750 = vmatpush1.msra.mxu0 0.0
    %3751 = vmatprep.subr.mxu0 0.0
    %3752 = vmatpush1.msra.mxu0 0.0
    %3753 = vmatprep.subr.mxu0 0.0
    %3754 = vmatpush1.msra.mxu0 0.0
    %3755 = vmatprep.subr.mxu0 0.0
    %3756 = vmatpush1.msra.mxu0 0.0
    %3757 = vmatprep.subr.mxu0 0.0
    %3758 = vmatpush1.msra.mxu0 0.0
    %3759 = vmatprep.subr.mxu0 0.0
    %3760 = vmatpush1.msra.mxu0 0.0
    %3761 = vmatprep.subr.mxu0 0.0
    %3762 = vmatpush1.msra.mxu0 0.0
    %3763 = vmatprep.mubr.f32.mxu0 0.0
    %3764 = vmatmul.mubr.f32.gmra.mrb[0].mxu0 %v3697
    %v3765 = vpop.f32.mrb[0].mxu0
    %v3766 = vadd.f32 0.0, %v3765
    %v3767 = vpop.f32.mrb[0].mxu0
    %3768 = vdwg.mxu0
    %v3770 = vsel %vm524, %v3692, 0
    %3772 = vmatprep.subr.mxu0 0.0
    %3773 = vmatpush1.msra.mxu0 %v3695
    %3774 = vmatprep.subr.mxu0 0.0
    %3775 = vmatpush1.msra.mxu0 0.0
    %3776 = vmatprep.subr.mxu0 0.0
    %3777 = vmatpush1.msra.mxu0 0.0
    %3778 = vmatprep.subr.mxu0 0.0
    %3779 = vmatpush1.msra.mxu0 0.0
    %3780 = vmatprep.subr.mxu0 0.0
    %3781 = vmatpush1.msra.mxu0 0.0
    %3782 = vmatprep.subr.mxu0 0.0
    %3783 = vmatpush1.msra.mxu0 0.0
    %3784 = vmatprep.subr.mxu0 0.0
    %3785 = vmatpush1.msra.mxu0 0.0
    %3786 = vmatprep.subr.mxu0 0.0
    %3787 = vmatpush1.msra.mxu0 0.0
    %3788 = vmatprep.subr.mxu0 0.0
    %3789 = vmatpush1.msra.mxu0 0.0
    %3790 = vmatprep.subr.mxu0 0.0
    %3791 = vmatpush1.msra.mxu0 0.0
    %3792 = vmatprep.subr.mxu0 0.0
    %3793 = vmatpush1.msra.mxu0 0.0
    %3794 = vmatprep.subr.mxu0 0.0
    %3795 = vmatpush1.msra.mxu0 0.0
    %3796 = vmatprep.subr.mxu0 0.0
    %3797 = vmatpush1.msra.mxu0 0.0
    %3798 = vmatprep.subr.mxu0 0.0
    %3799 = vmatpush1.msra.mxu0 0.0
    %3800 = vmatprep.subr.mxu0 0.0
    %3801 = vmatpush1.msra.mxu0 0.0
    %3802 = vmatprep.subr.mxu0 0.0
    %3803 = vmatpush1.msra.mxu0 0.0
    %3804 = vmatprep.subr.mxu0 0.0
    %3805 = vmatpush1.msra.mxu0 0.0
    %3806 = vmatprep.subr.mxu0 0.0
    %3807 = vmatpush1.msra.mxu0 0.0
    %3808 = vmatprep.subr.mxu0 0.0
    %3809 = vmatpush1.msra.mxu0 0.0
    %3810 = vmatprep.subr.mxu0 0.0
    %3811 = vmatpush1.msra.mxu0 0.0
    %3812 = vmatprep.subr.mxu0 0.0
    %3813 = vmatpush1.msra.mxu0 0.0
    %3814 = vmatprep.subr.mxu0 0.0
    %3815 = vmatpush1.msra.mxu0 0.0
    %3816 = vmatprep.subr.mxu0 0.0
    %3817 = vmatpush1.msra.mxu0 0.0
    %3818 = vmatprep.subr.mxu0 0.0
    %3819 = vmatpush1.msra.mxu0 0.0
    %3820 = vmatprep.subr.mxu0 0.0
    %3821 = vmatpush1.msra.mxu0 0.0
    %3822 = vmatprep.subr.mxu0 0.0
    %3823 = vmatpush1.msra.mxu0 0.0
    %3824 = vmatprep.subr.mxu0 0.0
    %3825 = vmatpush1.msra.mxu0 0.0
    %3826 = vmatprep.subr.mxu0 0.0
    %3827 = vmatpush1.msra.mxu0 0.0
    %3828 = vmatprep.subr.mxu0 0.0
    %3829 = vmatpush1.msra.mxu0 0.0
    %3830 = vmatprep.subr.mxu0 0.0
    %3831 = vmatpush1.msra.mxu0 0.0
    %3832 = vmatprep.subr.mxu0 0.0
    %3833 = vmatpush1.msra.mxu0 0.0
    %3834 = vmatprep.subr.mxu0 0.0
    %3835 = vmatpush1.msra.mxu0 0.0
    %3836 = vmatprep.mubr.f32.mxu0 0.0
    %3837 = vmatmul.mubr.f32.gmra.mrb[0].mxu0 %v3770
    %v3838 = vpop.f32.mrb[0].mxu0
    %v3839 = vadd.f32 0.0, %v3838
    %v3840 = vpop.f32.mrb[0].mxu0
    %3841 = vdwg.mxu0
    %v3842 = vadd.f32 %v3689, %v3766
    %v3843 = vadd.f32 %v3690, %v3839
    %v3844 = vld [vmem:[#allocation4 + $0xe] sm:$0x1]
    %v3845 = vld [vmem:[#allocation4 + $0x2e] sm:$0x1]
    %s3846 = scalar_lea.vmem %s7, 224
    %v3847 = vld [vmem:[%s3846] sm:$0xff]
    %v3848 = vld [vmem:[%s3846 + $0x8] sm:$0xff]
    %v3850 = vsel %vm524, %v3844, 0
    %3852 = vmatprep.subr.mxu0 0.0
    %3853 = vmatpush1.msra.mxu0 %v3847
    %3854 = vmatprep.subr.mxu0 0.0
    %3855 = vmatpush1.msra.mxu0 0.0
    %3856 = vmatprep.subr.mxu0 0.0
    %3857 = vmatpush1.msra.mxu0 0.0
    %3858 = vmatprep.subr.mxu0 0.0
    %3859 = vmatpush1.msra.mxu0 0.0
    %3860 = vmatprep.subr.mxu0 0.0
    %3861 = vmatpush1.msra.mxu0 0.0
    %3862 = vmatprep.subr.mxu0 0.0
    %3863 = vmatpush1.msra.mxu0 0.0
    %3864 = vmatprep.subr.mxu0 0.0
    %3865 = vmatpush1.msra.mxu0 0.0
    %3866 = vmatprep.subr.mxu0 0.0
    %3867 = vmatpush1.msra.mxu0 0.0
    %3868 = vmatprep.subr.mxu0 0.0
    %3869 = vmatpush1.msra.mxu0 0.0
    %3870 = vmatprep.subr.mxu0 0.0
    %3871 = vmatpush1.msra.mxu0 0.0
    %3872 = vmatprep.subr.mxu0 0.0
    %3873 = vmatpush1.msra.mxu0 0.0
    %3874 = vmatprep.subr.mxu0 0.0
    %3875 = vmatpush1.msra.mxu0 0.0
    %3876 = vmatprep.subr.mxu0 0.0
    %3877 = vmatpush1.msra.mxu0 0.0
    %3878 = vmatprep.subr.mxu0 0.0
    %3879 = vmatpush1.msra.mxu0 0.0
    %3880 = vmatprep.subr.mxu0 0.0
    %3881 = vmatpush1.msra.mxu0 0.0
    %3882 = vmatprep.subr.mxu0 0.0
    %3883 = vmatpush1.msra.mxu0 0.0
    %3884 = vmatprep.subr.mxu0 0.0
    %3885 = vmatpush1.msra.mxu0 0.0
    %3886 = vmatprep.subr.mxu0 0.0
    %3887 = vmatpush1.msra.mxu0 0.0
    %3888 = vmatprep.subr.mxu0 0.0
    %3889 = vmatpush1.msra.mxu0 0.0
    %3890 = vmatprep.subr.mxu0 0.0
    %3891 = vmatpush1.msra.mxu0 0.0
    %3892 = vmatprep.subr.mxu0 0.0
    %3893 = vmatpush1.msra.mxu0 0.0
    %3894 = vmatprep.subr.mxu0 0.0
    %3895 = vmatpush1.msra.mxu0 0.0
    %3896 = vmatprep.subr.mxu0 0.0
    %3897 = vmatpush1.msra.mxu0 0.0
    %3898 = vmatprep.subr.mxu0 0.0
    %3899 = vmatpush1.msra.mxu0 0.0
    %3900 = vmatprep.subr.mxu0 0.0
    %3901 = vmatpush1.msra.mxu0 0.0
    %3902 = vmatprep.subr.mxu0 0.0
    %3903 = vmatpush1.msra.mxu0 0.0
    %3904 = vmatprep.subr.mxu0 0.0
    %3905 = vmatpush1.msra.mxu0 0.0
    %3906 = vmatprep.subr.mxu0 0.0
    %3907 = vmatpush1.msra.mxu0 0.0
    %3908 = vmatprep.subr.mxu0 0.0
    %3909 = vmatpush1.msra.mxu0 0.0
    %3910 = vmatprep.subr.mxu0 0.0
    %3911 = vmatpush1.msra.mxu0 0.0
    %3912 = vmatprep.subr.mxu0 0.0
    %3913 = vmatpush1.msra.mxu0 0.0
    %3914 = vmatprep.subr.mxu0 0.0
    %3915 = vmatpush1.msra.mxu0 0.0
    %3916 = vmatprep.mubr.f32.mxu0 0.0
    %3917 = vmatmul.mubr.f32.gmra.mrb[0].mxu0 %v3850
    %v3918 = vpop.f32.mrb[0].mxu0
    %v3919 = vadd.f32 0.0, %v3918
    %v3920 = vpop.f32.mrb[0].mxu0
    %3921 = vdwg.mxu0
    %v3923 = vsel %vm524, %v3845, 0
    %3925 = vmatprep.subr.mxu0 0.0
    %3926 = vmatpush1.msra.mxu0 %v3848
    %3927 = vmatprep.subr.mxu0 0.0
    %3928 = vmatpush1.msra.mxu0 0.0
    %3929 = vmatprep.subr.mxu0 0.0
    %3930 = vmatpush1.msra.mxu0 0.0
    %3931 = vmatprep.subr.mxu0 0.0
    %3932 = vmatpush1.msra.mxu0 0.0
    %3933 = vmatprep.subr.mxu0 0.0
    %3934 = vmatpush1.msra.mxu0 0.0
    %3935 = vmatprep.subr.mxu0 0.0
    %3936 = vmatpush1.msra.mxu0 0.0
    %3937 = vmatprep.subr.mxu0 0.0
    %3938 = vmatpush1.msra.mxu0 0.0
    %3939 = vmatprep.subr.mxu0 0.0
    %3940 = vmatpush1.msra.mxu0 0.0
    %3941 = vmatprep.subr.mxu0 0.0
    %3942 = vmatpush1.msra.mxu0 0.0
    %3943 = vmatprep.subr.mxu0 0.0
    %3944 = vmatpush1.msra.mxu0 0.0
    %3945 = vmatprep.subr.mxu0 0.0
    %3946 = vmatpush1.msra.mxu0 0.0
    %3947 = vmatprep.subr.mxu0 0.0
    %3948 = vmatpush1.msra.mxu0 0.0
    %3949 = vmatprep.subr.mxu0 0.0
    %3950 = vmatpush1.msra.mxu0 0.0
    %3951 = vmatprep.subr.mxu0 0.0
    %3952 = vmatpush1.msra.mxu0 0.0
    %3953 = vmatprep.subr.mxu0 0.0
    %3954 = vmatpush1.msra.mxu0 0.0
    %3955 = vmatprep.subr.mxu0 0.0
    %3956 = vmatpush1.msra.mxu0 0.0
    %3957 = vmatprep.subr.mxu0 0.0
    %3958 = vmatpush1.msra.mxu0 0.0
    %3959 = vmatprep.subr.mxu0 0.0
    %3960 = vmatpush1.msra.mxu0 0.0
    %3961 = vmatprep.subr.mxu0 0.0
    %3962 = vmatpush1.msra.mxu0 0.0
    %3963 = vmatprep.subr.mxu0 0.0
    %3964 = vmatpush1.msra.mxu0 0.0
    %3965 = vmatprep.subr.mxu0 0.0
    %3966 = vmatpush1.msra.mxu0 0.0
    %3967 = vmatprep.subr.mxu0 0.0
    %3968 = vmatpush1.msra.mxu0 0.0
    %3969 = vmatprep.subr.mxu0 0.0
    %3970 = vmatpush1.msra.mxu0 0.0
    %3971 = vmatprep.subr.mxu0 0.0
    %3972 = vmatpush1.msra.mxu0 0.0
    %3973 = vmatprep.subr.mxu0 0.0
    %3974 = vmatpush1.msra.mxu0 0.0
    %3975 = vmatprep.subr.mxu0 0.0
    %3976 = vmatpush1.msra.mxu0 0.0
    %3977 = vmatprep.subr.mxu0 0.0
    %3978 = vmatpush1.msra.mxu0 0.0
    %3979 = vmatprep.subr.mxu0 0.0
    %3980 = vmatpush1.msra.mxu0 0.0
    %3981 = vmatprep.subr.mxu0 0.0
    %3982 = vmatpush1.msra.mxu0 0.0
    %3983 = vmatprep.subr.mxu0 0.0
    %3984 = vmatpush1.msra.mxu0 0.0
    %3985 = vmatprep.subr.mxu0 0.0
    %3986 = vmatpush1.msra.mxu0 0.0
    %3987 = vmatprep.subr.mxu0 0.0
    %3988 = vmatpush1.msra.mxu0 0.0
    %3989 = vmatprep.mubr.f32.mxu0 0.0
    %3990 = vmatmul.mubr.f32.gmra.mrb[0].mxu0 %v3923
    %v3991 = vpop.f32.mrb[0].mxu0
    %v3992 = vadd.f32 0.0, %v3991
    %v3993 = vpop.f32.mrb[0].mxu0
    %3994 = vdwg.mxu0
    %v3995 = vadd.f32 %v3842, %v3919
    %v3996 = vadd.f32 %v3843, %v3992
    %v3997 = vld [vmem:[#allocation4 + $0xf] sm:$0x1]
    %v3998 = vld [vmem:[#allocation4 + $0x2f] sm:$0x1]
    %s3999 = scalar_lea.vmem %s7, 240
    %v4000 = vld [vmem:[%s3999] sm:$0xff]
    %v4001 = vld [vmem:[%s3999 + $0x8] sm:$0xff]
    %v4003 = vsel %vm524, %v3997, 0
    %4005 = vmatprep.subr.mxu0 0.0
    %4006 = vmatpush1.msra.mxu0 %v4000
    %4007 = vmatprep.subr.mxu0 0.0
    %4008 = vmatpush1.msra.mxu0 0.0
    %4009 = vmatprep.subr.mxu0 0.0
    %4010 = vmatpush1.msra.mxu0 0.0
    %4011 = vmatprep.subr.mxu0 0.0
    %4012 = vmatpush1.msra.mxu0 0.0
    %4013 = vmatprep.subr.mxu0 0.0
    %4014 = vmatpush1.msra.mxu0 0.0
    %4015 = vmatprep.subr.mxu0 0.0
    %4016 = vmatpush1.msra.mxu0 0.0
    %4017 = vmatprep.subr.mxu0 0.0
    %4018 = vmatpush1.msra.mxu0 0.0
    %4019 = vmatprep.subr.mxu0 0.0
    %4020 = vmatpush1.msra.mxu0 0.0
    %4021 = vmatprep.subr.mxu0 0.0
    %4022 = vmatpush1.msra.mxu0 0.0
    %4023 = vmatprep.subr.mxu0 0.0
    %4024 = vmatpush1.msra.mxu0 0.0
    %4025 = vmatprep.subr.mxu0 0.0
    %4026 = vmatpush1.msra.mxu0 0.0
    %4027 = vmatprep.subr.mxu0 0.0
    %4028 = vmatpush1.msra.mxu0 0.0
    %4029 = vmatprep.subr.mxu0 0.0
    %4030 = vmatpush1.msra.mxu0 0.0
    %4031 = vmatprep.subr.mxu0 0.0
    %4032 = vmatpush1.msra.mxu0 0.0
    %4033 = vmatprep.subr.mxu0 0.0
    %4034 = vmatpush1.msra.mxu0 0.0
    %4035 = vmatprep.subr.mxu0 0.0
    %4036 = vmatpush1.msra.mxu0 0.0
    %4037 = vmatprep.subr.mxu0 0.0
    %4038 = vmatpush1.msra.mxu0 0.0
    %4039 = vmatprep.subr.mxu0 0.0
    %4040 = vmatpush1.msra.mxu0 0.0
    %4041 = vmatprep.subr.mxu0 0.0
    %4042 = vmatpush1.msra.mxu0 0.0
    %4043 = vmatprep.subr.mxu0 0.0
    %4044 = vmatpush1.msra.mxu0 0.0
    %4045 = vmatprep.subr.mxu0 0.0
    %4046 = vmatpush1.msra.mxu0 0.0
    %4047 = vmatprep.subr.mxu0 0.0
    %4048 = vmatpush1.msra.mxu0 0.0
    %4049 = vmatprep.subr.mxu0 0.0
    %4050 = vmatpush1.msra.mxu0 0.0
    %4051 = vmatprep.subr.mxu0 0.0
    %4052 = vmatpush1.msra.mxu0 0.0
    %4053 = vmatprep.subr.mxu0 0.0
    %4054 = vmatpush1.msra.mxu0 0.0
    %4055 = vmatprep.subr.mxu0 0.0
    %4056 = vmatpush1.msra.mxu0 0.0
    %4057 = vmatprep.subr.mxu0 0.0
    %4058 = vmatpush1.msra.mxu0 0.0
    %4059 = vmatprep.subr.mxu0 0.0
    %4060 = vmatpush1.msra.mxu0 0.0
    %4061 = vmatprep.subr.mxu0 0.0
    %4062 = vmatpush1.msra.mxu0 0.0
    %4063 = vmatprep.subr.mxu0 0.0
    %4064 = vmatpush1.msra.mxu0 0.0
    %4065 = vmatprep.subr.mxu0 0.0
    %4066 = vmatpush1.msra.mxu0 0.0
    %4067 = vmatprep.subr.mxu0 0.0
    %4068 = vmatpush1.msra.mxu0 0.0
    %4069 = vmatprep.mubr.f32.mxu0 0.0
    %4070 = vmatmul.mubr.f32.gmra.mrb[0].mxu0 %v4003
    %v4071 = vpop.f32.mrb[0].mxu0
    %v4072 = vadd.f32 0.0, %v4071
    %v4073 = vpop.f32.mrb[0].mxu0
    %4074 = vdwg.mxu0
    %v4076 = vsel %vm524, %v3998, 0
    %4078 = vmatprep.subr.mxu0 0.0
    %4079 = vmatpush1.msra.mxu0 %v4001
    %4080 = vmatprep.subr.mxu0 0.0
    %4081 = vmatpush1.msra.mxu0 0.0
    %4082 = vmatprep.subr.mxu0 0.0
    %4083 = vmatpush1.msra.mxu0 0.0
    %4084 = vmatprep.subr.mxu0 0.0
    %4085 = vmatpush1.msra.mxu0 0.0
    %4086 = vmatprep.subr.mxu0 0.0
    %4087 = vmatpush1.msra.mxu0 0.0
    %4088 = vmatprep.subr.mxu0 0.0
    %4089 = vmatpush1.msra.mxu0 0.0
    %4090 = vmatprep.subr.mxu0 0.0
    %4091 = vmatpush1.msra.mxu0 0.0
    %4092 = vmatprep.subr.mxu0 0.0
    %4093 = vmatpush1.msra.mxu0 0.0
    %4094 = vmatprep.subr.mxu0 0.0
    %4095 = vmatpush1.msra.mxu0 0.0
    %4096 = vmatprep.subr.mxu0 0.0
    %4097 = vmatpush1.msra.mxu0 0.0
    %4098 = vmatprep.subr.mxu0 0.0
    %4099 = vmatpush1.msra.mxu0 0.0
    %4100 = vmatprep.subr.mxu0 0.0
    %4101 = vmatpush1.msra.mxu0 0.0
    %4102 = vmatprep.subr.mxu0 0.0
    %4103 = vmatpush1.msra.mxu0 0.0
    %4104 = vmatprep.subr.mxu0 0.0
    %4105 = vmatpush1.msra.mxu0 0.0
    %4106 = vmatprep.subr.mxu0 0.0
    %4107 = vmatpush1.msra.mxu0 0.0
    %4108 = vmatprep.subr.mxu0 0.0
    %4109 = vmatpush1.msra.mxu0 0.0
    %4110 = vmatprep.subr.mxu0 0.0
    %4111 = vmatpush1.msra.mxu0 0.0
    %4112 = vmatprep.subr.mxu0 0.0
    %4113 = vmatpush1.msra.mxu0 0.0
    %4114 = vmatprep.subr.mxu0 0.0
    %4115 = vmatpush1.msra.mxu0 0.0
    %4116 = vmatprep.subr.mxu0 0.0
    %4117 = vmatpush1.msra.mxu0 0.0
    %4118 = vmatprep.subr.mxu0 0.0
    %4119 = vmatpush1.msra.mxu0 0.0
    %4120 = vmatprep.subr.mxu0 0.0
    %4121 = vmatpush1.msra.mxu0 0.0
    %4122 = vmatprep.subr.mxu0 0.0
    %4123 = vmatpush1.msra.mxu0 0.0
    %4124 = vmatprep.subr.mxu0 0.0
    %4125 = vmatpush1.msra.mxu0 0.0
    %4126 = vmatprep.subr.mxu0 0.0
    %4127 = vmatpush1.msra.mxu0 0.0
    %4128 = vmatprep.subr.mxu0 0.0
    %4129 = vmatpush1.msra.mxu0 0.0
    %4130 = vmatprep.subr.mxu0 0.0
    %4131 = vmatpush1.msra.mxu0 0.0
    %4132 = vmatprep.subr.mxu0 0.0
    %4133 = vmatpush1.msra.mxu0 0.0
    %4134 = vmatprep.subr.mxu0 0.0
    %4135 = vmatpush1.msra.mxu0 0.0
    %4136 = vmatprep.subr.mxu0 0.0
    %4137 = vmatpush1.msra.mxu0 0.0
    %4138 = vmatprep.subr.mxu0 0.0
    %4139 = vmatpush1.msra.mxu0 0.0
    %4140 = vmatprep.subr.mxu0 0.0
    %4141 = vmatpush1.msra.mxu0 0.0
    %4142 = vmatprep.mubr.f32.mxu0 0.0
    %4143 = vmatmul.mubr.f32.gmra.mrb[0].mxu0 %v4076
    %v4144 = vpop.f32.mrb[0].mxu0
    %v4145 = vadd.f32 0.0, %v4144
    %v4146 = vpop.f32.mrb[0].mxu0
    %4147 = vdwg.mxu0
    %v4148 = vadd.f32 %v3995, %v4072
    %v4149 = vadd.f32 %v3996, %v4145
    %v4150 = vld [vmem:[#allocation4 + $0x10] sm:$0x1]
    %v4151 = vld [vmem:[#allocation4 + $0x30] sm:$0x1]
    %s4152 = scalar_lea.vmem %s7, 256
    %v4153 = vld [vmem:[%s4152] sm:$0xff]
    %v4154 = vld [vmem:[%s4152 + $0x8] sm:$0xff]
    %v4156 = vsel %vm524, %v4150, 0
    %4158 = vmatprep.subr.mxu0 0.0
    %4159 = vmatpush1.msra.mxu0 %v4153
    %4160 = vmatprep.subr.mxu0 0.0
    %4161 = vmatpush1.msra.mxu0 0.0
    %4162 = vmatprep.subr.mxu0 0.0
    %4163 = vmatpush1.msra.mxu0 0.0
    %4164 = vmatprep.subr.mxu0 0.0
    %4165 = vmatpush1.msra.mxu0 0.0
    %4166 = vmatprep.subr.mxu0 0.0
    %4167 = vmatpush1.msra.mxu0 0.0
    %4168 = vmatprep.subr.mxu0 0.0
    %4169 = vmatpush1.msra.mxu0 0.0
    %4170 = vmatprep.subr.mxu0 0.0
    %4171 = vmatpush1.msra.mxu0 0.0
    %4172 = vmatprep.subr.mxu0 0.0
    %4173 = vmatpush1.msra.mxu0 0.0
    %4174 = vmatprep.subr.mxu0 0.0
    %4175 = vmatpush1.msra.mxu0 0.0
    %4176 = vmatprep.subr.mxu0 0.0
    %4177 = vmatpush1.msra.mxu0 0.0
    %4178 = vmatprep.subr.mxu0 0.0
    %4179 = vmatpush1.msra.mxu0 0.0
    %4180 = vmatprep.subr.mxu0 0.0
    %4181 = vmatpush1.msra.mxu0 0.0
    %4182 = vmatprep.subr.mxu0 0.0
    %4183 = vmatpush1.msra.mxu0 0.0
    %4184 = vmatprep.subr.mxu0 0.0
    %4185 = vmatpush1.msra.mxu0 0.0
    %4186 = vmatprep.subr.mxu0 0.0
    %4187 = vmatpush1.msra.mxu0 0.0
    %4188 = vmatprep.subr.mxu0 0.0
    %4189 = vmatpush1.msra.mxu0 0.0
    %4190 = vmatprep.subr.mxu0 0.0
    %4191 = vmatpush1.msra.mxu0 0.0
    %4192 = vmatprep.subr.mxu0 0.0
    %4193 = vmatpush1.msra.mxu0 0.0
    %4194 = vmatprep.subr.mxu0 0.0
    %4195 = vmatpush1.msra.mxu0 0.0
    %4196 = vmatprep.subr.mxu0 0.0
    %4197 = vmatpush1.msra.mxu0 0.0
    %4198 = vmatprep.subr.mxu0 0.0
    %4199 = vmatpush1.msra.mxu0 0.0
    %4200 = vmatprep.subr.mxu0 0.0
    %4201 = vmatpush1.msra.mxu0 0.0
    %4202 = vmatprep.subr.mxu0 0.0
    %4203 = vmatpush1.msra.mxu0 0.0
    %4204 = vmatprep.subr.mxu0 0.0
    %4205 = vmatpush1.msra.mxu0 0.0
    %4206 = vmatprep.subr.mxu0 0.0
    %4207 = vmatpush1.msra.mxu0 0.0
    %4208 = vmatprep.subr.mxu0 0.0
    %4209 = vmatpush1.msra.mxu0 0.0
    %4210 = vmatprep.subr.mxu0 0.0
    %4211 = vmatpush1.msra.mxu0 0.0
    %4212 = vmatprep.subr.mxu0 0.0
    %4213 = vmatpush1.msra.mxu0 0.0
    %4214 = vmatprep.subr.mxu0 0.0
    %4215 = vmatpush1.msra.mxu0 0.0
    %4216 = vmatprep.subr.mxu0 0.0
    %4217 = vmatpush1.msra.mxu0 0.0
    %4218 = vmatprep.subr.mxu0 0.0
    %4219 = vmatpush1.msra.mxu0 0.0
    %4220 = vmatprep.subr.mxu0 0.0
    %4221 = vmatpush1.msra.mxu0 0.0
    %4222 = vmatprep.mubr.f32.mxu0 0.0
    %4223 = vmatmul.mubr.f32.gmra.mrb[0].mxu0 %v4156
    %v4224 = vpop.f32.mrb[0].mxu0
    %v4225 = vadd.f32 0.0, %v4224
    %v4226 = vpop.f32.mrb[0].mxu0
    %4227 = vdwg.mxu0
    %v4229 = vsel %vm524, %v4151, 0
    %4231 = vmatprep.subr.mxu0 0.0
    %4232 = vmatpush1.msra.mxu0 %v4154
    %4233 = vmatprep.subr.mxu0 0.0
    %4234 = vmatpush1.msra.mxu0 0.0
    %4235 = vmatprep.subr.mxu0 0.0
    %4236 = vmatpush1.msra.mxu0 0.0
    %4237 = vmatprep.subr.mxu0 0.0
    %4238 = vmatpush1.msra.mxu0 0.0
    %4239 = vmatprep.subr.mxu0 0.0
    %4240 = vmatpush1.msra.mxu0 0.0
    %4241 = vmatprep.subr.mxu0 0.0
    %4242 = vmatpush1.msra.mxu0 0.0
    %4243 = vmatprep.subr.mxu0 0.0
    %4244 = vmatpush1.msra.mxu0 0.0
    %4245 = vmatprep.subr.mxu0 0.0
    %4246 = vmatpush1.msra.mxu0 0.0
    %4247 = vmatprep.subr.mxu0 0.0
    %4248 = vmatpush1.msra.mxu0 0.0
    %4249 = vmatprep.subr.mxu0 0.0
    %4250 = vmatpush1.msra.mxu0 0.0
    %4251 = vmatprep.subr.mxu0 0.0
    %4252 = vmatpush1.msra.mxu0 0.0
    %4253 = vmatprep.subr.mxu0 0.0
    %4254 = vmatpush1.msra.mxu0 0.0
    %4255 = vmatprep.subr.mxu0 0.0
    %4256 = vmatpush1.msra.mxu0 0.0
    %4257 = vmatprep.subr.mxu0 0.0
    %4258 = vmatpush1.msra.mxu0 0.0
    %4259 = vmatprep.subr.mxu0 0.0
    %4260 = vmatpush1.msra.mxu0 0.0
    %4261 = vmatprep.subr.mxu0 0.0
    %4262 = vmatpush1.msra.mxu0 0.0
    %4263 = vmatprep.subr.mxu0 0.0
    %4264 = vmatpush1.msra.mxu0 0.0
    %4265 = vmatprep.subr.mxu0 0.0
    %4266 = vmatpush1.msra.mxu0 0.0
    %4267 = vmatprep.subr.mxu0 0.0
    %4268 = vmatpush1.msra.mxu0 0.0
    %4269 = vmatprep.subr.mxu0 0.0
    %4270 = vmatpush1.msra.mxu0 0.0
    %4271 = vmatprep.subr.mxu0 0.0
    %4272 = vmatpush1.msra.mxu0 0.0
    %4273 = vmatprep.subr.mxu0 0.0
    %4274 = vmatpush1.msra.mxu0 0.0
    %4275 = vmatprep.subr.mxu0 0.0
    %4276 = vmatpush1.msra.mxu0 0.0
    %4277 = vmatprep.subr.mxu0 0.0
    %4278 = vmatpush1.msra.mxu0 0.0
    %4279 = vmatprep.subr.mxu0 0.0
    %4280 = vmatpush1.msra.mxu0 0.0
    %4281 = vmatprep.subr.mxu0 0.0
    %4282 = vmatpush1.msra.mxu0 0.0
    %4283 = vmatprep.subr.mxu0 0.0
    %4284 = vmatpush1.msra.mxu0 0.0
    %4285 = vmatprep.subr.mxu0 0.0
    %4286 = vmatpush1.msra.mxu0 0.0
    %4287 = vmatprep.subr.mxu0 0.0
    %4288 = vmatpush1.msra.mxu0 0.0
    %4289 = vmatprep.subr.mxu0 0.0
    %4290 = vmatpush1.msra.mxu0 0.0
    %4291 = vmatprep.subr.mxu0 0.0
    %4292 = vmatpush1.msra.mxu0 0.0
    %4293 = vmatprep.subr.mxu0 0.0
    %4294 = vmatpush1.msra.mxu0 0.0
    %4295 = vmatprep.mubr.f32.mxu0 0.0
    %4296 = vmatmul.mubr.f32.gmra.mrb[0].mxu0 %v4229
    %v4297 = vpop.f32.mrb[0].mxu0
    %v4298 = vadd.f32 0.0, %v4297
    %v4299 = vpop.f32.mrb[0].mxu0
    %4300 = vdwg.mxu0
    %v4301 = vadd.f32 %v4148, %v4225
    %v4302 = vadd.f32 %v4149, %v4298
    %v4303 = vld [vmem:[#allocation4 + $0x11] sm:$0x1]
    %v4304 = vld [vmem:[#allocation4 + $0x31] sm:$0x1]
    %s4305 = scalar_lea.vmem %s7, 272
    %v4306 = vld [vmem:[%s4305] sm:$0xff]
    %v4307 = vld [vmem:[%s4305 + $0x8] sm:$0xff]
    %v4309 = vsel %vm524, %v4303, 0
    %4311 = vmatprep.subr.mxu0 0.0
    %4312 = vmatpush1.msra.mxu0 %v4306
    %4313 = vmatprep.subr.mxu0 0.0
    %4314 = vmatpush1.msra.mxu0 0.0
    %4315 = vmatprep.subr.mxu0 0.0
    %4316 = vmatpush1.msra.mxu0 0.0
    %4317 = vmatprep.subr.mxu0 0.0
    %4318 = vmatpush1.msra.mxu0 0.0
    %4319 = vmatprep.subr.mxu0 0.0
    %4320 = vmatpush1.msra.mxu0 0.0
    %4321 = vmatprep.subr.mxu0 0.0
    %4322 = vmatpush1.msra.mxu0 0.0
    %4323 = vmatprep.subr.mxu0 0.0
    %4324 = vmatpush1.msra.mxu0 0.0
    %4325 = vmatprep.subr.mxu0 0.0
    %4326 = vmatpush1.msra.mxu0 0.0
    %4327 = vmatprep.subr.mxu0 0.0
    %4328 = vmatpush1.msra.mxu0 0.0
    %4329 = vmatprep.subr.mxu0 0.0
    %4330 = vmatpush1.msra.mxu0 0.0
    %4331 = vmatprep.subr.mxu0 0.0
    %4332 = vmatpush1.msra.mxu0 0.0
    %4333 = vmatprep.subr.mxu0 0.0
    %4334 = vmatpush1.msra.mxu0 0.0
    %4335 = vmatprep.subr.mxu0 0.0
    %4336 = vmatpush1.msra.mxu0 0.0
    %4337 = vmatprep.subr.mxu0 0.0
    %4338 = vmatpush1.msra.mxu0 0.0
    %4339 = vmatprep.subr.mxu0 0.0
    %4340 = vmatpush1.msra.mxu0 0.0
    %4341 = vmatprep.subr.mxu0 0.0
    %4342 = vmatpush1.msra.mxu0 0.0
    %4343 = vmatprep.subr.mxu0 0.0
    %4344 = vmatpush1.msra.mxu0 0.0
    %4345 = vmatprep.subr.mxu0 0.0
    %4346 = vmatpush1.msra.mxu0 0.0
    %4347 = vmatprep.subr.mxu0 0.0
    %4348 = vmatpush1.msra.mxu0 0.0
    %4349 = vmatprep.subr.mxu0 0.0
    %4350 = vmatpush1.msra.mxu0 0.0
    %4351 = vmatprep.subr.mxu0 0.0
    %4352 = vmatpush1.msra.mxu0 0.0
    %4353 = vmatprep.subr.mxu0 0.0
    %4354 = vmatpush1.msra.mxu0 0.0
    %4355 = vmatprep.subr.mxu0 0.0
    %4356 = vmatpush1.msra.mxu0 0.0
    %4357 = vmatprep.subr.mxu0 0.0
    %4358 = vmatpush1.msra.mxu0 0.0
    %4359 = vmatprep.subr.mxu0 0.0
    %4360 = vmatpush1.msra.mxu0 0.0
    %4361 = vmatprep.subr.mxu0 0.0
    %4362 = vmatpush1.msra.mxu0 0.0
    %4363 = vmatprep.subr.mxu0 0.0
    %4364 = vmatpush1.msra.mxu0 0.0
    %4365 = vmatprep.subr.mxu0 0.0
    %4366 = vmatpush1.msra.mxu0 0.0
    %4367 = vmatprep.subr.mxu0 0.0
    %4368 = vmatpush1.msra.mxu0 0.0
    %4369 = vmatprep.subr.mxu0 0.0
    %4370 = vmatpush1.msra.mxu0 0.0
    %4371 = vmatprep.subr.mxu0 0.0
    %4372 = vmatpush1.msra.mxu0 0.0
    %4373 = vmatprep.subr.mxu0 0.0
    %4374 = vmatpush1.msra.mxu0 0.0
    %4375 = vmatprep.mubr.f32.mxu0 0.0
    %4376 = vmatmul.mubr.f32.gmra.mrb[0].mxu0 %v4309
    %v4377 = vpop.f32.mrb[0].mxu0
    %v4378 = vadd.f32 0.0, %v4377
    %v4379 = vpop.f32.mrb[0].mxu0
    %4380 = vdwg.mxu0
    %v4382 = vsel %vm524, %v4304, 0
    %4384 = vmatprep.subr.mxu0 0.0
    %4385 = vmatpush1.msra.mxu0 %v4307
    %4386 = vmatprep.subr.mxu0 0.0
    %4387 = vmatpush1.msra.mxu0 0.0
    %4388 = vmatprep.subr.mxu0 0.0
    %4389 = vmatpush1.msra.mxu0 0.0
    %4390 = vmatprep.subr.mxu0 0.0
    %4391 = vmatpush1.msra.mxu0 0.0
    %4392 = vmatprep.subr.mxu0 0.0
    %4393 = vmatpush1.msra.mxu0 0.0
    %4394 = vmatprep.subr.mxu0 0.0
    %4395 = vmatpush1.msra.mxu0 0.0
    %4396 = vmatprep.subr.mxu0 0.0
    %4397 = vmatpush1.msra.mxu0 0.0
    %4398 = vmatprep.subr.mxu0 0.0
    %4399 = vmatpush1.msra.mxu0 0.0
    %4400 = vmatprep.subr.mxu0 0.0
    %4401 = vmatpush1.msra.mxu0 0.0
    %4402 = vmatprep.subr.mxu0 0.0
    %4403 = vmatpush1.msra.mxu0 0.0
    %4404 = vmatprep.subr.mxu0 0.0
    %4405 = vmatpush1.msra.mxu0 0.0
    %4406 = vmatprep.subr.mxu0 0.0
    %4407 = vmatpush1.msra.mxu0 0.0
    %4408 = vmatprep.subr.mxu0 0.0
    %4409 = vmatpush1.msra.mxu0 0.0
    %4410 = vmatprep.subr.mxu0 0.0
    %4411 = vmatpush1.msra.mxu0 0.0
    %4412 = vmatprep.subr.mxu0 0.0
    %4413 = vmatpush1.msra.mxu0 0.0
    %4414 = vmatprep.subr.mxu0 0.0
    %4415 = vmatpush1.msra.mxu0 0.0
    %4416 = vmatprep.subr.mxu0 0.0
    %4417 = vmatpush1.msra.mxu0 0.0
    %4418 = vmatprep.subr.mxu0 0.0
    %4419 = vmatpush1.msra.mxu0 0.0
    %4420 = vmatprep.subr.mxu0 0.0
    %4421 = vmatpush1.msra.mxu0 0.0
    %4422 = vmatprep.subr.mxu0 0.0
    %4423 = vmatpush1.msra.mxu0 0.0
    %4424 = vmatprep.subr.mxu0 0.0
    %4425 = vmatpush1.msra.mxu0 0.0
    %4426 = vmatprep.subr.mxu0 0.0
    %4427 = vmatpush1.msra.mxu0 0.0
    %4428 = vmatprep.subr.mxu0 0.0
    %4429 = vmatpush1.msra.mxu0 0.0
    %4430 = vmatprep.subr.mxu0 0.0
    %4431 = vmatpush1.msra.mxu0 0.0
    %4432 = vmatprep.subr.mxu0 0.0
    %4433 = vmatpush1.msra.mxu0 0.0
    %4434 = vmatprep.subr.mxu0 0.0
    %4435 = vmatpush1.msra.mxu0 0.0
    %4436 = vmatprep.subr.mxu0 0.0
    %4437 = vmatpush1.msra.mxu0 0.0
    %4438 = vmatprep.subr.mxu0 0.0
    %4439 = vmatpush1.msra.mxu0 0.0
    %4440 = vmatprep.subr.mxu0 0.0
    %4441 = vmatpush1.msra.mxu0 0.0
    %4442 = vmatprep.subr.mxu0 0.0
    %4443 = vmatpush1.msra.mxu0 0.0
    %4444 = vmatprep.subr.mxu0 0.0
    %4445 = vmatpush1.msra.mxu0 0.0
    %4446 = vmatprep.subr.mxu0 0.0
    %4447 = vmatpush1.msra.mxu0 0.0
    %4448 = vmatprep.mubr.f32.mxu0 0.0
    %4449 = vmatmul.mubr.f32.gmra.mrb[0].mxu0 %v4382
    %v4450 = vpop.f32.mrb[0].mxu0
    %v4451 = vadd.f32 0.0, %v4450
    %v4452 = vpop.f32.mrb[0].mxu0
    %4453 = vdwg.mxu0
    %v4454 = vadd.f32 %v4301, %v4378
    %v4455 = vadd.f32 %v4302, %v4451
    %v4456 = vld [vmem:[#allocation4 + $0x12] sm:$0x1]
    %v4457 = vld [vmem:[#allocation4 + $0x32] sm:$0x1]
    %s4458 = scalar_lea.vmem %s7, 288
    %v4459 = vld [vmem:[%s4458] sm:$0xff]
    %v4460 = vld [vmem:[%s4458 + $0x8] sm:$0xff]
    %v4462 = vsel %vm524, %v4456, 0
    %4464 = vmatprep.subr.mxu0 0.0
    %4465 = vmatpush1.msra.mxu0 %v4459
    %4466 = vmatprep.subr.mxu0 0.0
    %4467 = vmatpush1.msra.mxu0 0.0
    %4468 = vmatprep.subr.mxu0 0.0
    %4469 = vmatpush1.msra.mxu0 0.0
    %4470 = vmatprep.subr.mxu0 0.0
    %4471 = vmatpush1.msra.mxu0 0.0
    %4472 = vmatprep.subr.mxu0 0.0
    %4473 = vmatpush1.msra.mxu0 0.0
    %4474 = vmatprep.subr.mxu0 0.0
    %4475 = vmatpush1.msra.mxu0 0.0
    %4476 = vmatprep.subr.mxu0 0.0
    %4477 = vmatpush1.msra.mxu0 0.0
    %4478 = vmatprep.subr.mxu0 0.0
    %4479 = vmatpush1.msra.mxu0 0.0
    %4480 = vmatprep.subr.mxu0 0.0
    %4481 = vmatpush1.msra.mxu0 0.0
    %4482 = vmatprep.subr.mxu0 0.0
    %4483 = vmatpush1.msra.mxu0 0.0
    %4484 = vmatprep.subr.mxu0 0.0
    %4485 = vmatpush1.msra.mxu0 0.0
    %4486 = vmatprep.subr.mxu0 0.0
    %4487 = vmatpush1.msra.mxu0 0.0
    %4488 = vmatprep.subr.mxu0 0.0
    %4489 = vmatpush1.msra.mxu0 0.0
    %4490 = vmatprep.subr.mxu0 0.0
    %4491 = vmatpush1.msra.mxu0 0.0
    %4492 = vmatprep.subr.mxu0 0.0
    %4493 = vmatpush1.msra.mxu0 0.0
    %4494 = vmatprep.subr.mxu0 0.0
    %4495 = vmatpush1.msra.mxu0 0.0
    %4496 = vmatprep.subr.mxu0 0.0
    %4497 = vmatpush1.msra.mxu0 0.0
    %4498 = vmatprep.subr.mxu0 0.0
    %4499 = vmatpush1.msra.mxu0 0.0
    %4500 = vmatprep.subr.mxu0 0.0
    %4501 = vmatpush1.msra.mxu0 0.0
    %4502 = vmatprep.subr.mxu0 0.0
    %4503 = vmatpush1.msra.mxu0 0.0
    %4504 = vmatprep.subr.mxu0 0.0
    %4505 = vmatpush1.msra.mxu0 0.0
    %4506 = vmatprep.subr.mxu0 0.0
    %4507 = vmatpush1.msra.mxu0 0.0
    %4508 = vmatprep.subr.mxu0 0.0
    %4509 = vmatpush1.msra.mxu0 0.0
    %4510 = vmatprep.subr.mxu0 0.0
    %4511 = vmatpush1.msra.mxu0 0.0
    %4512 = vmatprep.subr.mxu0 0.0
    %4513 = vmatpush1.msra.mxu0 0.0
    %4514 = vmatprep.subr.mxu0 0.0
    %4515 = vmatpush1.msra.mxu0 0.0
    %4516 = vmatprep.subr.mxu0 0.0
    %4517 = vmatpush1.msra.mxu0 0.0
    %4518 = vmatprep.subr.mxu0 0.0
    %4519 = vmatpush1.msra.mxu0 0.0
    %4520 = vmatprep.subr.mxu0 0.0
    %4521 = vmatpush1.msra.mxu0 0.0
    %4522 = vmatprep.subr.mxu0 0.0
    %4523 = vmatpush1.msra.mxu0 0.0
    %4524 = vmatprep.subr.mxu0 0.0
    %4525 = vmatpush1.msra.mxu0 0.0
    %4526 = vmatprep.subr.mxu0 0.0
    %4527 = vmatpush1.msra.mxu0 0.0
    %4528 = vmatprep.mubr.f32.mxu0 0.0
    %4529 = vmatmul.mubr.f32.gmra.mrb[0].mxu0 %v4462
    %v4530 = vpop.f32.mrb[0].mxu0
    %v4531 = vadd.f32 0.0, %v4530
    %v4532 = vpop.f32.mrb[0].mxu0
    %4533 = vdwg.mxu0
    %v4535 = vsel %vm524, %v4457, 0
    %4537 = vmatprep.subr.mxu0 0.0
    %4538 = vmatpush1.msra.mxu0 %v4460
    %4539 = vmatprep.subr.mxu0 0.0
    %4540 = vmatpush1.msra.mxu0 0.0
    %4541 = vmatprep.subr.mxu0 0.0
    %4542 = vmatpush1.msra.mxu0 0.0
    %4543 = vmatprep.subr.mxu0 0.0
    %4544 = vmatpush1.msra.mxu0 0.0
    %4545 = vmatprep.subr.mxu0 0.0
    %4546 = vmatpush1.msra.mxu0 0.0
    %4547 = vmatprep.subr.mxu0 0.0
    %4548 = vmatpush1.msra.mxu0 0.0
    %4549 = vmatprep.subr.mxu0 0.0
    %4550 = vmatpush1.msra.mxu0 0.0
    %4551 = vmatprep.subr.mxu0 0.0
    %4552 = vmatpush1.msra.mxu0 0.0
    %4553 = vmatprep.subr.mxu0 0.0
    %4554 = vmatpush1.msra.mxu0 0.0
    %4555 = vmatprep.subr.mxu0 0.0
    %4556 = vmatpush1.msra.mxu0 0.0
    %4557 = vmatprep.subr.mxu0 0.0
    %4558 = vmatpush1.msra.mxu0 0.0
    %4559 = vmatprep.subr.mxu0 0.0
    %4560 = vmatpush1.msra.mxu0 0.0
    %4561 = vmatprep.subr.mxu0 0.0
    %4562 = vmatpush1.msra.mxu0 0.0
    %4563 = vmatprep.subr.mxu0 0.0
    %4564 = vmatpush1.msra.mxu0 0.0
    %4565 = vmatprep.subr.mxu0 0.0
    %4566 = vmatpush1.msra.mxu0 0.0
    %4567 = vmatprep.subr.mxu0 0.0
    %4568 = vmatpush1.msra.mxu0 0.0
    %4569 = vmatprep.subr.mxu0 0.0
    %4570 = vmatpush1.msra.mxu0 0.0
    %4571 = vmatprep.subr.mxu0 0.0
    %4572 = vmatpush1.msra.mxu0 0.0
    %4573 = vmatprep.subr.mxu0 0.0
    %4574 = vmatpush1.msra.mxu0 0.0
    %4575 = vmatprep.subr.mxu0 0.0
    %4576 = vmatpush1.msra.mxu0 0.0
    %4577 = vmatprep.subr.mxu0 0.0
    %4578 = vmatpush1.msra.mxu0 0.0
    %4579 = vmatprep.subr.mxu0 0.0
    %4580 = vmatpush1.msra.mxu0 0.0
    %4581 = vmatprep.subr.mxu0 0.0
    %4582 = vmatpush1.msra.mxu0 0.0
    %4583 = vmatprep.subr.mxu0 0.0
    %4584 = vmatpush1.msra.mxu0 0.0
    %4585 = vmatprep.subr.mxu0 0.0
    %4586 = vmatpush1.msra.mxu0 0.0
    %4587 = vmatprep.subr.mxu0 0.0
    %4588 = vmatpush1.msra.mxu0 0.0
    %4589 = vmatprep.subr.mxu0 0.0
    %4590 = vmatpush1.msra.mxu0 0.0
    %4591 = vmatprep.subr.mxu0 0.0
    %4592 = vmatpush1.msra.mxu0 0.0
    %4593 = vmatprep.subr.mxu0 0.0
    %4594 = vmatpush1.msra.mxu0 0.0
    %4595 = vmatprep.subr.mxu0 0.0
    %4596 = vmatpush1.msra.mxu0 0.0
    %4597 = vmatprep.subr.mxu0 0.0
    %4598 = vmatpush1.msra.mxu0 0.0
    %4599 = vmatprep.subr.mxu0 0.0
    %4600 = vmatpush1.msra.mxu0 0.0
    %4601 = vmatprep.mubr.f32.mxu0 0.0
    %4602 = vmatmul.mubr.f32.gmra.mrb[0].mxu0 %v4535
    %v4603 = vpop.f32.mrb[0].mxu0
    %v4604 = vadd.f32 0.0, %v4603
    %v4605 = vpop.f32.mrb[0].mxu0
    %4606 = vdwg.mxu0
    %v4607 = vadd.f32 %v4454, %v4531
    %v4608 = vadd.f32 %v4455, %v4604
    %v4609 = vld [vmem:[#allocation4 + $0x13] sm:$0x1]
    %v4610 = vld [vmem:[#allocation4 + $0x33] sm:$0x1]
    %s4611 = scalar_lea.vmem %s7, 304
    %v4612 = vld [vmem:[%s4611] sm:$0xff]
    %v4613 = vld [vmem:[%s4611 + $0x8] sm:$0xff]
    %v4615 = vsel %vm524, %v4609, 0
    %4617 = vmatprep.subr.mxu0 0.0
    %4618 = vmatpush1.msra.mxu0 %v4612
    %4619 = vmatprep.subr.mxu0 0.0
    %4620 = vmatpush1.msra.mxu0 0.0
    %4621 = vmatprep.subr.mxu0 0.0
    %4622 = vmatpush1.msra.mxu0 0.0
    %4623 = vmatprep.subr.mxu0 0.0
    %4624 = vmatpush1.msra.mxu0 0.0
    %4625 = vmatprep.subr.mxu0 0.0
    %4626 = vmatpush1.msra.mxu0 0.0
    %4627 = vmatprep.subr.mxu0 0.0
    %4628 = vmatpush1.msra.mxu0 0.0
    %4629 = vmatprep.subr.mxu0 0.0
    %4630 = vmatpush1.msra.mxu0 0.0
    %4631 = vmatprep.subr.mxu0 0.0
    %4632 = vmatpush1.msra.mxu0 0.0
    %4633 = vmatprep.subr.mxu0 0.0
    %4634 = vmatpush1.msra.mxu0 0.0
    %4635 = vmatprep.subr.mxu0 0.0
    %4636 = vmatpush1.msra.mxu0 0.0
    %4637 = vmatprep.subr.mxu0 0.0
    %4638 = vmatpush1.msra.mxu0 0.0
    %4639 = vmatprep.subr.mxu0 0.0
    %4640 = vmatpush1.msra.mxu0 0.0
    %4641 = vmatprep.subr.mxu0 0.0
    %4642 = vmatpush1.msra.mxu0 0.0
    %4643 = vmatprep.subr.mxu0 0.0
    %4644 = vmatpush1.msra.mxu0 0.0
    %4645 = vmatprep.subr.mxu0 0.0
    %4646 = vmatpush1.msra.mxu0 0.0
    %4647 = vmatprep.subr.mxu0 0.0
    %4648 = vmatpush1.msra.mxu0 0.0
    %4649 = vmatprep.subr.mxu0 0.0
    %4650 = vmatpush1.msra.mxu0 0.0
    %4651 = vmatprep.subr.mxu0 0.0
    %4652 = vmatpush1.msra.mxu0 0.0
    %4653 = vmatprep.subr.mxu0 0.0
    %4654 = vmatpush1.msra.mxu0 0.0
    %4655 = vmatprep.subr.mxu0 0.0
    %4656 = vmatpush1.msra.mxu0 0.0
    %4657 = vmatprep.subr.mxu0 0.0
    %4658 = vmatpush1.msra.mxu0 0.0
    %4659 = vmatprep.subr.mxu0 0.0
    %4660 = vmatpush1.msra.mxu0 0.0
    %4661 = vmatprep.subr.mxu0 0.0
    %4662 = vmatpush1.msra.mxu0 0.0
    %4663 = vmatprep.subr.mxu0 0.0
    %4664 = vmatpush1.msra.mxu0 0.0
    %4665 = vmatprep.subr.mxu0 0.0
    %4666 = vmatpush1.msra.mxu0 0.0
    %4667 = vmatprep.subr.mxu0 0.0
    %4668 = vmatpush1.msra.mxu0 0.0
    %4669 = vmatprep.subr.mxu0 0.0
    %4670 = vmatpush1.msra.mxu0 0.0
    %4671 = vmatprep.subr.mxu0 0.0
    %4672 = vmatpush1.msra.mxu0 0.0
    %4673 = vmatprep.subr.mxu0 0.0
    %4674 = vmatpush1.msra.mxu0 0.0
    %4675 = vmatprep.subr.mxu0 0.0
    %4676 = vmatpush1.msra.mxu0 0.0
    %4677 = vmatprep.subr.mxu0 0.0
    %4678 = vmatpush1.msra.mxu0 0.0
    %4679 = vmatprep.subr.mxu0 0.0
    %4680 = vmatpush1.msra.mxu0 0.0
    %4681 = vmatprep.mubr.f32.mxu0 0.0
    %4682 = vmatmul.mubr.f32.gmra.mrb[0].mxu0 %v4615
    %v4683 = vpop.f32.mrb[0].mxu0
    %v4684 = vadd.f32 0.0, %v4683
    %v4685 = vpop.f32.mrb[0].mxu0
    %4686 = vdwg.mxu0
    %v4688 = vsel %vm524, %v4610, 0
    %4690 = vmatprep.subr.mxu0 0.0
    %4691 = vmatpush1.msra.mxu0 %v4613
    %4692 = vmatprep.subr.mxu0 0.0
    %4693 = vmatpush1.msra.mxu0 0.0
    %4694 = vmatprep.subr.mxu0 0.0
    %4695 = vmatpush1.msra.mxu0 0.0
    %4696 = vmatprep.subr.mxu0 0.0
    %4697 = vmatpush1.msra.mxu0 0.0
    %4698 = vmatprep.subr.mxu0 0.0
    %4699 = vmatpush1.msra.mxu0 0.0
    %4700 = vmatprep.subr.mxu0 0.0
    %4701 = vmatpush1.msra.mxu0 0.0
    %4702 = vmatprep.subr.mxu0 0.0
    %4703 = vmatpush1.msra.mxu0 0.0
    %4704 = vmatprep.subr.mxu0 0.0
    %4705 = vmatpush1.msra.mxu0 0.0
    %4706 = vmatprep.subr.mxu0 0.0
    %4707 = vmatpush1.msra.mxu0 0.0
    %4708 = vmatprep.subr.mxu0 0.0
    %4709 = vmatpush1.msra.mxu0 0.0
    %4710 = vmatprep.subr.mxu0 0.0
    %4711 = vmatpush1.msra.mxu0 0.0
    %4712 = vmatprep.subr.mxu0 0.0
    %4713 = vmatpush1.msra.mxu0 0.0
    %4714 = vmatprep.subr.mxu0 0.0
    %4715 = vmatpush1.msra.mxu0 0.0
    %4716 = vmatprep.subr.mxu0 0.0
    %4717 = vmatpush1.msra.mxu0 0.0
    %4718 = vmatprep.subr.mxu0 0.0
    %4719 = vmatpush1.msra.mxu0 0.0
    %4720 = vmatprep.subr.mxu0 0.0
    %4721 = vmatpush1.msra.mxu0 0.0
    %4722 = vmatprep.subr.mxu0 0.0
    %4723 = vmatpush1.msra.mxu0 0.0
    %4724 = vmatprep.subr.mxu0 0.0
    %4725 = vmatpush1.msra.mxu0 0.0
    %4726 = vmatprep.subr.mxu0 0.0
    %4727 = vmatpush1.msra.mxu0 0.0
    %4728 = vmatprep.subr.mxu0 0.0
    %4729 = vmatpush1.msra.mxu0 0.0
    %4730 = vmatprep.subr.mxu0 0.0
    %4731 = vmatpush1.msra.mxu0 0.0
    %4732 = vmatprep.subr.mxu0 0.0
    %4733 = vmatpush1.msra.mxu0 0.0
    %4734 = vmatprep.subr.mxu0 0.0
    %4735 = vmatpush1.msra.mxu0 0.0
    %4736 = vmatprep.subr.mxu0 0.0
    %4737 = vmatpush1.msra.mxu0 0.0
    %4738 = vmatprep.subr.mxu0 0.0
    %4739 = vmatpush1.msra.mxu0 0.0
    %4740 = vmatprep.subr.mxu0 0.0
    %4741 = vmatpush1.msra.mxu0 0.0
    %4742 = vmatprep.subr.mxu0 0.0
    %4743 = vmatpush1.msra.mxu0 0.0
    %4744 = vmatprep.subr.mxu0 0.0
    %4745 = vmatpush1.msra.mxu0 0.0
    %4746 = vmatprep.subr.mxu0 0.0
    %4747 = vmatpush1.msra.mxu0 0.0
    %4748 = vmatprep.subr.mxu0 0.0
    %4749 = vmatpush1.msra.mxu0 0.0
    %4750 = vmatprep.subr.mxu0 0.0
    %4751 = vmatpush1.msra.mxu0 0.0
    %4752 = vmatprep.subr.mxu0 0.0
    %4753 = vmatpush1.msra.mxu0 0.0
    %4754 = vmatprep.mubr.f32.mxu0 0.0
    %4755 = vmatmul.mubr.f32.gmra.mrb[0].mxu0 %v4688
    %v4756 = vpop.f32.mrb[0].mxu0
    %v4757 = vadd.f32 0.0, %v4756
    %v4758 = vpop.f32.mrb[0].mxu0
    %4759 = vdwg.mxu0
    %v4760 = vadd.f32 %v4607, %v4684
    %v4761 = vadd.f32 %v4608, %v4757
    %v4762 = vld [vmem:[#allocation4 + $0x14] sm:$0x1]
    %v4763 = vld [vmem:[#allocation4 + $0x34] sm:$0x1]
    %s4764 = scalar_lea.vmem %s7, 320
    %v4765 = vld [vmem:[%s4764] sm:$0xff]
    %v4766 = vld [vmem:[%s4764 + $0x8] sm:$0xff]
    %v4768 = vsel %vm524, %v4762, 0
    %4770 = vmatprep.subr.mxu0 0.0
    %4771 = vmatpush1.msra.mxu0 %v4765
    %4772 = vmatprep.subr.mxu0 0.0
    %4773 = vmatpush1.msra.mxu0 0.0
    %4774 = vmatprep.subr.mxu0 0.0
    %4775 = vmatpush1.msra.mxu0 0.0
    %4776 = vmatprep.subr.mxu0 0.0
    %4777 = vmatpush1.msra.mxu0 0.0
    %4778 = vmatprep.subr.mxu0 0.0
    %4779 = vmatpush1.msra.mxu0 0.0
    %4780 = vmatprep.subr.mxu0 0.0
    %4781 = vmatpush1.msra.mxu0 0.0
    %4782 = vmatprep.subr.mxu0 0.0
    %4783 = vmatpush1.msra.mxu0 0.0
    %4784 = vmatprep.subr.mxu0 0.0
    %4785 = vmatpush1.msra.mxu0 0.0
    %4786 = vmatprep.subr.mxu0 0.0
    %4787 = vmatpush1.msra.mxu0 0.0
    %4788 = vmatprep.subr.mxu0 0.0
    %4789 = vmatpush1.msra.mxu0 0.0
    %4790 = vmatprep.subr.mxu0 0.0
    %4791 = vmatpush1.msra.mxu0 0.0
    %4792 = vmatprep.subr.mxu0 0.0
    %4793 = vmatpush1.msra.mxu0 0.0
    %4794 = vmatprep.subr.mxu0 0.0
    %4795 = vmatpush1.msra.mxu0 0.0
    %4796 = vmatprep.subr.mxu0 0.0
    %4797 = vmatpush1.msra.mxu0 0.0
    %4798 = vmatprep.subr.mxu0 0.0
    %4799 = vmatpush1.msra.mxu0 0.0
    %4800 = vmatprep.subr.mxu0 0.0
    %4801 = vmatpush1.msra.mxu0 0.0
    %4802 = vmatprep.subr.mxu0 0.0
    %4803 = vmatpush1.msra.mxu0 0.0
    %4804 = vmatprep.subr.mxu0 0.0
    %4805 = vmatpush1.msra.mxu0 0.0
    %4806 = vmatprep.subr.mxu0 0.0
    %4807 = vmatpush1.msra.mxu0 0.0
    %4808 = vmatprep.subr.mxu0 0.0
    %4809 = vmatpush1.msra.mxu0 0.0
    %4810 = vmatprep.subr.mxu0 0.0
    %4811 = vmatpush1.msra.mxu0 0.0
    %4812 = vmatprep.subr.mxu0 0.0
    %4813 = vmatpush1.msra.mxu0 0.0
    %4814 = vmatprep.subr.mxu0 0.0
    %4815 = vmatpush1.msra.mxu0 0.0
    %4816 = vmatprep.subr.mxu0 0.0
    %4817 = vmatpush1.msra.mxu0 0.0
    %4818 = vmatprep.subr.mxu0 0.0
    %4819 = vmatpush1.msra.mxu0 0.0
    %4820 = vmatprep.subr.mxu0 0.0
    %4821 = vmatpush1.msra.mxu0 0.0
    %4822 = vmatprep.subr.mxu0 0.0
    %4823 = vmatpush1.msra.mxu0 0.0
    %4824 = vmatprep.subr.mxu0 0.0
    %4825 = vmatpush1.msra.mxu0 0.0
    %4826 = vmatprep.subr.mxu0 0.0
    %4827 = vmatpush1.msra.mxu0 0.0
    %4828 = vmatprep.subr.mxu0 0.0
    %4829 = vmatpush1.msra.mxu0 0.0
    %4830 = vmatprep.subr.mxu0 0.0
    %4831 = vmatpush1.msra.mxu0 0.0
    %4832 = vmatprep.subr.mxu0 0.0
    %4833 = vmatpush1.msra.mxu0 0.0
    %4834 = vmatprep.mubr.f32.mxu0 0.0
    %4835 = vmatmul.mubr.f32.gmra.mrb[0].mxu0 %v4768
    %v4836 = vpop.f32.mrb[0].mxu0
    %v4837 = vadd.f32 0.0, %v4836
    %v4838 = vpop.f32.mrb[0].mxu0
    %4839 = vdwg.mxu0
    %v4841 = vsel %vm524, %v4763, 0
    %4843 = vmatprep.subr.mxu0 0.0
    %4844 = vmatpush1.msra.mxu0 %v4766
    %4845 = vmatprep.subr.mxu0 0.0
    %4846 = vmatpush1.msra.mxu0 0.0
    %4847 = vmatprep.subr.mxu0 0.0
    %4848 = vmatpush1.msra.mxu0 0.0
    %4849 = vmatprep.subr.mxu0 0.0
    %4850 = vmatpush1.msra.mxu0 0.0
    %4851 = vmatprep.subr.mxu0 0.0
    %4852 = vmatpush1.msra.mxu0 0.0
    %4853 = vmatprep.subr.mxu0 0.0
    %4854 = vmatpush1.msra.mxu0 0.0
    %4855 = vmatprep.subr.mxu0 0.0
    %4856 = vmatpush1.msra.mxu0 0.0
    %4857 = vmatprep.subr.mxu0 0.0
    %4858 = vmatpush1.msra.mxu0 0.0
    %4859 = vmatprep.subr.mxu0 0.0
    %4860 = vmatpush1.msra.mxu0 0.0
    %4861 = vmatprep.subr.mxu0 0.0
    %4862 = vmatpush1.msra.mxu0 0.0
    %4863 = vmatprep.subr.mxu0 0.0
    %4864 = vmatpush1.msra.mxu0 0.0
    %4865 = vmatprep.subr.mxu0 0.0
    %4866 = vmatpush1.msra.mxu0 0.0
    %4867 = vmatprep.subr.mxu0 0.0
    %4868 = vmatpush1.msra.mxu0 0.0
    %4869 = vmatprep.subr.mxu0 0.0
    %4870 = vmatpush1.msra.mxu0 0.0
    %4871 = vmatprep.subr.mxu0 0.0
    %4872 = vmatpush1.msra.mxu0 0.0
    %4873 = vmatprep.subr.mxu0 0.0
    %4874 = vmatpush1.msra.mxu0 0.0
    %4875 = vmatprep.subr.mxu0 0.0
    %4876 = vmatpush1.msra.mxu0 0.0
    %4877 = vmatprep.subr.mxu0 0.0
    %4878 = vmatpush1.msra.mxu0 0.0
    %4879 = vmatprep.subr.mxu0 0.0
    %4880 = vmatpush1.msra.mxu0 0.0
    %4881 = vmatprep.subr.mxu0 0.0
    %4882 = vmatpush1.msra.mxu0 0.0
    %4883 = vmatprep.subr.mxu0 0.0
    %4884 = vmatpush1.msra.mxu0 0.0
    %4885 = vmatprep.subr.mxu0 0.0
    %4886 = vmatpush1.msra.mxu0 0.0
    %4887 = vmatprep.subr.mxu0 0.0
    %4888 = vmatpush1.msra.mxu0 0.0
    %4889 = vmatprep.subr.mxu0 0.0
    %4890 = vmatpush1.msra.mxu0 0.0
    %4891 = vmatprep.subr.mxu0 0.0
    %4892 = vmatpush1.msra.mxu0 0.0
    %4893 = vmatprep.subr.mxu0 0.0
    %4894 = vmatpush1.msra.mxu0 0.0
    %4895 = vmatprep.subr.mxu0 0.0
    %4896 = vmatpush1.msra.mxu0 0.0
    %4897 = vmatprep.subr.mxu0 0.0
    %4898 = vmatpush1.msra.mxu0 0.0
    %4899 = vmatprep.subr.mxu0 0.0
    %4900 = vmatpush1.msra.mxu0 0.0
    %4901 = vmatprep.subr.mxu0 0.0
    %4902 = vmatpush1.msra.mxu0 0.0
    %4903 = vmatprep.subr.mxu0 0.0
    %4904 = vmatpush1.msra.mxu0 0.0
    %4905 = vmatprep.subr.mxu0 0.0
    %4906 = vmatpush1.msra.mxu0 0.0
    %4907 = vmatprep.mubr.f32.mxu0 0.0
    %4908 = vmatmul.mubr.f32.gmra.mrb[0].mxu0 %v4841
    %v4909 = vpop.f32.mrb[0].mxu0
    %v4910 = vadd.f32 0.0, %v4909
    %v4911 = vpop.f32.mrb[0].mxu0
    %4912 = vdwg.mxu0
    %v4913 = vadd.f32 %v4760, %v4837
    %v4914 = vadd.f32 %v4761, %v4910
    %v4915 = vld [vmem:[#allocation4 + $0x15] sm:$0x1]
    %v4916 = vld [vmem:[#allocation4 + $0x35] sm:$0x1]
    %s4917 = scalar_lea.vmem %s7, 336
    %v4918 = vld [vmem:[%s4917] sm:$0xff]
    %v4919 = vld [vmem:[%s4917 + $0x8] sm:$0xff]
    %v4921 = vsel %vm524, %v4915, 0
    %4923 = vmatprep.subr.mxu0 0.0
    %4924 = vmatpush1.msra.mxu0 %v4918
    %4925 = vmatprep.subr.mxu0 0.0
    %4926 = vmatpush1.msra.mxu0 0.0
    %4927 = vmatprep.subr.mxu0 0.0
    %4928 = vmatpush1.msra.mxu0 0.0
    %4929 = vmatprep.subr.mxu0 0.0
    %4930 = vmatpush1.msra.mxu0 0.0
    %4931 = vmatprep.subr.mxu0 0.0
    %4932 = vmatpush1.msra.mxu0 0.0
    %4933 = vmatprep.subr.mxu0 0.0
    %4934 = vmatpush1.msra.mxu0 0.0
    %4935 = vmatprep.subr.mxu0 0.0
    %4936 = vmatpush1.msra.mxu0 0.0
    %4937 = vmatprep.subr.mxu0 0.0
    %4938 = vmatpush1.msra.mxu0 0.0
    %4939 = vmatprep.subr.mxu0 0.0
    %4940 = vmatpush1.msra.mxu0 0.0
    %4941 = vmatprep.subr.mxu0 0.0
    %4942 = vmatpush1.msra.mxu0 0.0
    %4943 = vmatprep.subr.mxu0 0.0
    %4944 = vmatpush1.msra.mxu0 0.0
    %4945 = vmatprep.subr.mxu0 0.0
    %4946 = vmatpush1.msra.mxu0 0.0
    %4947 = vmatprep.subr.mxu0 0.0
    %4948 = vmatpush1.msra.mxu0 0.0
    %4949 = vmatprep.subr.mxu0 0.0
    %4950 = vmatpush1.msra.mxu0 0.0
    %4951 = vmatprep.subr.mxu0 0.0
    %4952 = vmatpush1.msra.mxu0 0.0
    %4953 = vmatprep.subr.mxu0 0.0
    %4954 = vmatpush1.msra.mxu0 0.0
    %4955 = vmatprep.subr.mxu0 0.0
    %4956 = vmatpush1.msra.mxu0 0.0
    %4957 = vmatprep.subr.mxu0 0.0
    %4958 = vmatpush1.msra.mxu0 0.0
    %4959 = vmatprep.subr.mxu0 0.0
    %4960 = vmatpush1.msra.mxu0 0.0
    %4961 = vmatprep.subr.mxu0 0.0
    %4962 = vmatpush1.msra.mxu0 0.0
    %4963 = vmatprep.subr.mxu0 0.0
    %4964 = vmatpush1.msra.mxu0 0.0
    %4965 = vmatprep.subr.mxu0 0.0
    %4966 = vmatpush1.msra.mxu0 0.0
    %4967 = vmatprep.subr.mxu0 0.0
    %4968 = vmatpush1.msra.mxu0 0.0
    %4969 = vmatprep.subr.mxu0 0.0
    %4970 = vmatpush1.msra.mxu0 0.0
    %4971 = vmatprep.subr.mxu0 0.0
    %4972 = vmatpush1.msra.mxu0 0.0
    %4973 = vmatprep.subr.mxu0 0.0
    %4974 = vmatpush1.msra.mxu0 0.0
    %4975 = vmatprep.subr.mxu0 0.0
    %4976 = vmatpush1.msra.mxu0 0.0
    %4977 = vmatprep.subr.mxu0 0.0
    %4978 = vmatpush1.msra.mxu0 0.0
    %4979 = vmatprep.subr.mxu0 0.0
    %4980 = vmatpush1.msra.mxu0 0.0
    %4981 = vmatprep.subr.mxu0 0.0
    %4982 = vmatpush1.msra.mxu0 0.0
    %4983 = vmatprep.subr.mxu0 0.0
    %4984 = vmatpush1.msra.mxu0 0.0
    %4985 = vmatprep.subr.mxu0 0.0
    %4986 = vmatpush1.msra.mxu0 0.0
    %4987 = vmatprep.mubr.f32.mxu0 0.0
    %4988 = vmatmul.mubr.f32.gmra.mrb[0].mxu0 %v4921
    %v4989 = vpop.f32.mrb[0].mxu0
    %v4990 = vadd.f32 0.0, %v4989
    %v4991 = vpop.f32.mrb[0].mxu0
    %4992 = vdwg.mxu0
    %v4994 = vsel %vm524, %v4916, 0
    %4996 = vmatprep.subr.mxu0 0.0
    %4997 = vmatpush1.msra.mxu0 %v4919
    %4998 = vmatprep.subr.mxu0 0.0
    %4999 = vmatpush1.msra.mxu0 0.0
    %5000 = vmatprep.subr.mxu0 0.0
    %5001 = vmatpush1.msra.mxu0 0.0
    %5002 = vmatprep.subr.mxu0 0.0
    %5003 = vmatpush1.msra.mxu0 0.0
    %5004 = vmatprep.subr.mxu0 0.0
    %5005 = vmatpush1.msra.mxu0 0.0
    %5006 = vmatprep.subr.mxu0 0.0
    %5007 = vmatpush1.msra.mxu0 0.0
    %5008 = vmatprep.subr.mxu0 0.0
    %5009 = vmatpush1.msra.mxu0 0.0
    %5010 = vmatprep.subr.mxu0 0.0
    %5011 = vmatpush1.msra.mxu0 0.0
    %5012 = vmatprep.subr.mxu0 0.0
    %5013 = vmatpush1.msra.mxu0 0.0
    %5014 = vmatprep.subr.mxu0 0.0
    %5015 = vmatpush1.msra.mxu0 0.0
    %5016 = vmatprep.subr.mxu0 0.0
    %5017 = vmatpush1.msra.mxu0 0.0
    %5018 = vmatprep.subr.mxu0 0.0
    %5019 = vmatpush1.msra.mxu0 0.0
    %5020 = vmatprep.subr.mxu0 0.0
    %5021 = vmatpush1.msra.mxu0 0.0
    %5022 = vmatprep.subr.mxu0 0.0
    %5023 = vmatpush1.msra.mxu0 0.0
    %5024 = vmatprep.subr.mxu0 0.0
    %5025 = vmatpush1.msra.mxu0 0.0
    %5026 = vmatprep.subr.mxu0 0.0
    %5027 = vmatpush1.msra.mxu0 0.0
    %5028 = vmatprep.subr.mxu0 0.0
    %5029 = vmatpush1.msra.mxu0 0.0
    %5030 = vmatprep.subr.mxu0 0.0
    %5031 = vmatpush1.msra.mxu0 0.0
    %5032 = vmatprep.subr.mxu0 0.0
    %5033 = vmatpush1.msra.mxu0 0.0
    %5034 = vmatprep.subr.mxu0 0.0
    %5035 = vmatpush1.msra.mxu0 0.0
    %5036 = vmatprep.subr.mxu0 0.0
    %5037 = vmatpush1.msra.mxu0 0.0
    %5038 = vmatprep.subr.mxu0 0.0
    %5039 = vmatpush1.msra.mxu0 0.0
    %5040 = vmatprep.subr.mxu0 0.0
    %5041 = vmatpush1.msra.mxu0 0.0
    %5042 = vmatprep.subr.mxu0 0.0
    %5043 = vmatpush1.msra.mxu0 0.0
    %5044 = vmatprep.subr.mxu0 0.0
    %5045 = vmatpush1.msra.mxu0 0.0
    %5046 = vmatprep.subr.mxu0 0.0
    %5047 = vmatpush1.msra.mxu0 0.0
    %5048 = vmatprep.subr.mxu0 0.0
    %5049 = vmatpush1.msra.mxu0 0.0
    %5050 = vmatprep.subr.mxu0 0.0
    %5051 = vmatpush1.msra.mxu0 0.0
    %5052 = vmatprep.subr.mxu0 0.0
    %5053 = vmatpush1.msra.mxu0 0.0
    %5054 = vmatprep.subr.mxu0 0.0
    %5055 = vmatpush1.msra.mxu0 0.0
    %5056 = vmatprep.subr.mxu0 0.0
    %5057 = vmatpush1.msra.mxu0 0.0
    %5058 = vmatprep.subr.mxu0 0.0
    %5059 = vmatpush1.msra.mxu0 0.0
    %5060 = vmatprep.mubr.f32.mxu0 0.0
    %5061 = vmatmul.mubr.f32.gmra.mrb[0].mxu0 %v4994
    %v5062 = vpop.f32.mrb[0].mxu0
    %v5063 = vadd.f32 0.0, %v5062
    %v5064 = vpop.f32.mrb[0].mxu0
    %5065 = vdwg.mxu0
    %v5066 = vadd.f32 %v4913, %v4990
    %v5067 = vadd.f32 %v4914, %v5063
    %v5068 = vld [vmem:[#allocation4 + $0x16] sm:$0x1]
    %v5069 = vld [vmem:[#allocation4 + $0x36] sm:$0x1]
    %s5070 = scalar_lea.vmem %s7, 352
    %v5071 = vld [vmem:[%s5070] sm:$0xff]
    %v5072 = vld [vmem:[%s5070 + $0x8] sm:$0xff]
    %v5074 = vsel %vm524, %v5068, 0
    %5076 = vmatprep.subr.mxu0 0.0
    %5077 = vmatpush1.msra.mxu0 %v5071
    %5078 = vmatprep.subr.mxu0 0.0
    %5079 = vmatpush1.msra.mxu0 0.0
    %5080 = vmatprep.subr.mxu0 0.0
    %5081 = vmatpush1.msra.mxu0 0.0
    %5082 = vmatprep.subr.mxu0 0.0
    %5083 = vmatpush1.msra.mxu0 0.0
    %5084 = vmatprep.subr.mxu0 0.0
    %5085 = vmatpush1.msra.mxu0 0.0
    %5086 = vmatprep.subr.mxu0 0.0
    %5087 = vmatpush1.msra.mxu0 0.0
    %5088 = vmatprep.subr.mxu0 0.0
    %5089 = vmatpush1.msra.mxu0 0.0
    %5090 = vmatprep.subr.mxu0 0.0
    %5091 = vmatpush1.msra.mxu0 0.0
    %5092 = vmatprep.subr.mxu0 0.0
    %5093 = vmatpush1.msra.mxu0 0.0
    %5094 = vmatprep.subr.mxu0 0.0
    %5095 = vmatpush1.msra.mxu0 0.0
    %5096 = vmatprep.subr.mxu0 0.0
    %5097 = vmatpush1.msra.mxu0 0.0
    %5098 = vmatprep.subr.mxu0 0.0
    %5099 = vmatpush1.msra.mxu0 0.0
    %5100 = vmatprep.subr.mxu0 0.0
    %5101 = vmatpush1.msra.mxu0 0.0
    %5102 = vmatprep.subr.mxu0 0.0
    %5103 = vmatpush1.msra.mxu0 0.0
    %5104 = vmatprep.subr.mxu0 0.0
    %5105 = vmatpush1.msra.mxu0 0.0
    %5106 = vmatprep.subr.mxu0 0.0
    %5107 = vmatpush1.msra.mxu0 0.0
    %5108 = vmatprep.subr.mxu0 0.0
    %5109 = vmatpush1.msra.mxu0 0.0
    %5110 = vmatprep.subr.mxu0 0.0
    %5111 = vmatpush1.msra.mxu0 0.0
    %5112 = vmatprep.subr.mxu0 0.0
    %5113 = vmatpush1.msra.mxu0 0.0
    %5114 = vmatprep.subr.mxu0 0.0
    %5115 = vmatpush1.msra.mxu0 0.0
    %5116 = vmatprep.subr.mxu0 0.0
    %5117 = vmatpush1.msra.mxu0 0.0
    %5118 = vmatprep.subr.mxu0 0.0
    %5119 = vmatpush1.msra.mxu0 0.0
    %5120 = vmatprep.subr.mxu0 0.0
    %5121 = vmatpush1.msra.mxu0 0.0
    %5122 = vmatprep.subr.mxu0 0.0
    %5123 = vmatpush1.msra.mxu0 0.0
    %5124 = vmatprep.subr.mxu0 0.0
    %5125 = vmatpush1.msra.mxu0 0.0
    %5126 = vmatprep.subr.mxu0 0.0
    %5127 = vmatpush1.msra.mxu0 0.0
    %5128 = vmatprep.subr.mxu0 0.0
    %5129 = vmatpush1.msra.mxu0 0.0
    %5130 = vmatprep.subr.mxu0 0.0
    %5131 = vmatpush1.msra.mxu0 0.0
    %5132 = vmatprep.subr.mxu0 0.0
    %5133 = vmatpush1.msra.mxu0 0.0
    %5134 = vmatprep.subr.mxu0 0.0
    %5135 = vmatpush1.msra.mxu0 0.0
    %5136 = vmatprep.subr.mxu0 0.0
    %5137 = vmatpush1.msra.mxu0 0.0
    %5138 = vmatprep.subr.mxu0 0.0
    %5139 = vmatpush1.msra.mxu0 0.0
    %5140 = vmatprep.mubr.f32.mxu0 0.0
    %5141 = vmatmul.mubr.f32.gmra.mrb[0].mxu0 %v5074
    %v5142 = vpop.f32.mrb[0].mxu0
    %v5143 = vadd.f32 0.0, %v5142
    %v5144 = vpop.f32.mrb[0].mxu0
    %5145 = vdwg.mxu0
    %v5147 = vsel %vm524, %v5069, 0
    %5149 = vmatprep.subr.mxu0 0.0
    %5150 = vmatpush1.msra.mxu0 %v5072
    %5151 = vmatprep.subr.mxu0 0.0
    %5152 = vmatpush1.msra.mxu0 0.0
    %5153 = vmatprep.subr.mxu0 0.0
    %5154 = vmatpush1.msra.mxu0 0.0
    %5155 = vmatprep.subr.mxu0 0.0
    %5156 = vmatpush1.msra.mxu0 0.0
    %5157 = vmatprep.subr.mxu0 0.0
    %5158 = vmatpush1.msra.mxu0 0.0
    %5159 = vmatprep.subr.mxu0 0.0
    %5160 = vmatpush1.msra.mxu0 0.0
    %5161 = vmatprep.subr.mxu0 0.0
    %5162 = vmatpush1.msra.mxu0 0.0
    %5163 = vmatprep.subr.mxu0 0.0
    %5164 = vmatpush1.msra.mxu0 0.0
    %5165 = vmatprep.subr.mxu0 0.0
    %5166 = vmatpush1.msra.mxu0 0.0
    %5167 = vmatprep.subr.mxu0 0.0
    %5168 = vmatpush1.msra.mxu0 0.0
    %5169 = vmatprep.subr.mxu0 0.0
    %5170 = vmatpush1.msra.mxu0 0.0
    %5171 = vmatprep.subr.mxu0 0.0
    %5172 = vmatpush1.msra.mxu0 0.0
    %5173 = vmatprep.subr.mxu0 0.0
    %5174 = vmatpush1.msra.mxu0 0.0
    %5175 = vmatprep.subr.mxu0 0.0
    %5176 = vmatpush1.msra.mxu0 0.0
    %5177 = vmatprep.subr.mxu0 0.0
    %5178 = vmatpush1.msra.mxu0 0.0
    %5179 = vmatprep.subr.mxu0 0.0
    %5180 = vmatpush1.msra.mxu0 0.0
    %5181 = vmatprep.subr.mxu0 0.0
    %5182 = vmatpush1.msra.mxu0 0.0
    %5183 = vmatprep.subr.mxu0 0.0
    %5184 = vmatpush1.msra.mxu0 0.0
    %5185 = vmatprep.subr.mxu0 0.0
    %5186 = vmatpush1.msra.mxu0 0.0
    %5187 = vmatprep.subr.mxu0 0.0
    %5188 = vmatpush1.msra.mxu0 0.0
    %5189 = vmatprep.subr.mxu0 0.0
    %5190 = vmatpush1.msra.mxu0 0.0
    %5191 = vmatprep.subr.mxu0 0.0
    %5192 = vmatpush1.msra.mxu0 0.0
    %5193 = vmatprep.subr.mxu0 0.0
    %5194 = vmatpush1.msra.mxu0 0.0
    %5195 = vmatprep.subr.mxu0 0.0
    %5196 = vmatpush1.msra.mxu0 0.0
    %5197 = vmatprep.subr.mxu0 0.0
    %5198 = vmatpush1.msra.mxu0 0.0
    %5199 = vmatprep.subr.mxu0 0.0
    %5200 = vmatpush1.msra.mxu0 0.0
    %5201 = vmatprep.subr.mxu0 0.0
    %5202 = vmatpush1.msra.mxu0 0.0
    %5203 = vmatprep.subr.mxu0 0.0
    %5204 = vmatpush1.msra.mxu0 0.0
    %5205 = vmatprep.subr.mxu0 0.0
    %5206 = vmatpush1.msra.mxu0 0.0
    %5207 = vmatprep.subr.mxu0 0.0
    %5208 = vmatpush1.msra.mxu0 0.0
    %5209 = vmatprep.subr.mxu0 0.0
    %5210 = vmatpush1.msra.mxu0 0.0
    %5211 = vmatprep.subr.mxu0 0.0
    %5212 = vmatpush1.msra.mxu0 0.0
    %5213 = vmatprep.mubr.f32.mxu0 0.0
    %5214 = vmatmul.mubr.f32.gmra.mrb[0].mxu0 %v5147
    %v5215 = vpop.f32.mrb[0].mxu0
    %v5216 = vadd.f32 0.0, %v5215
    %v5217 = vpop.f32.mrb[0].mxu0
    %5218 = vdwg.mxu0
    %v5219 = vadd.f32 %v5066, %v5143
    %v5220 = vadd.f32 %v5067, %v5216
    %v5221 = vld [vmem:[#allocation4 + $0x17] sm:$0x1]
    %v5222 = vld [vmem:[#allocation4 + $0x37] sm:$0x1]
    %s5223 = scalar_lea.vmem %s7, 368
    %v5224 = vld [vmem:[%s5223] sm:$0xff]
    %v5225 = vld [vmem:[%s5223 + $0x8] sm:$0xff]
    %v5227 = vsel %vm524, %v5221, 0
    %5229 = vmatprep.subr.mxu0 0.0
    %5230 = vmatpush1.msra.mxu0 %v5224
    %5231 = vmatprep.subr.mxu0 0.0
    %5232 = vmatpush1.msra.mxu0 0.0
    %5233 = vmatprep.subr.mxu0 0.0
    %5234 = vmatpush1.msra.mxu0 0.0
    %5235 = vmatprep.subr.mxu0 0.0
    %5236 = vmatpush1.msra.mxu0 0.0
    %5237 = vmatprep.subr.mxu0 0.0
    %5238 = vmatpush1.msra.mxu0 0.0
    %5239 = vmatprep.subr.mxu0 0.0
    %5240 = vmatpush1.msra.mxu0 0.0
    %5241 = vmatprep.subr.mxu0 0.0
    %5242 = vmatpush1.msra.mxu0 0.0
    %5243 = vmatprep.subr.mxu0 0.0
    %5244 = vmatpush1.msra.mxu0 0.0
    %5245 = vmatprep.subr.mxu0 0.0
    %5246 = vmatpush1.msra.mxu0 0.0
    %5247 = vmatprep.subr.mxu0 0.0
    %5248 = vmatpush1.msra.mxu0 0.0
    %5249 = vmatprep.subr.mxu0 0.0
    %5250 = vmatpush1.msra.mxu0 0.0
    %5251 = vmatprep.subr.mxu0 0.0
    %5252 = vmatpush1.msra.mxu0 0.0
    %5253 = vmatprep.subr.mxu0 0.0
    %5254 = vmatpush1.msra.mxu0 0.0
    %5255 = vmatprep.subr.mxu0 0.0
    %5256 = vmatpush1.msra.mxu0 0.0
    %5257 = vmatprep.subr.mxu0 0.0
    %5258 = vmatpush1.msra.mxu0 0.0
    %5259 = vmatprep.subr.mxu0 0.0
    %5260 = vmatpush1.msra.mxu0 0.0
    %5261 = vmatprep.subr.mxu0 0.0
    %5262 = vmatpush1.msra.mxu0 0.0
    %5263 = vmatprep.subr.mxu0 0.0
    %5264 = vmatpush1.msra.mxu0 0.0
    %5265 = vmatprep.subr.mxu0 0.0
    %5266 = vmatpush1.msra.mxu0 0.0
    %5267 = vmatprep.subr.mxu0 0.0
    %5268 = vmatpush1.msra.mxu0 0.0
    %5269 = vmatprep.subr.mxu0 0.0
    %5270 = vmatpush1.msra.mxu0 0.0
    %5271 = vmatprep.subr.mxu0 0.0
    %5272 = vmatpush1.msra.mxu0 0.0
    %5273 = vmatprep.subr.mxu0 0.0
    %5274 = vmatpush1.msra.mxu0 0.0
    %5275 = vmatprep.subr.mxu0 0.0
    %5276 = vmatpush1.msra.mxu0 0.0
    %5277 = vmatprep.subr.mxu0 0.0
    %5278 = vmatpush1.msra.mxu0 0.0
    %5279 = vmatprep.subr.mxu0 0.0
    %5280 = vmatpush1.msra.mxu0 0.0
    %5281 = vmatprep.subr.mxu0 0.0
    %5282 = vmatpush1.msra.mxu0 0.0
    %5283 = vmatprep.subr.mxu0 0.0
    %5284 = vmatpush1.msra.mxu0 0.0
    %5285 = vmatprep.subr.mxu0 0.0
    %5286 = vmatpush1.msra.mxu0 0.0
    %5287 = vmatprep.subr.mxu0 0.0
    %5288 = vmatpush1.msra.mxu0 0.0
    %5289 = vmatprep.subr.mxu0 0.0
    %5290 = vmatpush1.msra.mxu0 0.0
    %5291 = vmatprep.subr.mxu0 0.0
    %5292 = vmatpush1.msra.mxu0 0.0
    %5293 = vmatprep.mubr.f32.mxu0 0.0
    %5294 = vmatmul.mubr.f32.gmra.mrb[0].mxu0 %v5227
    %v5295 = vpop.f32.mrb[0].mxu0
    %v5296 = vadd.f32 0.0, %v5295
    %v5297 = vpop.f32.mrb[0].mxu0
    %5298 = vdwg.mxu0
    %v5300 = vsel %vm524, %v5222, 0
    %5302 = vmatprep.subr.mxu0 0.0
    %5303 = vmatpush1.msra.mxu0 %v5225
    %5304 = vmatprep.subr.mxu0 0.0
    %5305 = vmatpush1.msra.mxu0 0.0
    %5306 = vmatprep.subr.mxu0 0.0
    %5307 = vmatpush1.msra.mxu0 0.0
    %5308 = vmatprep.subr.mxu0 0.0
    %5309 = vmatpush1.msra.mxu0 0.0
    %5310 = vmatprep.subr.mxu0 0.0
    %5311 = vmatpush1.msra.mxu0 0.0
    %5312 = vmatprep.subr.mxu0 0.0
    %5313 = vmatpush1.msra.mxu0 0.0
    %5314 = vmatprep.subr.mxu0 0.0
    %5315 = vmatpush1.msra.mxu0 0.0
    %5316 = vmatprep.subr.mxu0 0.0
    %5317 = vmatpush1.msra.mxu0 0.0
    %5318 = vmatprep.subr.mxu0 0.0
    %5319 = vmatpush1.msra.mxu0 0.0
    %5320 = vmatprep.subr.mxu0 0.0
    %5321 = vmatpush1.msra.mxu0 0.0
    %5322 = vmatprep.subr.mxu0 0.0
    %5323 = vmatpush1.msra.mxu0 0.0
    %5324 = vmatprep.subr.mxu0 0.0
    %5325 = vmatpush1.msra.mxu0 0.0
    %5326 = vmatprep.subr.mxu0 0.0
    %5327 = vmatpush1.msra.mxu0 0.0
    %5328 = vmatprep.subr.mxu0 0.0
    %5329 = vmatpush1.msra.mxu0 0.0
    %5330 = vmatprep.subr.mxu0 0.0
    %5331 = vmatpush1.msra.mxu0 0.0
    %5332 = vmatprep.subr.mxu0 0.0
    %5333 = vmatpush1.msra.mxu0 0.0
    %5334 = vmatprep.subr.mxu0 0.0
    %5335 = vmatpush1.msra.mxu0 0.0
    %5336 = vmatprep.subr.mxu0 0.0
    %5337 = vmatpush1.msra.mxu0 0.0
    %5338 = vmatprep.subr.mxu0 0.0
    %5339 = vmatpush1.msra.mxu0 0.0
    %5340 = vmatprep.subr.mxu0 0.0
    %5341 = vmatpush1.msra.mxu0 0.0
    %5342 = vmatprep.subr.mxu0 0.0
    %5343 = vmatpush1.msra.mxu0 0.0
    %5344 = vmatprep.subr.mxu0 0.0
    %5345 = vmatpush1.msra.mxu0 0.0
    %5346 = vmatprep.subr.mxu0 0.0
    %5347 = vmatpush1.msra.mxu0 0.0
    %5348 = vmatprep.subr.mxu0 0.0
    %5349 = vmatpush1.msra.mxu0 0.0
    %5350 = vmatprep.subr.mxu0 0.0
    %5351 = vmatpush1.msra.mxu0 0.0
    %5352 = vmatprep.subr.mxu0 0.0
    %5353 = vmatpush1.msra.mxu0 0.0
    %5354 = vmatprep.subr.mxu0 0.0
    %5355 = vmatpush1.msra.mxu0 0.0
    %5356 = vmatprep.subr.mxu0 0.0
    %5357 = vmatpush1.msra.mxu0 0.0
    %5358 = vmatprep.subr.mxu0 0.0
    %5359 = vmatpush1.msra.mxu0 0.0
    %5360 = vmatprep.subr.mxu0 0.0
    %5361 = vmatpush1.msra.mxu0 0.0
    %5362 = vmatprep.subr.mxu0 0.0
    %5363 = vmatpush1.msra.mxu0 0.0
    %5364 = vmatprep.subr.mxu0 0.0
    %5365 = vmatpush1.msra.mxu0 0.0
    %5366 = vmatprep.mubr.f32.mxu0 0.0
    %5367 = vmatmul.mubr.f32.gmra.mrb[0].mxu0 %v5300
    %v5368 = vpop.f32.mrb[0].mxu0
    %v5369 = vadd.f32 0.0, %v5368
    %v5370 = vpop.f32.mrb[0].mxu0
    %5371 = vdwg.mxu0
    %v5372 = vadd.f32 %v5219, %v5296
    %v5373 = vadd.f32 %v5220, %v5369
    %v5374 = vld [vmem:[#allocation4 + $0x18] sm:$0x1]
    %v5375 = vld [vmem:[#allocation4 + $0x38] sm:$0x1]
    %s5376 = scalar_lea.vmem %s7, 384
    %v5377 = vld [vmem:[%s5376] sm:$0xff]
    %v5378 = vld [vmem:[%s5376 + $0x8] sm:$0xff]
    %v5380 = vsel %vm524, %v5374, 0
    %5382 = vmatprep.subr.mxu0 0.0
    %5383 = vmatpush1.msra.mxu0 %v5377
    %5384 = vmatprep.subr.mxu0 0.0
    %5385 = vmatpush1.msra.mxu0 0.0
    %5386 = vmatprep.subr.mxu0 0.0
    %5387 = vmatpush1.msra.mxu0 0.0
    %5388 = vmatprep.subr.mxu0 0.0
    %5389 = vmatpush1.msra.mxu0 0.0
    %5390 = vmatprep.subr.mxu0 0.0
    %5391 = vmatpush1.msra.mxu0 0.0
    %5392 = vmatprep.subr.mxu0 0.0
    %5393 = vmatpush1.msra.mxu0 0.0
    %5394 = vmatprep.subr.mxu0 0.0
    %5395 = vmatpush1.msra.mxu0 0.0
    %5396 = vmatprep.subr.mxu0 0.0
    %5397 = vmatpush1.msra.mxu0 0.0
    %5398 = vmatprep.subr.mxu0 0.0
    %5399 = vmatpush1.msra.mxu0 0.0
    %5400 = vmatprep.subr.mxu0 0.0
    %5401 = vmatpush1.msra.mxu0 0.0
    %5402 = vmatprep.subr.mxu0 0.0
    %5403 = vmatpush1.msra.mxu0 0.0
    %5404 = vmatprep.subr.mxu0 0.0
    %5405 = vmatpush1.msra.mxu0 0.0
    %5406 = vmatprep.subr.mxu0 0.0
    %5407 = vmatpush1.msra.mxu0 0.0
    %5408 = vmatprep.subr.mxu0 0.0
    %5409 = vmatpush1.msra.mxu0 0.0
    %5410 = vmatprep.subr.mxu0 0.0
    %5411 = vmatpush1.msra.mxu0 0.0
    %5412 = vmatprep.subr.mxu0 0.0
    %5413 = vmatpush1.msra.mxu0 0.0
    %5414 = vmatprep.subr.mxu0 0.0
    %5415 = vmatpush1.msra.mxu0 0.0
    %5416 = vmatprep.subr.mxu0 0.0
    %5417 = vmatpush1.msra.mxu0 0.0
    %5418 = vmatprep.subr.mxu0 0.0
    %5419 = vmatpush1.msra.mxu0 0.0
    %5420 = vmatprep.subr.mxu0 0.0
    %5421 = vmatpush1.msra.mxu0 0.0
    %5422 = vmatprep.subr.mxu0 0.0
    %5423 = vmatpush1.msra.mxu0 0.0
    %5424 = vmatprep.subr.mxu0 0.0
    %5425 = vmatpush1.msra.mxu0 0.0
    %5426 = vmatprep.subr.mxu0 0.0
    %5427 = vmatpush1.msra.mxu0 0.0
    %5428 = vmatprep.subr.mxu0 0.0
    %5429 = vmatpush1.msra.mxu0 0.0
    %5430 = vmatprep.subr.mxu0 0.0
    %5431 = vmatpush1.msra.mxu0 0.0
    %5432 = vmatprep.subr.mxu0 0.0
    %5433 = vmatpush1.msra.mxu0 0.0
    %5434 = vmatprep.subr.mxu0 0.0
    %5435 = vmatpush1.msra.mxu0 0.0
    %5436 = vmatprep.subr.mxu0 0.0
    %5437 = vmatpush1.msra.mxu0 0.0
    %5438 = vmatprep.subr.mxu0 0.0
    %5439 = vmatpush1.msra.mxu0 0.0
    %5440 = vmatprep.subr.mxu0 0.0
    %5441 = vmatpush1.msra.mxu0 0.0
    %5442 = vmatprep.subr.mxu0 0.0
    %5443 = vmatpush1.msra.mxu0 0.0
    %5444 = vmatprep.subr.mxu0 0.0
    %5445 = vmatpush1.msra.mxu0 0.0
    %5446 = vmatprep.mubr.f32.mxu0 0.0
    %5447 = vmatmul.mubr.f32.gmra.mrb[0].mxu0 %v5380
    %v5448 = vpop.f32.mrb[0].mxu0
    %v5449 = vadd.f32 0.0, %v5448
    %v5450 = vpop.f32.mrb[0].mxu0
    %5451 = vdwg.mxu0
    %v5453 = vsel %vm524, %v5375, 0
    %5455 = vmatprep.subr.mxu0 0.0
    %5456 = vmatpush1.msra.mxu0 %v5378
    %5457 = vmatprep.subr.mxu0 0.0
    %5458 = vmatpush1.msra.mxu0 0.0
    %5459 = vmatprep.subr.mxu0 0.0
    %5460 = vmatpush1.msra.mxu0 0.0
    %5461 = vmatprep.subr.mxu0 0.0
    %5462 = vmatpush1.msra.mxu0 0.0
    %5463 = vmatprep.subr.mxu0 0.0
    %5464 = vmatpush1.msra.mxu0 0.0
    %5465 = vmatprep.subr.mxu0 0.0
    %5466 = vmatpush1.msra.mxu0 0.0
    %5467 = vmatprep.subr.mxu0 0.0
    %5468 = vmatpush1.msra.mxu0 0.0
    %5469 = vmatprep.subr.mxu0 0.0
    %5470 = vmatpush1.msra.mxu0 0.0
    %5471 = vmatprep.subr.mxu0 0.0
    %5472 = vmatpush1.msra.mxu0 0.0
    %5473 = vmatprep.subr.mxu0 0.0
    %5474 = vmatpush1.msra.mxu0 0.0
    %5475 = vmatprep.subr.mxu0 0.0
    %5476 = vmatpush1.msra.mxu0 0.0
    %5477 = vmatprep.subr.mxu0 0.0
    %5478 = vmatpush1.msra.mxu0 0.0
    %5479 = vmatprep.subr.mxu0 0.0
    %5480 = vmatpush1.msra.mxu0 0.0
    %5481 = vmatprep.subr.mxu0 0.0
    %5482 = vmatpush1.msra.mxu0 0.0
    %5483 = vmatprep.subr.mxu0 0.0
    %5484 = vmatpush1.msra.mxu0 0.0
    %5485 = vmatprep.subr.mxu0 0.0
    %5486 = vmatpush1.msra.mxu0 0.0
    %5487 = vmatprep.subr.mxu0 0.0
    %5488 = vmatpush1.msra.mxu0 0.0
    %5489 = vmatprep.subr.mxu0 0.0
    %5490 = vmatpush1.msra.mxu0 0.0
    %5491 = vmatprep.subr.mxu0 0.0
    %5492 = vmatpush1.msra.mxu0 0.0
    %5493 = vmatprep.subr.mxu0 0.0
    %5494 = vmatpush1.msra.mxu0 0.0
    %5495 = vmatprep.subr.mxu0 0.0
    %5496 = vmatpush1.msra.mxu0 0.0
    %5497 = vmatprep.subr.mxu0 0.0
    %5498 = vmatpush1.msra.mxu0 0.0
    %5499 = vmatprep.subr.mxu0 0.0
    %5500 = vmatpush1.msra.mxu0 0.0
    %5501 = vmatprep.subr.mxu0 0.0
    %5502 = vmatpush1.msra.mxu0 0.0
    %5503 = vmatprep.subr.mxu0 0.0
    %5504 = vmatpush1.msra.mxu0 0.0
    %5505 = vmatprep.subr.mxu0 0.0
    %5506 = vmatpush1.msra.mxu0 0.0
    %5507 = vmatprep.subr.mxu0 0.0
    %5508 = vmatpush1.msra.mxu0 0.0
    %5509 = vmatprep.subr.mxu0 0.0
    %5510 = vmatpush1.msra.mxu0 0.0
    %5511 = vmatprep.subr.mxu0 0.0
    %5512 = vmatpush1.msra.mxu0 0.0
    %5513 = vmatprep.subr.mxu0 0.0
    %5514 = vmatpush1.msra.mxu0 0.0
    %5515 = vmatprep.subr.mxu0 0.0
    %5516 = vmatpush1.msra.mxu0 0.0
    %5517 = vmatprep.subr.mxu0 0.0
    %5518 = vmatpush1.msra.mxu0 0.0
    %5519 = vmatprep.mubr.f32.mxu0 0.0
    %5520 = vmatmul.mubr.f32.gmra.mrb[0].mxu0 %v5453
    %v5521 = vpop.f32.mrb[0].mxu0
    %v5522 = vadd.f32 0.0, %v5521
    %v5523 = vpop.f32.mrb[0].mxu0
    %5524 = vdwg.mxu0
    %v5525 = vadd.f32 %v5372, %v5449
    %v5526 = vadd.f32 %v5373, %v5522
    %v5527 = vld [vmem:[#allocation4 + $0x19] sm:$0x1]
    %v5528 = vld [vmem:[#allocation4 + $0x39] sm:$0x1]
    %s5529 = scalar_lea.vmem %s7, 400
    %v5530 = vld [vmem:[%s5529] sm:$0xff]
    %v5531 = vld [vmem:[%s5529 + $0x8] sm:$0xff]
    %v5533 = vsel %vm524, %v5527, 0
    %5535 = vmatprep.subr.mxu0 0.0
    %5536 = vmatpush1.msra.mxu0 %v5530
    %5537 = vmatprep.subr.mxu0 0.0
    %5538 = vmatpush1.msra.mxu0 0.0
    %5539 = vmatprep.subr.mxu0 0.0
    %5540 = vmatpush1.msra.mxu0 0.0
    %5541 = vmatprep.subr.mxu0 0.0
    %5542 = vmatpush1.msra.mxu0 0.0
    %5543 = vmatprep.subr.mxu0 0.0
    %5544 = vmatpush1.msra.mxu0 0.0
    %5545 = vmatprep.subr.mxu0 0.0
    %5546 = vmatpush1.msra.mxu0 0.0
    %5547 = vmatprep.subr.mxu0 0.0
    %5548 = vmatpush1.msra.mxu0 0.0
    %5549 = vmatprep.subr.mxu0 0.0
    %5550 = vmatpush1.msra.mxu0 0.0
    %5551 = vmatprep.subr.mxu0 0.0
    %5552 = vmatpush1.msra.mxu0 0.0
    %5553 = vmatprep.subr.mxu0 0.0
    %5554 = vmatpush1.msra.mxu0 0.0
    %5555 = vmatprep.subr.mxu0 0.0
    %5556 = vmatpush1.msra.mxu0 0.0
    %5557 = vmatprep.subr.mxu0 0.0
    %5558 = vmatpush1.msra.mxu0 0.0
    %5559 = vmatprep.subr.mxu0 0.0
    %5560 = vmatpush1.msra.mxu0 0.0
    %5561 = vmatprep.subr.mxu0 0.0
    %5562 = vmatpush1.msra.mxu0 0.0
    %5563 = vmatprep.subr.mxu0 0.0
    %5564 = vmatpush1.msra.mxu0 0.0
    %5565 = vmatprep.subr.mxu0 0.0
    %5566 = vmatpush1.msra.mxu0 0.0
    %5567 = vmatprep.subr.mxu0 0.0
    %5568 = vmatpush1.msra.mxu0 0.0
    %5569 = vmatprep.subr.mxu0 0.0
    %5570 = vmatpush1.msra.mxu0 0.0
    %5571 = vmatprep.subr.mxu0 0.0
    %5572 = vmatpush1.msra.mxu0 0.0
    %5573 = vmatprep.subr.mxu0 0.0
    %5574 = vmatpush1.msra.mxu0 0.0
    %5575 = vmatprep.subr.mxu0 0.0
    %5576 = vmatpush1.msra.mxu0 0.0
    %5577 = vmatprep.subr.mxu0 0.0
    %5578 = vmatpush1.msra.mxu0 0.0
    %5579 = vmatprep.subr.mxu0 0.0
    %5580 = vmatpush1.msra.mxu0 0.0
    %5581 = vmatprep.subr.mxu0 0.0
    %5582 = vmatpush1.msra.mxu0 0.0
    %5583 = vmatprep.subr.mxu0 0.0
    %5584 = vmatpush1.msra.mxu0 0.0
    %5585 = vmatprep.subr.mxu0 0.0
    %5586 = vmatpush1.msra.mxu0 0.0
    %5587 = vmatprep.subr.mxu0 0.0
    %5588 = vmatpush1.msra.mxu0 0.0
    %5589 = vmatprep.subr.mxu0 0.0
    %5590 = vmatpush1.msra.mxu0 0.0
    %5591 = vmatprep.subr.mxu0 0.0
    %5592 = vmatpush1.msra.mxu0 0.0
    %5593 = vmatprep.subr.mxu0 0.0
    %5594 = vmatpush1.msra.mxu0 0.0
    %5595 = vmatprep.subr.mxu0 0.0
    %5596 = vmatpush1.msra.mxu0 0.0
    %5597 = vmatprep.subr.mxu0 0.0
    %5598 = vmatpush1.msra.mxu0 0.0
    %5599 = vmatprep.mubr.f32.mxu0 0.0
    %5600 = vmatmul.mubr.f32.gmra.mrb[0].mxu0 %v5533
    %v5601 = vpop.f32.mrb[0].mxu0
    %v5602 = vadd.f32 0.0, %v5601
    %v5603 = vpop.f32.mrb[0].mxu0
    %5604 = vdwg.mxu0
    %v5606 = vsel %vm524, %v5528, 0
    %5608 = vmatprep.subr.mxu0 0.0
    %5609 = vmatpush1.msra.mxu0 %v5531
    %5610 = vmatprep.subr.mxu0 0.0
    %5611 = vmatpush1.msra.mxu0 0.0
    %5612 = vmatprep.subr.mxu0 0.0
    %5613 = vmatpush1.msra.mxu0 0.0
    %5614 = vmatprep.subr.mxu0 0.0
    %5615 = vmatpush1.msra.mxu0 0.0
    %5616 = vmatprep.subr.mxu0 0.0
    %5617 = vmatpush1.msra.mxu0 0.0
    %5618 = vmatprep.subr.mxu0 0.0
    %5619 = vmatpush1.msra.mxu0 0.0
    %5620 = vmatprep.subr.mxu0 0.0
    %5621 = vmatpush1.msra.mxu0 0.0
    %5622 = vmatprep.subr.mxu0 0.0
    %5623 = vmatpush1.msra.mxu0 0.0
    %5624 = vmatprep.subr.mxu0 0.0
    %5625 = vmatpush1.msra.mxu0 0.0
    %5626 = vmatprep.subr.mxu0 0.0
    %5627 = vmatpush1.msra.mxu0 0.0
    %5628 = vmatprep.subr.mxu0 0.0
    %5629 = vmatpush1.msra.mxu0 0.0
    %5630 = vmatprep.subr.mxu0 0.0
    %5631 = vmatpush1.msra.mxu0 0.0
    %5632 = vmatprep.subr.mxu0 0.0
    %5633 = vmatpush1.msra.mxu0 0.0
    %5634 = vmatprep.subr.mxu0 0.0
    %5635 = vmatpush1.msra.mxu0 0.0
    %5636 = vmatprep.subr.mxu0 0.0
    %5637 = vmatpush1.msra.mxu0 0.0
    %5638 = vmatprep.subr.mxu0 0.0
    %5639 = vmatpush1.msra.mxu0 0.0
    %5640 = vmatprep.subr.mxu0 0.0
    %5641 = vmatpush1.msra.mxu0 0.0
    %5642 = vmatprep.subr.mxu0 0.0
    %5643 = vmatpush1.msra.mxu0 0.0
    %5644 = vmatprep.subr.mxu0 0.0
    %5645 = vmatpush1.msra.mxu0 0.0
    %5646 = vmatprep.subr.mxu0 0.0
    %5647 = vmatpush1.msra.mxu0 0.0
    %5648 = vmatprep.subr.mxu0 0.0
    %5649 = vmatpush1.msra.mxu0 0.0
    %5650 = vmatprep.subr.mxu0 0.0
    %5651 = vmatpush1.msra.mxu0 0.0
    %5652 = vmatprep.subr.mxu0 0.0
    %5653 = vmatpush1.msra.mxu0 0.0
    %5654 = vmatprep.subr.mxu0 0.0
    %5655 = vmatpush1.msra.mxu0 0.0
    %5656 = vmatprep.subr.mxu0 0.0
    %5657 = vmatpush1.msra.mxu0 0.0
    %5658 = vmatprep.subr.mxu0 0.0
    %5659 = vmatpush1.msra.mxu0 0.0
    %5660 = vmatprep.subr.mxu0 0.0
    %5661 = vmatpush1.msra.mxu0 0.0
    %5662 = vmatprep.subr.mxu0 0.0
    %5663 = vmatpush1.msra.mxu0 0.0
    %5664 = vmatprep.subr.mxu0 0.0
    %5665 = vmatpush1.msra.mxu0 0.0
    %5666 = vmatprep.subr.mxu0 0.0
    %5667 = vmatpush1.msra.mxu0 0.0
    %5668 = vmatprep.subr.mxu0 0.0
    %5669 = vmatpush1.msra.mxu0 0.0
    %5670 = vmatprep.subr.mxu0 0.0
    %5671 = vmatpush1.msra.mxu0 0.0
    %5672 = vmatprep.mubr.f32.mxu0 0.0
    %5673 = vmatmul.mubr.f32.gmra.mrb[0].mxu0 %v5606
    %v5674 = vpop.f32.mrb[0].mxu0
    %v5675 = vadd.f32 0.0, %v5674
    %v5676 = vpop.f32.mrb[0].mxu0
    %5677 = vdwg.mxu0
    %v5678 = vadd.f32 %v5525, %v5602
    %v5679 = vadd.f32 %v5526, %v5675
    %v5680 = vld [vmem:[#allocation4 + $0x1a] sm:$0x1]
    %v5681 = vld [vmem:[#allocation4 + $0x3a] sm:$0x1]
    %s5682 = scalar_lea.vmem %s7, 416
    %v5683 = vld [vmem:[%s5682] sm:$0xff]
    %v5684 = vld [vmem:[%s5682 + $0x8] sm:$0xff]
    %v5686 = vsel %vm524, %v5680, 0
    %5688 = vmatprep.subr.mxu0 0.0
    %5689 = vmatpush1.msra.mxu0 %v5683
    %5690 = vmatprep.subr.mxu0 0.0
    %5691 = vmatpush1.msra.mxu0 0.0
    %5692 = vmatprep.subr.mxu0 0.0
    %5693 = vmatpush1.msra.mxu0 0.0
    %5694 = vmatprep.subr.mxu0 0.0
    %5695 = vmatpush1.msra.mxu0 0.0
    %5696 = vmatprep.subr.mxu0 0.0
    %5697 = vmatpush1.msra.mxu0 0.0
    %5698 = vmatprep.subr.mxu0 0.0
    %5699 = vmatpush1.msra.mxu0 0.0
    %5700 = vmatprep.subr.mxu0 0.0
    %5701 = vmatpush1.msra.mxu0 0.0
    %5702 = vmatprep.subr.mxu0 0.0
    %5703 = vmatpush1.msra.mxu0 0.0
    %5704 = vmatprep.subr.mxu0 0.0
    %5705 = vmatpush1.msra.mxu0 0.0
    %5706 = vmatprep.subr.mxu0 0.0
    %5707 = vmatpush1.msra.mxu0 0.0
    %5708 = vmatprep.subr.mxu0 0.0
    %5709 = vmatpush1.msra.mxu0 0.0
    %5710 = vmatprep.subr.mxu0 0.0
    %5711 = vmatpush1.msra.mxu0 0.0
    %5712 = vmatprep.subr.mxu0 0.0
    %5713 = vmatpush1.msra.mxu0 0.0
    %5714 = vmatprep.subr.mxu0 0.0
    %5715 = vmatpush1.msra.mxu0 0.0
    %5716 = vmatprep.subr.mxu0 0.0
    %5717 = vmatpush1.msra.mxu0 0.0
    %5718 = vmatprep.subr.mxu0 0.0
    %5719 = vmatpush1.msra.mxu0 0.0
    %5720 = vmatprep.subr.mxu0 0.0
    %5721 = vmatpush1.msra.mxu0 0.0
    %5722 = vmatprep.subr.mxu0 0.0
    %5723 = vmatpush1.msra.mxu0 0.0
    %5724 = vmatprep.subr.mxu0 0.0
    %5725 = vmatpush1.msra.mxu0 0.0
    %5726 = vmatprep.subr.mxu0 0.0
    %5727 = vmatpush1.msra.mxu0 0.0
    %5728 = vmatprep.subr.mxu0 0.0
    %5729 = vmatpush1.msra.mxu0 0.0
    %5730 = vmatprep.subr.mxu0 0.0
    %5731 = vmatpush1.msra.mxu0 0.0
    %5732 = vmatprep.subr.mxu0 0.0
    %5733 = vmatpush1.msra.mxu0 0.0
    %5734 = vmatprep.subr.mxu0 0.0
    %5735 = vmatpush1.msra.mxu0 0.0
    %5736 = vmatprep.subr.mxu0 0.0
    %5737 = vmatpush1.msra.mxu0 0.0
    %5738 = vmatprep.subr.mxu0 0.0
    %5739 = vmatpush1.msra.mxu0 0.0
    %5740 = vmatprep.subr.mxu0 0.0
    %5741 = vmatpush1.msra.mxu0 0.0
    %5742 = vmatprep.subr.mxu0 0.0
    %5743 = vmatpush1.msra.mxu0 0.0
    %5744 = vmatprep.subr.mxu0 0.0
    %5745 = vmatpush1.msra.mxu0 0.0
    %5746 = vmatprep.subr.mxu0 0.0
    %5747 = vmatpush1.msra.mxu0 0.0
    %5748 = vmatprep.subr.mxu0 0.0
    %5749 = vmatpush1.msra.mxu0 0.0
    %5750 = vmatprep.subr.mxu0 0.0
    %5751 = vmatpush1.msra.mxu0 0.0
    %5752 = vmatprep.mubr.f32.mxu0 0.0
    %5753 = vmatmul.mubr.f32.gmra.mrb[0].mxu0 %v5686
    %v5754 = vpop.f32.mrb[0].mxu0
    %v5755 = vadd.f32 0.0, %v5754
    %v5756 = vpop.f32.mrb[0].mxu0
    %5757 = vdwg.mxu0
    %v5759 = vsel %vm524, %v5681, 0
    %5761 = vmatprep.subr.mxu0 0.0
    %5762 = vmatpush1.msra.mxu0 %v5684
    %5763 = vmatprep.subr.mxu0 0.0
    %5764 = vmatpush1.msra.mxu0 0.0
    %5765 = vmatprep.subr.mxu0 0.0
    %5766 = vmatpush1.msra.mxu0 0.0
    %5767 = vmatprep.subr.mxu0 0.0
    %5768 = vmatpush1.msra.mxu0 0.0
    %5769 = vmatprep.subr.mxu0 0.0
    %5770 = vmatpush1.msra.mxu0 0.0
    %5771 = vmatprep.subr.mxu0 0.0
    %5772 = vmatpush1.msra.mxu0 0.0
    %5773 = vmatprep.subr.mxu0 0.0
    %5774 = vmatpush1.msra.mxu0 0.0
    %5775 = vmatprep.subr.mxu0 0.0
    %5776 = vmatpush1.msra.mxu0 0.0
    %5777 = vmatprep.subr.mxu0 0.0
    %5778 = vmatpush1.msra.mxu0 0.0
    %5779 = vmatprep.subr.mxu0 0.0
    %5780 = vmatpush1.msra.mxu0 0.0
    %5781 = vmatprep.subr.mxu0 0.0
    %5782 = vmatpush1.msra.mxu0 0.0
    %5783 = vmatprep.subr.mxu0 0.0
    %5784 = vmatpush1.msra.mxu0 0.0
    %5785 = vmatprep.subr.mxu0 0.0
    %5786 = vmatpush1.msra.mxu0 0.0
    %5787 = vmatprep.subr.mxu0 0.0
    %5788 = vmatpush1.msra.mxu0 0.0
    %5789 = vmatprep.subr.mxu0 0.0
    %5790 = vmatpush1.msra.mxu0 0.0
    %5791 = vmatprep.subr.mxu0 0.0
    %5792 = vmatpush1.msra.mxu0 0.0
    %5793 = vmatprep.subr.mxu0 0.0
    %5794 = vmatpush1.msra.mxu0 0.0
    %5795 = vmatprep.subr.mxu0 0.0
    %5796 = vmatpush1.msra.mxu0 0.0
    %5797 = vmatprep.subr.mxu0 0.0
    %5798 = vmatpush1.msra.mxu0 0.0
    %5799 = vmatprep.subr.mxu0 0.0
    %5800 = vmatpush1.msra.mxu0 0.0
    %5801 = vmatprep.subr.mxu0 0.0
    %5802 = vmatpush1.msra.mxu0 0.0
    %5803 = vmatprep.subr.mxu0 0.0
    %5804 = vmatpush1.msra.mxu0 0.0
    %5805 = vmatprep.subr.mxu0 0.0
    %5806 = vmatpush1.msra.mxu0 0.0
    %5807 = vmatprep.subr.mxu0 0.0
    %5808 = vmatpush1.msra.mxu0 0.0
    %5809 = vmatprep.subr.mxu0 0.0
    %5810 = vmatpush1.msra.mxu0 0.0
    %5811 = vmatprep.subr.mxu0 0.0
    %5812 = vmatpush1.msra.mxu0 0.0
    %5813 = vmatprep.subr.mxu0 0.0
    %5814 = vmatpush1.msra.mxu0 0.0
    %5815 = vmatprep.subr.mxu0 0.0
    %5816 = vmatpush1.msra.mxu0 0.0
    %5817 = vmatprep.subr.mxu0 0.0
    %5818 = vmatpush1.msra.mxu0 0.0
    %5819 = vmatprep.subr.mxu0 0.0
    %5820 = vmatpush1.msra.mxu0 0.0
    %5821 = vmatprep.subr.mxu0 0.0
    %5822 = vmatpush1.msra.mxu0 0.0
    %5823 = vmatprep.subr.mxu0 0.0
    %5824 = vmatpush1.msra.mxu0 0.0
    %5825 = vmatprep.mubr.f32.mxu0 0.0
    %5826 = vmatmul.mubr.f32.gmra.mrb[0].mxu0 %v5759
    %v5827 = vpop.f32.mrb[0].mxu0
    %v5828 = vadd.f32 0.0, %v5827
    %v5829 = vpop.f32.mrb[0].mxu0
    %5830 = vdwg.mxu0
    %v5831 = vadd.f32 %v5678, %v5755
    %v5832 = vadd.f32 %v5679, %v5828
    %v5833 = vld [vmem:[#allocation4 + $0x1b] sm:$0x1]
    %v5834 = vld [vmem:[#allocation4 + $0x3b] sm:$0x1]
    %s5835 = scalar_lea.vmem %s7, 432
    %v5836 = vld [vmem:[%s5835] sm:$0xff]
    %v5837 = vld [vmem:[%s5835 + $0x8] sm:$0xff]
    %v5839 = vsel %vm524, %v5833, 0
    %5841 = vmatprep.subr.mxu0 0.0
    %5842 = vmatpush1.msra.mxu0 %v5836
    %5843 = vmatprep.subr.mxu0 0.0
    %5844 = vmatpush1.msra.mxu0 0.0
    %5845 = vmatprep.subr.mxu0 0.0
    %5846 = vmatpush1.msra.mxu0 0.0
    %5847 = vmatprep.subr.mxu0 0.0
    %5848 = vmatpush1.msra.mxu0 0.0
    %5849 = vmatprep.subr.mxu0 0.0
    %5850 = vmatpush1.msra.mxu0 0.0
    %5851 = vmatprep.subr.mxu0 0.0
    %5852 = vmatpush1.msra.mxu0 0.0
    %5853 = vmatprep.subr.mxu0 0.0
    %5854 = vmatpush1.msra.mxu0 0.0
    %5855 = vmatprep.subr.mxu0 0.0
    %5856 = vmatpush1.msra.mxu0 0.0
    %5857 = vmatprep.subr.mxu0 0.0
    %5858 = vmatpush1.msra.mxu0 0.0
    %5859 = vmatprep.subr.mxu0 0.0
    %5860 = vmatpush1.msra.mxu0 0.0
    %5861 = vmatprep.subr.mxu0 0.0
    %5862 = vmatpush1.msra.mxu0 0.0
    %5863 = vmatprep.subr.mxu0 0.0
    %5864 = vmatpush1.msra.mxu0 0.0
    %5865 = vmatprep.subr.mxu0 0.0
    %5866 = vmatpush1.msra.mxu0 0.0
    %5867 = vmatprep.subr.mxu0 0.0
    %5868 = vmatpush1.msra.mxu0 0.0
    %5869 = vmatprep.subr.mxu0 0.0
    %5870 = vmatpush1.msra.mxu0 0.0
    %5871 = vmatprep.subr.mxu0 0.0
    %5872 = vmatpush1.msra.mxu0 0.0
    %5873 = vmatprep.subr.mxu0 0.0
    %5874 = vmatpush1.msra.mxu0 0.0
    %5875 = vmatprep.subr.mxu0 0.0
    %5876 = vmatpush1.msra.mxu0 0.0
    %5877 = vmatprep.subr.mxu0 0.0
    %5878 = vmatpush1.msra.mxu0 0.0
    %5879 = vmatprep.subr.mxu0 0.0
    %5880 = vmatpush1.msra.mxu0 0.0
    %5881 = vmatprep.subr.mxu0 0.0
    %5882 = vmatpush1.msra.mxu0 0.0
    %5883 = vmatprep.subr.mxu0 0.0
    %5884 = vmatpush1.msra.mxu0 0.0
    %5885 = vmatprep.subr.mxu0 0.0
    %5886 = vmatpush1.msra.mxu0 0.0
    %5887 = vmatprep.subr.mxu0 0.0
    %5888 = vmatpush1.msra.mxu0 0.0
    %5889 = vmatprep.subr.mxu0 0.0
    %5890 = vmatpush1.msra.mxu0 0.0
    %5891 = vmatprep.subr.mxu0 0.0
    %5892 = vmatpush1.msra.mxu0 0.0
    %5893 = vmatprep.subr.mxu0 0.0
    %5894 = vmatpush1.msra.mxu0 0.0
    %5895 = vmatprep.subr.mxu0 0.0
    %5896 = vmatpush1.msra.mxu0 0.0
    %5897 = vmatprep.subr.mxu0 0.0
    %5898 = vmatpush1.msra.mxu0 0.0
    %5899 = vmatprep.subr.mxu0 0.0
    %5900 = vmatpush1.msra.mxu0 0.0
    %5901 = vmatprep.subr.mxu0 0.0
    %5902 = vmatpush1.msra.mxu0 0.0
    %5903 = vmatprep.subr.mxu0 0.0
    %5904 = vmatpush1.msra.mxu0 0.0
    %5905 = vmatprep.mubr.f32.mxu0 0.0
    %5906 = vmatmul.mubr.f32.gmra.mrb[0].mxu0 %v5839
    %v5907 = vpop.f32.mrb[0].mxu0
    %v5908 = vadd.f32 0.0, %v5907
    %v5909 = vpop.f32.mrb[0].mxu0
    %5910 = vdwg.mxu0
    %v5912 = vsel %vm524, %v5834, 0
    %5914 = vmatprep.subr.mxu0 0.0
    %5915 = vmatpush1.msra.mxu0 %v5837
    %5916 = vmatprep.subr.mxu0 0.0
    %5917 = vmatpush1.msra.mxu0 0.0
    %5918 = vmatprep.subr.mxu0 0.0
    %5919 = vmatpush1.msra.mxu0 0.0
    %5920 = vmatprep.subr.mxu0 0.0
    %5921 = vmatpush1.msra.mxu0 0.0
    %5922 = vmatprep.subr.mxu0 0.0
    %5923 = vmatpush1.msra.mxu0 0.0
    %5924 = vmatprep.subr.mxu0 0.0
    %5925 = vmatpush1.msra.mxu0 0.0
    %5926 = vmatprep.subr.mxu0 0.0
    %5927 = vmatpush1.msra.mxu0 0.0
    %5928 = vmatprep.subr.mxu0 0.0
    %5929 = vmatpush1.msra.mxu0 0.0
    %5930 = vmatprep.subr.mxu0 0.0
    %5931 = vmatpush1.msra.mxu0 0.0
    %5932 = vmatprep.subr.mxu0 0.0
    %5933 = vmatpush1.msra.mxu0 0.0
    %5934 = vmatprep.subr.mxu0 0.0
    %5935 = vmatpush1.msra.mxu0 0.0
    %5936 = vmatprep.subr.mxu0 0.0
    %5937 = vmatpush1.msra.mxu0 0.0
    %5938 = vmatprep.subr.mxu0 0.0
    %5939 = vmatpush1.msra.mxu0 0.0
    %5940 = vmatprep.subr.mxu0 0.0
    %5941 = vmatpush1.msra.mxu0 0.0
    %5942 = vmatprep.subr.mxu0 0.0
    %5943 = vmatpush1.msra.mxu0 0.0
    %5944 = vmatprep.subr.mxu0 0.0
    %5945 = vmatpush1.msra.mxu0 0.0
    %5946 = vmatprep.subr.mxu0 0.0
    %5947 = vmatpush1.msra.mxu0 0.0
    %5948 = vmatprep.subr.mxu0 0.0
    %5949 = vmatpush1.msra.mxu0 0.0
    %5950 = vmatprep.subr.mxu0 0.0
    %5951 = vmatpush1.msra.mxu0 0.0
    %5952 = vmatprep.subr.mxu0 0.0
    %5953 = vmatpush1.msra.mxu0 0.0
    %5954 = vmatprep.subr.mxu0 0.0
    %5955 = vmatpush1.msra.mxu0 0.0
    %5956 = vmatprep.subr.mxu0 0.0
    %5957 = vmatpush1.msra.mxu0 0.0
    %5958 = vmatprep.subr.mxu0 0.0
    %5959 = vmatpush1.msra.mxu0 0.0
    %5960 = vmatprep.subr.mxu0 0.0
    %5961 = vmatpush1.msra.mxu0 0.0
    %5962 = vmatprep.subr.mxu0 0.0
    %5963 = vmatpush1.msra.mxu0 0.0
    %5964 = vmatprep.subr.mxu0 0.0
    %5965 = vmatpush1.msra.mxu0 0.0
    %5966 = vmatprep.subr.mxu0 0.0
    %5967 = vmatpush1.msra.mxu0 0.0
    %5968 = vmatprep.subr.mxu0 0.0
    %5969 = vmatpush1.msra.mxu0 0.0
    %5970 = vmatprep.subr.mxu0 0.0
    %5971 = vmatpush1.msra.mxu0 0.0
    %5972 = vmatprep.subr.mxu0 0.0
    %5973 = vmatpush1.msra.mxu0 0.0
    %5974 = vmatprep.subr.mxu0 0.0
    %5975 = vmatpush1.msra.mxu0 0.0
    %5976 = vmatprep.subr.mxu0 0.0
    %5977 = vmatpush1.msra.mxu0 0.0
    %5978 = vmatprep.mubr.f32.mxu0 0.0
    %5979 = vmatmul.mubr.f32.gmra.mrb[0].mxu0 %v5912
    %v5980 = vpop.f32.mrb[0].mxu0
    %v5981 = vadd.f32 0.0, %v5980
    %v5982 = vpop.f32.mrb[0].mxu0
    %5983 = vdwg.mxu0
    %v5984 = vadd.f32 %v5831, %v5908
    %v5985 = vadd.f32 %v5832, %v5981
    %v5986 = vld [vmem:[%s8] sm:$0x1]
    %v5987 = vadd.f32 %v5984, %v5986
    %v5988 = vadd.f32 %v5985, %v5986
    %v5989 = vmax.f32 %v5987, 0.0
    %v5990 = vmax.f32 %v5988, 0.0
    %v5991 = vld [vmem:[%s9] sm:$0xff]
    %v5992 = vld [vmem:[%s9 + $0x8] sm:$0xf]
    %v5993 = vld [vmem:[%s9 + $0x10] sm:$0xff]
    %v5994 = vld [vmem:[%s9 + $0x18] sm:$0xf]
    %v5995 = vld [vmem:[%s10] sm:$0x1]
    %vm5996 = vcmask 97280
    %v5998 = vsel %vm5996, %v5989, 0
    %v6001 = vsel %vm73, %v5992, 0
    %6003 = vmatprep.subr.mxu0 0.0
    %6004 = vmatpush1.msra.mxu0 %v5991
    %6005 = vmatprep.subr.mxu0 0.0
    %6006 = vmatpush1.msra.mxu0 %v6001
    %6007 = vmatprep.subr.mxu0 0.0
    %6008 = vmatpush1.msra.mxu0 0.0
    %6009 = vmatprep.subr.mxu0 0.0
    %6010 = vmatpush1.msra.mxu0 0.0
    %6011 = vmatprep.subr.mxu0 0.0
    %6012 = vmatpush1.msra.mxu0 0.0
    %6013 = vmatprep.subr.mxu0 0.0
    %6014 = vmatpush1.msra.mxu0 0.0
    %6015 = vmatprep.subr.mxu0 0.0
    %6016 = vmatpush1.msra.mxu0 0.0
    %6017 = vmatprep.subr.mxu0 0.0
    %6018 = vmatpush1.msra.mxu0 0.0
    %6019 = vmatprep.subr.mxu0 0.0
    %6020 = vmatpush1.msra.mxu0 0.0
    %6021 = vmatprep.subr.mxu0 0.0
    %6022 = vmatpush1.msra.mxu0 0.0
    %6023 = vmatprep.subr.mxu0 0.0
    %6024 = vmatpush1.msra.mxu0 0.0
    %6025 = vmatprep.subr.mxu0 0.0
    %6026 = vmatpush1.msra.mxu0 0.0
    %6027 = vmatprep.subr.mxu0 0.0
    %6028 = vmatpush1.msra.mxu0 0.0
    %6029 = vmatprep.subr.mxu0 0.0
    %6030 = vmatpush1.msra.mxu0 0.0
    %6031 = vmatprep.subr.mxu0 0.0
    %6032 = vmatpush1.msra.mxu0 0.0
    %6033 = vmatprep.subr.mxu0 0.0
    %6034 = vmatpush1.msra.mxu0 0.0
    %6035 = vmatprep.subr.mxu0 0.0
    %6036 = vmatpush1.msra.mxu0 0.0
    %6037 = vmatprep.subr.mxu0 0.0
    %6038 = vmatpush1.msra.mxu0 0.0
    %6039 = vmatprep.subr.mxu0 0.0
    %6040 = vmatpush1.msra.mxu0 0.0
    %6041 = vmatprep.subr.mxu0 0.0
    %6042 = vmatpush1.msra.mxu0 0.0
    %6043 = vmatprep.subr.mxu0 0.0
    %6044 = vmatpush1.msra.mxu0 0.0
    %6045 = vmatprep.subr.mxu0 0.0
    %6046 = vmatpush1.msra.mxu0 0.0
    %6047 = vmatprep.subr.mxu0 0.0
    %6048 = vmatpush1.msra.mxu0 0.0
    %6049 = vmatprep.subr.mxu0 0.0
    %6050 = vmatpush1.msra.mxu0 0.0
    %6051 = vmatprep.subr.mxu0 0.0
    %6052 = vmatpush1.msra.mxu0 0.0
    %6053 = vmatprep.subr.mxu0 0.0
    %6054 = vmatpush1.msra.mxu0 0.0
    %6055 = vmatprep.subr.mxu0 0.0
    %6056 = vmatpush1.msra.mxu0 0.0
    %6057 = vmatprep.subr.mxu0 0.0
    %6058 = vmatpush1.msra.mxu0 0.0
    %6059 = vmatprep.subr.mxu0 0.0
    %6060 = vmatpush1.msra.mxu0 0.0
    %6061 = vmatprep.subr.mxu0 0.0
    %6062 = vmatpush1.msra.mxu0 0.0
    %6063 = vmatprep.subr.mxu0 0.0
    %6064 = vmatpush1.msra.mxu0 0.0
    %6065 = vmatprep.subr.mxu0 0.0
    %6066 = vmatpush1.msra.mxu0 0.0
    %6067 = vmatprep.mubr.f32.mxu0 0.0
    %6068 = vmatmul.mubr.f32.gmra.mrb[0].mxu0 %v5998
    %v6069 = vpop.f32.mrb[0].mxu0
    %v6070 = vadd.f32 %v5995, %v6069
    %v6071 = vpop.f32.mrb[0].mxu0
    %6072 = vdwg.mxu0
    %v6074 = vsel %vm5996, %v5990, 0
    %v6077 = vsel %vm73, %v5994, 0
    %6079 = vmatprep.subr.mxu0 0.0
    %6080 = vmatpush1.msra.mxu0 %v5993
    %6081 = vmatprep.subr.mxu0 0.0
    %6082 = vmatpush1.msra.mxu0 %v6077
    %6083 = vmatprep.subr.mxu0 0.0
    %6084 = vmatpush1.msra.mxu0 0.0
    %6085 = vmatprep.subr.mxu0 0.0
    %6086 = vmatpush1.msra.mxu0 0.0
    %6087 = vmatprep.subr.mxu0 0.0
    %6088 = vmatpush1.msra.mxu0 0.0
    %6089 = vmatprep.subr.mxu0 0.0
    %6090 = vmatpush1.msra.mxu0 0.0
    %6091 = vmatprep.subr.mxu0 0.0
    %6092 = vmatpush1.msra.mxu0 0.0
    %6093 = vmatprep.subr.mxu0 0.0
    %6094 = vmatpush1.msra.mxu0 0.0
    %6095 = vmatprep.subr.mxu0 0.0
    %6096 = vmatpush1.msra.mxu0 0.0
    %6097 = vmatprep.subr.mxu0 0.0
    %6098 = vmatpush1.msra.mxu0 0.0
    %6099 = vmatprep.subr.mxu0 0.0
    %6100 = vmatpush1.msra.mxu0 0.0
    %6101 = vmatprep.subr.mxu0 0.0
    %6102 = vmatpush1.msra.mxu0 0.0
    %6103 = vmatprep.subr.mxu0 0.0
    %6104 = vmatpush1.msra.mxu0 0.0
    %6105 = vmatprep.subr.mxu0 0.0
    %6106 = vmatpush1.msra.mxu0 0.0
    %6107 = vmatprep.subr.mxu0 0.0
    %6108 = vmatpush1.msra.mxu0 0.0
    %6109 = vmatprep.subr.mxu0 0.0
    %6110 = vmatpush1.msra.mxu0 0.0
    %6111 = vmatprep.subr.mxu0 0.0
    %6112 = vmatpush1.msra.mxu0 0.0
    %6113 = vmatprep.subr.mxu0 0.0
    %6114 = vmatpush1.msra.mxu0 0.0
    %6115 = vmatprep.subr.mxu0 0.0
    %6116 = vmatpush1.msra.mxu0 0.0
    %6117 = vmatprep.subr.mxu0 0.0
    %6118 = vmatpush1.msra.mxu0 0.0
    %6119 = vmatprep.subr.mxu0 0.0
    %6120 = vmatpush1.msra.mxu0 0.0
    %6121 = vmatprep.subr.mxu0 0.0
    %6122 = vmatpush1.msra.mxu0 0.0
    %6123 = vmatprep.subr.mxu0 0.0
    %6124 = vmatpush1.msra.mxu0 0.0
    %6125 = vmatprep.subr.mxu0 0.0
    %6126 = vmatpush1.msra.mxu0 0.0
    %6127 = vmatprep.subr.mxu0 0.0
    %6128 = vmatpush1.msra.mxu0 0.0
    %6129 = vmatprep.subr.mxu0 0.0
    %6130 = vmatpush1.msra.mxu0 0.0
    %6131 = vmatprep.subr.mxu0 0.0
    %6132 = vmatpush1.msra.mxu0 0.0
    %6133 = vmatprep.subr.mxu0 0.0
    %6134 = vmatpush1.msra.mxu0 0.0
    %6135 = vmatprep.subr.mxu0 0.0
    %6136 = vmatpush1.msra.mxu0 0.0
    %6137 = vmatprep.subr.mxu0 0.0
    %6138 = vmatpush1.msra.mxu0 0.0
    %6139 = vmatprep.subr.mxu0 0.0
    %6140 = vmatpush1.msra.mxu0 0.0
    %6141 = vmatprep.subr.mxu0 0.0
    %6142 = vmatpush1.msra.mxu0 0.0
    %6143 = vmatprep.mubr.f32.mxu0 0.0
    %6144 = vmatmul.mubr.f32.gmra.mrb[0].mxu0 %v6074
    %v6145 = vpop.f32.mrb[0].mxu0
    %v6146 = vadd.f32 %v5995, %v6145
    %v6147 = vpop.f32.mrb[0].mxu0
    %6148 = vdwg.mxu0
    %vm6149 = vcmask 40960
    %6150 = vst.msk [vmem:[#allocation5] sm:$0x1] %vm6149, %v6070
    %6151 = vst.msk [vmem:[#allocation5 + $0x1] sm:$0x1] %vm6149, %v6146
    // Predicated region
    $region46: #{_lambda_.3} parent=1 // pred_check
      _
    $region47: #{_lambda_.3} parent=1 // pred_check_branch
      %6153 = sbr.rel (0) target = $region49
    $region48: #{_lambda_.3} parent=1 // pred_region
      %s6155 = ssub.s32 32, 32
      %6156 = vsyncadd [#allocation6], %s6155
      %s6157 = sshll.u32 [#allocation5], 4
      %s6158 = int_to_ptr.vmem [resolvable:$true] %s6157
      %6163 = dma.vmem_to_hbm [thread:$0]  %s6158, 32, %s11, [#allocation6], 16, 16, 1
    $region49: #{_lambda_.3} parent=1 // pred_fallthru
      _
    // Predicated region
    $region50: #{_lambda_.3} parent=1 // pred_check
      _
    $region51: #{_lambda_.3} parent=1 // pred_check_branch
      %6165 = sbr.rel (0) target = $region53
    $region52: #{_lambda_.3} parent=1 // pred_region
      %6166 = dma.done [#allocation6], 32
    $region53: #{_lambda_.3} parent=1 // pred_fallthru
      _
    %6167 = vsyncpa [#allocation6], 1

</llo_original>
